<compile_context>
chip_gen: v5e
topology: v5e:2x2
jax: 0.10.0
libtpu: 0.0.40
codegen_flags: <defaults>
</compile_context>

<pallas_src>
import functools

import jax
import jax.numpy as jnp
from jax.experimental import pallas as pl
from jax.experimental.pallas import tpu as pltpu

_C_IN = 64  # fixed by the module: fmri_inner.view(B, 64, -1)


def _silu(x):
    return x * jax.nn.sigmoid(x)


# ---------------------------------------------------------------------------
# Fused kernel: MLP (3x Linear+SiLU) -> view -> 3x Conv1d(k=3, pad=1)+SiLU
# ---------------------------------------------------------------------------
def _fused_kernel(D, T, bt,
                  x_ref, w1_ref, b1_ref, w2_ref, b2_ref, w3_ref, b3_ref,
                  cw1_ref, cb1_ref, cw2_ref, cb2_ref, cw3_ref, cb3_ref,
                  o_ref, xs_ref, pb_ref):
    """One batch tile.

    x_ref  : (F, bt)           fmri tile (transposed in the wrapper; batch along lanes)
    w*/b*  : MLP weights, native PyTorch (out, in) layout, biases (out, 1);
             w3/b3 rows pre-permuted to d-major order (row = d*64 + c)
    cw*    : conv weights repacked to (C_out, 3*C_in)  (taps stacked along K)
    cb*    : conv biases (C_out, 1)
    o_ref  : (T, D*bt)         output tile, lane index = d*bt + b
    xs_ref : (64, (D+2)*bt)    VMEM zero-padded conv-1 input slab
    pb_ref : (T,  (D+2)*bt)    VMEM zero-padded conv-2/3 input slab
    """
    f32 = jnp.float32

    # ----------------- MLP: 3x (matmul -> bias -> SiLU) on the MXU -----------------
    h = _silu(jnp.dot(w1_ref[...], x_ref[...], preferred_element_type=f32) + b1_ref[...])
    h = _silu(jnp.dot(w2_ref[...], h, preferred_element_type=f32) + b2_ref[...])
    # TODO(synk): for very large text_dim / fmri_dim, tile w3 over output rows (and w1 over
    # K) with an extra "arbitrary" grid axis so no weight block exceeds v7x's 64 MiB VMEM.
    h3 = _silu(jnp.dot(w3_ref[...], h, preferred_element_type=f32) + b3_ref[...])
    # h3: (D*64, bt), row = d*64 + c   (w3 rows were permuted at parameter-prepare time)

    # ------ torch .view(B, 64, D): write into the zero-padded slab, d-major lanes ------
    # Only the pad stripes need zeros; re-zero them every step (2*bt lanes per slab, cheap
    # and safe under megacore grid splitting). The interior is fully overwritten below.
    xs_ref[:, 0:bt] = jnp.zeros((_C_IN, bt), f32)
    xs_ref[:, (D + 1) * bt:(D + 2) * bt] = jnp.zeros((_C_IN, bt), f32)
    pb_ref[:, 0:bt] = jnp.zeros((T, bt), f32)
    pb_ref[:, (D + 1) * bt:(D + 2) * bt] = jnp.zeros((T, bt), f32)
    # TODO(synk): convert to lax.fori_loop for very large text_dim (IR size).
    for d in range(D):
        xs_ref[:, (d + 1) * bt:(d + 2) * bt] = h3[d * _C_IN:(d + 1) * _C_IN, :]

    # ------ Conv1d(k=3, pad=1) x3 + SiLU, batched over the whole tile ------------------
    # With lane index d*bt + b the per-batch +/-1 shifts are plain static lane slices of
    # the padded slab; the 3 taps fuse into one (C_out, 3*C_in) @ (3*C_in, D*bt) matmul.
    def conv_layer(padded_ref, w_ref, bias_ref):
        x_m1 = padded_ref[:, 0:D * bt]                    # x[., d-1]  (zeros at d == 0)
        x_00 = padded_ref[:, bt:(D + 1) * bt]             # x[., d]
        x_p1 = padded_ref[:, 2 * bt:(D + 2) * bt]         # x[., d+1]  (zeros at d == D-1)
        x_cat = jnp.concatenate([x_m1, x_00, x_p1], axis=0)      # (3*C_in, D*bt)
        y = jnp.dot(w_ref[...], x_cat, preferred_element_type=f32) + bias_ref[...]
        return _silu(y)                                           # (C_out, D*bt)

    y = conv_layer(xs_ref, cw1_ref, cb1_ref)
    pb_ref[:, bt:(D + 1) * bt] = y
    y = conv_layer(pb_ref, cw2_ref, cb2_ref)
    pb_ref[:, bt:(D + 1) * bt] = y
    y = conv_layer(pb_ref, cw3_ref, cb3_ref)
    o_ref[...] = y                                        # single lane-dense store


# ---------------------------------------------------------------------------
# One-time parameter preparation (load time, NOT per forward call)
# ---------------------------------------------------------------------------
def _repack_conv_weight(w):
    """PyTorch Conv1d weight (C_out, C_in, 3) -> (C_out, 3*C_in), tap-major columns."""
    co, ci, k = w.shape
    return jnp.transpose(w, (0, 2, 1)).reshape(co, k * ci)


def prepare_params(params, *, text_length, text_dim):
    T, D = text_length, text_dim
    inner = params["mlp0_w"].shape[0]
    # w3 rows are permuted from feature index c*D + d to d*64 + c so the MLP output is
    # already in the conv's d-major lane layout (no in-kernel transpose / big reshape).
    w3 = params["mlp4_w"].reshape(_C_IN, D, inner).transpose(1, 0, 2).reshape(D * _C_IN, inner)
    b3 = params["mlp4_b"].reshape(_C_IN, D).transpose(1, 0).reshape(D * _C_IN, 1)
    return {
        "w1": params["mlp0_w"], "b1": params["mlp0_b"].reshape(inner, 1),
        "w2": params["mlp2_w"], "b2": params["mlp2_b"].reshape(inner, 1),
        "w3": w3, "b3": b3,
        "cw1": _repack_conv_weight(params["conv0_w"]), "cb1": params["conv0_b"].reshape(T, 1),
        "cw2": _repack_conv_weight(params["conv2_w"]), "cb2": params["conv2_b"].reshape(T, 1),
        "cw3": _repack_conv_weight(params["conv4_w"]), "cb3": params["conv4_b"].reshape(T, 1),
    }


# ---------------------------------------------------------------------------
# Batch-tile selection + VMEM footprint estimate
# ---------------------------------------------------------------------------
def _vmem_bytes(bt, F, inner, D, T):
    f32 = 4
    weights = (inner * F + inner * inner + _C_IN * D * inner + 2 * inner + _C_IN * D
               + T * 3 * _C_IN + 2 * T * 3 * T + 3 * T) * f32
    weights *= 2  # Pallas double-buffers inputs even with constant index_maps (see TODO)
    acts = bt * (2 * F + 2 * inner + 2 * _C_IN * D          # x (x2), h1/h2, h3
                 + (D + 2) * (_C_IN + T)                     # padded scratch slabs
                 + 3 * _C_IN * D + 3 * T * D                 # x_cat values
                 + 3 * T * D) * f32                          # y values + out block (x2)
    return weights + acts


def _pick_batch_tile(B, F, inner, D, T, budget=40 * 1024 * 1024):
    # bt must divide B and be either == B or a multiple of 128 (BlockSpec lane rule).
    cands = [B] + [m for m in range(128, B, 128) if B % m == 0]
    fitting = [c for c in cands if _vmem_bytes(c, F, inner, D, T) <= budget]
    if not fitting:
        return min(cands, key=lambda c: _vmem_bytes(c, F, inner, D, T))
    multi = [c for c in fitting if B // c >= 2]   # keep >= 2 grid steps for v7x's 2 TCs
    return max(multi) if multi else max(fitting)


# ---------------------------------------------------------------------------
# Forward wrapper
# ---------------------------------------------------------------------------
def fmri2text_forward(fmri, prepared, *, text_length, text_dim, batch_tile=None):
    B, F = fmri.shape
    T, D = text_length, text_dim
    inner = prepared["w1"].shape[0]
    assert prepared["w3"].shape == (D * _C_IN, inner)

    bt = _pick_batch_tile(B, F, inner, D, T) if batch_tile is None else batch_tile
    assert B % bt == 0 and (bt == B or bt % 128 == 0), (B, bt)
    grid = (B // bt,)

    x_t = fmri.T  # (F, B): batch along lanes -> batch tile fills the MXU N dimension

    def const_spec(shape):
        # Constant block index -> DMA'd once, stays resident in VMEM across grid steps.
        return pl.BlockSpec(shape, lambda i, _n=len(shape): (0,) * _n)

    kernel = functools.partial(_fused_kernel, D, T, bt)
    vmem_limit = int(min(max(_vmem_bytes(bt, F, inner, D, T), 32 * 1024 * 1024),
                         64 * 1024 * 1024))

    out_flat = pl.pallas_call(
        kernel,
        out_shape=jax.ShapeDtypeStruct((T, D * B), jnp.float32),
        grid=grid,
        in_specs=[
            pl.BlockSpec((F, bt), lambda i: (0, i)),
            const_spec((inner, F)), const_spec((inner, 1)),
            const_spec((inner, inner)), const_spec((inner, 1)),
            const_spec((D * _C_IN, inner)), const_spec((D * _C_IN, 1)),
            const_spec((T, 3 * _C_IN)), const_spec((T, 1)),
            const_spec((T, 3 * T)), const_spec((T, 1)),
            const_spec((T, 3 * T)), const_spec((T, 1)),
        ],
        out_specs=pl.BlockSpec((T, D * bt), lambda i: (0, i)),
        scratch_shapes=[
            pltpu.VMEM((_C_IN, (D + 2) * bt), jnp.float32),
            pltpu.VMEM((T, (D + 2) * bt), jnp.float32),
        ],
        compiler_params=pltpu.CompilerParams(
            dimension_semantics=("parallel",),
            vmem_limit_bytes=vmem_limit,
        ),
    )(x_t, prepared["w1"], prepared["b1"], prepared["w2"], prepared["b2"],
      prepared["w3"], prepared["b3"], prepared["cw1"], prepared["cb1"],
      prepared["cw2"], prepared["cb2"], prepared["cw3"], prepared["cb3"])

    # Undo the tile-local (d*bt + b) lane layout -> (B, T, D).
    g = B // bt
    out = out_flat.reshape(T, g, D, bt).transpose(1, 3, 0, 2).reshape(B, T, D)
    return out


# ---------------------------------------------------------------------------
# Pure-JAX reference (PyTorch semantics) for correctness checking.
# ---------------------------------------------------------------------------
def reference_forward(fmri, params, *, text_length, text_dim):
    def silu(v):
        return v * jax.nn.sigmoid(v)

    with jax.default_matmul_precision("highest"):
        h = silu(fmri @ params["mlp0_w"].T + params["mlp0_b"])
        h = silu(h @ params["mlp2_w"].T + params["mlp2_b"])
        h = silu(h @ params["mlp4_w"].T + params["mlp4_b"])
        x = h.reshape(fmri.shape[0], 64, text_dim)

        def conv1d(x, w, b):  # w: (Co, Ci, 3), PyTorch Conv1d(k=3, pad=1)
            L = x.shape[-1]
            xp = jnp.pad(x, ((0, 0), (0, 0), (1, 1)))
            out = sum(jnp.einsum('oc,bcl->bol', w[:, :, k], xp[:, :, k:k + L])
                      for k in range(3))
            return silu(out + b[None, :, None])

        x = conv1d(x, params["conv0_w"], params["conv0_b"])
        x = conv1d(x, params["conv2_w"], params["conv2_b"])
        x = conv1d(x, params["conv4_w"], params["conv4_b"])
    return x


def init_params(key, fmri_dim, text_length, text_dim):
    inner = 512
    out3 = 64 * text_dim
    ks = jax.random.split(key, 12)
    s = 0.05

    def n(k, shape):
        return jax.random.normal(k, shape, jnp.float32) * s

    return {
        # PyTorch layouts: Linear.weight (out, in); Conv1d.weight (out, in, k).
        "mlp0_w": n(ks[0], (inner, fmri_dim)),   "mlp0_b": n(ks[1], (inner,)),
        "mlp2_w": n(ks[2], (inner, inner)),      "mlp2_b": n(ks[3], (inner,)),
        "mlp4_w": n(ks[4], (out3, inner)),       "mlp4_b": n(ks[5], (out3,)),
        "conv0_w": n(ks[6], (text_length, 64, 3)),           "conv0_b": n(ks[7], (text_length,)),
        "conv2_w": n(ks[8], (text_length, text_length, 3)),  "conv2_b": n(ks[9], (text_length,)),
        "conv4_w": n(ks[10], (text_length, text_length, 3)), "conv4_b": n(ks[11], (text_length,)),
    }


if __name__ == "__main__":
    B = 2
    fmri_dim = 128
    text_length = 8
    text_dim = 16

    key = jax.random.PRNGKey(0)
    k_x, k_p = jax.random.split(key)
    fmri = jax.random.normal(k_x, (B, fmri_dim), jnp.float32)
    params = init_params(k_p, fmri_dim, text_length, text_dim)

    prepared = prepare_params(params, text_length=text_length, text_dim=text_dim)

    out = fmri2text_forward(fmri, prepared, text_length=text_length, text_dim=text_dim)
    out = jax.block_until_ready(out)

    ref = reference_forward(fmri, params, text_length=text_length, text_dim=text_dim)
    assert out.shape == (B, text_length, text_dim), out.shape
    max_err = float(jnp.max(jnp.abs(out - ref)))
    assert jnp.allclose(out, ref, rtol=1e-4, atol=2e-5), max_err

    print("KERNEL_OK")
</pallas_src>

<mosaic_0001>
module attributes {stable_mosaic.version = 11 : i64} {
  func.func @_fused_kernel(%arg0: i32, %arg1: memref<128x2xf32, #tpu.memory_space<vmem>>, %arg2: memref<512x128xf32, #tpu.memory_space<vmem>>, %arg3: memref<512x1xf32, #tpu.memory_space<vmem>>, %arg4: memref<512x512xf32, #tpu.memory_space<vmem>>, %arg5: memref<512x1xf32, #tpu.memory_space<vmem>>, %arg6: memref<1024x512xf32, #tpu.memory_space<vmem>>, %arg7: memref<1024x1xf32, #tpu.memory_space<vmem>>, %arg8: memref<8x192xf32, #tpu.memory_space<vmem>>, %arg9: memref<8x1xf32, #tpu.memory_space<vmem>>, %arg10: memref<8x24xf32, #tpu.memory_space<vmem>>, %arg11: memref<8x1xf32, #tpu.memory_space<vmem>>, %arg12: memref<8x24xf32, #tpu.memory_space<vmem>>, %arg13: memref<8x1xf32, #tpu.memory_space<vmem>>, %arg14: memref<8x32xf32, #tpu.memory_space<vmem>>, %arg15: memref<64x36xf32, #tpu.memory_space<vmem>>, %arg16: memref<8x36xf32, #tpu.memory_space<vmem>>) attributes {dimension_semantics = [#tpu.dimension_semantics<parallel>], iteration_bounds = array<i64: 1>, scalar_prefetch = 0 : i64, scratch_operands = 2 : i64, tpu.core_type = #tpu.core_type<tc>, window_params = [{transform_indices = @transform_0, window_bounds = array<i64: 128, 2>}, {pipeline_mode = #tpu.pipeline_mode<synchronous>, transform_indices = @transform_1, window_bounds = array<i64: 512, 128>}, {pipeline_mode = #tpu.pipeline_mode<synchronous>, transform_indices = @transform_2, window_bounds = array<i64: 512, 1>}, {pipeline_mode = #tpu.pipeline_mode<synchronous>, transform_indices = @transform_3, window_bounds = array<i64: 512, 512>}, {pipeline_mode = #tpu.pipeline_mode<synchronous>, transform_indices = @transform_4, window_bounds = array<i64: 512, 1>}, {pipeline_mode = #tpu.pipeline_mode<synchronous>, transform_indices = @transform_5, window_bounds = array<i64: 1024, 512>}, {pipeline_mode = #tpu.pipeline_mode<synchronous>, transform_indices = @transform_6, window_bounds = array<i64: 1024, 1>}, {pipeline_mode = #tpu.pipeline_mode<synchronous>, transform_indices = @transform_7, window_bounds = array<i64: 8, 192>}, {pipeline_mode = #tpu.pipeline_mode<synchronous>, transform_indices = @transform_8, window_bounds = array<i64: 8, 1>}, {pipeline_mode = #tpu.pipeline_mode<synchronous>, transform_indices = @transform_9, window_bounds = array<i64: 8, 24>}, {pipeline_mode = #tpu.pipeline_mode<synchronous>, transform_indices = @transform_10, window_bounds = array<i64: 8, 1>}, {pipeline_mode = #tpu.pipeline_mode<synchronous>, transform_indices = @transform_11, window_bounds = array<i64: 8, 24>}, {pipeline_mode = #tpu.pipeline_mode<synchronous>, transform_indices = @transform_12, window_bounds = array<i64: 8, 1>}, {transform_indices = @transform_13, window_bounds = array<i64: 8, 32>}]} {
    %c0 = arith.constant 0 : index
    %c0_0 = arith.constant 0 : index
    %0 = vector.load %arg2[%c0, %c0_0] : memref<512x128xf32, #tpu.memory_space<vmem>>, vector<512x128xf32>
    %c0_1 = arith.constant 0 : index
    %c0_2 = arith.constant 0 : index
    %1 = vector.load %arg1[%c0_1, %c0_2] : memref<128x2xf32, #tpu.memory_space<vmem>>, vector<128x2xf32>
    %cst = arith.constant dense<0.000000e+00> : vector<512x2xf32>
    %2 = tpu.matmul %0, %1, %cst {dimension_numbers = #tpu.dot_dimension_numbers<[1], [0], [0], [1], [0, 0, 1, 1], [], []>} : vector<512x128xf32>, vector<128x2xf32>, vector<512x2xf32> -> vector<512x2xf32>
    %c0_3 = arith.constant 0 : index
    %c0_4 = arith.constant 0 : index
    %3 = vector.load %arg3[%c0_3, %c0_4] : memref<512x1xf32, #tpu.memory_space<vmem>>, vector<512x1xf32>
    %4 = vector.broadcast %3 : vector<512x1xf32> to vector<512x2xf32>
    %5 = arith.addf %2, %4 : vector<512x2xf32>
    %6 = arith.negf %5 : vector<512x2xf32>
    %7 = math.exp %6 : vector<512x2xf32>
    %cst_5 = arith.constant 1.000000e+00 : f32
    %8 = vector.broadcast %cst_5 : f32 to vector<512x2xf32>
    %9 = arith.addf %8, %7 : vector<512x2xf32>
    %10 = arith.divf %8, %9 : vector<512x2xf32>
    %11 = arith.mulf %5, %10 : vector<512x2xf32>
    %c0_6 = arith.constant 0 : index
    %c0_7 = arith.constant 0 : index
    %12 = vector.load %arg4[%c0_6, %c0_7] : memref<512x512xf32, #tpu.memory_space<vmem>>, vector<512x512xf32>
    %cst_8 = arith.constant dense<0.000000e+00> : vector<512x2xf32>
    %13 = tpu.matmul %12, %11, %cst_8 {dimension_numbers = #tpu.dot_dimension_numbers<[1], [0], [0], [1], [0, 0, 1, 1], [], []>} : vector<512x512xf32>, vector<512x2xf32>, vector<512x2xf32> -> vector<512x2xf32>
    %c0_9 = arith.constant 0 : index
    %c0_10 = arith.constant 0 : index
    %14 = vector.load %arg5[%c0_9, %c0_10] : memref<512x1xf32, #tpu.memory_space<vmem>>, vector<512x1xf32>
    %15 = vector.broadcast %14 : vector<512x1xf32> to vector<512x2xf32>
    %16 = arith.addf %13, %15 : vector<512x2xf32>
    %17 = arith.negf %16 : vector<512x2xf32>
    %18 = math.exp %17 : vector<512x2xf32>
    %cst_11 = arith.constant 1.000000e+00 : f32
    %19 = vector.broadcast %cst_11 : f32 to vector<512x2xf32>
    %20 = arith.addf %19, %18 : vector<512x2xf32>
    %21 = arith.divf %19, %20 : vector<512x2xf32>
    %22 = arith.mulf %16, %21 : vector<512x2xf32>
    %c0_12 = arith.constant 0 : index
    %c0_13 = arith.constant 0 : index
    %23 = vector.load %arg6[%c0_12, %c0_13] : memref<1024x512xf32, #tpu.memory_space<vmem>>, vector<1024x512xf32>
    %cst_14 = arith.constant dense<0.000000e+00> : vector<1024x2xf32>
    %24 = tpu.matmul %23, %22, %cst_14 {dimension_numbers = #tpu.dot_dimension_numbers<[1], [0], [0], [1], [0, 0, 1, 1], [], []>} : vector<1024x512xf32>, vector<512x2xf32>, vector<1024x2xf32> -> vector<1024x2xf32>
    %c0_15 = arith.constant 0 : index
    %c0_16 = arith.constant 0 : index
    %25 = vector.load %arg7[%c0_15, %c0_16] : memref<1024x1xf32, #tpu.memory_space<vmem>>, vector<1024x1xf32>
    %26 = vector.broadcast %25 : vector<1024x1xf32> to vector<1024x2xf32>
    %27 = arith.addf %24, %26 : vector<1024x2xf32>
    %28 = arith.negf %27 : vector<1024x2xf32>
    %29 = math.exp %28 : vector<1024x2xf32>
    %cst_17 = arith.constant 1.000000e+00 : f32
    %30 = vector.broadcast %cst_17 : f32 to vector<1024x2xf32>
    %31 = arith.addf %30, %29 : vector<1024x2xf32>
    %32 = arith.divf %30, %31 : vector<1024x2xf32>
    %33 = arith.mulf %27, %32 : vector<1024x2xf32>
    %cst_18 = arith.constant 0.000000e+00 : f32
    %34 = vector.broadcast %cst_18 : f32 to vector<64x2xf32>
    %c0_19 = arith.constant 0 : index
    %c0_20 = arith.constant 0 : index
    %35 = vector.load %arg15[%c0_19, %c0_20] : memref<64x36xf32, #tpu.memory_space<vmem>>, vector<64x2xf32>
    tpu.vector_store %arg15[%c0_19, %c0_20], %34 {strides = array<i32>} : memref<64x36xf32, #tpu.memory_space<vmem>>, vector<64x2xf32>,
    %cst_21 = arith.constant 0.000000e+00 : f32
    %36 = vector.broadcast %cst_21 : f32 to vector<64x2xf32>
    %c0_22 = arith.constant 0 : index
    %c34 = arith.constant 34 : index
    %37 = vector.load %arg15[%c0_22, %c34] : memref<64x36xf32, #tpu.memory_space<vmem>>, vector<64x2xf32>
    tpu.vector_store %arg15[%c0_22, %c34], %36 {strides = array<i32>} : memref<64x36xf32, #tpu.memory_space<vmem>>, vector<64x2xf32>,
    %cst_23 = arith.constant 0.000000e+00 : f32
    %38 = vector.broadcast %cst_23 : f32 to vector<8x2xf32>
    %c0_24 = arith.constant 0 : index
    %c0_25 = arith.constant 0 : index
    %39 = vector.load %arg16[%c0_24, %c0_25] : memref<8x36xf32, #tpu.memory_space<vmem>>, vector<8x2xf32>
    tpu.vector_store %arg16[%c0_24, %c0_25], %38 {strides = array<i32>} : memref<8x36xf32, #tpu.memory_space<vmem>>, vector<8x2xf32>,
    %cst_26 = arith.constant 0.000000e+00 : f32
    %40 = vector.broadcast %cst_26 : f32 to vector<8x2xf32>
    %c0_27 = arith.constant 0 : index
    %c34_28 = arith.constant 34 : index
    %41 = vector.load %arg16[%c0_27, %c34_28] : memref<8x36xf32, #tpu.memory_space<vmem>>, vector<8x2xf32>
    tpu.vector_store %arg16[%c0_27, %c34_28], %40 {strides = array<i32>} : memref<8x36xf32, #tpu.memory_space<vmem>>, vector<8x2xf32>,
    %42 = vector.extract_strided_slice %33 {offsets = [0, 0], sizes = [64, 2], strides = [1, 1]} : vector<1024x2xf32> to vector<64x2xf32>
    %c0_29 = arith.constant 0 : index
    %c2 = arith.constant 2 : index
    %43 = vector.load %arg15[%c0_29, %c2] : memref<64x36xf32, #tpu.memory_space<vmem>>, vector<64x2xf32>
    tpu.vector_store %arg15[%c0_29, %c2], %42 {strides = array<i32>} : memref<64x36xf32, #tpu.memory_space<vmem>>, vector<64x2xf32>,
    %44 = vector.extract_strided_slice %33 {offsets = [64, 0], sizes = [64, 2], strides = [1, 1]} : vector<1024x2xf32> to vector<64x2xf32>
    %c0_30 = arith.constant 0 : index
    %c4 = arith.constant 4 : index
    %45 = vector.load %arg15[%c0_30, %c4] : memref<64x36xf32, #tpu.memory_space<vmem>>, vector<64x2xf32>
    tpu.vector_store %arg15[%c0_30, %c4], %44 {strides = array<i32>} : memref<64x36xf32, #tpu.memory_space<vmem>>, vector<64x2xf32>,
    %46 = vector.extract_strided_slice %33 {offsets = [128, 0], sizes = [64, 2], strides = [1, 1]} : vector<1024x2xf32> to vector<64x2xf32>
    %c0_31 = arith.constant 0 : index
    %c6 = arith.constant 6 : index
    %47 = vector.load %arg15[%c0_31, %c6] : memref<64x36xf32, #tpu.memory_space<vmem>>, vector<64x2xf32>
    tpu.vector_store %arg15[%c0_31, %c6], %46 {strides = array<i32>} : memref<64x36xf32, #tpu.memory_space<vmem>>, vector<64x2xf32>,
    %48 = vector.extract_strided_slice %33 {offsets = [192, 0], sizes = [64, 2], strides = [1, 1]} : vector<1024x2xf32> to vector<64x2xf32>
    %c0_32 = arith.constant 0 : index
    %c8 = arith.constant 8 : index
    %49 = vector.load %arg15[%c0_32, %c8] : memref<64x36xf32, #tpu.memory_space<vmem>>, vector<64x2xf32>
    tpu.vector_store %arg15[%c0_32, %c8], %48 {strides = array<i32>} : memref<64x36xf32, #tpu.memory_space<vmem>>, vector<64x2xf32>,
    %50 = vector.extract_strided_slice %33 {offsets = [256, 0], sizes = [64, 2], strides = [1, 1]} : vector<1024x2xf32> to vector<64x2xf32>
    %c0_33 = arith.constant 0 : index
    %c10 = arith.constant 10 : index
    %51 = vector.load %arg15[%c0_33, %c10] : memref<64x36xf32, #tpu.memory_space<vmem>>, vector<64x2xf32>
    tpu.vector_store %arg15[%c0_33, %c10], %50 {strides = array<i32>} : memref<64x36xf32, #tpu.memory_space<vmem>>, vector<64x2xf32>,
    %52 = vector.extract_strided_slice %33 {offsets = [320, 0], sizes = [64, 2], strides = [1, 1]} : vector<1024x2xf32> to vector<64x2xf32>
    %c0_34 = arith.constant 0 : index
    %c12 = arith.constant 12 : index
    %53 = vector.load %arg15[%c0_34, %c12] : memref<64x36xf32, #tpu.memory_space<vmem>>, vector<64x2xf32>
    tpu.vector_store %arg15[%c0_34, %c12], %52 {strides = array<i32>} : memref<64x36xf32, #tpu.memory_space<vmem>>, vector<64x2xf32>,
    %54 = vector.extract_strided_slice %33 {offsets = [384, 0], sizes = [64, 2], strides = [1, 1]} : vector<1024x2xf32> to vector<64x2xf32>
    %c0_35 = arith.constant 0 : index
    %c14 = arith.constant 14 : index
    %55 = vector.load %arg15[%c0_35, %c14] : memref<64x36xf32, #tpu.memory_space<vmem>>, vector<64x2xf32>
    tpu.vector_store %arg15[%c0_35, %c14], %54 {strides = array<i32>} : memref<64x36xf32, #tpu.memory_space<vmem>>, vector<64x2xf32>,
    %56 = vector.extract_strided_slice %33 {offsets = [448, 0], sizes = [64, 2], strides = [1, 1]} : vector<1024x2xf32> to vector<64x2xf32>
    %c0_36 = arith.constant 0 : index
    %c16 = arith.constant 16 : index
    %57 = vector.load %arg15[%c0_36, %c16] : memref<64x36xf32, #tpu.memory_space<vmem>>, vector<64x2xf32>
    tpu.vector_store %arg15[%c0_36, %c16], %56 {strides = array<i32>} : memref<64x36xf32, #tpu.memory_space<vmem>>, vector<64x2xf32>,
    %58 = vector.extract_strided_slice %33 {offsets = [512, 0], sizes = [64, 2], strides = [1, 1]} : vector<1024x2xf32> to vector<64x2xf32>
    %c0_37 = arith.constant 0 : index
    %c18 = arith.constant 18 : index
    %59 = vector.load %arg15[%c0_37, %c18] : memref<64x36xf32, #tpu.memory_space<vmem>>, vector<64x2xf32>
    tpu.vector_store %arg15[%c0_37, %c18], %58 {strides = array<i32>} : memref<64x36xf32, #tpu.memory_space<vmem>>, vector<64x2xf32>,
    %60 = vector.extract_strided_slice %33 {offsets = [576, 0], sizes = [64, 2], strides = [1, 1]} : vector<1024x2xf32> to vector<64x2xf32>
    %c0_38 = arith.constant 0 : index
    %c20 = arith.constant 20 : index
    %61 = vector.load %arg15[%c0_38, %c20] : memref<64x36xf32, #tpu.memory_space<vmem>>, vector<64x2xf32>
    tpu.vector_store %arg15[%c0_38, %c20], %60 {strides = array<i32>} : memref<64x36xf32, #tpu.memory_space<vmem>>, vector<64x2xf32>,
    %62 = vector.extract_strided_slice %33 {offsets = [640, 0], sizes = [64, 2], strides = [1, 1]} : vector<1024x2xf32> to vector<64x2xf32>
    %c0_39 = arith.constant 0 : index
    %c22 = arith.constant 22 : index
    %63 = vector.load %arg15[%c0_39, %c22] : memref<64x36xf32, #tpu.memory_space<vmem>>, vector<64x2xf32>
    tpu.vector_store %arg15[%c0_39, %c22], %62 {strides = array<i32>} : memref<64x36xf32, #tpu.memory_space<vmem>>, vector<64x2xf32>,
    %64 = vector.extract_strided_slice %33 {offsets = [704, 0], sizes = [64, 2], strides = [1, 1]} : vector<1024x2xf32> to vector<64x2xf32>
    %c0_40 = arith.constant 0 : index
    %c24 = arith.constant 24 : index
    %65 = vector.load %arg15[%c0_40, %c24] : memref<64x36xf32, #tpu.memory_space<vmem>>, vector<64x2xf32>
    tpu.vector_store %arg15[%c0_40, %c24], %64 {strides = array<i32>} : memref<64x36xf32, #tpu.memory_space<vmem>>, vector<64x2xf32>,
    %66 = vector.extract_strided_slice %33 {offsets = [768, 0], sizes = [64, 2], strides = [1, 1]} : vector<1024x2xf32> to vector<64x2xf32>
    %c0_41 = arith.constant 0 : index
    %c26 = arith.constant 26 : index
    %67 = vector.load %arg15[%c0_41, %c26] : memref<64x36xf32, #tpu.memory_space<vmem>>, vector<64x2xf32>
    tpu.vector_store %arg15[%c0_41, %c26], %66 {strides = array<i32>} : memref<64x36xf32, #tpu.memory_space<vmem>>, vector<64x2xf32>,
    %68 = vector.extract_strided_slice %33 {offsets = [832, 0], sizes = [64, 2], strides = [1, 1]} : vector<1024x2xf32> to vector<64x2xf32>
    %c0_42 = arith.constant 0 : index
    %c28 = arith.constant 28 : index
    %69 = vector.load %arg15[%c0_42, %c28] : memref<64x36xf32, #tpu.memory_space<vmem>>, vector<64x2xf32>
    tpu.vector_store %arg15[%c0_42, %c28], %68 {strides = array<i32>} : memref<64x36xf32, #tpu.memory_space<vmem>>, vector<64x2xf32>,
    %70 = vector.extract_strided_slice %33 {offsets = [896, 0], sizes = [64, 2], strides = [1, 1]} : vector<1024x2xf32> to vector<64x2xf32>
    %c0_43 = arith.constant 0 : index
    %c30 = arith.constant 30 : index
    %71 = vector.load %arg15[%c0_43, %c30] : memref<64x36xf32, #tpu.memory_space<vmem>>, vector<64x2xf32>
    tpu.vector_store %arg15[%c0_43, %c30], %70 {strides = array<i32>} : memref<64x36xf32, #tpu.memory_space<vmem>>, vector<64x2xf32>,
    %72 = vector.extract_strided_slice %33 {offsets = [960, 0], sizes = [64, 2], strides = [1, 1]} : vector<1024x2xf32> to vector<64x2xf32>
    %c0_44 = arith.constant 0 : index
    %c32 = arith.constant 32 : index
    %73 = vector.load %arg15[%c0_44, %c32] : memref<64x36xf32, #tpu.memory_space<vmem>>, vector<64x2xf32>
    tpu.vector_store %arg15[%c0_44, %c32], %72 {strides = array<i32>} : memref<64x36xf32, #tpu.memory_space<vmem>>, vector<64x2xf32>,
    %c0_45 = arith.constant 0 : index
    %c0_46 = arith.constant 0 : index
    %74 = vector.load %arg15[%c0_45, %c0_46] : memref<64x36xf32, #tpu.memory_space<vmem>>, vector<64x32xf32>
    %c0_47 = arith.constant 0 : index
    %c2_48 = arith.constant 2 : index
    %75 = vector.load %arg15[%c0_47, %c2_48] : memref<64x36xf32, #tpu.memory_space<vmem>>, vector<64x32xf32>
    %c0_49 = arith.constant 0 : index
    %c4_50 = arith.constant 4 : index
    %76 = vector.load %arg15[%c0_49, %c4_50] : memref<64x36xf32, #tpu.memory_space<vmem>>, vector<64x32xf32>
    %77 = tpu.concatenate %74, %75, %76 in 0 : vector<64x32xf32>, vector<64x32xf32>, vector<64x32xf32> -> vector<192x32xf32>
    %c0_51 = arith.constant 0 : index
    %c0_52 = arith.constant 0 : index
    %78 = vector.load %arg8[%c0_51, %c0_52] : memref<8x192xf32, #tpu.memory_space<vmem>>, vector<8x192xf32>
    %cst_53 = arith.constant dense<0.000000e+00> : vector<8x32xf32>
    %79 = tpu.matmul %78, %77, %cst_53 {dimension_numbers = #tpu.dot_dimension_numbers<[1], [0], [0], [1], [0, 0, 1, 1], [], []>} : vector<8x192xf32>, vector<192x32xf32>, vector<8x32xf32> -> vector<8x32xf32>
    %c0_54 = arith.constant 0 : index
    %c0_55 = arith.constant 0 : index
    %80 = vector.load %arg9[%c0_54, %c0_55] : memref<8x1xf32, #tpu.memory_space<vmem>>, vector<8x1xf32>
    %81 = vector.broadcast %80 : vector<8x1xf32> to vector<8x32xf32>
    %82 = arith.addf %79, %81 : vector<8x32xf32>
    %83 = arith.negf %82 : vector<8x32xf32>
    %84 = math.exp %83 : vector<8x32xf32>
    %cst_56 = arith.constant 1.000000e+00 : f32
    %85 = vector.broadcast %cst_56 : f32 to vector<8x32xf32>
    %86 = arith.addf %85, %84 : vector<8x32xf32>
    %87 = arith.divf %85, %86 : vector<8x32xf32>
    %88 = arith.mulf %82, %87 : vector<8x32xf32>
    %c0_57 = arith.constant 0 : index
    %c2_58 = arith.constant 2 : index
    %89 = vector.load %arg16[%c0_57, %c2_58] : memref<8x36xf32, #tpu.memory_space<vmem>>, vector<8x32xf32>
    tpu.vector_store %arg16[%c0_57, %c2_58], %88 {strides = array<i32>} : memref<8x36xf32, #tpu.memory_space<vmem>>, vector<8x32xf32>,
    %c0_59 = arith.constant 0 : index
    %c0_60 = arith.constant 0 : index
    %90 = vector.load %arg16[%c0_59, %c0_60] : memref<8x36xf32, #tpu.memory_space<vmem>>, vector<8x32xf32>
    %c0_61 = arith.constant 0 : index
    %c2_62 = arith.constant 2 : index
    %91 = vector.load %arg16[%c0_61, %c2_62] : memref<8x36xf32, #tpu.memory_space<vmem>>, vector<8x32xf32>
    %c0_63 = arith.constant 0 : index
    %c4_64 = arith.constant 4 : index
    %92 = vector.load %arg16[%c0_63, %c4_64] : memref<8x36xf32, #tpu.memory_space<vmem>>, vector<8x32xf32>
    %93 = tpu.concatenate %90, %91, %92 in 0 : vector<8x32xf32>, vector<8x32xf32>, vector<8x32xf32> -> vector<24x32xf32>
    %c0_65 = arith.constant 0 : index
    %c0_66 = arith.constant 0 : index
    %94 = vector.load %arg10[%c0_65, %c0_66] : memref<8x24xf32, #tpu.memory_space<vmem>>, vector<8x24xf32>
    %cst_67 = arith.constant dense<0.000000e+00> : vector<8x32xf32>
    %95 = tpu.matmul %94, %93, %cst_67 {dimension_numbers = #tpu.dot_dimension_numbers<[1], [0], [0], [1], [0, 0, 1, 1], [], []>} : vector<8x24xf32>, vector<24x32xf32>, vector<8x32xf32> -> vector<8x32xf32>
    %c0_68 = arith.constant 0 : index
    %c0_69 = arith.constant 0 : index
    %96 = vector.load %arg11[%c0_68, %c0_69] : memref<8x1xf32, #tpu.memory_space<vmem>>, vector<8x1xf32>
    %97 = vector.broadcast %96 : vector<8x1xf32> to vector<8x32xf32>
    %98 = arith.addf %95, %97 : vector<8x32xf32>
    %99 = arith.negf %98 : vector<8x32xf32>
    %100 = math.exp %99 : vector<8x32xf32>
    %cst_70 = arith.constant 1.000000e+00 : f32
    %101 = vector.broadcast %cst_70 : f32 to vector<8x32xf32>
    %102 = arith.addf %101, %100 : vector<8x32xf32>
    %103 = arith.divf %101, %102 : vector<8x32xf32>
    %104 = arith.mulf %98, %103 : vector<8x32xf32>
    %c0_71 = arith.constant 0 : index
    %c2_72 = arith.constant 2 : index
    %105 = vector.load %arg16[%c0_71, %c2_72] : memref<8x36xf32, #tpu.memory_space<vmem>>, vector<8x32xf32>
    tpu.vector_store %arg16[%c0_71, %c2_72], %104 {strides = array<i32>} : memref<8x36xf32, #tpu.memory_space<vmem>>, vector<8x32xf32>,
    %c0_73 = arith.constant 0 : index
    %c0_74 = arith.constant 0 : index
    %106 = vector.load %arg16[%c0_73, %c0_74] : memref<8x36xf32, #tpu.memory_space<vmem>>, vector<8x32xf32>
    %c0_75 = arith.constant 0 : index
    %c2_76 = arith.constant 2 : index
    %107 = vector.load %arg16[%c0_75, %c2_76] : memref<8x36xf32, #tpu.memory_space<vmem>>, vector<8x32xf32>
    %c0_77 = arith.constant 0 : index
    %c4_78 = arith.constant 4 : index
    %108 = vector.load %arg16[%c0_77, %c4_78] : memref<8x36xf32, #tpu.memory_space<vmem>>, vector<8x32xf32>
    %109 = tpu.concatenate %106, %107, %108 in 0 : vector<8x32xf32>, vector<8x32xf32>, vector<8x32xf32> -> vector<24x32xf32>
    %c0_79 = arith.constant 0 : index
    %c0_80 = arith.constant 0 : index
    %110 = vector.load %arg12[%c0_79, %c0_80] : memref<8x24xf32, #tpu.memory_space<vmem>>, vector<8x24xf32>
    %cst_81 = arith.constant dense<0.000000e+00> : vector<8x32xf32>
    %111 = tpu.matmul %110, %109, %cst_81 {dimension_numbers = #tpu.dot_dimension_numbers<[1], [0], [0], [1], [0, 0, 1, 1], [], []>} : vector<8x24xf32>, vector<24x32xf32>, vector<8x32xf32> -> vector<8x32xf32>
    %c0_82 = arith.constant 0 : index
    %c0_83 = arith.constant 0 : index
    %112 = vector.load %arg13[%c0_82, %c0_83] : memref<8x1xf32, #tpu.memory_space<vmem>>, vector<8x1xf32>
    %113 = vector.broadcast %112 : vector<8x1xf32> to vector<8x32xf32>
    %114 = arith.addf %111, %113 : vector<8x32xf32>
    %115 = arith.negf %114 : vector<8x32xf32>
    %116 = math.exp %115 : vector<8x32xf32>
    %cst_84 = arith.constant 1.000000e+00 : f32
    %117 = vector.broadcast %cst_84 : f32 to vector<8x32xf32>
    %118 = arith.addf %117, %116 : vector<8x32xf32>
    %119 = arith.divf %117, %118 : vector<8x32xf32>
    %120 = arith.mulf %114, %119 : vector<8x32xf32>
    %c0_85 = arith.constant 0 : index
    %c0_86 = arith.constant 0 : index
    %121 = vector.load %arg14[%c0_85, %c0_86] : memref<8x32xf32, #tpu.memory_space<vmem>>, vector<8x32xf32>
    tpu.vector_store %arg14[%c0_85, %c0_86], %120 {strides = array<i32>} : memref<8x32xf32, #tpu.memory_space<vmem>>, vector<8x32xf32>,
    return
  }
  func.func @transform_0(%arg0: i32) -> (i32, i32) {
    %c0_i32 = arith.constant 0 : i32
    %c0_i32_0 = arith.constant 0 : i32
    return %c0_i32, %arg0 : i32, i32
  }
  func.func @transform_1(%arg0: i32) -> (i32, i32) {
    %c0_i32 = arith.constant 0 : i32
    %c0_i32_0 = arith.constant 0 : i32
    %c0_i32_1 = arith.constant 0 : i32
    return %c0_i32, %c0_i32_0 : i32, i32
  }
  func.func @transform_2(%arg0: i32) -> (i32, i32) {
    %c0_i32 = arith.constant 0 : i32
    %c0_i32_0 = arith.constant 0 : i32
    %c0_i32_1 = arith.constant 0 : i32
    return %c0_i32, %c0_i32_0 : i32, i32
  }
  func.func @transform_3(%arg0: i32) -> (i32, i32) {
    %c0_i32 = arith.constant 0 : i32
    %c0_i32_0 = arith.constant 0 : i32
    %c0_i32_1 = arith.constant 0 : i32
    return %c0_i32, %c0_i32_0 : i32, i32
  }
  func.func @transform_4(%arg0: i32) -> (i32, i32) {
    %c0_i32 = arith.constant 0 : i32
    %c0_i32_0 = arith.constant 0 : i32
    %c0_i32_1 = arith.constant 0 : i32
    return %c0_i32, %c0_i32_0 : i32, i32
  }
  func.func @transform_5(%arg0: i32) -> (i32, i32) {
    %c0_i32 = arith.constant 0 : i32
    %c0_i32_0 = arith.constant 0 : i32
    %c0_i32_1 = arith.constant 0 : i32
    return %c0_i32, %c0_i32_0 : i32, i32
  }
  func.func @transform_6(%arg0: i32) -> (i32, i32) {
    %c0_i32 = arith.constant 0 : i32
    %c0_i32_0 = arith.constant 0 : i32
    %c0_i32_1 = arith.constant 0 : i32
    return %c0_i32, %c0_i32_0 : i32, i32
  }
  func.func @transform_7(%arg0: i32) -> (i32, i32) {
    %c0_i32 = arith.constant 0 : i32
    %c0_i32_0 = arith.constant 0 : i32
    %c0_i32_1 = arith.constant 0 : i32
    return %c0_i32, %c0_i32_0 : i32, i32
  }
  func.func @transform_8(%arg0: i32) -> (i32, i32) {
    %c0_i32 = arith.constant 0 : i32
    %c0_i32_0 = arith.constant 0 : i32
    %c0_i32_1 = arith.constant 0 : i32
    return %c0_i32, %c0_i32_0 : i32, i32
  }
  func.func @transform_9(%arg0: i32) -> (i32, i32) {
    %c0_i32 = arith.constant 0 : i32
    %c0_i32_0 = arith.constant 0 : i32
    %c0_i32_1 = arith.constant 0 : i32
    return %c0_i32, %c0_i32_0 : i32, i32
  }
  func.func @transform_10(%arg0: i32) -> (i32, i32) {
    %c0_i32 = arith.constant 0 : i32
    %c0_i32_0 = arith.constant 0 : i32
    %c0_i32_1 = arith.constant 0 : i32
    return %c0_i32, %c0_i32_0 : i32, i32
  }
  func.func @transform_11(%arg0: i32) -> (i32, i32) {
    %c0_i32 = arith.constant 0 : i32
    %c0_i32_0 = arith.constant 0 : i32
    %c0_i32_1 = arith.constant 0 : i32
    return %c0_i32, %c0_i32_0 : i32, i32
  }
  func.func @transform_12(%arg0: i32) -> (i32, i32) {
    %c0_i32 = arith.constant 0 : i32
    %c0_i32_0 = arith.constant 0 : i32
    %c0_i32_1 = arith.constant 0 : i32
    return %c0_i32, %c0_i32_0 : i32, i32
  }
  func.func @transform_13(%arg0: i32) -> (i32, i32) {
    %c0_i32 = arith.constant 0 : i32
    %c0_i32_0 = arith.constant 0 : i32
    return %c0_i32, %arg0 : i32, i32
  }
}

</mosaic_0001>

<llo_original>
// kernel: tpu_custom_call.1
$region0: #{tpu_custom_call.1}
  #allocation0 [shape = 'u32[]', space=smem, size = 0x4, offset = 0x4, fixed_abs, tag = 'smem constant byte address 0x4 - core index']
  #allocation1 [shape = 'u32[72,128]{1,0:T(1,128)}', space=vmem, size = 0x9000, scoped, tag = 'internal scratch']
  #allocation2 [shape = 'f32[64,36]{1,0:T(8,128)}', space=vmem, size = 0x8000, scoped, tag = 'scratch operand']
  #allocation3 [shape = 'f32[8,36]{1,0:T(8,128)}', space=vmem, size = 0x1000, scoped, tag = 'scratch operand']
  %s0 = inlined_call_operand.vmem [shape: f32[128,2], index: 0, kind: input, shape index: {}]
  %s1 = inlined_call_operand.hbm [shape: f32[512,128], index: 1, kind: input, shape index: {}]
  %s2 = inlined_call_operand.vmem [shape: f32[512,1], index: 2, kind: input, shape index: {}]
  %s3 = inlined_call_operand.hbm [shape: f32[512,512], index: 3, kind: input, shape index: {}]
  %s4 = inlined_call_operand.vmem [shape: f32[512,1], index: 4, kind: input, shape index: {}]
  %s5 = inlined_call_operand.hbm [shape: f32[1024,512], index: 5, kind: input, shape index: {}]
  %s6 = inlined_call_operand.vmem [shape: f32[1024,1], index: 6, kind: input, shape index: {}]
  %s7 = inlined_call_operand.hbm [shape: f32[8,192], index: 7, kind: input, shape index: {}]
  %s8 = inlined_call_operand.vmem [shape: f32[8,1], index: 8, kind: input, shape index: {}]
  %s9 = inlined_call_operand.hbm [shape: f32[8,24], index: 9, kind: input, shape index: {}]
  %s10 = inlined_call_operand.vmem [shape: f32[8,1], index: 10, kind: input, shape index: {}]
  %s11 = inlined_call_operand.hbm [shape: f32[8,24], index: 11, kind: input, shape index: {}]
  %s12 = inlined_call_operand.vmem [shape: f32[8,1], index: 12, kind: input, shape index: {}]
  %s13 = inlined_call_operand.hbm [shape: f32[8,32], index: 13, kind: output, shape index: {}]
  %s14 = sld [smem:[#allocation0]]
  $region86: #{tpu_custom_call.1} parent=0
    _
  %s16 = ssub.s32 1, %s14
  %s17 = scalar_select 0, %s16, %s14
  $region1: #{tpu_custom_call.1} parent=0
    #allocation4 [shape = 'u8[262144]{0}', space=vmem, size = 0x40000, scoped, tag = 'input window, operand 1, single buffered']
    #allocation5 [shape = 's32[1]{0}', space=sflag, size = 0x4, scoped, tag = 'scoped memory for tpu_custom_call.1']
    #allocation6 [shape = 's32[1]{0}', space=sflag, size = 0x4, scoped, tag = 'scoped memory for tpu_custom_call.1']
    #allocation7 [shape = 'u8[1048576]{0}', space=vmem, size = 0x100000, scoped, tag = 'input window, operand 3, single buffered']
    #allocation8 [shape = 's32[1]{0}', space=sflag, size = 0x4, scoped, tag = 'scoped memory for tpu_custom_call.1']
    #allocation9 [shape = 'u8[2097152]{0}', space=vmem, size = 0x200000, scoped, tag = 'input window, operand 5, single buffered']
    #allocation10 [shape = 'u8[8192]{0}', space=vmem, size = 0x2000, scoped, tag = 'input window, operand 7, single buffered']
    #allocation11 [shape = 's32[1]{0}', space=sflag, size = 0x4, scoped, tag = 'scoped memory for tpu_custom_call.1']
    #allocation12 [shape = 'u8[4096]{0}', space=vmem, size = 0x1000, scoped, tag = 'input window, operand 9, single buffered']
    #allocation13 [shape = 'u8[4096]{0}', space=vmem, size = 0x1000, scoped, tag = 'input window, operand 11, single buffered']
    #allocation14 [shape = 's32[1]{0}', space=sflag, size = 0x4, scoped, tag = 'scoped memory for tpu_custom_call.1']
    #allocation15 [shape = 'u8[4096]{0}', space=vmem, size = 0x1000, scoped, tag = 'output window, operand 0, single buffered']
    %18 = vsyncpa [#allocation5], 0
    %19 = vsyncpa [#allocation8], 0
    %20 = vsyncpa [#allocation11], 0
    %21 = vsyncpa [#allocation14], 0
    %22 = vsyncpa [#allocation6], 0
    // Predicated region
    $region2: #{tpu_custom_call.1} parent=1 // pred_check
      _
    $region3: #{tpu_custom_call.1} parent=1 // pred_check_branch
      %24 = sbr.rel (0) target = $region5
    $region4: #{tpu_custom_call.1} parent=1 // pred_region
      _
    $region5: #{tpu_custom_call.1} parent=1 // pred_fallthru
      _
    // Predicated region
    $region6: #{tpu_custom_call.1} parent=1 // pred_check
      _
    $region7: #{tpu_custom_call.1} parent=1 // pred_check_branch
      %26 = sbr.rel (0) target = $region9
    $region8: #{tpu_custom_call.1} parent=1 // pred_region
      %28 = vsyncadd [#allocation5], 0
      %s29 = sshll.u32 %s1, 4
      %s30 = int_to_ptr.hbm [resolvable:$true] %s29
      %s31 = sshll.u32 [#allocation4], 4
      %s32 = int_to_ptr.vmem [resolvable:$true] %s31
      %37 = dma.hbm_to_vmem [thread:$0]  %s30, 8192, %s32, [#allocation5], 128, 128, 8
    $region9: #{tpu_custom_call.1} parent=1 // pred_fallthru
      _
    // Predicated region
    $region10: #{tpu_custom_call.1} parent=1 // pred_check
      _
    $region11: #{tpu_custom_call.1} parent=1 // pred_check_branch
      %39 = sbr.rel (0) target = $region13
    $region12: #{tpu_custom_call.1} parent=1 // pred_region
      _
    $region13: #{tpu_custom_call.1} parent=1 // pred_fallthru
      _
    // Predicated region
    $region14: #{tpu_custom_call.1} parent=1 // pred_check
      _
    $region15: #{tpu_custom_call.1} parent=1 // pred_check_branch
      %41 = sbr.rel (0) target = $region17
    $region16: #{tpu_custom_call.1} parent=1 // pred_region
      %43 = vsyncadd [#allocation8], 0
      %s44 = sshll.u32 %s3, 4
      %s45 = int_to_ptr.hbm [resolvable:$true] %s44
      %s46 = sshll.u32 [#allocation7], 4
      %s47 = int_to_ptr.vmem [resolvable:$true] %s46
      %52 = dma.hbm_to_vmem [thread:$0]  %s45, 32768, %s47, [#allocation8], 512, 512, 32
    $region17: #{tpu_custom_call.1} parent=1 // pred_fallthru
      _
    // Predicated region
    $region18: #{tpu_custom_call.1} parent=1 // pred_check
      _
    $region19: #{tpu_custom_call.1} parent=1 // pred_check_branch
      %54 = sbr.rel (0) target = $region21
    $region20: #{tpu_custom_call.1} parent=1 // pred_region
      _
    $region21: #{tpu_custom_call.1} parent=1 // pred_fallthru
      _
    // Predicated region
    $region22: #{tpu_custom_call.1} parent=1 // pred_check
      _
    $region23: #{tpu_custom_call.1} parent=1 // pred_check_branch
      %56 = sbr.rel (0) target = $region25
    $region24: #{tpu_custom_call.1} parent=1 // pred_region
      %58 = vsyncadd [#allocation8], 0
      %s59 = sshll.u32 %s5, 4
      %s60 = int_to_ptr.hbm [resolvable:$true] %s59
      %s61 = sshll.u32 [#allocation9], 4
      %s62 = int_to_ptr.vmem [resolvable:$true] %s61
      %67 = dma.hbm_to_vmem [thread:$0]  %s60, 65536, %s62, [#allocation8], 512, 512, 32
    $region25: #{tpu_custom_call.1} parent=1 // pred_fallthru
      _
    // Predicated region
    $region26: #{tpu_custom_call.1} parent=1 // pred_check
      _
    $region27: #{tpu_custom_call.1} parent=1 // pred_check_branch
      %69 = sbr.rel (0) target = $region29
    $region28: #{tpu_custom_call.1} parent=1 // pred_region
      _
    $region29: #{tpu_custom_call.1} parent=1 // pred_fallthru
      _
    // Predicated region
    $region30: #{tpu_custom_call.1} parent=1 // pred_check
      _
    $region31: #{tpu_custom_call.1} parent=1 // pred_check_branch
      %71 = sbr.rel (0) target = $region33
    $region32: #{tpu_custom_call.1} parent=1 // pred_region
      %73 = vsyncadd [#allocation11], 0
      %s75 = sshll.u32 %s7, 4
      %s76 = int_to_ptr.hbm [resolvable:$true] %s75
      %s77 = sshll.u32 [#allocation10], 4
      %s78 = int_to_ptr.vmem [resolvable:$true] %s77
      %80 = dma.hbm_to_vmem [thread:$0]  %s76, 256, %s78, [#allocation11]
    $region33: #{tpu_custom_call.1} parent=1 // pred_fallthru
      _
    // Predicated region
    $region34: #{tpu_custom_call.1} parent=1 // pred_check
      _
    $region35: #{tpu_custom_call.1} parent=1 // pred_check_branch
      %82 = sbr.rel (0) target = $region37
    $region36: #{tpu_custom_call.1} parent=1 // pred_region
      _
    $region37: #{tpu_custom_call.1} parent=1 // pred_fallthru
      _
    // Predicated region
    $region38: #{tpu_custom_call.1} parent=1 // pred_check
      _
    $region39: #{tpu_custom_call.1} parent=1 // pred_check_branch
      %84 = sbr.rel (0) target = $region41
    $region40: #{tpu_custom_call.1} parent=1 // pred_region
      %86 = vsyncadd [#allocation11], 0
      %s88 = sshll.u32 %s9, 4
      %s89 = int_to_ptr.hbm [resolvable:$true] %s88
      %s90 = sshll.u32 [#allocation12], 4
      %s91 = int_to_ptr.vmem [resolvable:$true] %s90
      %93 = dma.hbm_to_vmem [thread:$0]  %s89, 128, %s91, [#allocation11]
    $region41: #{tpu_custom_call.1} parent=1 // pred_fallthru
      _
    // Predicated region
    $region42: #{tpu_custom_call.1} parent=1 // pred_check
      _
    $region43: #{tpu_custom_call.1} parent=1 // pred_check_branch
      %95 = sbr.rel (0) target = $region45
    $region44: #{tpu_custom_call.1} parent=1 // pred_region
      _
    $region45: #{tpu_custom_call.1} parent=1 // pred_fallthru
      _
    // Predicated region
    $region46: #{tpu_custom_call.1} parent=1 // pred_check
      _
    $region47: #{tpu_custom_call.1} parent=1 // pred_check_branch
      %97 = sbr.rel (0) target = $region49
    $region48: #{tpu_custom_call.1} parent=1 // pred_region
      %99 = vsyncadd [#allocation14], 0
      %s101 = sshll.u32 %s11, 4
      %s102 = int_to_ptr.hbm [resolvable:$true] %s101
      %s103 = sshll.u32 [#allocation13], 4
      %s104 = int_to_ptr.vmem [resolvable:$true] %s103
      %106 = dma.hbm_to_vmem [thread:$0]  %s102, 128, %s104, [#allocation14]
    $region49: #{tpu_custom_call.1} parent=1 // pred_fallthru
      _
    // Predicated region
    $region50: #{tpu_custom_call.1} parent=1 // pred_check
      _
    $region51: #{tpu_custom_call.1} parent=1 // pred_check_branch
      %108 = sbr.rel (0) target = $region53
    $region52: #{tpu_custom_call.1} parent=1 // pred_region
      _
    $region53: #{tpu_custom_call.1} parent=1 // pred_fallthru
      _
    // Predicated region
    $region54: #{tpu_custom_call.1} parent=1 // pred_check
      _
    $region55: #{tpu_custom_call.1} parent=1 // pred_check_branch
      %110 = sbr.rel (0) target = $region57
    $region56: #{tpu_custom_call.1} parent=1 // pred_region
      %112 = dma.done [#allocation5], 8192
    $region57: #{tpu_custom_call.1} parent=1 // pred_fallthru
      _
    // Predicated region
    $region58: #{tpu_custom_call.1} parent=1 // pred_check
      _
    $region59: #{tpu_custom_call.1} parent=1 // pred_check_branch
      %114 = sbr.rel (0) target = $region61
    $region60: #{tpu_custom_call.1} parent=1 // pred_region
      %116 = dma.done [#allocation8], 32768
    $region61: #{tpu_custom_call.1} parent=1 // pred_fallthru
      _
    // Predicated region
    $region62: #{tpu_custom_call.1} parent=1 // pred_check
      _
    $region63: #{tpu_custom_call.1} parent=1 // pred_check_branch
      %118 = sbr.rel (0) target = $region65
    $region64: #{tpu_custom_call.1} parent=1 // pred_region
      %120 = dma.done [#allocation8], 65536
    $region65: #{tpu_custom_call.1} parent=1 // pred_fallthru
      _
    // Predicated region
    $region66: #{tpu_custom_call.1} parent=1 // pred_check
      _
    $region67: #{tpu_custom_call.1} parent=1 // pred_check_branch
      %122 = sbr.rel (0) target = $region69
    $region68: #{tpu_custom_call.1} parent=1 // pred_region
      %124 = dma.done [#allocation11], 256
    $region69: #{tpu_custom_call.1} parent=1 // pred_fallthru
      _
    // Predicated region
    $region70: #{tpu_custom_call.1} parent=1 // pred_check
      _
    $region71: #{tpu_custom_call.1} parent=1 // pred_check_branch
      %126 = sbr.rel (0) target = $region73
    $region72: #{tpu_custom_call.1} parent=1 // pred_region
      %128 = dma.done [#allocation11], 128
    $region73: #{tpu_custom_call.1} parent=1 // pred_fallthru
      _
    // Predicated region
    $region74: #{tpu_custom_call.1} parent=1 // pred_check
      _
    $region75: #{tpu_custom_call.1} parent=1 // pred_check_branch
      %130 = sbr.rel (0) target = $region77
    $region76: #{tpu_custom_call.1} parent=1 // pred_region
      %132 = dma.done [#allocation14], 128
    $region77: #{tpu_custom_call.1} parent=1 // pred_fallthru
      _
    %v133 = vld [vmem:[#allocation4] sm:$0xff]
    %v134 = vld [vmem:[#allocation4 + $0x8] sm:$0xff]
    %v135 = vld [vmem:[#allocation4 + $0x10] sm:$0xff]
    %v136 = vld [vmem:[#allocation4 + $0x18] sm:$0xff]
    %v137 = vld [vmem:[#allocation4 + $0x20] sm:$0xff]
    %v138 = vld [vmem:[#allocation4 + $0x28] sm:$0xff]
    %v139 = vld [vmem:[#allocation4 + $0x30] sm:$0xff]
    %v140 = vld [vmem:[#allocation4 + $0x38] sm:$0xff]
    %v141 = vld [vmem:[#allocation4 + $0x40] sm:$0xff]
    %v142 = vld [vmem:[#allocation4 + $0x48] sm:$0xff]
    %v143 = vld [vmem:[#allocation4 + $0x50] sm:$0xff]
    %v144 = vld [vmem:[#allocation4 + $0x58] sm:$0xff]
    %v145 = vld [vmem:[#allocation4 + $0x60] sm:$0xff]
    %v146 = vld [vmem:[#allocation4 + $0x68] sm:$0xff]
    %v147 = vld [vmem:[#allocation4 + $0x70] sm:$0xff]
    %v148 = vld [vmem:[#allocation4 + $0x78] sm:$0xff]
    %v149 = vld [vmem:[#allocation4 + $0x80] sm:$0xff]
    %v150 = vld [vmem:[#allocation4 + $0x88] sm:$0xff]
    %v151 = vld [vmem:[#allocation4 + $0x90] sm:$0xff]
    %v152 = vld [vmem:[#allocation4 + $0x98] sm:$0xff]
    %v153 = vld [vmem:[#allocation4 + $0xa0] sm:$0xff]
    %v154 = vld [vmem:[#allocation4 + $0xa8] sm:$0xff]
    %v155 = vld [vmem:[#allocation4 + $0xb0] sm:$0xff]
    %v156 = vld [vmem:[#allocation4 + $0xb8] sm:$0xff]
    %v157 = vld [vmem:[#allocation4 + $0xc0] sm:$0xff]
    %v158 = vld [vmem:[#allocation4 + $0xc8] sm:$0xff]
    %v159 = vld [vmem:[#allocation4 + $0xd0] sm:$0xff]
    %v160 = vld [vmem:[#allocation4 + $0xd8] sm:$0xff]
    %v161 = vld [vmem:[#allocation4 + $0xe0] sm:$0xff]
    %v162 = vld [vmem:[#allocation4 + $0xe8] sm:$0xff]
    %v163 = vld [vmem:[#allocation4 + $0xf0] sm:$0xff]
    %v164 = vld [vmem:[#allocation4 + $0xf8] sm:$0xff]
    %v165 = vld [vmem:[#allocation4 + $0x100] sm:$0xff]
    %v166 = vld [vmem:[#allocation4 + $0x108] sm:$0xff]
    %v167 = vld [vmem:[#allocation4 + $0x110] sm:$0xff]
    %v168 = vld [vmem:[#allocation4 + $0x118] sm:$0xff]
    %v169 = vld [vmem:[#allocation4 + $0x120] sm:$0xff]
    %v170 = vld [vmem:[#allocation4 + $0x128] sm:$0xff]
    %v171 = vld [vmem:[#allocation4 + $0x130] sm:$0xff]
    %v172 = vld [vmem:[#allocation4 + $0x138] sm:$0xff]
    %v173 = vld [vmem:[#allocation4 + $0x140] sm:$0xff]
    %v174 = vld [vmem:[#allocation4 + $0x148] sm:$0xff]
    %v175 = vld [vmem:[#allocation4 + $0x150] sm:$0xff]
    %v176 = vld [vmem:[#allocation4 + $0x158] sm:$0xff]
    %v177 = vld [vmem:[#allocation4 + $0x160] sm:$0xff]
    %v178 = vld [vmem:[#allocation4 + $0x168] sm:$0xff]
    %v179 = vld [vmem:[#allocation4 + $0x170] sm:$0xff]
    %v180 = vld [vmem:[#allocation4 + $0x178] sm:$0xff]
    %v181 = vld [vmem:[#allocation4 + $0x180] sm:$0xff]
    %v182 = vld [vmem:[#allocation4 + $0x188] sm:$0xff]
    %v183 = vld [vmem:[#allocation4 + $0x190] sm:$0xff]
    %v184 = vld [vmem:[#allocation4 + $0x198] sm:$0xff]
    %v185 = vld [vmem:[#allocation4 + $0x1a0] sm:$0xff]
    %v186 = vld [vmem:[#allocation4 + $0x1a8] sm:$0xff]
    %v187 = vld [vmem:[#allocation4 + $0x1b0] sm:$0xff]
    %v188 = vld [vmem:[#allocation4 + $0x1b8] sm:$0xff]
    %v189 = vld [vmem:[#allocation4 + $0x1c0] sm:$0xff]
    %v190 = vld [vmem:[#allocation4 + $0x1c8] sm:$0xff]
    %v191 = vld [vmem:[#allocation4 + $0x1d0] sm:$0xff]
    %v192 = vld [vmem:[#allocation4 + $0x1d8] sm:$0xff]
    %v193 = vld [vmem:[#allocation4 + $0x1e0] sm:$0xff]
    %v194 = vld [vmem:[#allocation4 + $0x1e8] sm:$0xff]
    %v195 = vld [vmem:[#allocation4 + $0x1f0] sm:$0xff]
    %v196 = vld [vmem:[#allocation4 + $0x1f8] sm:$0xff]
    %v197 = vld [vmem:[%s0] sm:$0xff]
    %v198 = vld [vmem:[%s0 + $0x8] sm:$0xff]
    %v199 = vld [vmem:[%s0 + $0x10] sm:$0xff]
    %v200 = vld [vmem:[%s0 + $0x18] sm:$0xff]
    %v201 = vld [vmem:[%s0 + $0x20] sm:$0xff]
    %v202 = vld [vmem:[%s0 + $0x28] sm:$0xff]
    %v203 = vld [vmem:[%s0 + $0x30] sm:$0xff]
    %v204 = vld [vmem:[%s0 + $0x38] sm:$0xff]
    %v205 = vld [vmem:[%s0 + $0x40] sm:$0xff]
    %v206 = vld [vmem:[%s0 + $0x48] sm:$0xff]
    %v207 = vld [vmem:[%s0 + $0x50] sm:$0xff]
    %v208 = vld [vmem:[%s0 + $0x58] sm:$0xff]
    %v209 = vld [vmem:[%s0 + $0x60] sm:$0xff]
    %v210 = vld [vmem:[%s0 + $0x68] sm:$0xff]
    %v211 = vld [vmem:[%s0 + $0x70] sm:$0xff]
    %v212 = vld [vmem:[%s0 + $0x78] sm:$0xff]
    %v213 = vld [vmem:[%s2] sm:$0xff]
    %v214 = vld [vmem:[%s2 + $0x8] sm:$0xff]
    %v215 = vld [vmem:[%s2 + $0x10] sm:$0xff]
    %v216 = vld [vmem:[%s2 + $0x18] sm:$0xff]
    %v217 = vld [vmem:[%s2 + $0x20] sm:$0xff]
    %v218 = vld [vmem:[%s2 + $0x28] sm:$0xff]
    %v219 = vld [vmem:[%s2 + $0x30] sm:$0xff]
    %v220 = vld [vmem:[%s2 + $0x38] sm:$0xff]
    %v221 = vld [vmem:[%s2 + $0x40] sm:$0xff]
    %v222 = vld [vmem:[%s2 + $0x48] sm:$0xff]
    %v223 = vld [vmem:[%s2 + $0x50] sm:$0xff]
    %v224 = vld [vmem:[%s2 + $0x58] sm:$0xff]
    %v225 = vld [vmem:[%s2 + $0x60] sm:$0xff]
    %v226 = vld [vmem:[%s2 + $0x68] sm:$0xff]
    %v227 = vld [vmem:[%s2 + $0x70] sm:$0xff]
    %v228 = vld [vmem:[%s2 + $0x78] sm:$0xff]
    %v229 = vld [vmem:[%s2 + $0x80] sm:$0xff]
    %v230 = vld [vmem:[%s2 + $0x88] sm:$0xff]
    %v231 = vld [vmem:[%s2 + $0x90] sm:$0xff]
    %v232 = vld [vmem:[%s2 + $0x98] sm:$0xff]
    %v233 = vld [vmem:[%s2 + $0xa0] sm:$0xff]
    %v234 = vld [vmem:[%s2 + $0xa8] sm:$0xff]
    %v235 = vld [vmem:[%s2 + $0xb0] sm:$0xff]
    %v236 = vld [vmem:[%s2 + $0xb8] sm:$0xff]
    %v237 = vld [vmem:[%s2 + $0xc0] sm:$0xff]
    %v238 = vld [vmem:[%s2 + $0xc8] sm:$0xff]
    %v239 = vld [vmem:[%s2 + $0xd0] sm:$0xff]
    %v240 = vld [vmem:[%s2 + $0xd8] sm:$0xff]
    %v241 = vld [vmem:[%s2 + $0xe0] sm:$0xff]
    %v242 = vld [vmem:[%s2 + $0xe8] sm:$0xff]
    %v243 = vld [vmem:[%s2 + $0xf0] sm:$0xff]
    %v244 = vld [vmem:[%s2 + $0xf8] sm:$0xff]
    %v245 = vld [vmem:[%s2 + $0x100] sm:$0xff]
    %v246 = vld [vmem:[%s2 + $0x108] sm:$0xff]
    %v247 = vld [vmem:[%s2 + $0x110] sm:$0xff]
    %v248 = vld [vmem:[%s2 + $0x118] sm:$0xff]
    %v249 = vld [vmem:[%s2 + $0x120] sm:$0xff]
    %v250 = vld [vmem:[%s2 + $0x128] sm:$0xff]
    %v251 = vld [vmem:[%s2 + $0x130] sm:$0xff]
    %v252 = vld [vmem:[%s2 + $0x138] sm:$0xff]
    %v253 = vld [vmem:[%s2 + $0x140] sm:$0xff]
    %v254 = vld [vmem:[%s2 + $0x148] sm:$0xff]
    %v255 = vld [vmem:[%s2 + $0x150] sm:$0xff]
    %v256 = vld [vmem:[%s2 + $0x158] sm:$0xff]
    %v257 = vld [vmem:[%s2 + $0x160] sm:$0xff]
    %v258 = vld [vmem:[%s2 + $0x168] sm:$0xff]
    %v259 = vld [vmem:[%s2 + $0x170] sm:$0xff]
    %v260 = vld [vmem:[%s2 + $0x178] sm:$0xff]
    %v261 = vld [vmem:[%s2 + $0x180] sm:$0xff]
    %v262 = vld [vmem:[%s2 + $0x188] sm:$0xff]
    %v263 = vld [vmem:[%s2 + $0x190] sm:$0xff]
    %v264 = vld [vmem:[%s2 + $0x198] sm:$0xff]
    %v265 = vld [vmem:[%s2 + $0x1a0] sm:$0xff]
    %v266 = vld [vmem:[%s2 + $0x1a8] sm:$0xff]
    %v267 = vld [vmem:[%s2 + $0x1b0] sm:$0xff]
    %v268 = vld [vmem:[%s2 + $0x1b8] sm:$0xff]
    %v269 = vld [vmem:[%s2 + $0x1c0] sm:$0xff]
    %v270 = vld [vmem:[%s2 + $0x1c8] sm:$0xff]
    %v271 = vld [vmem:[%s2 + $0x1d0] sm:$0xff]
    %v272 = vld [vmem:[%s2 + $0x1d8] sm:$0xff]
    %v273 = vld [vmem:[%s2 + $0x1e0] sm:$0xff]
    %v274 = vld [vmem:[%s2 + $0x1e8] sm:$0xff]
    %v275 = vld [vmem:[%s2 + $0x1f0] sm:$0xff]
    %v276 = vld [vmem:[%s2 + $0x1f8] sm:$0xff]
    %278 = vset.pattern.permute.xlu0 0
    %279 = vperm.xlu0 %278, %v213
    %v280 = vpop.permute.xlu0 %279
    %283 = vset.pattern.permute.xlu0 0
    %284 = vperm.xlu0 %283, %v214
    %v285 = vpop.permute.xlu0 %284
    %288 = vset.pattern.permute.xlu0 0
    %289 = vperm.xlu0 %288, %v215
    %v290 = vpop.permute.xlu0 %289
    %293 = vset.pattern.permute.xlu0 0
    %294 = vperm.xlu0 %293, %v216
    %v295 = vpop.permute.xlu0 %294
    %298 = vset.pattern.permute.xlu0 0
    %299 = vperm.xlu0 %298, %v217
    %v300 = vpop.permute.xlu0 %299
    %303 = vset.pattern.permute.xlu0 0
    %304 = vperm.xlu0 %303, %v218
    %v305 = vpop.permute.xlu0 %304
    %308 = vset.pattern.permute.xlu0 0
    %309 = vperm.xlu0 %308, %v219
    %v310 = vpop.permute.xlu0 %309
    %313 = vset.pattern.permute.xlu0 0
    %314 = vperm.xlu0 %313, %v220
    %v315 = vpop.permute.xlu0 %314
    %318 = vset.pattern.permute.xlu0 0
    %319 = vperm.xlu0 %318, %v221
    %v320 = vpop.permute.xlu0 %319
    %323 = vset.pattern.permute.xlu0 0
    %324 = vperm.xlu0 %323, %v222
    %v325 = vpop.permute.xlu0 %324
    %328 = vset.pattern.permute.xlu0 0
    %329 = vperm.xlu0 %328, %v223
    %v330 = vpop.permute.xlu0 %329
    %333 = vset.pattern.permute.xlu0 0
    %334 = vperm.xlu0 %333, %v224
    %v335 = vpop.permute.xlu0 %334
    %338 = vset.pattern.permute.xlu0 0
    %339 = vperm.xlu0 %338, %v225
    %v340 = vpop.permute.xlu0 %339
    %343 = vset.pattern.permute.xlu0 0
    %344 = vperm.xlu0 %343, %v226
    %v345 = vpop.permute.xlu0 %344
    %348 = vset.pattern.permute.xlu0 0
    %349 = vperm.xlu0 %348, %v227
    %v350 = vpop.permute.xlu0 %349
    %353 = vset.pattern.permute.xlu0 0
    %354 = vperm.xlu0 %353, %v228
    %v355 = vpop.permute.xlu0 %354
    %358 = vset.pattern.permute.xlu0 0
    %359 = vperm.xlu0 %358, %v229
    %v360 = vpop.permute.xlu0 %359
    %363 = vset.pattern.permute.xlu0 0
    %364 = vperm.xlu0 %363, %v230
    %v365 = vpop.permute.xlu0 %364
    %368 = vset.pattern.permute.xlu0 0
    %369 = vperm.xlu0 %368, %v231
    %v370 = vpop.permute.xlu0 %369
    %373 = vset.pattern.permute.xlu0 0
    %374 = vperm.xlu0 %373, %v232
    %v375 = vpop.permute.xlu0 %374
    %378 = vset.pattern.permute.xlu0 0
    %379 = vperm.xlu0 %378, %v233
    %v380 = vpop.permute.xlu0 %379
    %383 = vset.pattern.permute.xlu0 0
    %384 = vperm.xlu0 %383, %v234
    %v385 = vpop.permute.xlu0 %384
    %388 = vset.pattern.permute.xlu0 0
    %389 = vperm.xlu0 %388, %v235
    %v390 = vpop.permute.xlu0 %389
    %393 = vset.pattern.permute.xlu0 0
    %394 = vperm.xlu0 %393, %v236
    %v395 = vpop.permute.xlu0 %394
    %398 = vset.pattern.permute.xlu0 0
    %399 = vperm.xlu0 %398, %v237
    %v400 = vpop.permute.xlu0 %399
    %403 = vset.pattern.permute.xlu0 0
    %404 = vperm.xlu0 %403, %v238
    %v405 = vpop.permute.xlu0 %404
    %408 = vset.pattern.permute.xlu0 0
    %409 = vperm.xlu0 %408, %v239
    %v410 = vpop.permute.xlu0 %409
    %413 = vset.pattern.permute.xlu0 0
    %414 = vperm.xlu0 %413, %v240
    %v415 = vpop.permute.xlu0 %414
    %418 = vset.pattern.permute.xlu0 0
    %419 = vperm.xlu0 %418, %v241
    %v420 = vpop.permute.xlu0 %419
    %423 = vset.pattern.permute.xlu0 0
    %424 = vperm.xlu0 %423, %v242
    %v425 = vpop.permute.xlu0 %424
    %428 = vset.pattern.permute.xlu0 0
    %429 = vperm.xlu0 %428, %v243
    %v430 = vpop.permute.xlu0 %429
    %433 = vset.pattern.permute.xlu0 0
    %434 = vperm.xlu0 %433, %v244
    %v435 = vpop.permute.xlu0 %434
    %438 = vset.pattern.permute.xlu0 0
    %439 = vperm.xlu0 %438, %v245
    %v440 = vpop.permute.xlu0 %439
    %443 = vset.pattern.permute.xlu0 0
    %444 = vperm.xlu0 %443, %v246
    %v445 = vpop.permute.xlu0 %444
    %448 = vset.pattern.permute.xlu0 0
    %449 = vperm.xlu0 %448, %v247
    %v450 = vpop.permute.xlu0 %449
    %453 = vset.pattern.permute.xlu0 0
    %454 = vperm.xlu0 %453, %v248
    %v455 = vpop.permute.xlu0 %454
    %458 = vset.pattern.permute.xlu0 0
    %459 = vperm.xlu0 %458, %v249
    %v460 = vpop.permute.xlu0 %459
    %463 = vset.pattern.permute.xlu0 0
    %464 = vperm.xlu0 %463, %v250
    %v465 = vpop.permute.xlu0 %464
    %468 = vset.pattern.permute.xlu0 0
    %469 = vperm.xlu0 %468, %v251
    %v470 = vpop.permute.xlu0 %469
    %473 = vset.pattern.permute.xlu0 0
    %474 = vperm.xlu0 %473, %v252
    %v475 = vpop.permute.xlu0 %474
    %478 = vset.pattern.permute.xlu0 0
    %479 = vperm.xlu0 %478, %v253
    %v480 = vpop.permute.xlu0 %479
    %483 = vset.pattern.permute.xlu0 0
    %484 = vperm.xlu0 %483, %v254
    %v485 = vpop.permute.xlu0 %484
    %488 = vset.pattern.permute.xlu0 0
    %489 = vperm.xlu0 %488, %v255
    %v490 = vpop.permute.xlu0 %489
    %493 = vset.pattern.permute.xlu0 0
    %494 = vperm.xlu0 %493, %v256
    %v495 = vpop.permute.xlu0 %494
    %498 = vset.pattern.permute.xlu0 0
    %499 = vperm.xlu0 %498, %v257
    %v500 = vpop.permute.xlu0 %499
    %503 = vset.pattern.permute.xlu0 0
    %504 = vperm.xlu0 %503, %v258
    %v505 = vpop.permute.xlu0 %504
    %508 = vset.pattern.permute.xlu0 0
    %509 = vperm.xlu0 %508, %v259
    %v510 = vpop.permute.xlu0 %509
    %513 = vset.pattern.permute.xlu0 0
    %514 = vperm.xlu0 %513, %v260
    %v515 = vpop.permute.xlu0 %514
    %518 = vset.pattern.permute.xlu0 0
    %519 = vperm.xlu0 %518, %v261
    %v520 = vpop.permute.xlu0 %519
    %523 = vset.pattern.permute.xlu0 0
    %524 = vperm.xlu0 %523, %v262
    %v525 = vpop.permute.xlu0 %524
    %528 = vset.pattern.permute.xlu0 0
    %529 = vperm.xlu0 %528, %v263
    %v530 = vpop.permute.xlu0 %529
    %533 = vset.pattern.permute.xlu0 0
    %534 = vperm.xlu0 %533, %v264
    %v535 = vpop.permute.xlu0 %534
    %538 = vset.pattern.permute.xlu0 0
    %539 = vperm.xlu0 %538, %v265
    %v540 = vpop.permute.xlu0 %539
    %543 = vset.pattern.permute.xlu0 0
    %544 = vperm.xlu0 %543, %v266
    %v545 = vpop.permute.xlu0 %544
    %548 = vset.pattern.permute.xlu0 0
    %549 = vperm.xlu0 %548, %v267
    %v550 = vpop.permute.xlu0 %549
    %553 = vset.pattern.permute.xlu0 0
    %554 = vperm.xlu0 %553, %v268
    %v555 = vpop.permute.xlu0 %554
    %558 = vset.pattern.permute.xlu0 0
    %559 = vperm.xlu0 %558, %v269
    %v560 = vpop.permute.xlu0 %559
    %563 = vset.pattern.permute.xlu0 0
    %564 = vperm.xlu0 %563, %v270
    %v565 = vpop.permute.xlu0 %564
    %568 = vset.pattern.permute.xlu0 0
    %569 = vperm.xlu0 %568, %v271
    %v570 = vpop.permute.xlu0 %569
    %573 = vset.pattern.permute.xlu0 0
    %574 = vperm.xlu0 %573, %v272
    %v575 = vpop.permute.xlu0 %574
    %578 = vset.pattern.permute.xlu0 0
    %579 = vperm.xlu0 %578, %v273
    %v580 = vpop.permute.xlu0 %579
    %583 = vset.pattern.permute.xlu0 0
    %584 = vperm.xlu0 %583, %v274
    %v585 = vpop.permute.xlu0 %584
    %588 = vset.pattern.permute.xlu0 0
    %589 = vperm.xlu0 %588, %v275
    %v590 = vpop.permute.xlu0 %589
    %593 = vset.pattern.permute.xlu0 0
    %594 = vperm.xlu0 %593, %v276
    %v595 = vpop.permute.xlu0 %594
    %597 = vmatpush.msra.mxu0 %v212
    %598 = vmatpush.msra.mxu0 %v211
    %599 = vmatpush.msra.mxu0 %v210
    %600 = vmatpush.msra.mxu0 %v209
    %601 = vmatpush.msra.mxu0 %v208
    %602 = vmatpush.msra.mxu0 %v207
    %603 = vmatpush.msra.mxu0 %v206
    %604 = vmatpush.msra.mxu0 %v205
    %605 = vmatpush.msra.mxu0 %v204
    %606 = vmatpush.msra.mxu0 %v203
    %607 = vmatpush.msra.mxu0 %v202
    %608 = vmatpush.msra.mxu0 %v201
    %609 = vmatpush.msra.mxu0 %v200
    %610 = vmatpush.msra.mxu0 %v199
    %611 = vmatpush.msra.mxu0 %v198
    %612 = vmatpush.msra.mxu0 %v197
    %613 = vmatmul.f32.gmra.mxu0 %v133
    %v614 = vpop.f32.mrf.mxu0
    %v615 = vadd.f32 %v280, %v614
    %616 = vmatmul.f32.gmra.mxu0 %v134
    %v617 = vpop.f32.mrf.mxu0
    %v618 = vadd.f32 %v285, %v617
    %619 = vmatmul.f32.gmra.mxu0 %v135
    %v620 = vpop.f32.mrf.mxu0
    %v621 = vadd.f32 %v290, %v620
    %622 = vmatmul.f32.gmra.mxu0 %v136
    %v623 = vpop.f32.mrf.mxu0
    %v624 = vadd.f32 %v295, %v623
    %625 = vmatmul.f32.gmra.mxu0 %v137
    %v626 = vpop.f32.mrf.mxu0
    %v627 = vadd.f32 %v300, %v626
    %628 = vmatmul.f32.gmra.mxu0 %v138
    %v629 = vpop.f32.mrf.mxu0
    %v630 = vadd.f32 %v305, %v629
    %631 = vmatmul.f32.gmra.mxu0 %v139
    %v632 = vpop.f32.mrf.mxu0
    %v633 = vadd.f32 %v310, %v632
    %634 = vmatmul.f32.gmra.mxu0 %v140
    %v635 = vpop.f32.mrf.mxu0
    %v636 = vadd.f32 %v315, %v635
    %637 = vmatmul.f32.gmra.mxu0 %v141
    %v638 = vpop.f32.mrf.mxu0
    %v639 = vadd.f32 %v320, %v638
    %640 = vmatmul.f32.gmra.mxu0 %v142
    %v641 = vpop.f32.mrf.mxu0
    %v642 = vadd.f32 %v325, %v641
    %643 = vmatmul.f32.gmra.mxu0 %v143
    %v644 = vpop.f32.mrf.mxu0
    %v645 = vadd.f32 %v330, %v644
    %646 = vmatmul.f32.gmra.mxu0 %v144
    %v647 = vpop.f32.mrf.mxu0
    %v648 = vadd.f32 %v335, %v647
    %649 = vmatmul.f32.gmra.mxu0 %v145
    %v650 = vpop.f32.mrf.mxu0
    %v651 = vadd.f32 %v340, %v650
    %652 = vmatmul.f32.gmra.mxu0 %v146
    %v653 = vpop.f32.mrf.mxu0
    %v654 = vadd.f32 %v345, %v653
    %655 = vmatmul.f32.gmra.mxu0 %v147
    %v656 = vpop.f32.mrf.mxu0
    %v657 = vadd.f32 %v350, %v656
    %658 = vmatmul.f32.gmra.mxu0 %v148
    %v659 = vpop.f32.mrf.mxu0
    %v660 = vadd.f32 %v355, %v659
    %661 = vmatmul.f32.gmra.mxu0 %v149
    %v662 = vpop.f32.mrf.mxu0
    %v663 = vadd.f32 %v360, %v662
    %664 = vmatmul.f32.gmra.mxu0 %v150
    %v665 = vpop.f32.mrf.mxu0
    %v666 = vadd.f32 %v365, %v665
    %667 = vmatmul.f32.gmra.mxu0 %v151
    %v668 = vpop.f32.mrf.mxu0
    %v669 = vadd.f32 %v370, %v668
    %670 = vmatmul.f32.gmra.mxu0 %v152
    %v671 = vpop.f32.mrf.mxu0
    %v672 = vadd.f32 %v375, %v671
    %673 = vmatmul.f32.gmra.mxu0 %v153
    %v674 = vpop.f32.mrf.mxu0
    %v675 = vadd.f32 %v380, %v674
    %676 = vmatmul.f32.gmra.mxu0 %v154
    %v677 = vpop.f32.mrf.mxu0
    %v678 = vadd.f32 %v385, %v677
    %679 = vmatmul.f32.gmra.mxu0 %v155
    %v680 = vpop.f32.mrf.mxu0
    %v681 = vadd.f32 %v390, %v680
    %682 = vmatmul.f32.gmra.mxu0 %v156
    %v683 = vpop.f32.mrf.mxu0
    %v684 = vadd.f32 %v395, %v683
    %685 = vmatmul.f32.gmra.mxu0 %v157
    %v686 = vpop.f32.mrf.mxu0
    %v687 = vadd.f32 %v400, %v686
    %688 = vmatmul.f32.gmra.mxu0 %v158
    %v689 = vpop.f32.mrf.mxu0
    %v690 = vadd.f32 %v405, %v689
    %691 = vmatmul.f32.gmra.mxu0 %v159
    %v692 = vpop.f32.mrf.mxu0
    %v693 = vadd.f32 %v410, %v692
    %694 = vmatmul.f32.gmra.mxu0 %v160
    %v695 = vpop.f32.mrf.mxu0
    %v696 = vadd.f32 %v415, %v695
    %697 = vmatmul.f32.gmra.mxu0 %v161
    %v698 = vpop.f32.mrf.mxu0
    %v699 = vadd.f32 %v420, %v698
    %700 = vmatmul.f32.gmra.mxu0 %v162
    %v701 = vpop.f32.mrf.mxu0
    %v702 = vadd.f32 %v425, %v701
    %703 = vmatmul.f32.gmra.mxu0 %v163
    %v704 = vpop.f32.mrf.mxu0
    %v705 = vadd.f32 %v430, %v704
    %706 = vmatmul.f32.gmra.mxu0 %v164
    %v707 = vpop.f32.mrf.mxu0
    %v708 = vadd.f32 %v435, %v707
    %709 = vmatmul.f32.gmra.mxu0 %v165
    %v710 = vpop.f32.mrf.mxu0
    %v711 = vadd.f32 %v440, %v710
    %712 = vmatmul.f32.gmra.mxu0 %v166
    %v713 = vpop.f32.mrf.mxu0
    %v714 = vadd.f32 %v445, %v713
    %715 = vmatmul.f32.gmra.mxu0 %v167
    %v716 = vpop.f32.mrf.mxu0
    %v717 = vadd.f32 %v450, %v716
    %718 = vmatmul.f32.gmra.mxu0 %v168
    %v719 = vpop.f32.mrf.mxu0
    %v720 = vadd.f32 %v455, %v719
    %721 = vmatmul.f32.gmra.mxu0 %v169
    %v722 = vpop.f32.mrf.mxu0
    %v723 = vadd.f32 %v460, %v722
    %724 = vmatmul.f32.gmra.mxu0 %v170
    %v725 = vpop.f32.mrf.mxu0
    %v726 = vadd.f32 %v465, %v725
    %727 = vmatmul.f32.gmra.mxu0 %v171
    %v728 = vpop.f32.mrf.mxu0
    %v729 = vadd.f32 %v470, %v728
    %730 = vmatmul.f32.gmra.mxu0 %v172
    %v731 = vpop.f32.mrf.mxu0
    %v732 = vadd.f32 %v475, %v731
    %733 = vmatmul.f32.gmra.mxu0 %v173
    %v734 = vpop.f32.mrf.mxu0
    %v735 = vadd.f32 %v480, %v734
    %736 = vmatmul.f32.gmra.mxu0 %v174
    %v737 = vpop.f32.mrf.mxu0
    %v738 = vadd.f32 %v485, %v737
    %739 = vmatmul.f32.gmra.mxu0 %v175
    %v740 = vpop.f32.mrf.mxu0
    %v741 = vadd.f32 %v490, %v740
    %742 = vmatmul.f32.gmra.mxu0 %v176
    %v743 = vpop.f32.mrf.mxu0
    %v744 = vadd.f32 %v495, %v743
    %745 = vmatmul.f32.gmra.mxu0 %v177
    %v746 = vpop.f32.mrf.mxu0
    %v747 = vadd.f32 %v500, %v746
    %748 = vmatmul.f32.gmra.mxu0 %v178
    %v749 = vpop.f32.mrf.mxu0
    %v750 = vadd.f32 %v505, %v749
    %751 = vmatmul.f32.gmra.mxu0 %v179
    %v752 = vpop.f32.mrf.mxu0
    %v753 = vadd.f32 %v510, %v752
    %754 = vmatmul.f32.gmra.mxu0 %v180
    %v755 = vpop.f32.mrf.mxu0
    %v756 = vadd.f32 %v515, %v755
    %757 = vmatmul.f32.gmra.mxu0 %v181
    %v758 = vpop.f32.mrf.mxu0
    %v759 = vadd.f32 %v520, %v758
    %760 = vmatmul.f32.gmra.mxu0 %v182
    %v761 = vpop.f32.mrf.mxu0
    %v762 = vadd.f32 %v525, %v761
    %763 = vmatmul.f32.gmra.mxu0 %v183
    %v764 = vpop.f32.mrf.mxu0
    %v765 = vadd.f32 %v530, %v764
    %766 = vmatmul.f32.gmra.mxu0 %v184
    %v767 = vpop.f32.mrf.mxu0
    %v768 = vadd.f32 %v535, %v767
    %769 = vmatmul.f32.gmra.mxu0 %v185
    %v770 = vpop.f32.mrf.mxu0
    %v771 = vadd.f32 %v540, %v770
    %772 = vmatmul.f32.gmra.mxu0 %v186
    %v773 = vpop.f32.mrf.mxu0
    %v774 = vadd.f32 %v545, %v773
    %775 = vmatmul.f32.gmra.mxu0 %v187
    %v776 = vpop.f32.mrf.mxu0
    %v777 = vadd.f32 %v550, %v776
    %778 = vmatmul.f32.gmra.mxu0 %v188
    %v779 = vpop.f32.mrf.mxu0
    %v780 = vadd.f32 %v555, %v779
    %781 = vmatmul.f32.gmra.mxu0 %v189
    %v782 = vpop.f32.mrf.mxu0
    %v783 = vadd.f32 %v560, %v782
    %784 = vmatmul.f32.gmra.mxu0 %v190
    %v785 = vpop.f32.mrf.mxu0
    %v786 = vadd.f32 %v565, %v785
    %787 = vmatmul.f32.gmra.mxu0 %v191
    %v788 = vpop.f32.mrf.mxu0
    %v789 = vadd.f32 %v570, %v788
    %790 = vmatmul.f32.gmra.mxu0 %v192
    %v791 = vpop.f32.mrf.mxu0
    %v792 = vadd.f32 %v575, %v791
    %793 = vmatmul.f32.gmra.mxu0 %v193
    %v794 = vpop.f32.mrf.mxu0
    %v795 = vadd.f32 %v580, %v794
    %796 = vmatmul.f32.gmra.mxu0 %v194
    %v797 = vpop.f32.mrf.mxu0
    %v798 = vadd.f32 %v585, %v797
    %799 = vmatmul.f32.gmra.mxu0 %v195
    %v800 = vpop.f32.mrf.mxu0
    %v801 = vadd.f32 %v590, %v800
    %802 = vmatmul.f32.gmra.mxu0 %v196
    %v803 = vpop.f32.mrf.mxu0
    %v804 = vadd.f32 %v595, %v803
    %805 = vdwg.mxu0
    %v806 = vxor.u32 %v615, 2147483648
    %v807 = vxor.u32 %v618, 2147483648
    %v808 = vxor.u32 %v621, 2147483648
    %v809 = vxor.u32 %v624, 2147483648
    %v810 = vxor.u32 %v627, 2147483648
    %v811 = vxor.u32 %v630, 2147483648
    %v812 = vxor.u32 %v633, 2147483648
    %v813 = vxor.u32 %v636, 2147483648
    %v814 = vxor.u32 %v639, 2147483648
    %v815 = vxor.u32 %v642, 2147483648
    %v816 = vxor.u32 %v645, 2147483648
    %v817 = vxor.u32 %v648, 2147483648
    %v818 = vxor.u32 %v651, 2147483648
    %v819 = vxor.u32 %v654, 2147483648
    %v820 = vxor.u32 %v657, 2147483648
    %v821 = vxor.u32 %v660, 2147483648
    %v822 = vxor.u32 %v663, 2147483648
    %v823 = vxor.u32 %v666, 2147483648
    %v824 = vxor.u32 %v669, 2147483648
    %v825 = vxor.u32 %v672, 2147483648
    %v826 = vxor.u32 %v675, 2147483648
    %v827 = vxor.u32 %v678, 2147483648
    %v828 = vxor.u32 %v681, 2147483648
    %v829 = vxor.u32 %v684, 2147483648
    %v830 = vxor.u32 %v687, 2147483648
    %v831 = vxor.u32 %v690, 2147483648
    %v832 = vxor.u32 %v693, 2147483648
    %v833 = vxor.u32 %v696, 2147483648
    %v834 = vxor.u32 %v699, 2147483648
    %v835 = vxor.u32 %v702, 2147483648
    %v836 = vxor.u32 %v705, 2147483648
    %v837 = vxor.u32 %v708, 2147483648
    %v838 = vxor.u32 %v711, 2147483648
    %v839 = vxor.u32 %v714, 2147483648
    %v840 = vxor.u32 %v717, 2147483648
    %v841 = vxor.u32 %v720, 2147483648
    %v842 = vxor.u32 %v723, 2147483648
    %v843 = vxor.u32 %v726, 2147483648
    %v844 = vxor.u32 %v729, 2147483648
    %v845 = vxor.u32 %v732, 2147483648
    %v846 = vxor.u32 %v735, 2147483648
    %v847 = vxor.u32 %v738, 2147483648
    %v848 = vxor.u32 %v741, 2147483648
    %v849 = vxor.u32 %v744, 2147483648
    %v850 = vxor.u32 %v747, 2147483648
    %v851 = vxor.u32 %v750, 2147483648
    %v852 = vxor.u32 %v753, 2147483648
    %v853 = vxor.u32 %v756, 2147483648
    %v854 = vxor.u32 %v759, 2147483648
    %v855 = vxor.u32 %v762, 2147483648
    %v856 = vxor.u32 %v765, 2147483648
    %v857 = vxor.u32 %v768, 2147483648
    %v858 = vxor.u32 %v771, 2147483648
    %v859 = vxor.u32 %v774, 2147483648
    %v860 = vxor.u32 %v777, 2147483648
    %v861 = vxor.u32 %v780, 2147483648
    %v862 = vxor.u32 %v783, 2147483648
    %v863 = vxor.u32 %v786, 2147483648
    %v864 = vxor.u32 %v789, 2147483648
    %v865 = vxor.u32 %v792, 2147483648
    %v866 = vxor.u32 %v795, 2147483648
    %v867 = vxor.u32 %v798, 2147483648
    %v868 = vxor.u32 %v801, 2147483648
    %v869 = vxor.u32 %v804, 2147483648
    %v870 = vmul.f32 %v806, 1.442695
    %v871 = vpow.pop %v870
    %v872 = vmul.f32 %v807, 1.442695
    %v873 = vpow.pop %v872
    %v874 = vmul.f32 %v808, 1.442695
    %v875 = vpow.pop %v874
    %v876 = vmul.f32 %v809, 1.442695
    %v877 = vpow.pop %v876
    %v878 = vmul.f32 %v810, 1.442695
    %v879 = vpow.pop %v878
    %v880 = vmul.f32 %v811, 1.442695
    %v881 = vpow.pop %v880
    %v882 = vmul.f32 %v812, 1.442695
    %v883 = vpow.pop %v882
    %v884 = vmul.f32 %v813, 1.442695
    %v885 = vpow.pop %v884
    %v886 = vmul.f32 %v814, 1.442695
    %v887 = vpow.pop %v886
    %v888 = vmul.f32 %v815, 1.442695
    %v889 = vpow.pop %v888
    %v890 = vmul.f32 %v816, 1.442695
    %v891 = vpow.pop %v890
    %v892 = vmul.f32 %v817, 1.442695
    %v893 = vpow.pop %v892
    %v894 = vmul.f32 %v818, 1.442695
    %v895 = vpow.pop %v894
    %v896 = vmul.f32 %v819, 1.442695
    %v897 = vpow.pop %v896
    %v898 = vmul.f32 %v820, 1.442695
    %v899 = vpow.pop %v898
    %v900 = vmul.f32 %v821, 1.442695
    %v901 = vpow.pop %v900
    %v902 = vmul.f32 %v822, 1.442695
    %v903 = vpow.pop %v902
    %v904 = vmul.f32 %v823, 1.442695
    %v905 = vpow.pop %v904
    %v906 = vmul.f32 %v824, 1.442695
    %v907 = vpow.pop %v906
    %v908 = vmul.f32 %v825, 1.442695
    %v909 = vpow.pop %v908
    %v910 = vmul.f32 %v826, 1.442695
    %v911 = vpow.pop %v910
    %v912 = vmul.f32 %v827, 1.442695
    %v913 = vpow.pop %v912
    %v914 = vmul.f32 %v828, 1.442695
    %v915 = vpow.pop %v914
    %v916 = vmul.f32 %v829, 1.442695
    %v917 = vpow.pop %v916
    %v918 = vmul.f32 %v830, 1.442695
    %v919 = vpow.pop %v918
    %v920 = vmul.f32 %v831, 1.442695
    %v921 = vpow.pop %v920
    %v922 = vmul.f32 %v832, 1.442695
    %v923 = vpow.pop %v922
    %v924 = vmul.f32 %v833, 1.442695
    %v925 = vpow.pop %v924
    %v926 = vmul.f32 %v834, 1.442695
    %v927 = vpow.pop %v926
    %v928 = vmul.f32 %v835, 1.442695
    %v929 = vpow.pop %v928
    %v930 = vmul.f32 %v836, 1.442695
    %v931 = vpow.pop %v930
    %v932 = vmul.f32 %v837, 1.442695
    %v933 = vpow.pop %v932
    %v934 = vmul.f32 %v838, 1.442695
    %v935 = vpow.pop %v934
    %v936 = vmul.f32 %v839, 1.442695
    %v937 = vpow.pop %v936
    %v938 = vmul.f32 %v840, 1.442695
    %v939 = vpow.pop %v938
    %v940 = vmul.f32 %v841, 1.442695
    %v941 = vpow.pop %v940
    %v942 = vmul.f32 %v842, 1.442695
    %v943 = vpow.pop %v942
    %v944 = vmul.f32 %v843, 1.442695
    %v945 = vpow.pop %v944
    %v946 = vmul.f32 %v844, 1.442695
    %v947 = vpow.pop %v946
    %v948 = vmul.f32 %v845, 1.442695
    %v949 = vpow.pop %v948
    %v950 = vmul.f32 %v846, 1.442695
    %v951 = vpow.pop %v950
    %v952 = vmul.f32 %v847, 1.442695
    %v953 = vpow.pop %v952
    %v954 = vmul.f32 %v848, 1.442695
    %v955 = vpow.pop %v954
    %v956 = vmul.f32 %v849, 1.442695
    %v957 = vpow.pop %v956
    %v958 = vmul.f32 %v850, 1.442695
    %v959 = vpow.pop %v958
    %v960 = vmul.f32 %v851, 1.442695
    %v961 = vpow.pop %v960
    %v962 = vmul.f32 %v852, 1.442695
    %v963 = vpow.pop %v962
    %v964 = vmul.f32 %v853, 1.442695
    %v965 = vpow.pop %v964
    %v966 = vmul.f32 %v854, 1.442695
    %v967 = vpow.pop %v966
    %v968 = vmul.f32 %v855, 1.442695
    %v969 = vpow.pop %v968
    %v970 = vmul.f32 %v856, 1.442695
    %v971 = vpow.pop %v970
    %v972 = vmul.f32 %v857, 1.442695
    %v973 = vpow.pop %v972
    %v974 = vmul.f32 %v858, 1.442695
    %v975 = vpow.pop %v974
    %v976 = vmul.f32 %v859, 1.442695
    %v977 = vpow.pop %v976
    %v978 = vmul.f32 %v860, 1.442695
    %v979 = vpow.pop %v978
    %v980 = vmul.f32 %v861, 1.442695
    %v981 = vpow.pop %v980
    %v982 = vmul.f32 %v862, 1.442695
    %v983 = vpow.pop %v982
    %v984 = vmul.f32 %v863, 1.442695
    %v985 = vpow.pop %v984
    %v986 = vmul.f32 %v864, 1.442695
    %v987 = vpow.pop %v986
    %v988 = vmul.f32 %v865, 1.442695
    %v989 = vpow.pop %v988
    %v990 = vmul.f32 %v866, 1.442695
    %v991 = vpow.pop %v990
    %v992 = vmul.f32 %v867, 1.442695
    %v993 = vpow.pop %v992
    %v994 = vmul.f32 %v868, 1.442695
    %v995 = vpow.pop %v994
    %v996 = vmul.f32 %v869, 1.442695
    %v997 = vpow.pop %v996
    %v998 = vadd.f32 %v871, 1.0
    %v999 = vadd.f32 %v873, 1.0
    %v1000 = vadd.f32 %v875, 1.0
    %v1001 = vadd.f32 %v877, 1.0
    %v1002 = vadd.f32 %v879, 1.0
    %v1003 = vadd.f32 %v881, 1.0
    %v1004 = vadd.f32 %v883, 1.0
    %v1005 = vadd.f32 %v885, 1.0
    %v1006 = vadd.f32 %v887, 1.0
    %v1007 = vadd.f32 %v889, 1.0
    %v1008 = vadd.f32 %v891, 1.0
    %v1009 = vadd.f32 %v893, 1.0
    %v1010 = vadd.f32 %v895, 1.0
    %v1011 = vadd.f32 %v897, 1.0
    %v1012 = vadd.f32 %v899, 1.0
    %v1013 = vadd.f32 %v901, 1.0
    %v1014 = vadd.f32 %v903, 1.0
    %v1015 = vadd.f32 %v905, 1.0
    %v1016 = vadd.f32 %v907, 1.0
    %v1017 = vadd.f32 %v909, 1.0
    %v1018 = vadd.f32 %v911, 1.0
    %v1019 = vadd.f32 %v913, 1.0
    %v1020 = vadd.f32 %v915, 1.0
    %v1021 = vadd.f32 %v917, 1.0
    %v1022 = vadd.f32 %v919, 1.0
    %v1023 = vadd.f32 %v921, 1.0
    %v1024 = vadd.f32 %v923, 1.0
    %v1025 = vadd.f32 %v925, 1.0
    %v1026 = vadd.f32 %v927, 1.0
    %v1027 = vadd.f32 %v929, 1.0
    %v1028 = vadd.f32 %v931, 1.0
    %v1029 = vadd.f32 %v933, 1.0
    %v1030 = vadd.f32 %v935, 1.0
    %v1031 = vadd.f32 %v937, 1.0
    %v1032 = vadd.f32 %v939, 1.0
    %v1033 = vadd.f32 %v941, 1.0
    %v1034 = vadd.f32 %v943, 1.0
    %v1035 = vadd.f32 %v945, 1.0
    %v1036 = vadd.f32 %v947, 1.0
    %v1037 = vadd.f32 %v949, 1.0
    %v1038 = vadd.f32 %v951, 1.0
    %v1039 = vadd.f32 %v953, 1.0
    %v1040 = vadd.f32 %v955, 1.0
    %v1041 = vadd.f32 %v957, 1.0
    %v1042 = vadd.f32 %v959, 1.0
    %v1043 = vadd.f32 %v961, 1.0
    %v1044 = vadd.f32 %v963, 1.0
    %v1045 = vadd.f32 %v965, 1.0
    %v1046 = vadd.f32 %v967, 1.0
    %v1047 = vadd.f32 %v969, 1.0
    %v1048 = vadd.f32 %v971, 1.0
    %v1049 = vadd.f32 %v973, 1.0
    %v1050 = vadd.f32 %v975, 1.0
    %v1051 = vadd.f32 %v977, 1.0
    %v1052 = vadd.f32 %v979, 1.0
    %v1053 = vadd.f32 %v981, 1.0
    %v1054 = vadd.f32 %v983, 1.0
    %v1055 = vadd.f32 %v985, 1.0
    %v1056 = vadd.f32 %v987, 1.0
    %v1057 = vadd.f32 %v989, 1.0
    %v1058 = vadd.f32 %v991, 1.0
    %v1059 = vadd.f32 %v993, 1.0
    %v1060 = vadd.f32 %v995, 1.0
    %v1061 = vadd.f32 %v997, 1.0
    %v1062 = vrcp.pop %v998
    %v1063 = vmul.f32 %v998, %v1062
    %v1064 = vsub.f32 1.0, %v1063
    %v1065 = vmul.f32 %v1062, %v1064
    %v1066 = vadd.f32 %v1062, %v1065
    %vm1067 = vweird.f32 %v998
    %vm1068 = vweird.f32 %v1062
    %vm1069 = vmor %vm1067, %vm1068
    %v1070 = vsel %vm1069, %v1062, %v1066
    %v1071 = vand.u32 2147483647, %v998
    %vm1072 = vcmp.eq.f32.partialorder %v1071, 8.507059e+37
    %v1073 = vand.u32 %v998, 2147483648
    %v1074 = vor.u32 1.1754944e-38, %v1073
    %v1075 = vsel %vm1072, %v1074, %v1070
    %v1076 = vmul.f32 1.0, %v1075
    %v1077 = vrcp.pop %v999
    %v1078 = vmul.f32 %v999, %v1077
    %v1079 = vsub.f32 1.0, %v1078
    %v1080 = vmul.f32 %v1077, %v1079
    %v1081 = vadd.f32 %v1077, %v1080
    %vm1082 = vweird.f32 %v999
    %vm1083 = vweird.f32 %v1077
    %vm1084 = vmor %vm1082, %vm1083
    %v1085 = vsel %vm1084, %v1077, %v1081
    %v1086 = vand.u32 2147483647, %v999
    %vm1087 = vcmp.eq.f32.partialorder %v1086, 8.507059e+37
    %v1088 = vand.u32 %v999, 2147483648
    %v1089 = vor.u32 1.1754944e-38, %v1088
    %v1090 = vsel %vm1087, %v1089, %v1085
    %v1091 = vmul.f32 1.0, %v1090
    %v1092 = vrcp.pop %v1000
    %v1093 = vmul.f32 %v1000, %v1092
    %v1094 = vsub.f32 1.0, %v1093
    %v1095 = vmul.f32 %v1092, %v1094
    %v1096 = vadd.f32 %v1092, %v1095
    %vm1097 = vweird.f32 %v1000
    %vm1098 = vweird.f32 %v1092
    %vm1099 = vmor %vm1097, %vm1098
    %v1100 = vsel %vm1099, %v1092, %v1096
    %v1101 = vand.u32 2147483647, %v1000
    %vm1102 = vcmp.eq.f32.partialorder %v1101, 8.507059e+37
    %v1103 = vand.u32 %v1000, 2147483648
    %v1104 = vor.u32 1.1754944e-38, %v1103
    %v1105 = vsel %vm1102, %v1104, %v1100
    %v1106 = vmul.f32 1.0, %v1105
    %v1107 = vrcp.pop %v1001
    %v1108 = vmul.f32 %v1001, %v1107
    %v1109 = vsub.f32 1.0, %v1108
    %v1110 = vmul.f32 %v1107, %v1109
    %v1111 = vadd.f32 %v1107, %v1110
    %vm1112 = vweird.f32 %v1001
    %vm1113 = vweird.f32 %v1107
    %vm1114 = vmor %vm1112, %vm1113
    %v1115 = vsel %vm1114, %v1107, %v1111
    %v1116 = vand.u32 2147483647, %v1001
    %vm1117 = vcmp.eq.f32.partialorder %v1116, 8.507059e+37
    %v1118 = vand.u32 %v1001, 2147483648
    %v1119 = vor.u32 1.1754944e-38, %v1118
    %v1120 = vsel %vm1117, %v1119, %v1115
    %v1121 = vmul.f32 1.0, %v1120
    %v1122 = vrcp.pop %v1002
    %v1123 = vmul.f32 %v1002, %v1122
    %v1124 = vsub.f32 1.0, %v1123
    %v1125 = vmul.f32 %v1122, %v1124
    %v1126 = vadd.f32 %v1122, %v1125
    %vm1127 = vweird.f32 %v1002
    %vm1128 = vweird.f32 %v1122
    %vm1129 = vmor %vm1127, %vm1128
    %v1130 = vsel %vm1129, %v1122, %v1126
    %v1131 = vand.u32 2147483647, %v1002
    %vm1132 = vcmp.eq.f32.partialorder %v1131, 8.507059e+37
    %v1133 = vand.u32 %v1002, 2147483648
    %v1134 = vor.u32 1.1754944e-38, %v1133
    %v1135 = vsel %vm1132, %v1134, %v1130
    %v1136 = vmul.f32 1.0, %v1135
    %v1137 = vrcp.pop %v1003
    %v1138 = vmul.f32 %v1003, %v1137
    %v1139 = vsub.f32 1.0, %v1138
    %v1140 = vmul.f32 %v1137, %v1139
    %v1141 = vadd.f32 %v1137, %v1140
    %vm1142 = vweird.f32 %v1003
    %vm1143 = vweird.f32 %v1137
    %vm1144 = vmor %vm1142, %vm1143
    %v1145 = vsel %vm1144, %v1137, %v1141
    %v1146 = vand.u32 2147483647, %v1003
    %vm1147 = vcmp.eq.f32.partialorder %v1146, 8.507059e+37
    %v1148 = vand.u32 %v1003, 2147483648
    %v1149 = vor.u32 1.1754944e-38, %v1148
    %v1150 = vsel %vm1147, %v1149, %v1145
    %v1151 = vmul.f32 1.0, %v1150
    %v1152 = vrcp.pop %v1004
    %v1153 = vmul.f32 %v1004, %v1152
    %v1154 = vsub.f32 1.0, %v1153
    %v1155 = vmul.f32 %v1152, %v1154
    %v1156 = vadd.f32 %v1152, %v1155
    %vm1157 = vweird.f32 %v1004
    %vm1158 = vweird.f32 %v1152
    %vm1159 = vmor %vm1157, %vm1158
    %v1160 = vsel %vm1159, %v1152, %v1156
    %v1161 = vand.u32 2147483647, %v1004
    %vm1162 = vcmp.eq.f32.partialorder %v1161, 8.507059e+37
    %v1163 = vand.u32 %v1004, 2147483648
    %v1164 = vor.u32 1.1754944e-38, %v1163
    %v1165 = vsel %vm1162, %v1164, %v1160
    %v1166 = vmul.f32 1.0, %v1165
    %v1167 = vrcp.pop %v1005
    %v1168 = vmul.f32 %v1005, %v1167
    %v1169 = vsub.f32 1.0, %v1168
    %v1170 = vmul.f32 %v1167, %v1169
    %v1171 = vadd.f32 %v1167, %v1170
    %vm1172 = vweird.f32 %v1005
    %vm1173 = vweird.f32 %v1167
    %vm1174 = vmor %vm1172, %vm1173
    %v1175 = vsel %vm1174, %v1167, %v1171
    %v1176 = vand.u32 2147483647, %v1005
    %vm1177 = vcmp.eq.f32.partialorder %v1176, 8.507059e+37
    %v1178 = vand.u32 %v1005, 2147483648
    %v1179 = vor.u32 1.1754944e-38, %v1178
    %v1180 = vsel %vm1177, %v1179, %v1175
    %v1181 = vmul.f32 1.0, %v1180
    %v1182 = vrcp.pop %v1006
    %v1183 = vmul.f32 %v1006, %v1182
    %v1184 = vsub.f32 1.0, %v1183
    %v1185 = vmul.f32 %v1182, %v1184
    %v1186 = vadd.f32 %v1182, %v1185
    %vm1187 = vweird.f32 %v1006
    %vm1188 = vweird.f32 %v1182
    %vm1189 = vmor %vm1187, %vm1188
    %v1190 = vsel %vm1189, %v1182, %v1186
    %v1191 = vand.u32 2147483647, %v1006
    %vm1192 = vcmp.eq.f32.partialorder %v1191, 8.507059e+37
    %v1193 = vand.u32 %v1006, 2147483648
    %v1194 = vor.u32 1.1754944e-38, %v1193
    %v1195 = vsel %vm1192, %v1194, %v1190
    %v1196 = vmul.f32 1.0, %v1195
    %v1197 = vrcp.pop %v1007
    %v1198 = vmul.f32 %v1007, %v1197
    %v1199 = vsub.f32 1.0, %v1198
    %v1200 = vmul.f32 %v1197, %v1199
    %v1201 = vadd.f32 %v1197, %v1200
    %vm1202 = vweird.f32 %v1007
    %vm1203 = vweird.f32 %v1197
    %vm1204 = vmor %vm1202, %vm1203
    %v1205 = vsel %vm1204, %v1197, %v1201
    %v1206 = vand.u32 2147483647, %v1007
    %vm1207 = vcmp.eq.f32.partialorder %v1206, 8.507059e+37
    %v1208 = vand.u32 %v1007, 2147483648
    %v1209 = vor.u32 1.1754944e-38, %v1208
    %v1210 = vsel %vm1207, %v1209, %v1205
    %v1211 = vmul.f32 1.0, %v1210
    %v1212 = vrcp.pop %v1008
    %v1213 = vmul.f32 %v1008, %v1212
    %v1214 = vsub.f32 1.0, %v1213
    %v1215 = vmul.f32 %v1212, %v1214
    %v1216 = vadd.f32 %v1212, %v1215
    %vm1217 = vweird.f32 %v1008
    %vm1218 = vweird.f32 %v1212
    %vm1219 = vmor %vm1217, %vm1218
    %v1220 = vsel %vm1219, %v1212, %v1216
    %v1221 = vand.u32 2147483647, %v1008
    %vm1222 = vcmp.eq.f32.partialorder %v1221, 8.507059e+37
    %v1223 = vand.u32 %v1008, 2147483648
    %v1224 = vor.u32 1.1754944e-38, %v1223
    %v1225 = vsel %vm1222, %v1224, %v1220
    %v1226 = vmul.f32 1.0, %v1225
    %v1227 = vrcp.pop %v1009
    %v1228 = vmul.f32 %v1009, %v1227
    %v1229 = vsub.f32 1.0, %v1228
    %v1230 = vmul.f32 %v1227, %v1229
    %v1231 = vadd.f32 %v1227, %v1230
    %vm1232 = vweird.f32 %v1009
    %vm1233 = vweird.f32 %v1227
    %vm1234 = vmor %vm1232, %vm1233
    %v1235 = vsel %vm1234, %v1227, %v1231
    %v1236 = vand.u32 2147483647, %v1009
    %vm1237 = vcmp.eq.f32.partialorder %v1236, 8.507059e+37
    %v1238 = vand.u32 %v1009, 2147483648
    %v1239 = vor.u32 1.1754944e-38, %v1238
    %v1240 = vsel %vm1237, %v1239, %v1235
    %v1241 = vmul.f32 1.0, %v1240
    %v1242 = vrcp.pop %v1010
    %v1243 = vmul.f32 %v1010, %v1242
    %v1244 = vsub.f32 1.0, %v1243
    %v1245 = vmul.f32 %v1242, %v1244
    %v1246 = vadd.f32 %v1242, %v1245
    %vm1247 = vweird.f32 %v1010
    %vm1248 = vweird.f32 %v1242
    %vm1249 = vmor %vm1247, %vm1248
    %v1250 = vsel %vm1249, %v1242, %v1246
    %v1251 = vand.u32 2147483647, %v1010
    %vm1252 = vcmp.eq.f32.partialorder %v1251, 8.507059e+37
    %v1253 = vand.u32 %v1010, 2147483648
    %v1254 = vor.u32 1.1754944e-38, %v1253
    %v1255 = vsel %vm1252, %v1254, %v1250
    %v1256 = vmul.f32 1.0, %v1255
    %v1257 = vrcp.pop %v1011
    %v1258 = vmul.f32 %v1011, %v1257
    %v1259 = vsub.f32 1.0, %v1258
    %v1260 = vmul.f32 %v1257, %v1259
    %v1261 = vadd.f32 %v1257, %v1260
    %vm1262 = vweird.f32 %v1011
    %vm1263 = vweird.f32 %v1257
    %vm1264 = vmor %vm1262, %vm1263
    %v1265 = vsel %vm1264, %v1257, %v1261
    %v1266 = vand.u32 2147483647, %v1011
    %vm1267 = vcmp.eq.f32.partialorder %v1266, 8.507059e+37
    %v1268 = vand.u32 %v1011, 2147483648
    %v1269 = vor.u32 1.1754944e-38, %v1268
    %v1270 = vsel %vm1267, %v1269, %v1265
    %v1271 = vmul.f32 1.0, %v1270
    %v1272 = vrcp.pop %v1012
    %v1273 = vmul.f32 %v1012, %v1272
    %v1274 = vsub.f32 1.0, %v1273
    %v1275 = vmul.f32 %v1272, %v1274
    %v1276 = vadd.f32 %v1272, %v1275
    %vm1277 = vweird.f32 %v1012
    %vm1278 = vweird.f32 %v1272
    %vm1279 = vmor %vm1277, %vm1278
    %v1280 = vsel %vm1279, %v1272, %v1276
    %v1281 = vand.u32 2147483647, %v1012
    %vm1282 = vcmp.eq.f32.partialorder %v1281, 8.507059e+37
    %v1283 = vand.u32 %v1012, 2147483648
    %v1284 = vor.u32 1.1754944e-38, %v1283
    %v1285 = vsel %vm1282, %v1284, %v1280
    %v1286 = vmul.f32 1.0, %v1285
    %v1287 = vrcp.pop %v1013
    %v1288 = vmul.f32 %v1013, %v1287
    %v1289 = vsub.f32 1.0, %v1288
    %v1290 = vmul.f32 %v1287, %v1289
    %v1291 = vadd.f32 %v1287, %v1290
    %vm1292 = vweird.f32 %v1013
    %vm1293 = vweird.f32 %v1287
    %vm1294 = vmor %vm1292, %vm1293
    %v1295 = vsel %vm1294, %v1287, %v1291
    %v1296 = vand.u32 2147483647, %v1013
    %vm1297 = vcmp.eq.f32.partialorder %v1296, 8.507059e+37
    %v1298 = vand.u32 %v1013, 2147483648
    %v1299 = vor.u32 1.1754944e-38, %v1298
    %v1300 = vsel %vm1297, %v1299, %v1295
    %v1301 = vmul.f32 1.0, %v1300
    %v1302 = vrcp.pop %v1014
    %v1303 = vmul.f32 %v1014, %v1302
    %v1304 = vsub.f32 1.0, %v1303
    %v1305 = vmul.f32 %v1302, %v1304
    %v1306 = vadd.f32 %v1302, %v1305
    %vm1307 = vweird.f32 %v1014
    %vm1308 = vweird.f32 %v1302
    %vm1309 = vmor %vm1307, %vm1308
    %v1310 = vsel %vm1309, %v1302, %v1306
    %v1311 = vand.u32 2147483647, %v1014
    %vm1312 = vcmp.eq.f32.partialorder %v1311, 8.507059e+37
    %v1313 = vand.u32 %v1014, 2147483648
    %v1314 = vor.u32 1.1754944e-38, %v1313
    %v1315 = vsel %vm1312, %v1314, %v1310
    %v1316 = vmul.f32 1.0, %v1315
    %v1317 = vrcp.pop %v1015
    %v1318 = vmul.f32 %v1015, %v1317
    %v1319 = vsub.f32 1.0, %v1318
    %v1320 = vmul.f32 %v1317, %v1319
    %v1321 = vadd.f32 %v1317, %v1320
    %vm1322 = vweird.f32 %v1015
    %vm1323 = vweird.f32 %v1317
    %vm1324 = vmor %vm1322, %vm1323
    %v1325 = vsel %vm1324, %v1317, %v1321
    %v1326 = vand.u32 2147483647, %v1015
    %vm1327 = vcmp.eq.f32.partialorder %v1326, 8.507059e+37
    %v1328 = vand.u32 %v1015, 2147483648
    %v1329 = vor.u32 1.1754944e-38, %v1328
    %v1330 = vsel %vm1327, %v1329, %v1325
    %v1331 = vmul.f32 1.0, %v1330
    %v1332 = vrcp.pop %v1016
    %v1333 = vmul.f32 %v1016, %v1332
    %v1334 = vsub.f32 1.0, %v1333
    %v1335 = vmul.f32 %v1332, %v1334
    %v1336 = vadd.f32 %v1332, %v1335
    %vm1337 = vweird.f32 %v1016
    %vm1338 = vweird.f32 %v1332
    %vm1339 = vmor %vm1337, %vm1338
    %v1340 = vsel %vm1339, %v1332, %v1336
    %v1341 = vand.u32 2147483647, %v1016
    %vm1342 = vcmp.eq.f32.partialorder %v1341, 8.507059e+37
    %v1343 = vand.u32 %v1016, 2147483648
    %v1344 = vor.u32 1.1754944e-38, %v1343
    %v1345 = vsel %vm1342, %v1344, %v1340
    %v1346 = vmul.f32 1.0, %v1345
    %v1347 = vrcp.pop %v1017
    %v1348 = vmul.f32 %v1017, %v1347
    %v1349 = vsub.f32 1.0, %v1348
    %v1350 = vmul.f32 %v1347, %v1349
    %v1351 = vadd.f32 %v1347, %v1350
    %vm1352 = vweird.f32 %v1017
    %vm1353 = vweird.f32 %v1347
    %vm1354 = vmor %vm1352, %vm1353
    %v1355 = vsel %vm1354, %v1347, %v1351
    %v1356 = vand.u32 2147483647, %v1017
    %vm1357 = vcmp.eq.f32.partialorder %v1356, 8.507059e+37
    %v1358 = vand.u32 %v1017, 2147483648
    %v1359 = vor.u32 1.1754944e-38, %v1358
    %v1360 = vsel %vm1357, %v1359, %v1355
    %v1361 = vmul.f32 1.0, %v1360
    %v1362 = vrcp.pop %v1018
    %v1363 = vmul.f32 %v1018, %v1362
    %v1364 = vsub.f32 1.0, %v1363
    %v1365 = vmul.f32 %v1362, %v1364
    %v1366 = vadd.f32 %v1362, %v1365
    %vm1367 = vweird.f32 %v1018
    %vm1368 = vweird.f32 %v1362
    %vm1369 = vmor %vm1367, %vm1368
    %v1370 = vsel %vm1369, %v1362, %v1366
    %v1371 = vand.u32 2147483647, %v1018
    %vm1372 = vcmp.eq.f32.partialorder %v1371, 8.507059e+37
    %v1373 = vand.u32 %v1018, 2147483648
    %v1374 = vor.u32 1.1754944e-38, %v1373
    %v1375 = vsel %vm1372, %v1374, %v1370
    %v1376 = vmul.f32 1.0, %v1375
    %v1377 = vrcp.pop %v1019
    %v1378 = vmul.f32 %v1019, %v1377
    %v1379 = vsub.f32 1.0, %v1378
    %v1380 = vmul.f32 %v1377, %v1379
    %v1381 = vadd.f32 %v1377, %v1380
    %vm1382 = vweird.f32 %v1019
    %vm1383 = vweird.f32 %v1377
    %vm1384 = vmor %vm1382, %vm1383
    %v1385 = vsel %vm1384, %v1377, %v1381
    %v1386 = vand.u32 2147483647, %v1019
    %vm1387 = vcmp.eq.f32.partialorder %v1386, 8.507059e+37
    %v1388 = vand.u32 %v1019, 2147483648
    %v1389 = vor.u32 1.1754944e-38, %v1388
    %v1390 = vsel %vm1387, %v1389, %v1385
    %v1391 = vmul.f32 1.0, %v1390
    %v1392 = vrcp.pop %v1020
    %v1393 = vmul.f32 %v1020, %v1392
    %v1394 = vsub.f32 1.0, %v1393
    %v1395 = vmul.f32 %v1392, %v1394
    %v1396 = vadd.f32 %v1392, %v1395
    %vm1397 = vweird.f32 %v1020
    %vm1398 = vweird.f32 %v1392
    %vm1399 = vmor %vm1397, %vm1398
    %v1400 = vsel %vm1399, %v1392, %v1396
    %v1401 = vand.u32 2147483647, %v1020
    %vm1402 = vcmp.eq.f32.partialorder %v1401, 8.507059e+37
    %v1403 = vand.u32 %v1020, 2147483648
    %v1404 = vor.u32 1.1754944e-38, %v1403
    %v1405 = vsel %vm1402, %v1404, %v1400
    %v1406 = vmul.f32 1.0, %v1405
    %v1407 = vrcp.pop %v1021
    %v1408 = vmul.f32 %v1021, %v1407
    %v1409 = vsub.f32 1.0, %v1408
    %v1410 = vmul.f32 %v1407, %v1409
    %v1411 = vadd.f32 %v1407, %v1410
    %vm1412 = vweird.f32 %v1021
    %vm1413 = vweird.f32 %v1407
    %vm1414 = vmor %vm1412, %vm1413
    %v1415 = vsel %vm1414, %v1407, %v1411
    %v1416 = vand.u32 2147483647, %v1021
    %vm1417 = vcmp.eq.f32.partialorder %v1416, 8.507059e+37
    %v1418 = vand.u32 %v1021, 2147483648
    %v1419 = vor.u32 1.1754944e-38, %v1418
    %v1420 = vsel %vm1417, %v1419, %v1415
    %v1421 = vmul.f32 1.0, %v1420
    %v1422 = vrcp.pop %v1022
    %v1423 = vmul.f32 %v1022, %v1422
    %v1424 = vsub.f32 1.0, %v1423
    %v1425 = vmul.f32 %v1422, %v1424
    %v1426 = vadd.f32 %v1422, %v1425
    %vm1427 = vweird.f32 %v1022
    %vm1428 = vweird.f32 %v1422
    %vm1429 = vmor %vm1427, %vm1428
    %v1430 = vsel %vm1429, %v1422, %v1426
    %v1431 = vand.u32 2147483647, %v1022
    %vm1432 = vcmp.eq.f32.partialorder %v1431, 8.507059e+37
    %v1433 = vand.u32 %v1022, 2147483648
    %v1434 = vor.u32 1.1754944e-38, %v1433
    %v1435 = vsel %vm1432, %v1434, %v1430
    %v1436 = vmul.f32 1.0, %v1435
    %v1437 = vrcp.pop %v1023
    %v1438 = vmul.f32 %v1023, %v1437
    %v1439 = vsub.f32 1.0, %v1438
    %v1440 = vmul.f32 %v1437, %v1439
    %v1441 = vadd.f32 %v1437, %v1440
    %vm1442 = vweird.f32 %v1023
    %vm1443 = vweird.f32 %v1437
    %vm1444 = vmor %vm1442, %vm1443
    %v1445 = vsel %vm1444, %v1437, %v1441
    %v1446 = vand.u32 2147483647, %v1023
    %vm1447 = vcmp.eq.f32.partialorder %v1446, 8.507059e+37
    %v1448 = vand.u32 %v1023, 2147483648
    %v1449 = vor.u32 1.1754944e-38, %v1448
    %v1450 = vsel %vm1447, %v1449, %v1445
    %v1451 = vmul.f32 1.0, %v1450
    %v1452 = vrcp.pop %v1024
    %v1453 = vmul.f32 %v1024, %v1452
    %v1454 = vsub.f32 1.0, %v1453
    %v1455 = vmul.f32 %v1452, %v1454
    %v1456 = vadd.f32 %v1452, %v1455
    %vm1457 = vweird.f32 %v1024
    %vm1458 = vweird.f32 %v1452
    %vm1459 = vmor %vm1457, %vm1458
    %v1460 = vsel %vm1459, %v1452, %v1456
    %v1461 = vand.u32 2147483647, %v1024
    %vm1462 = vcmp.eq.f32.partialorder %v1461, 8.507059e+37
    %v1463 = vand.u32 %v1024, 2147483648
    %v1464 = vor.u32 1.1754944e-38, %v1463
    %v1465 = vsel %vm1462, %v1464, %v1460
    %v1466 = vmul.f32 1.0, %v1465
    %v1467 = vrcp.pop %v1025
    %v1468 = vmul.f32 %v1025, %v1467
    %v1469 = vsub.f32 1.0, %v1468
    %v1470 = vmul.f32 %v1467, %v1469
    %v1471 = vadd.f32 %v1467, %v1470
    %vm1472 = vweird.f32 %v1025
    %vm1473 = vweird.f32 %v1467
    %vm1474 = vmor %vm1472, %vm1473
    %v1475 = vsel %vm1474, %v1467, %v1471
    %v1476 = vand.u32 2147483647, %v1025
    %vm1477 = vcmp.eq.f32.partialorder %v1476, 8.507059e+37
    %v1478 = vand.u32 %v1025, 2147483648
    %v1479 = vor.u32 1.1754944e-38, %v1478
    %v1480 = vsel %vm1477, %v1479, %v1475
    %v1481 = vmul.f32 1.0, %v1480
    %v1482 = vrcp.pop %v1026
    %v1483 = vmul.f32 %v1026, %v1482
    %v1484 = vsub.f32 1.0, %v1483
    %v1485 = vmul.f32 %v1482, %v1484
    %v1486 = vadd.f32 %v1482, %v1485
    %vm1487 = vweird.f32 %v1026
    %vm1488 = vweird.f32 %v1482
    %vm1489 = vmor %vm1487, %vm1488
    %v1490 = vsel %vm1489, %v1482, %v1486
    %v1491 = vand.u32 2147483647, %v1026
    %vm1492 = vcmp.eq.f32.partialorder %v1491, 8.507059e+37
    %v1493 = vand.u32 %v1026, 2147483648
    %v1494 = vor.u32 1.1754944e-38, %v1493
    %v1495 = vsel %vm1492, %v1494, %v1490
    %v1496 = vmul.f32 1.0, %v1495
    %v1497 = vrcp.pop %v1027
    %v1498 = vmul.f32 %v1027, %v1497
    %v1499 = vsub.f32 1.0, %v1498
    %v1500 = vmul.f32 %v1497, %v1499
    %v1501 = vadd.f32 %v1497, %v1500
    %vm1502 = vweird.f32 %v1027
    %vm1503 = vweird.f32 %v1497
    %vm1504 = vmor %vm1502, %vm1503
    %v1505 = vsel %vm1504, %v1497, %v1501
    %v1506 = vand.u32 2147483647, %v1027
    %vm1507 = vcmp.eq.f32.partialorder %v1506, 8.507059e+37
    %v1508 = vand.u32 %v1027, 2147483648
    %v1509 = vor.u32 1.1754944e-38, %v1508
    %v1510 = vsel %vm1507, %v1509, %v1505
    %v1511 = vmul.f32 1.0, %v1510
    %v1512 = vrcp.pop %v1028
    %v1513 = vmul.f32 %v1028, %v1512
    %v1514 = vsub.f32 1.0, %v1513
    %v1515 = vmul.f32 %v1512, %v1514
    %v1516 = vadd.f32 %v1512, %v1515
    %vm1517 = vweird.f32 %v1028
    %vm1518 = vweird.f32 %v1512
    %vm1519 = vmor %vm1517, %vm1518
    %v1520 = vsel %vm1519, %v1512, %v1516
    %v1521 = vand.u32 2147483647, %v1028
    %vm1522 = vcmp.eq.f32.partialorder %v1521, 8.507059e+37
    %v1523 = vand.u32 %v1028, 2147483648
    %v1524 = vor.u32 1.1754944e-38, %v1523
    %v1525 = vsel %vm1522, %v1524, %v1520
    %v1526 = vmul.f32 1.0, %v1525
    %v1527 = vrcp.pop %v1029
    %v1528 = vmul.f32 %v1029, %v1527
    %v1529 = vsub.f32 1.0, %v1528
    %v1530 = vmul.f32 %v1527, %v1529
    %v1531 = vadd.f32 %v1527, %v1530
    %vm1532 = vweird.f32 %v1029
    %vm1533 = vweird.f32 %v1527
    %vm1534 = vmor %vm1532, %vm1533
    %v1535 = vsel %vm1534, %v1527, %v1531
    %v1536 = vand.u32 2147483647, %v1029
    %vm1537 = vcmp.eq.f32.partialorder %v1536, 8.507059e+37
    %v1538 = vand.u32 %v1029, 2147483648
    %v1539 = vor.u32 1.1754944e-38, %v1538
    %v1540 = vsel %vm1537, %v1539, %v1535
    %v1541 = vmul.f32 1.0, %v1540
    %v1542 = vrcp.pop %v1030
    %v1543 = vmul.f32 %v1030, %v1542
    %v1544 = vsub.f32 1.0, %v1543
    %v1545 = vmul.f32 %v1542, %v1544
    %v1546 = vadd.f32 %v1542, %v1545
    %vm1547 = vweird.f32 %v1030
    %vm1548 = vweird.f32 %v1542
    %vm1549 = vmor %vm1547, %vm1548
    %v1550 = vsel %vm1549, %v1542, %v1546
    %v1551 = vand.u32 2147483647, %v1030
    %vm1552 = vcmp.eq.f32.partialorder %v1551, 8.507059e+37
    %v1553 = vand.u32 %v1030, 2147483648
    %v1554 = vor.u32 1.1754944e-38, %v1553
    %v1555 = vsel %vm1552, %v1554, %v1550
    %v1556 = vmul.f32 1.0, %v1555
    %v1557 = vrcp.pop %v1031
    %v1558 = vmul.f32 %v1031, %v1557
    %v1559 = vsub.f32 1.0, %v1558
    %v1560 = vmul.f32 %v1557, %v1559
    %v1561 = vadd.f32 %v1557, %v1560
    %vm1562 = vweird.f32 %v1031
    %vm1563 = vweird.f32 %v1557
    %vm1564 = vmor %vm1562, %vm1563
    %v1565 = vsel %vm1564, %v1557, %v1561
    %v1566 = vand.u32 2147483647, %v1031
    %vm1567 = vcmp.eq.f32.partialorder %v1566, 8.507059e+37
    %v1568 = vand.u32 %v1031, 2147483648
    %v1569 = vor.u32 1.1754944e-38, %v1568
    %v1570 = vsel %vm1567, %v1569, %v1565
    %v1571 = vmul.f32 1.0, %v1570
    %v1572 = vrcp.pop %v1032
    %v1573 = vmul.f32 %v1032, %v1572
    %v1574 = vsub.f32 1.0, %v1573
    %v1575 = vmul.f32 %v1572, %v1574
    %v1576 = vadd.f32 %v1572, %v1575
    %vm1577 = vweird.f32 %v1032
    %vm1578 = vweird.f32 %v1572
    %vm1579 = vmor %vm1577, %vm1578
    %v1580 = vsel %vm1579, %v1572, %v1576
    %v1581 = vand.u32 2147483647, %v1032
    %vm1582 = vcmp.eq.f32.partialorder %v1581, 8.507059e+37
    %v1583 = vand.u32 %v1032, 2147483648
    %v1584 = vor.u32 1.1754944e-38, %v1583
    %v1585 = vsel %vm1582, %v1584, %v1580
    %v1586 = vmul.f32 1.0, %v1585
    %v1587 = vrcp.pop %v1033
    %v1588 = vmul.f32 %v1033, %v1587
    %v1589 = vsub.f32 1.0, %v1588
    %v1590 = vmul.f32 %v1587, %v1589
    %v1591 = vadd.f32 %v1587, %v1590
    %vm1592 = vweird.f32 %v1033
    %vm1593 = vweird.f32 %v1587
    %vm1594 = vmor %vm1592, %vm1593
    %v1595 = vsel %vm1594, %v1587, %v1591
    %v1596 = vand.u32 2147483647, %v1033
    %vm1597 = vcmp.eq.f32.partialorder %v1596, 8.507059e+37
    %v1598 = vand.u32 %v1033, 2147483648
    %v1599 = vor.u32 1.1754944e-38, %v1598
    %v1600 = vsel %vm1597, %v1599, %v1595
    %v1601 = vmul.f32 1.0, %v1600
    %v1602 = vrcp.pop %v1034
    %v1603 = vmul.f32 %v1034, %v1602
    %v1604 = vsub.f32 1.0, %v1603
    %v1605 = vmul.f32 %v1602, %v1604
    %v1606 = vadd.f32 %v1602, %v1605
    %vm1607 = vweird.f32 %v1034
    %vm1608 = vweird.f32 %v1602
    %vm1609 = vmor %vm1607, %vm1608
    %v1610 = vsel %vm1609, %v1602, %v1606
    %v1611 = vand.u32 2147483647, %v1034
    %vm1612 = vcmp.eq.f32.partialorder %v1611, 8.507059e+37
    %v1613 = vand.u32 %v1034, 2147483648
    %v1614 = vor.u32 1.1754944e-38, %v1613
    %v1615 = vsel %vm1612, %v1614, %v1610
    %v1616 = vmul.f32 1.0, %v1615
    %v1617 = vrcp.pop %v1035
    %v1618 = vmul.f32 %v1035, %v1617
    %v1619 = vsub.f32 1.0, %v1618
    %v1620 = vmul.f32 %v1617, %v1619
    %v1621 = vadd.f32 %v1617, %v1620
    %vm1622 = vweird.f32 %v1035
    %vm1623 = vweird.f32 %v1617
    %vm1624 = vmor %vm1622, %vm1623
    %v1625 = vsel %vm1624, %v1617, %v1621
    %v1626 = vand.u32 2147483647, %v1035
    %vm1627 = vcmp.eq.f32.partialorder %v1626, 8.507059e+37
    %v1628 = vand.u32 %v1035, 2147483648
    %v1629 = vor.u32 1.1754944e-38, %v1628
    %v1630 = vsel %vm1627, %v1629, %v1625
    %v1631 = vmul.f32 1.0, %v1630
    %v1632 = vrcp.pop %v1036
    %v1633 = vmul.f32 %v1036, %v1632
    %v1634 = vsub.f32 1.0, %v1633
    %v1635 = vmul.f32 %v1632, %v1634
    %v1636 = vadd.f32 %v1632, %v1635
    %vm1637 = vweird.f32 %v1036
    %vm1638 = vweird.f32 %v1632
    %vm1639 = vmor %vm1637, %vm1638
    %v1640 = vsel %vm1639, %v1632, %v1636
    %v1641 = vand.u32 2147483647, %v1036
    %vm1642 = vcmp.eq.f32.partialorder %v1641, 8.507059e+37
    %v1643 = vand.u32 %v1036, 2147483648
    %v1644 = vor.u32 1.1754944e-38, %v1643
    %v1645 = vsel %vm1642, %v1644, %v1640
    %v1646 = vmul.f32 1.0, %v1645
    %v1647 = vrcp.pop %v1037
    %v1648 = vmul.f32 %v1037, %v1647
    %v1649 = vsub.f32 1.0, %v1648
    %v1650 = vmul.f32 %v1647, %v1649
    %v1651 = vadd.f32 %v1647, %v1650
    %vm1652 = vweird.f32 %v1037
    %vm1653 = vweird.f32 %v1647
    %vm1654 = vmor %vm1652, %vm1653
    %v1655 = vsel %vm1654, %v1647, %v1651
    %v1656 = vand.u32 2147483647, %v1037
    %vm1657 = vcmp.eq.f32.partialorder %v1656, 8.507059e+37
    %v1658 = vand.u32 %v1037, 2147483648
    %v1659 = vor.u32 1.1754944e-38, %v1658
    %v1660 = vsel %vm1657, %v1659, %v1655
    %v1661 = vmul.f32 1.0, %v1660
    %v1662 = vrcp.pop %v1038
    %v1663 = vmul.f32 %v1038, %v1662
    %v1664 = vsub.f32 1.0, %v1663
    %v1665 = vmul.f32 %v1662, %v1664
    %v1666 = vadd.f32 %v1662, %v1665
    %vm1667 = vweird.f32 %v1038
    %vm1668 = vweird.f32 %v1662
    %vm1669 = vmor %vm1667, %vm1668
    %v1670 = vsel %vm1669, %v1662, %v1666
    %v1671 = vand.u32 2147483647, %v1038
    %vm1672 = vcmp.eq.f32.partialorder %v1671, 8.507059e+37
    %v1673 = vand.u32 %v1038, 2147483648
    %v1674 = vor.u32 1.1754944e-38, %v1673
    %v1675 = vsel %vm1672, %v1674, %v1670
    %v1676 = vmul.f32 1.0, %v1675
    %v1677 = vrcp.pop %v1039
    %v1678 = vmul.f32 %v1039, %v1677
    %v1679 = vsub.f32 1.0, %v1678
    %v1680 = vmul.f32 %v1677, %v1679
    %v1681 = vadd.f32 %v1677, %v1680
    %vm1682 = vweird.f32 %v1039
    %vm1683 = vweird.f32 %v1677
    %vm1684 = vmor %vm1682, %vm1683
    %v1685 = vsel %vm1684, %v1677, %v1681
    %v1686 = vand.u32 2147483647, %v1039
    %vm1687 = vcmp.eq.f32.partialorder %v1686, 8.507059e+37
    %v1688 = vand.u32 %v1039, 2147483648
    %v1689 = vor.u32 1.1754944e-38, %v1688
    %v1690 = vsel %vm1687, %v1689, %v1685
    %v1691 = vmul.f32 1.0, %v1690
    %v1692 = vrcp.pop %v1040
    %v1693 = vmul.f32 %v1040, %v1692
    %v1694 = vsub.f32 1.0, %v1693
    %v1695 = vmul.f32 %v1692, %v1694
    %v1696 = vadd.f32 %v1692, %v1695
    %vm1697 = vweird.f32 %v1040
    %vm1698 = vweird.f32 %v1692
    %vm1699 = vmor %vm1697, %vm1698
    %v1700 = vsel %vm1699, %v1692, %v1696
    %v1701 = vand.u32 2147483647, %v1040
    %vm1702 = vcmp.eq.f32.partialorder %v1701, 8.507059e+37
    %v1703 = vand.u32 %v1040, 2147483648
    %v1704 = vor.u32 1.1754944e-38, %v1703
    %v1705 = vsel %vm1702, %v1704, %v1700
    %v1706 = vmul.f32 1.0, %v1705
    %v1707 = vrcp.pop %v1041
    %v1708 = vmul.f32 %v1041, %v1707
    %v1709 = vsub.f32 1.0, %v1708
    %v1710 = vmul.f32 %v1707, %v1709
    %v1711 = vadd.f32 %v1707, %v1710
    %vm1712 = vweird.f32 %v1041
    %vm1713 = vweird.f32 %v1707
    %vm1714 = vmor %vm1712, %vm1713
    %v1715 = vsel %vm1714, %v1707, %v1711
    %v1716 = vand.u32 2147483647, %v1041
    %vm1717 = vcmp.eq.f32.partialorder %v1716, 8.507059e+37
    %v1718 = vand.u32 %v1041, 2147483648
    %v1719 = vor.u32 1.1754944e-38, %v1718
    %v1720 = vsel %vm1717, %v1719, %v1715
    %v1721 = vmul.f32 1.0, %v1720
    %v1722 = vrcp.pop %v1042
    %v1723 = vmul.f32 %v1042, %v1722
    %v1724 = vsub.f32 1.0, %v1723
    %v1725 = vmul.f32 %v1722, %v1724
    %v1726 = vadd.f32 %v1722, %v1725
    %vm1727 = vweird.f32 %v1042
    %vm1728 = vweird.f32 %v1722
    %vm1729 = vmor %vm1727, %vm1728
    %v1730 = vsel %vm1729, %v1722, %v1726
    %v1731 = vand.u32 2147483647, %v1042
    %vm1732 = vcmp.eq.f32.partialorder %v1731, 8.507059e+37
    %v1733 = vand.u32 %v1042, 2147483648
    %v1734 = vor.u32 1.1754944e-38, %v1733
    %v1735 = vsel %vm1732, %v1734, %v1730
    %v1736 = vmul.f32 1.0, %v1735
    %v1737 = vrcp.pop %v1043
    %v1738 = vmul.f32 %v1043, %v1737
    %v1739 = vsub.f32 1.0, %v1738
    %v1740 = vmul.f32 %v1737, %v1739
    %v1741 = vadd.f32 %v1737, %v1740
    %vm1742 = vweird.f32 %v1043
    %vm1743 = vweird.f32 %v1737
    %vm1744 = vmor %vm1742, %vm1743
    %v1745 = vsel %vm1744, %v1737, %v1741
    %v1746 = vand.u32 2147483647, %v1043
    %vm1747 = vcmp.eq.f32.partialorder %v1746, 8.507059e+37
    %v1748 = vand.u32 %v1043, 2147483648
    %v1749 = vor.u32 1.1754944e-38, %v1748
    %v1750 = vsel %vm1747, %v1749, %v1745
    %v1751 = vmul.f32 1.0, %v1750
    %v1752 = vrcp.pop %v1044
    %v1753 = vmul.f32 %v1044, %v1752
    %v1754 = vsub.f32 1.0, %v1753
    %v1755 = vmul.f32 %v1752, %v1754
    %v1756 = vadd.f32 %v1752, %v1755
    %vm1757 = vweird.f32 %v1044
    %vm1758 = vweird.f32 %v1752
    %vm1759 = vmor %vm1757, %vm1758
    %v1760 = vsel %vm1759, %v1752, %v1756
    %v1761 = vand.u32 2147483647, %v1044
    %vm1762 = vcmp.eq.f32.partialorder %v1761, 8.507059e+37
    %v1763 = vand.u32 %v1044, 2147483648
    %v1764 = vor.u32 1.1754944e-38, %v1763
    %v1765 = vsel %vm1762, %v1764, %v1760
    %v1766 = vmul.f32 1.0, %v1765
    %v1767 = vrcp.pop %v1045
    %v1768 = vmul.f32 %v1045, %v1767
    %v1769 = vsub.f32 1.0, %v1768
    %v1770 = vmul.f32 %v1767, %v1769
    %v1771 = vadd.f32 %v1767, %v1770
    %vm1772 = vweird.f32 %v1045
    %vm1773 = vweird.f32 %v1767
    %vm1774 = vmor %vm1772, %vm1773
    %v1775 = vsel %vm1774, %v1767, %v1771
    %v1776 = vand.u32 2147483647, %v1045
    %vm1777 = vcmp.eq.f32.partialorder %v1776, 8.507059e+37
    %v1778 = vand.u32 %v1045, 2147483648
    %v1779 = vor.u32 1.1754944e-38, %v1778
    %v1780 = vsel %vm1777, %v1779, %v1775
    %v1781 = vmul.f32 1.0, %v1780
    %v1782 = vrcp.pop %v1046
    %v1783 = vmul.f32 %v1046, %v1782
    %v1784 = vsub.f32 1.0, %v1783
    %v1785 = vmul.f32 %v1782, %v1784
    %v1786 = vadd.f32 %v1782, %v1785
    %vm1787 = vweird.f32 %v1046
    %vm1788 = vweird.f32 %v1782
    %vm1789 = vmor %vm1787, %vm1788
    %v1790 = vsel %vm1789, %v1782, %v1786
    %v1791 = vand.u32 2147483647, %v1046
    %vm1792 = vcmp.eq.f32.partialorder %v1791, 8.507059e+37
    %v1793 = vand.u32 %v1046, 2147483648
    %v1794 = vor.u32 1.1754944e-38, %v1793
    %v1795 = vsel %vm1792, %v1794, %v1790
    %v1796 = vmul.f32 1.0, %v1795
    %v1797 = vrcp.pop %v1047
    %v1798 = vmul.f32 %v1047, %v1797
    %v1799 = vsub.f32 1.0, %v1798
    %v1800 = vmul.f32 %v1797, %v1799
    %v1801 = vadd.f32 %v1797, %v1800
    %vm1802 = vweird.f32 %v1047
    %vm1803 = vweird.f32 %v1797
    %vm1804 = vmor %vm1802, %vm1803
    %v1805 = vsel %vm1804, %v1797, %v1801
    %v1806 = vand.u32 2147483647, %v1047
    %vm1807 = vcmp.eq.f32.partialorder %v1806, 8.507059e+37
    %v1808 = vand.u32 %v1047, 2147483648
    %v1809 = vor.u32 1.1754944e-38, %v1808
    %v1810 = vsel %vm1807, %v1809, %v1805
    %v1811 = vmul.f32 1.0, %v1810
    %v1812 = vrcp.pop %v1048
    %v1813 = vmul.f32 %v1048, %v1812
    %v1814 = vsub.f32 1.0, %v1813
    %v1815 = vmul.f32 %v1812, %v1814
    %v1816 = vadd.f32 %v1812, %v1815
    %vm1817 = vweird.f32 %v1048
    %vm1818 = vweird.f32 %v1812
    %vm1819 = vmor %vm1817, %vm1818
    %v1820 = vsel %vm1819, %v1812, %v1816
    %v1821 = vand.u32 2147483647, %v1048
    %vm1822 = vcmp.eq.f32.partialorder %v1821, 8.507059e+37
    %v1823 = vand.u32 %v1048, 2147483648
    %v1824 = vor.u32 1.1754944e-38, %v1823
    %v1825 = vsel %vm1822, %v1824, %v1820
    %v1826 = vmul.f32 1.0, %v1825
    %v1827 = vrcp.pop %v1049
    %v1828 = vmul.f32 %v1049, %v1827
    %v1829 = vsub.f32 1.0, %v1828
    %v1830 = vmul.f32 %v1827, %v1829
    %v1831 = vadd.f32 %v1827, %v1830
    %vm1832 = vweird.f32 %v1049
    %vm1833 = vweird.f32 %v1827
    %vm1834 = vmor %vm1832, %vm1833
    %v1835 = vsel %vm1834, %v1827, %v1831
    %v1836 = vand.u32 2147483647, %v1049
    %vm1837 = vcmp.eq.f32.partialorder %v1836, 8.507059e+37
    %v1838 = vand.u32 %v1049, 2147483648
    %v1839 = vor.u32 1.1754944e-38, %v1838
    %v1840 = vsel %vm1837, %v1839, %v1835
    %v1841 = vmul.f32 1.0, %v1840
    %v1842 = vrcp.pop %v1050
    %v1843 = vmul.f32 %v1050, %v1842
    %v1844 = vsub.f32 1.0, %v1843
    %v1845 = vmul.f32 %v1842, %v1844
    %v1846 = vadd.f32 %v1842, %v1845
    %vm1847 = vweird.f32 %v1050
    %vm1848 = vweird.f32 %v1842
    %vm1849 = vmor %vm1847, %vm1848
    %v1850 = vsel %vm1849, %v1842, %v1846
    %v1851 = vand.u32 2147483647, %v1050
    %vm1852 = vcmp.eq.f32.partialorder %v1851, 8.507059e+37
    %v1853 = vand.u32 %v1050, 2147483648
    %v1854 = vor.u32 1.1754944e-38, %v1853
    %v1855 = vsel %vm1852, %v1854, %v1850
    %v1856 = vmul.f32 1.0, %v1855
    %v1857 = vrcp.pop %v1051
    %v1858 = vmul.f32 %v1051, %v1857
    %v1859 = vsub.f32 1.0, %v1858
    %v1860 = vmul.f32 %v1857, %v1859
    %v1861 = vadd.f32 %v1857, %v1860
    %vm1862 = vweird.f32 %v1051
    %vm1863 = vweird.f32 %v1857
    %vm1864 = vmor %vm1862, %vm1863
    %v1865 = vsel %vm1864, %v1857, %v1861
    %v1866 = vand.u32 2147483647, %v1051
    %vm1867 = vcmp.eq.f32.partialorder %v1866, 8.507059e+37
    %v1868 = vand.u32 %v1051, 2147483648
    %v1869 = vor.u32 1.1754944e-38, %v1868
    %v1870 = vsel %vm1867, %v1869, %v1865
    %v1871 = vmul.f32 1.0, %v1870
    %v1872 = vrcp.pop %v1052
    %v1873 = vmul.f32 %v1052, %v1872
    %v1874 = vsub.f32 1.0, %v1873
    %v1875 = vmul.f32 %v1872, %v1874
    %v1876 = vadd.f32 %v1872, %v1875
    %vm1877 = vweird.f32 %v1052
    %vm1878 = vweird.f32 %v1872
    %vm1879 = vmor %vm1877, %vm1878
    %v1880 = vsel %vm1879, %v1872, %v1876
    %v1881 = vand.u32 2147483647, %v1052
    %vm1882 = vcmp.eq.f32.partialorder %v1881, 8.507059e+37
    %v1883 = vand.u32 %v1052, 2147483648
    %v1884 = vor.u32 1.1754944e-38, %v1883
    %v1885 = vsel %vm1882, %v1884, %v1880
    %v1886 = vmul.f32 1.0, %v1885
    %v1887 = vrcp.pop %v1053
    %v1888 = vmul.f32 %v1053, %v1887
    %v1889 = vsub.f32 1.0, %v1888
    %v1890 = vmul.f32 %v1887, %v1889
    %v1891 = vadd.f32 %v1887, %v1890
    %vm1892 = vweird.f32 %v1053
    %vm1893 = vweird.f32 %v1887
    %vm1894 = vmor %vm1892, %vm1893
    %v1895 = vsel %vm1894, %v1887, %v1891
    %v1896 = vand.u32 2147483647, %v1053
    %vm1897 = vcmp.eq.f32.partialorder %v1896, 8.507059e+37
    %v1898 = vand.u32 %v1053, 2147483648
    %v1899 = vor.u32 1.1754944e-38, %v1898
    %v1900 = vsel %vm1897, %v1899, %v1895
    %v1901 = vmul.f32 1.0, %v1900
    %v1902 = vrcp.pop %v1054
    %v1903 = vmul.f32 %v1054, %v1902
    %v1904 = vsub.f32 1.0, %v1903
    %v1905 = vmul.f32 %v1902, %v1904
    %v1906 = vadd.f32 %v1902, %v1905
    %vm1907 = vweird.f32 %v1054
    %vm1908 = vweird.f32 %v1902
    %vm1909 = vmor %vm1907, %vm1908
    %v1910 = vsel %vm1909, %v1902, %v1906
    %v1911 = vand.u32 2147483647, %v1054
    %vm1912 = vcmp.eq.f32.partialorder %v1911, 8.507059e+37
    %v1913 = vand.u32 %v1054, 2147483648
    %v1914 = vor.u32 1.1754944e-38, %v1913
    %v1915 = vsel %vm1912, %v1914, %v1910
    %v1916 = vmul.f32 1.0, %v1915
    %v1917 = vrcp.pop %v1055
    %v1918 = vmul.f32 %v1055, %v1917
    %v1919 = vsub.f32 1.0, %v1918
    %v1920 = vmul.f32 %v1917, %v1919
    %v1921 = vadd.f32 %v1917, %v1920
    %vm1922 = vweird.f32 %v1055
    %vm1923 = vweird.f32 %v1917
    %vm1924 = vmor %vm1922, %vm1923
    %v1925 = vsel %vm1924, %v1917, %v1921
    %v1926 = vand.u32 2147483647, %v1055
    %vm1927 = vcmp.eq.f32.partialorder %v1926, 8.507059e+37
    %v1928 = vand.u32 %v1055, 2147483648
    %v1929 = vor.u32 1.1754944e-38, %v1928
    %v1930 = vsel %vm1927, %v1929, %v1925
    %v1931 = vmul.f32 1.0, %v1930
    %v1932 = vrcp.pop %v1056
    %v1933 = vmul.f32 %v1056, %v1932
    %v1934 = vsub.f32 1.0, %v1933
    %v1935 = vmul.f32 %v1932, %v1934
    %v1936 = vadd.f32 %v1932, %v1935
    %vm1937 = vweird.f32 %v1056
    %vm1938 = vweird.f32 %v1932
    %vm1939 = vmor %vm1937, %vm1938
    %v1940 = vsel %vm1939, %v1932, %v1936
    %v1941 = vand.u32 2147483647, %v1056
    %vm1942 = vcmp.eq.f32.partialorder %v1941, 8.507059e+37
    %v1943 = vand.u32 %v1056, 2147483648
    %v1944 = vor.u32 1.1754944e-38, %v1943
    %v1945 = vsel %vm1942, %v1944, %v1940
    %v1946 = vmul.f32 1.0, %v1945
    %v1947 = vrcp.pop %v1057
    %v1948 = vmul.f32 %v1057, %v1947
    %v1949 = vsub.f32 1.0, %v1948
    %v1950 = vmul.f32 %v1947, %v1949
    %v1951 = vadd.f32 %v1947, %v1950
    %vm1952 = vweird.f32 %v1057
    %vm1953 = vweird.f32 %v1947
    %vm1954 = vmor %vm1952, %vm1953
    %v1955 = vsel %vm1954, %v1947, %v1951
    %v1956 = vand.u32 2147483647, %v1057
    %vm1957 = vcmp.eq.f32.partialorder %v1956, 8.507059e+37
    %v1958 = vand.u32 %v1057, 2147483648
    %v1959 = vor.u32 1.1754944e-38, %v1958
    %v1960 = vsel %vm1957, %v1959, %v1955
    %v1961 = vmul.f32 1.0, %v1960
    %v1962 = vrcp.pop %v1058
    %v1963 = vmul.f32 %v1058, %v1962
    %v1964 = vsub.f32 1.0, %v1963
    %v1965 = vmul.f32 %v1962, %v1964
    %v1966 = vadd.f32 %v1962, %v1965
    %vm1967 = vweird.f32 %v1058
    %vm1968 = vweird.f32 %v1962
    %vm1969 = vmor %vm1967, %vm1968
    %v1970 = vsel %vm1969, %v1962, %v1966
    %v1971 = vand.u32 2147483647, %v1058
    %vm1972 = vcmp.eq.f32.partialorder %v1971, 8.507059e+37
    %v1973 = vand.u32 %v1058, 2147483648
    %v1974 = vor.u32 1.1754944e-38, %v1973
    %v1975 = vsel %vm1972, %v1974, %v1970
    %v1976 = vmul.f32 1.0, %v1975
    %v1977 = vrcp.pop %v1059
    %v1978 = vmul.f32 %v1059, %v1977
    %v1979 = vsub.f32 1.0, %v1978
    %v1980 = vmul.f32 %v1977, %v1979
    %v1981 = vadd.f32 %v1977, %v1980
    %vm1982 = vweird.f32 %v1059
    %vm1983 = vweird.f32 %v1977
    %vm1984 = vmor %vm1982, %vm1983
    %v1985 = vsel %vm1984, %v1977, %v1981
    %v1986 = vand.u32 2147483647, %v1059
    %vm1987 = vcmp.eq.f32.partialorder %v1986, 8.507059e+37
    %v1988 = vand.u32 %v1059, 2147483648
    %v1989 = vor.u32 1.1754944e-38, %v1988
    %v1990 = vsel %vm1987, %v1989, %v1985
    %v1991 = vmul.f32 1.0, %v1990
    %v1992 = vrcp.pop %v1060
    %v1993 = vmul.f32 %v1060, %v1992
    %v1994 = vsub.f32 1.0, %v1993
    %v1995 = vmul.f32 %v1992, %v1994
    %v1996 = vadd.f32 %v1992, %v1995
    %vm1997 = vweird.f32 %v1060
    %vm1998 = vweird.f32 %v1992
    %vm1999 = vmor %vm1997, %vm1998
    %v2000 = vsel %vm1999, %v1992, %v1996
    %v2001 = vand.u32 2147483647, %v1060
    %vm2002 = vcmp.eq.f32.partialorder %v2001, 8.507059e+37
    %v2003 = vand.u32 %v1060, 2147483648
    %v2004 = vor.u32 1.1754944e-38, %v2003
    %v2005 = vsel %vm2002, %v2004, %v2000
    %v2006 = vmul.f32 1.0, %v2005
    %v2007 = vrcp.pop %v1061
    %v2008 = vmul.f32 %v1061, %v2007
    %v2009 = vsub.f32 1.0, %v2008
    %v2010 = vmul.f32 %v2007, %v2009
    %v2011 = vadd.f32 %v2007, %v2010
    %vm2012 = vweird.f32 %v1061
    %vm2013 = vweird.f32 %v2007
    %vm2014 = vmor %vm2012, %vm2013
    %v2015 = vsel %vm2014, %v2007, %v2011
    %v2016 = vand.u32 2147483647, %v1061
    %vm2017 = vcmp.eq.f32.partialorder %v2016, 8.507059e+37
    %v2018 = vand.u32 %v1061, 2147483648
    %v2019 = vor.u32 1.1754944e-38, %v2018
    %v2020 = vsel %vm2017, %v2019, %v2015
    %v2021 = vmul.f32 1.0, %v2020
    %v2022 = vmul.f32 %v615, %v1076
    %v2023 = vmul.f32 %v618, %v1091
    %v2024 = vmul.f32 %v621, %v1106
    %v2025 = vmul.f32 %v624, %v1121
    %v2026 = vmul.f32 %v627, %v1136
    %v2027 = vmul.f32 %v630, %v1151
    %v2028 = vmul.f32 %v633, %v1166
    %v2029 = vmul.f32 %v636, %v1181
    %v2030 = vmul.f32 %v639, %v1196
    %v2031 = vmul.f32 %v642, %v1211
    %v2032 = vmul.f32 %v645, %v1226
    %v2033 = vmul.f32 %v648, %v1241
    %v2034 = vmul.f32 %v651, %v1256
    %v2035 = vmul.f32 %v654, %v1271
    %v2036 = vmul.f32 %v657, %v1286
    %v2037 = vmul.f32 %v660, %v1301
    %v2038 = vmul.f32 %v663, %v1316
    %v2039 = vmul.f32 %v666, %v1331
    %v2040 = vmul.f32 %v669, %v1346
    %v2041 = vmul.f32 %v672, %v1361
    %v2042 = vmul.f32 %v675, %v1376
    %v2043 = vmul.f32 %v678, %v1391
    %v2044 = vmul.f32 %v681, %v1406
    %v2045 = vmul.f32 %v684, %v1421
    %v2046 = vmul.f32 %v687, %v1436
    %v2047 = vmul.f32 %v690, %v1451
    %v2048 = vmul.f32 %v693, %v1466
    %v2049 = vmul.f32 %v696, %v1481
    %v2050 = vmul.f32 %v699, %v1496
    %v2051 = vmul.f32 %v702, %v1511
    %v2052 = vmul.f32 %v705, %v1526
    %v2053 = vmul.f32 %v708, %v1541
    %v2054 = vmul.f32 %v711, %v1556
    %v2055 = vmul.f32 %v714, %v1571
    %v2056 = vmul.f32 %v717, %v1586
    %v2057 = vmul.f32 %v720, %v1601
    %v2058 = vmul.f32 %v723, %v1616
    %v2059 = vmul.f32 %v726, %v1631
    %v2060 = vmul.f32 %v729, %v1646
    %v2061 = vmul.f32 %v732, %v1661
    %v2062 = vmul.f32 %v735, %v1676
    %v2063 = vmul.f32 %v738, %v1691
    %v2064 = vmul.f32 %v741, %v1706
    %v2065 = vmul.f32 %v744, %v1721
    %v2066 = vmul.f32 %v747, %v1736
    %v2067 = vmul.f32 %v750, %v1751
    %v2068 = vmul.f32 %v753, %v1766
    %v2069 = vmul.f32 %v756, %v1781
    %v2070 = vmul.f32 %v759, %v1796
    %v2071 = vmul.f32 %v762, %v1811
    %v2072 = vmul.f32 %v765, %v1826
    %v2073 = vmul.f32 %v768, %v1841
    %v2074 = vmul.f32 %v771, %v1856
    %v2075 = vmul.f32 %v774, %v1871
    %v2076 = vmul.f32 %v777, %v1886
    %v2077 = vmul.f32 %v780, %v1901
    %v2078 = vmul.f32 %v783, %v1916
    %v2079 = vmul.f32 %v786, %v1931
    %v2080 = vmul.f32 %v789, %v1946
    %v2081 = vmul.f32 %v792, %v1961
    %v2082 = vmul.f32 %v795, %v1976
    %v2083 = vmul.f32 %v798, %v1991
    %v2084 = vmul.f32 %v801, %v2006
    %v2085 = vmul.f32 %v804, %v2021
    %v2086 = vld [vmem:[#allocation7] sm:$0xff]
    %v2087 = vld [vmem:[#allocation7 + $0x8] sm:$0xff]
    %v2088 = vld [vmem:[#allocation7 + $0x10] sm:$0xff]
    %v2089 = vld [vmem:[#allocation7 + $0x18] sm:$0xff]
    %v2090 = vld [vmem:[#allocation7 + $0x20] sm:$0xff]
    %v2091 = vld [vmem:[#allocation7 + $0x28] sm:$0xff]
    %v2092 = vld [vmem:[#allocation7 + $0x30] sm:$0xff]
    %v2093 = vld [vmem:[#allocation7 + $0x38] sm:$0xff]
    %v2094 = vld [vmem:[#allocation7 + $0x40] sm:$0xff]
    %v2095 = vld [vmem:[#allocation7 + $0x48] sm:$0xff]
    %v2096 = vld [vmem:[#allocation7 + $0x50] sm:$0xff]
    %v2097 = vld [vmem:[#allocation7 + $0x58] sm:$0xff]
    %v2098 = vld [vmem:[#allocation7 + $0x60] sm:$0xff]
    %v2099 = vld [vmem:[#allocation7 + $0x68] sm:$0xff]
    %v2100 = vld [vmem:[#allocation7 + $0x70] sm:$0xff]
    %v2101 = vld [vmem:[#allocation7 + $0x78] sm:$0xff]
    %v2102 = vld [vmem:[#allocation7 + $0x80] sm:$0xff]
    %v2103 = vld [vmem:[#allocation7 + $0x88] sm:$0xff]
    %v2104 = vld [vmem:[#allocation7 + $0x90] sm:$0xff]
    %v2105 = vld [vmem:[#allocation7 + $0x98] sm:$0xff]
    %v2106 = vld [vmem:[#allocation7 + $0xa0] sm:$0xff]
    %v2107 = vld [vmem:[#allocation7 + $0xa8] sm:$0xff]
    %v2108 = vld [vmem:[#allocation7 + $0xb0] sm:$0xff]
    %v2109 = vld [vmem:[#allocation7 + $0xb8] sm:$0xff]
    %v2110 = vld [vmem:[#allocation7 + $0xc0] sm:$0xff]
    %v2111 = vld [vmem:[#allocation7 + $0xc8] sm:$0xff]
    %v2112 = vld [vmem:[#allocation7 + $0xd0] sm:$0xff]
    %v2113 = vld [vmem:[#allocation7 + $0xd8] sm:$0xff]
    %v2114 = vld [vmem:[#allocation7 + $0xe0] sm:$0xff]
    %v2115 = vld [vmem:[#allocation7 + $0xe8] sm:$0xff]
    %v2116 = vld [vmem:[#allocation7 + $0xf0] sm:$0xff]
    %v2117 = vld [vmem:[#allocation7 + $0xf8] sm:$0xff]
    %v2118 = vld [vmem:[#allocation7 + $0x100] sm:$0xff]
    %v2119 = vld [vmem:[#allocation7 + $0x108] sm:$0xff]
    %v2120 = vld [vmem:[#allocation7 + $0x110] sm:$0xff]
    %v2121 = vld [vmem:[#allocation7 + $0x118] sm:$0xff]
    %v2122 = vld [vmem:[#allocation7 + $0x120] sm:$0xff]
    %v2123 = vld [vmem:[#allocation7 + $0x128] sm:$0xff]
    %v2124 = vld [vmem:[#allocation7 + $0x130] sm:$0xff]
    %v2125 = vld [vmem:[#allocation7 + $0x138] sm:$0xff]
    %v2126 = vld [vmem:[#allocation7 + $0x140] sm:$0xff]
    %v2127 = vld [vmem:[#allocation7 + $0x148] sm:$0xff]
    %v2128 = vld [vmem:[#allocation7 + $0x150] sm:$0xff]
    %v2129 = vld [vmem:[#allocation7 + $0x158] sm:$0xff]
    %v2130 = vld [vmem:[#allocation7 + $0x160] sm:$0xff]
    %v2131 = vld [vmem:[#allocation7 + $0x168] sm:$0xff]
    %v2132 = vld [vmem:[#allocation7 + $0x170] sm:$0xff]
    %v2133 = vld [vmem:[#allocation7 + $0x178] sm:$0xff]
    %v2134 = vld [vmem:[#allocation7 + $0x180] sm:$0xff]
    %v2135 = vld [vmem:[#allocation7 + $0x188] sm:$0xff]
    %v2136 = vld [vmem:[#allocation7 + $0x190] sm:$0xff]
    %v2137 = vld [vmem:[#allocation7 + $0x198] sm:$0xff]
    %v2138 = vld [vmem:[#allocation7 + $0x1a0] sm:$0xff]
    %v2139 = vld [vmem:[#allocation7 + $0x1a8] sm:$0xff]
    %v2140 = vld [vmem:[#allocation7 + $0x1b0] sm:$0xff]
    %v2141 = vld [vmem:[#allocation7 + $0x1b8] sm:$0xff]
    %v2142 = vld [vmem:[#allocation7 + $0x1c0] sm:$0xff]
    %v2143 = vld [vmem:[#allocation7 + $0x1c8] sm:$0xff]
    %v2144 = vld [vmem:[#allocation7 + $0x1d0] sm:$0xff]
    %v2145 = vld [vmem:[#allocation7 + $0x1d8] sm:$0xff]
    %v2146 = vld [vmem:[#allocation7 + $0x1e0] sm:$0xff]
    %v2147 = vld [vmem:[#allocation7 + $0x1e8] sm:$0xff]
    %v2148 = vld [vmem:[#allocation7 + $0x1f0] sm:$0xff]
    %v2149 = vld [vmem:[#allocation7 + $0x1f8] sm:$0xff]
    %v2150 = vld [vmem:[#allocation7 + $0x200] sm:$0xff]
    %v2151 = vld [vmem:[#allocation7 + $0x208] sm:$0xff]
    %v2152 = vld [vmem:[#allocation7 + $0x210] sm:$0xff]
    %v2153 = vld [vmem:[#allocation7 + $0x218] sm:$0xff]
    %v2154 = vld [vmem:[#allocation7 + $0x220] sm:$0xff]
    %v2155 = vld [vmem:[#allocation7 + $0x228] sm:$0xff]
    %v2156 = vld [vmem:[#allocation7 + $0x230] sm:$0xff]
    %v2157 = vld [vmem:[#allocation7 + $0x238] sm:$0xff]
    %v2158 = vld [vmem:[#allocation7 + $0x240] sm:$0xff]
    %v2159 = vld [vmem:[#allocation7 + $0x248] sm:$0xff]
    %v2160 = vld [vmem:[#allocation7 + $0x250] sm:$0xff]
    %v2161 = vld [vmem:[#allocation7 + $0x258] sm:$0xff]
    %v2162 = vld [vmem:[#allocation7 + $0x260] sm:$0xff]
    %v2163 = vld [vmem:[#allocation7 + $0x268] sm:$0xff]
    %v2164 = vld [vmem:[#allocation7 + $0x270] sm:$0xff]
    %v2165 = vld [vmem:[#allocation7 + $0x278] sm:$0xff]
    %v2166 = vld [vmem:[#allocation7 + $0x280] sm:$0xff]
    %v2167 = vld [vmem:[#allocation7 + $0x288] sm:$0xff]
    %v2168 = vld [vmem:[#allocation7 + $0x290] sm:$0xff]
    %v2169 = vld [vmem:[#allocation7 + $0x298] sm:$0xff]
    %v2170 = vld [vmem:[#allocation7 + $0x2a0] sm:$0xff]
    %v2171 = vld [vmem:[#allocation7 + $0x2a8] sm:$0xff]
    %v2172 = vld [vmem:[#allocation7 + $0x2b0] sm:$0xff]
    %v2173 = vld [vmem:[#allocation7 + $0x2b8] sm:$0xff]
    %v2174 = vld [vmem:[#allocation7 + $0x2c0] sm:$0xff]
    %v2175 = vld [vmem:[#allocation7 + $0x2c8] sm:$0xff]
    %v2176 = vld [vmem:[#allocation7 + $0x2d0] sm:$0xff]
    %v2177 = vld [vmem:[#allocation7 + $0x2d8] sm:$0xff]
    %v2178 = vld [vmem:[#allocation7 + $0x2e0] sm:$0xff]
    %v2179 = vld [vmem:[#allocation7 + $0x2e8] sm:$0xff]
    %v2180 = vld [vmem:[#allocation7 + $0x2f0] sm:$0xff]
    %v2181 = vld [vmem:[#allocation7 + $0x2f8] sm:$0xff]
    %v2182 = vld [vmem:[#allocation7 + $0x300] sm:$0xff]
    %v2183 = vld [vmem:[#allocation7 + $0x308] sm:$0xff]
    %v2184 = vld [vmem:[#allocation7 + $0x310] sm:$0xff]
    %v2185 = vld [vmem:[#allocation7 + $0x318] sm:$0xff]
    %v2186 = vld [vmem:[#allocation7 + $0x320] sm:$0xff]
    %v2187 = vld [vmem:[#allocation7 + $0x328] sm:$0xff]
    %v2188 = vld [vmem:[#allocation7 + $0x330] sm:$0xff]
    %v2189 = vld [vmem:[#allocation7 + $0x338] sm:$0xff]
    %v2190 = vld [vmem:[#allocation7 + $0x340] sm:$0xff]
    %v2191 = vld [vmem:[#allocation7 + $0x348] sm:$0xff]
    %v2192 = vld [vmem:[#allocation7 + $0x350] sm:$0xff]
    %v2193 = vld [vmem:[#allocation7 + $0x358] sm:$0xff]
    %v2194 = vld [vmem:[#allocation7 + $0x360] sm:$0xff]
    %v2195 = vld [vmem:[#allocation7 + $0x368] sm:$0xff]
    %v2196 = vld [vmem:[#allocation7 + $0x370] sm:$0xff]
    %v2197 = vld [vmem:[#allocation7 + $0x378] sm:$0xff]
    %v2198 = vld [vmem:[#allocation7 + $0x380] sm:$0xff]
    %v2199 = vld [vmem:[#allocation7 + $0x388] sm:$0xff]
    %v2200 = vld [vmem:[#allocation7 + $0x390] sm:$0xff]
    %v2201 = vld [vmem:[#allocation7 + $0x398] sm:$0xff]
    %v2202 = vld [vmem:[#allocation7 + $0x3a0] sm:$0xff]
    %v2203 = vld [vmem:[#allocation7 + $0x3a8] sm:$0xff]
    %v2204 = vld [vmem:[#allocation7 + $0x3b0] sm:$0xff]
    %v2205 = vld [vmem:[#allocation7 + $0x3b8] sm:$0xff]
    %v2206 = vld [vmem:[#allocation7 + $0x3c0] sm:$0xff]
    %v2207 = vld [vmem:[#allocation7 + $0x3c8] sm:$0xff]
    %v2208 = vld [vmem:[#allocation7 + $0x3d0] sm:$0xff]
    %v2209 = vld [vmem:[#allocation7 + $0x3d8] sm:$0xff]
    %v2210 = vld [vmem:[#allocation7 + $0x3e0] sm:$0xff]
    %v2211 = vld [vmem:[#allocation7 + $0x3e8] sm:$0xff]
    %v2212 = vld [vmem:[#allocation7 + $0x3f0] sm:$0xff]
    %v2213 = vld [vmem:[#allocation7 + $0x3f8] sm:$0xff]
    %v2214 = vld [vmem:[#allocation7 + $0x400] sm:$0xff]
    %v2215 = vld [vmem:[#allocation7 + $0x408] sm:$0xff]
    %v2216 = vld [vmem:[#allocation7 + $0x410] sm:$0xff]
    %v2217 = vld [vmem:[#allocation7 + $0x418] sm:$0xff]
    %v2218 = vld [vmem:[#allocation7 + $0x420] sm:$0xff]
    %v2219 = vld [vmem:[#allocation7 + $0x428] sm:$0xff]
    %v2220 = vld [vmem:[#allocation7 + $0x430] sm:$0xff]
    %v2221 = vld [vmem:[#allocation7 + $0x438] sm:$0xff]
    %v2222 = vld [vmem:[#allocation7 + $0x440] sm:$0xff]
    %v2223 = vld [vmem:[#allocation7 + $0x448] sm:$0xff]
    %v2224 = vld [vmem:[#allocation7 + $0x450] sm:$0xff]
    %v2225 = vld [vmem:[#allocation7 + $0x458] sm:$0xff]
    %v2226 = vld [vmem:[#allocation7 + $0x460] sm:$0xff]
    %v2227 = vld [vmem:[#allocation7 + $0x468] sm:$0xff]
    %v2228 = vld [vmem:[#allocation7 + $0x470] sm:$0xff]
    %v2229 = vld [vmem:[#allocation7 + $0x478] sm:$0xff]
    %v2230 = vld [vmem:[#allocation7 + $0x480] sm:$0xff]
    %v2231 = vld [vmem:[#allocation7 + $0x488] sm:$0xff]
    %v2232 = vld [vmem:[#allocation7 + $0x490] sm:$0xff]
    %v2233 = vld [vmem:[#allocation7 + $0x498] sm:$0xff]
    %v2234 = vld [vmem:[#allocation7 + $0x4a0] sm:$0xff]
    %v2235 = vld [vmem:[#allocation7 + $0x4a8] sm:$0xff]
    %v2236 = vld [vmem:[#allocation7 + $0x4b0] sm:$0xff]
    %v2237 = vld [vmem:[#allocation7 + $0x4b8] sm:$0xff]
    %v2238 = vld [vmem:[#allocation7 + $0x4c0] sm:$0xff]
    %v2239 = vld [vmem:[#allocation7 + $0x4c8] sm:$0xff]
    %v2240 = vld [vmem:[#allocation7 + $0x4d0] sm:$0xff]
    %v2241 = vld [vmem:[#allocation7 + $0x4d8] sm:$0xff]
    %v2242 = vld [vmem:[#allocation7 + $0x4e0] sm:$0xff]
    %v2243 = vld [vmem:[#allocation7 + $0x4e8] sm:$0xff]
    %v2244 = vld [vmem:[#allocation7 + $0x4f0] sm:$0xff]
    %v2245 = vld [vmem:[#allocation7 + $0x4f8] sm:$0xff]
    %v2246 = vld [vmem:[#allocation7 + $0x500] sm:$0xff]
    %v2247 = vld [vmem:[#allocation7 + $0x508] sm:$0xff]
    %v2248 = vld [vmem:[#allocation7 + $0x510] sm:$0xff]
    %v2249 = vld [vmem:[#allocation7 + $0x518] sm:$0xff]
    %v2250 = vld [vmem:[#allocation7 + $0x520] sm:$0xff]
    %v2251 = vld [vmem:[#allocation7 + $0x528] sm:$0xff]
    %v2252 = vld [vmem:[#allocation7 + $0x530] sm:$0xff]
    %v2253 = vld [vmem:[#allocation7 + $0x538] sm:$0xff]
    %v2254 = vld [vmem:[#allocation7 + $0x540] sm:$0xff]
    %v2255 = vld [vmem:[#allocation7 + $0x548] sm:$0xff]
    %v2256 = vld [vmem:[#allocation7 + $0x550] sm:$0xff]
    %v2257 = vld [vmem:[#allocation7 + $0x558] sm:$0xff]
    %v2258 = vld [vmem:[#allocation7 + $0x560] sm:$0xff]
    %v2259 = vld [vmem:[#allocation7 + $0x568] sm:$0xff]
    %v2260 = vld [vmem:[#allocation7 + $0x570] sm:$0xff]
    %v2261 = vld [vmem:[#allocation7 + $0x578] sm:$0xff]
    %v2262 = vld [vmem:[#allocation7 + $0x580] sm:$0xff]
    %v2263 = vld [vmem:[#allocation7 + $0x588] sm:$0xff]
    %v2264 = vld [vmem:[#allocation7 + $0x590] sm:$0xff]
    %v2265 = vld [vmem:[#allocation7 + $0x598] sm:$0xff]
    %v2266 = vld [vmem:[#allocation7 + $0x5a0] sm:$0xff]
    %v2267 = vld [vmem:[#allocation7 + $0x5a8] sm:$0xff]
    %v2268 = vld [vmem:[#allocation7 + $0x5b0] sm:$0xff]
    %v2269 = vld [vmem:[#allocation7 + $0x5b8] sm:$0xff]
    %v2270 = vld [vmem:[#allocation7 + $0x5c0] sm:$0xff]
    %v2271 = vld [vmem:[#allocation7 + $0x5c8] sm:$0xff]
    %v2272 = vld [vmem:[#allocation7 + $0x5d0] sm:$0xff]
    %v2273 = vld [vmem:[#allocation7 + $0x5d8] sm:$0xff]
    %v2274 = vld [vmem:[#allocation7 + $0x5e0] sm:$0xff]
    %v2275 = vld [vmem:[#allocation7 + $0x5e8] sm:$0xff]
    %v2276 = vld [vmem:[#allocation7 + $0x5f0] sm:$0xff]
    %v2277 = vld [vmem:[#allocation7 + $0x5f8] sm:$0xff]
    %v2278 = vld [vmem:[#allocation7 + $0x600] sm:$0xff]
    %v2279 = vld [vmem:[#allocation7 + $0x608] sm:$0xff]
    %v2280 = vld [vmem:[#allocation7 + $0x610] sm:$0xff]
    %v2281 = vld [vmem:[#allocation7 + $0x618] sm:$0xff]
    %v2282 = vld [vmem:[#allocation7 + $0x620] sm:$0xff]
    %v2283 = vld [vmem:[#allocation7 + $0x628] sm:$0xff]
    %v2284 = vld [vmem:[#allocation7 + $0x630] sm:$0xff]
    %v2285 = vld [vmem:[#allocation7 + $0x638] sm:$0xff]
    %v2286 = vld [vmem:[#allocation7 + $0x640] sm:$0xff]
    %v2287 = vld [vmem:[#allocation7 + $0x648] sm:$0xff]
    %v2288 = vld [vmem:[#allocation7 + $0x650] sm:$0xff]
    %v2289 = vld [vmem:[#allocation7 + $0x658] sm:$0xff]
    %v2290 = vld [vmem:[#allocation7 + $0x660] sm:$0xff]
    %v2291 = vld [vmem:[#allocation7 + $0x668] sm:$0xff]
    %v2292 = vld [vmem:[#allocation7 + $0x670] sm:$0xff]
    %v2293 = vld [vmem:[#allocation7 + $0x678] sm:$0xff]
    %v2294 = vld [vmem:[#allocation7 + $0x680] sm:$0xff]
    %v2295 = vld [vmem:[#allocation7 + $0x688] sm:$0xff]
    %v2296 = vld [vmem:[#allocation7 + $0x690] sm:$0xff]
    %v2297 = vld [vmem:[#allocation7 + $0x698] sm:$0xff]
    %v2298 = vld [vmem:[#allocation7 + $0x6a0] sm:$0xff]
    %v2299 = vld [vmem:[#allocation7 + $0x6a8] sm:$0xff]
    %v2300 = vld [vmem:[#allocation7 + $0x6b0] sm:$0xff]
    %v2301 = vld [vmem:[#allocation7 + $0x6b8] sm:$0xff]
    %v2302 = vld [vmem:[#allocation7 + $0x6c0] sm:$0xff]
    %v2303 = vld [vmem:[#allocation7 + $0x6c8] sm:$0xff]
    %v2304 = vld [vmem:[#allocation7 + $0x6d0] sm:$0xff]
    %v2305 = vld [vmem:[#allocation7 + $0x6d8] sm:$0xff]
    %v2306 = vld [vmem:[#allocation7 + $0x6e0] sm:$0xff]
    %v2307 = vld [vmem:[#allocation7 + $0x6e8] sm:$0xff]
    %v2308 = vld [vmem:[#allocation7 + $0x6f0] sm:$0xff]
    %v2309 = vld [vmem:[#allocation7 + $0x6f8] sm:$0xff]
    %v2310 = vld [vmem:[#allocation7 + $0x700] sm:$0xff]
    %v2311 = vld [vmem:[#allocation7 + $0x708] sm:$0xff]
    %v2312 = vld [vmem:[#allocation7 + $0x710] sm:$0xff]
    %v2313 = vld [vmem:[#allocation7 + $0x718] sm:$0xff]
    %v2314 = vld [vmem:[#allocation7 + $0x720] sm:$0xff]
    %v2315 = vld [vmem:[#allocation7 + $0x728] sm:$0xff]
    %v2316 = vld [vmem:[#allocation7 + $0x730] sm:$0xff]
    %v2317 = vld [vmem:[#allocation7 + $0x738] sm:$0xff]
    %v2318 = vld [vmem:[#allocation7 + $0x740] sm:$0xff]
    %v2319 = vld [vmem:[#allocation7 + $0x748] sm:$0xff]
    %v2320 = vld [vmem:[#allocation7 + $0x750] sm:$0xff]
    %v2321 = vld [vmem:[#allocation7 + $0x758] sm:$0xff]
    %v2322 = vld [vmem:[#allocation7 + $0x760] sm:$0xff]
    %v2323 = vld [vmem:[#allocation7 + $0x768] sm:$0xff]
    %v2324 = vld [vmem:[#allocation7 + $0x770] sm:$0xff]
    %v2325 = vld [vmem:[#allocation7 + $0x778] sm:$0xff]
    %v2326 = vld [vmem:[#allocation7 + $0x780] sm:$0xff]
    %v2327 = vld [vmem:[#allocation7 + $0x788] sm:$0xff]
    %v2328 = vld [vmem:[#allocation7 + $0x790] sm:$0xff]
    %v2329 = vld [vmem:[#allocation7 + $0x798] sm:$0xff]
    %v2330 = vld [vmem:[#allocation7 + $0x7a0] sm:$0xff]
    %v2331 = vld [vmem:[#allocation7 + $0x7a8] sm:$0xff]
    %v2332 = vld [vmem:[#allocation7 + $0x7b0] sm:$0xff]
    %v2333 = vld [vmem:[#allocation7 + $0x7b8] sm:$0xff]
    %v2334 = vld [vmem:[#allocation7 + $0x7c0] sm:$0xff]
    %v2335 = vld [vmem:[#allocation7 + $0x7c8] sm:$0xff]
    %v2336 = vld [vmem:[#allocation7 + $0x7d0] sm:$0xff]
    %v2337 = vld [vmem:[#allocation7 + $0x7d8] sm:$0xff]
    %v2338 = vld [vmem:[#allocation7 + $0x7e0] sm:$0xff]
    %v2339 = vld [vmem:[#allocation7 + $0x7e8] sm:$0xff]
    %v2340 = vld [vmem:[#allocation7 + $0x7f0] sm:$0xff]
    %v2341 = vld [vmem:[#allocation7 + $0x7f8] sm:$0xff]
    %v2342 = vld [vmem:[%s4] sm:$0xff]
    %v2343 = vld [vmem:[%s4 + $0x8] sm:$0xff]
    %v2344 = vld [vmem:[%s4 + $0x10] sm:$0xff]
    %v2345 = vld [vmem:[%s4 + $0x18] sm:$0xff]
    %v2346 = vld [vmem:[%s4 + $0x20] sm:$0xff]
    %v2347 = vld [vmem:[%s4 + $0x28] sm:$0xff]
    %v2348 = vld [vmem:[%s4 + $0x30] sm:$0xff]
    %v2349 = vld [vmem:[%s4 + $0x38] sm:$0xff]
    %v2350 = vld [vmem:[%s4 + $0x40] sm:$0xff]
    %v2351 = vld [vmem:[%s4 + $0x48] sm:$0xff]
    %v2352 = vld [vmem:[%s4 + $0x50] sm:$0xff]
    %v2353 = vld [vmem:[%s4 + $0x58] sm:$0xff]
    %v2354 = vld [vmem:[%s4 + $0x60] sm:$0xff]
    %v2355 = vld [vmem:[%s4 + $0x68] sm:$0xff]
    %v2356 = vld [vmem:[%s4 + $0x70] sm:$0xff]
    %v2357 = vld [vmem:[%s4 + $0x78] sm:$0xff]
    %v2358 = vld [vmem:[%s4 + $0x80] sm:$0xff]
    %v2359 = vld [vmem:[%s4 + $0x88] sm:$0xff]
    %v2360 = vld [vmem:[%s4 + $0x90] sm:$0xff]
    %v2361 = vld [vmem:[%s4 + $0x98] sm:$0xff]
    %v2362 = vld [vmem:[%s4 + $0xa0] sm:$0xff]
    %v2363 = vld [vmem:[%s4 + $0xa8] sm:$0xff]
    %v2364 = vld [vmem:[%s4 + $0xb0] sm:$0xff]
    %v2365 = vld [vmem:[%s4 + $0xb8] sm:$0xff]
    %v2366 = vld [vmem:[%s4 + $0xc0] sm:$0xff]
    %v2367 = vld [vmem:[%s4 + $0xc8] sm:$0xff]
    %v2368 = vld [vmem:[%s4 + $0xd0] sm:$0xff]
    %v2369 = vld [vmem:[%s4 + $0xd8] sm:$0xff]
    %v2370 = vld [vmem:[%s4 + $0xe0] sm:$0xff]
    %v2371 = vld [vmem:[%s4 + $0xe8] sm:$0xff]
    %v2372 = vld [vmem:[%s4 + $0xf0] sm:$0xff]
    %v2373 = vld [vmem:[%s4 + $0xf8] sm:$0xff]
    %v2374 = vld [vmem:[%s4 + $0x100] sm:$0xff]
    %v2375 = vld [vmem:[%s4 + $0x108] sm:$0xff]
    %v2376 = vld [vmem:[%s4 + $0x110] sm:$0xff]
    %v2377 = vld [vmem:[%s4 + $0x118] sm:$0xff]
    %v2378 = vld [vmem:[%s4 + $0x120] sm:$0xff]
    %v2379 = vld [vmem:[%s4 + $0x128] sm:$0xff]
    %v2380 = vld [vmem:[%s4 + $0x130] sm:$0xff]
    %v2381 = vld [vmem:[%s4 + $0x138] sm:$0xff]
    %v2382 = vld [vmem:[%s4 + $0x140] sm:$0xff]
    %v2383 = vld [vmem:[%s4 + $0x148] sm:$0xff]
    %v2384 = vld [vmem:[%s4 + $0x150] sm:$0xff]
    %v2385 = vld [vmem:[%s4 + $0x158] sm:$0xff]
    %v2386 = vld [vmem:[%s4 + $0x160] sm:$0xff]
    %v2387 = vld [vmem:[%s4 + $0x168] sm:$0xff]
    %v2388 = vld [vmem:[%s4 + $0x170] sm:$0xff]
    %v2389 = vld [vmem:[%s4 + $0x178] sm:$0xff]
    %v2390 = vld [vmem:[%s4 + $0x180] sm:$0xff]
    %v2391 = vld [vmem:[%s4 + $0x188] sm:$0xff]
    %v2392 = vld [vmem:[%s4 + $0x190] sm:$0xff]
    %v2393 = vld [vmem:[%s4 + $0x198] sm:$0xff]
    %v2394 = vld [vmem:[%s4 + $0x1a0] sm:$0xff]
    %v2395 = vld [vmem:[%s4 + $0x1a8] sm:$0xff]
    %v2396 = vld [vmem:[%s4 + $0x1b0] sm:$0xff]
    %v2397 = vld [vmem:[%s4 + $0x1b8] sm:$0xff]
    %v2398 = vld [vmem:[%s4 + $0x1c0] sm:$0xff]
    %v2399 = vld [vmem:[%s4 + $0x1c8] sm:$0xff]
    %v2400 = vld [vmem:[%s4 + $0x1d0] sm:$0xff]
    %v2401 = vld [vmem:[%s4 + $0x1d8] sm:$0xff]
    %v2402 = vld [vmem:[%s4 + $0x1e0] sm:$0xff]
    %v2403 = vld [vmem:[%s4 + $0x1e8] sm:$0xff]
    %v2404 = vld [vmem:[%s4 + $0x1f0] sm:$0xff]
    %v2405 = vld [vmem:[%s4 + $0x1f8] sm:$0xff]
    %2407 = vset.pattern.permute.xlu0 0
    %2408 = vperm.xlu0 %2407, %v2342
    %v2409 = vpop.permute.xlu0 %2408
    %2412 = vset.pattern.permute.xlu0 0
    %2413 = vperm.xlu0 %2412, %v2343
    %v2414 = vpop.permute.xlu0 %2413
    %2417 = vset.pattern.permute.xlu0 0
    %2418 = vperm.xlu0 %2417, %v2344
    %v2419 = vpop.permute.xlu0 %2418
    %2422 = vset.pattern.permute.xlu0 0
    %2423 = vperm.xlu0 %2422, %v2345
    %v2424 = vpop.permute.xlu0 %2423
    %2427 = vset.pattern.permute.xlu0 0
    %2428 = vperm.xlu0 %2427, %v2346
    %v2429 = vpop.permute.xlu0 %2428
    %2432 = vset.pattern.permute.xlu0 0
    %2433 = vperm.xlu0 %2432, %v2347
    %v2434 = vpop.permute.xlu0 %2433
    %2437 = vset.pattern.permute.xlu0 0
    %2438 = vperm.xlu0 %2437, %v2348
    %v2439 = vpop.permute.xlu0 %2438
    %2442 = vset.pattern.permute.xlu0 0
    %2443 = vperm.xlu0 %2442, %v2349
    %v2444 = vpop.permute.xlu0 %2443
    %2447 = vset.pattern.permute.xlu0 0
    %2448 = vperm.xlu0 %2447, %v2350
    %v2449 = vpop.permute.xlu0 %2448
    %2452 = vset.pattern.permute.xlu0 0
    %2453 = vperm.xlu0 %2452, %v2351
    %v2454 = vpop.permute.xlu0 %2453
    %2457 = vset.pattern.permute.xlu0 0
    %2458 = vperm.xlu0 %2457, %v2352
    %v2459 = vpop.permute.xlu0 %2458
    %2462 = vset.pattern.permute.xlu0 0
    %2463 = vperm.xlu0 %2462, %v2353
    %v2464 = vpop.permute.xlu0 %2463
    %2467 = vset.pattern.permute.xlu0 0
    %2468 = vperm.xlu0 %2467, %v2354
    %v2469 = vpop.permute.xlu0 %2468
    %2472 = vset.pattern.permute.xlu0 0
    %2473 = vperm.xlu0 %2472, %v2355
    %v2474 = vpop.permute.xlu0 %2473
    %2477 = vset.pattern.permute.xlu0 0
    %2478 = vperm.xlu0 %2477, %v2356
    %v2479 = vpop.permute.xlu0 %2478
    %2482 = vset.pattern.permute.xlu0 0
    %2483 = vperm.xlu0 %2482, %v2357
    %v2484 = vpop.permute.xlu0 %2483
    %2487 = vset.pattern.permute.xlu0 0
    %2488 = vperm.xlu0 %2487, %v2358
    %v2489 = vpop.permute.xlu0 %2488
    %2492 = vset.pattern.permute.xlu0 0
    %2493 = vperm.xlu0 %2492, %v2359
    %v2494 = vpop.permute.xlu0 %2493
    %2497 = vset.pattern.permute.xlu0 0
    %2498 = vperm.xlu0 %2497, %v2360
    %v2499 = vpop.permute.xlu0 %2498
    %2502 = vset.pattern.permute.xlu0 0
    %2503 = vperm.xlu0 %2502, %v2361
    %v2504 = vpop.permute.xlu0 %2503
    %2507 = vset.pattern.permute.xlu0 0
    %2508 = vperm.xlu0 %2507, %v2362
    %v2509 = vpop.permute.xlu0 %2508
    %2512 = vset.pattern.permute.xlu0 0
    %2513 = vperm.xlu0 %2512, %v2363
    %v2514 = vpop.permute.xlu0 %2513
    %2517 = vset.pattern.permute.xlu0 0
    %2518 = vperm.xlu0 %2517, %v2364
    %v2519 = vpop.permute.xlu0 %2518
    %2522 = vset.pattern.permute.xlu0 0
    %2523 = vperm.xlu0 %2522, %v2365
    %v2524 = vpop.permute.xlu0 %2523
    %2527 = vset.pattern.permute.xlu0 0
    %2528 = vperm.xlu0 %2527, %v2366
    %v2529 = vpop.permute.xlu0 %2528
    %2532 = vset.pattern.permute.xlu0 0
    %2533 = vperm.xlu0 %2532, %v2367
    %v2534 = vpop.permute.xlu0 %2533
    %2537 = vset.pattern.permute.xlu0 0
    %2538 = vperm.xlu0 %2537, %v2368
    %v2539 = vpop.permute.xlu0 %2538
    %2542 = vset.pattern.permute.xlu0 0
    %2543 = vperm.xlu0 %2542, %v2369
    %v2544 = vpop.permute.xlu0 %2543
    %2547 = vset.pattern.permute.xlu0 0
    %2548 = vperm.xlu0 %2547, %v2370
    %v2549 = vpop.permute.xlu0 %2548
    %2552 = vset.pattern.permute.xlu0 0
    %2553 = vperm.xlu0 %2552, %v2371
    %v2554 = vpop.permute.xlu0 %2553
    %2557 = vset.pattern.permute.xlu0 0
    %2558 = vperm.xlu0 %2557, %v2372
    %v2559 = vpop.permute.xlu0 %2558
    %2562 = vset.pattern.permute.xlu0 0
    %2563 = vperm.xlu0 %2562, %v2373
    %v2564 = vpop.permute.xlu0 %2563
    %2567 = vset.pattern.permute.xlu0 0
    %2568 = vperm.xlu0 %2567, %v2374
    %v2569 = vpop.permute.xlu0 %2568
    %2572 = vset.pattern.permute.xlu0 0
    %2573 = vperm.xlu0 %2572, %v2375
    %v2574 = vpop.permute.xlu0 %2573
    %2577 = vset.pattern.permute.xlu0 0
    %2578 = vperm.xlu0 %2577, %v2376
    %v2579 = vpop.permute.xlu0 %2578
    %2582 = vset.pattern.permute.xlu0 0
    %2583 = vperm.xlu0 %2582, %v2377
    %v2584 = vpop.permute.xlu0 %2583
    %2587 = vset.pattern.permute.xlu0 0
    %2588 = vperm.xlu0 %2587, %v2378
    %v2589 = vpop.permute.xlu0 %2588
    %2592 = vset.pattern.permute.xlu0 0
    %2593 = vperm.xlu0 %2592, %v2379
    %v2594 = vpop.permute.xlu0 %2593
    %2597 = vset.pattern.permute.xlu0 0
    %2598 = vperm.xlu0 %2597, %v2380
    %v2599 = vpop.permute.xlu0 %2598
    %2602 = vset.pattern.permute.xlu0 0
    %2603 = vperm.xlu0 %2602, %v2381
    %v2604 = vpop.permute.xlu0 %2603
    %2607 = vset.pattern.permute.xlu0 0
    %2608 = vperm.xlu0 %2607, %v2382
    %v2609 = vpop.permute.xlu0 %2608
    %2612 = vset.pattern.permute.xlu0 0
    %2613 = vperm.xlu0 %2612, %v2383
    %v2614 = vpop.permute.xlu0 %2613
    %2617 = vset.pattern.permute.xlu0 0
    %2618 = vperm.xlu0 %2617, %v2384
    %v2619 = vpop.permute.xlu0 %2618
    %2622 = vset.pattern.permute.xlu0 0
    %2623 = vperm.xlu0 %2622, %v2385
    %v2624 = vpop.permute.xlu0 %2623
    %2627 = vset.pattern.permute.xlu0 0
    %2628 = vperm.xlu0 %2627, %v2386
    %v2629 = vpop.permute.xlu0 %2628
    %2632 = vset.pattern.permute.xlu0 0
    %2633 = vperm.xlu0 %2632, %v2387
    %v2634 = vpop.permute.xlu0 %2633
    %2637 = vset.pattern.permute.xlu0 0
    %2638 = vperm.xlu0 %2637, %v2388
    %v2639 = vpop.permute.xlu0 %2638
    %2642 = vset.pattern.permute.xlu0 0
    %2643 = vperm.xlu0 %2642, %v2389
    %v2644 = vpop.permute.xlu0 %2643
    %2647 = vset.pattern.permute.xlu0 0
    %2648 = vperm.xlu0 %2647, %v2390
    %v2649 = vpop.permute.xlu0 %2648
    %2652 = vset.pattern.permute.xlu0 0
    %2653 = vperm.xlu0 %2652, %v2391
    %v2654 = vpop.permute.xlu0 %2653
    %2657 = vset.pattern.permute.xlu0 0
    %2658 = vperm.xlu0 %2657, %v2392
    %v2659 = vpop.permute.xlu0 %2658
    %2662 = vset.pattern.permute.xlu0 0
    %2663 = vperm.xlu0 %2662, %v2393
    %v2664 = vpop.permute.xlu0 %2663
    %2667 = vset.pattern.permute.xlu0 0
    %2668 = vperm.xlu0 %2667, %v2394
    %v2669 = vpop.permute.xlu0 %2668
    %2672 = vset.pattern.permute.xlu0 0
    %2673 = vperm.xlu0 %2672, %v2395
    %v2674 = vpop.permute.xlu0 %2673
    %2677 = vset.pattern.permute.xlu0 0
    %2678 = vperm.xlu0 %2677, %v2396
    %v2679 = vpop.permute.xlu0 %2678
    %2682 = vset.pattern.permute.xlu0 0
    %2683 = vperm.xlu0 %2682, %v2397
    %v2684 = vpop.permute.xlu0 %2683
    %2687 = vset.pattern.permute.xlu0 0
    %2688 = vperm.xlu0 %2687, %v2398
    %v2689 = vpop.permute.xlu0 %2688
    %2692 = vset.pattern.permute.xlu0 0
    %2693 = vperm.xlu0 %2692, %v2399
    %v2694 = vpop.permute.xlu0 %2693
    %2697 = vset.pattern.permute.xlu0 0
    %2698 = vperm.xlu0 %2697, %v2400
    %v2699 = vpop.permute.xlu0 %2698
    %2702 = vset.pattern.permute.xlu0 0
    %2703 = vperm.xlu0 %2702, %v2401
    %v2704 = vpop.permute.xlu0 %2703
    %2707 = vset.pattern.permute.xlu0 0
    %2708 = vperm.xlu0 %2707, %v2402
    %v2709 = vpop.permute.xlu0 %2708
    %2712 = vset.pattern.permute.xlu0 0
    %2713 = vperm.xlu0 %2712, %v2403
    %v2714 = vpop.permute.xlu0 %2713
    %2717 = vset.pattern.permute.xlu0 0
    %2718 = vperm.xlu0 %2717, %v2404
    %v2719 = vpop.permute.xlu0 %2718
    %2722 = vset.pattern.permute.xlu0 0
    %2723 = vperm.xlu0 %2722, %v2405
    %v2724 = vpop.permute.xlu0 %2723
    %2726 = vmatpush.msra.mxu0 %v2037
    %2727 = vmatpush.msra.mxu0 %v2036
    %2728 = vmatpush.msra.mxu0 %v2035
    %2729 = vmatpush.msra.mxu0 %v2034
    %2730 = vmatpush.msra.mxu0 %v2033
    %2731 = vmatpush.msra.mxu0 %v2032
    %2732 = vmatpush.msra.mxu0 %v2031
    %2733 = vmatpush.msra.mxu0 %v2030
    %2734 = vmatpush.msra.mxu0 %v2029
    %2735 = vmatpush.msra.mxu0 %v2028
    %2736 = vmatpush.msra.mxu0 %v2027
    %2737 = vmatpush.msra.mxu0 %v2026
    %2738 = vmatpush.msra.mxu0 %v2025
    %2739 = vmatpush.msra.mxu0 %v2024
    %2740 = vmatpush.msra.mxu0 %v2023
    %2741 = vmatpush.msra.mxu0 %v2022
    %2742 = vmatmul.f32.gmra.mxu0 %v2086
    %v2743 = vpop.f32.mrf.mxu0
    %v2744 = vadd.f32 %v2409, %v2743
    %2745 = vmatmul.f32.gmra.mxu0 %v2090
    %v2746 = vpop.f32.mrf.mxu0
    %v2747 = vadd.f32 %v2414, %v2746
    %2748 = vmatmul.f32.gmra.mxu0 %v2094
    %v2749 = vpop.f32.mrf.mxu0
    %v2750 = vadd.f32 %v2419, %v2749
    %2751 = vmatmul.f32.gmra.mxu0 %v2098
    %v2752 = vpop.f32.mrf.mxu0
    %v2753 = vadd.f32 %v2424, %v2752
    %2754 = vmatmul.f32.gmra.mxu0 %v2102
    %v2755 = vpop.f32.mrf.mxu0
    %v2756 = vadd.f32 %v2429, %v2755
    %2757 = vmatmul.f32.gmra.mxu0 %v2106
    %v2758 = vpop.f32.mrf.mxu0
    %v2759 = vadd.f32 %v2434, %v2758
    %2760 = vmatmul.f32.gmra.mxu0 %v2110
    %v2761 = vpop.f32.mrf.mxu0
    %v2762 = vadd.f32 %v2439, %v2761
    %2763 = vmatmul.f32.gmra.mxu0 %v2114
    %v2764 = vpop.f32.mrf.mxu0
    %v2765 = vadd.f32 %v2444, %v2764
    %2766 = vmatmul.f32.gmra.mxu0 %v2118
    %v2767 = vpop.f32.mrf.mxu0
    %v2768 = vadd.f32 %v2449, %v2767
    %2769 = vmatmul.f32.gmra.mxu0 %v2122
    %v2770 = vpop.f32.mrf.mxu0
    %v2771 = vadd.f32 %v2454, %v2770
    %2772 = vmatmul.f32.gmra.mxu0 %v2126
    %v2773 = vpop.f32.mrf.mxu0
    %v2774 = vadd.f32 %v2459, %v2773
    %2775 = vmatmul.f32.gmra.mxu0 %v2130
    %v2776 = vpop.f32.mrf.mxu0
    %v2777 = vadd.f32 %v2464, %v2776
    %2778 = vmatmul.f32.gmra.mxu0 %v2134
    %v2779 = vpop.f32.mrf.mxu0
    %v2780 = vadd.f32 %v2469, %v2779
    %2781 = vmatmul.f32.gmra.mxu0 %v2138
    %v2782 = vpop.f32.mrf.mxu0
    %v2783 = vadd.f32 %v2474, %v2782
    %2784 = vmatmul.f32.gmra.mxu0 %v2142
    %v2785 = vpop.f32.mrf.mxu0
    %v2786 = vadd.f32 %v2479, %v2785
    %2787 = vmatmul.f32.gmra.mxu0 %v2146
    %v2788 = vpop.f32.mrf.mxu0
    %v2789 = vadd.f32 %v2484, %v2788
    %2790 = vmatmul.f32.gmra.mxu0 %v2150
    %v2791 = vpop.f32.mrf.mxu0
    %v2792 = vadd.f32 %v2489, %v2791
    %2793 = vmatmul.f32.gmra.mxu0 %v2154
    %v2794 = vpop.f32.mrf.mxu0
    %v2795 = vadd.f32 %v2494, %v2794
    %2796 = vmatmul.f32.gmra.mxu0 %v2158
    %v2797 = vpop.f32.mrf.mxu0
    %v2798 = vadd.f32 %v2499, %v2797
    %2799 = vmatmul.f32.gmra.mxu0 %v2162
    %v2800 = vpop.f32.mrf.mxu0
    %v2801 = vadd.f32 %v2504, %v2800
    %2802 = vmatmul.f32.gmra.mxu0 %v2166
    %v2803 = vpop.f32.mrf.mxu0
    %v2804 = vadd.f32 %v2509, %v2803
    %2805 = vmatmul.f32.gmra.mxu0 %v2170
    %v2806 = vpop.f32.mrf.mxu0
    %v2807 = vadd.f32 %v2514, %v2806
    %2808 = vmatmul.f32.gmra.mxu0 %v2174
    %v2809 = vpop.f32.mrf.mxu0
    %v2810 = vadd.f32 %v2519, %v2809
    %2811 = vmatmul.f32.gmra.mxu0 %v2178
    %v2812 = vpop.f32.mrf.mxu0
    %v2813 = vadd.f32 %v2524, %v2812
    %2814 = vmatmul.f32.gmra.mxu0 %v2182
    %v2815 = vpop.f32.mrf.mxu0
    %v2816 = vadd.f32 %v2529, %v2815
    %2817 = vmatmul.f32.gmra.mxu0 %v2186
    %v2818 = vpop.f32.mrf.mxu0
    %v2819 = vadd.f32 %v2534, %v2818
    %2820 = vmatmul.f32.gmra.mxu0 %v2190
    %v2821 = vpop.f32.mrf.mxu0
    %v2822 = vadd.f32 %v2539, %v2821
    %2823 = vmatmul.f32.gmra.mxu0 %v2194
    %v2824 = vpop.f32.mrf.mxu0
    %v2825 = vadd.f32 %v2544, %v2824
    %2826 = vmatmul.f32.gmra.mxu0 %v2198
    %v2827 = vpop.f32.mrf.mxu0
    %v2828 = vadd.f32 %v2549, %v2827
    %2829 = vmatmul.f32.gmra.mxu0 %v2202
    %v2830 = vpop.f32.mrf.mxu0
    %v2831 = vadd.f32 %v2554, %v2830
    %2832 = vmatmul.f32.gmra.mxu0 %v2206
    %v2833 = vpop.f32.mrf.mxu0
    %v2834 = vadd.f32 %v2559, %v2833
    %2835 = vmatmul.f32.gmra.mxu0 %v2210
    %v2836 = vpop.f32.mrf.mxu0
    %v2837 = vadd.f32 %v2564, %v2836
    %2838 = vmatmul.f32.gmra.mxu0 %v2214
    %v2839 = vpop.f32.mrf.mxu0
    %v2840 = vadd.f32 %v2569, %v2839
    %2841 = vmatmul.f32.gmra.mxu0 %v2218
    %v2842 = vpop.f32.mrf.mxu0
    %v2843 = vadd.f32 %v2574, %v2842
    %2844 = vmatmul.f32.gmra.mxu0 %v2222
    %v2845 = vpop.f32.mrf.mxu0
    %v2846 = vadd.f32 %v2579, %v2845
    %2847 = vmatmul.f32.gmra.mxu0 %v2226
    %v2848 = vpop.f32.mrf.mxu0
    %v2849 = vadd.f32 %v2584, %v2848
    %2850 = vmatmul.f32.gmra.mxu0 %v2230
    %v2851 = vpop.f32.mrf.mxu0
    %v2852 = vadd.f32 %v2589, %v2851
    %2853 = vmatmul.f32.gmra.mxu0 %v2234
    %v2854 = vpop.f32.mrf.mxu0
    %v2855 = vadd.f32 %v2594, %v2854
    %2856 = vmatmul.f32.gmra.mxu0 %v2238
    %v2857 = vpop.f32.mrf.mxu0
    %v2858 = vadd.f32 %v2599, %v2857
    %2859 = vmatmul.f32.gmra.mxu0 %v2242
    %v2860 = vpop.f32.mrf.mxu0
    %v2861 = vadd.f32 %v2604, %v2860
    %2862 = vmatmul.f32.gmra.mxu0 %v2246
    %v2863 = vpop.f32.mrf.mxu0
    %v2864 = vadd.f32 %v2609, %v2863
    %2865 = vmatmul.f32.gmra.mxu0 %v2250
    %v2866 = vpop.f32.mrf.mxu0
    %v2867 = vadd.f32 %v2614, %v2866
    %2868 = vmatmul.f32.gmra.mxu0 %v2254
    %v2869 = vpop.f32.mrf.mxu0
    %v2870 = vadd.f32 %v2619, %v2869
    %2871 = vmatmul.f32.gmra.mxu0 %v2258
    %v2872 = vpop.f32.mrf.mxu0
    %v2873 = vadd.f32 %v2624, %v2872
    %2874 = vmatmul.f32.gmra.mxu0 %v2262
    %v2875 = vpop.f32.mrf.mxu0
    %v2876 = vadd.f32 %v2629, %v2875
    %2877 = vmatmul.f32.gmra.mxu0 %v2266
    %v2878 = vpop.f32.mrf.mxu0
    %v2879 = vadd.f32 %v2634, %v2878
    %2880 = vmatmul.f32.gmra.mxu0 %v2270
    %v2881 = vpop.f32.mrf.mxu0
    %v2882 = vadd.f32 %v2639, %v2881
    %2883 = vmatmul.f32.gmra.mxu0 %v2274
    %v2884 = vpop.f32.mrf.mxu0
    %v2885 = vadd.f32 %v2644, %v2884
    %2886 = vmatmul.f32.gmra.mxu0 %v2278
    %v2887 = vpop.f32.mrf.mxu0
    %v2888 = vadd.f32 %v2649, %v2887
    %2889 = vmatmul.f32.gmra.mxu0 %v2282
    %v2890 = vpop.f32.mrf.mxu0
    %v2891 = vadd.f32 %v2654, %v2890
    %2892 = vmatmul.f32.gmra.mxu0 %v2286
    %v2893 = vpop.f32.mrf.mxu0
    %v2894 = vadd.f32 %v2659, %v2893
    %2895 = vmatmul.f32.gmra.mxu0 %v2290
    %v2896 = vpop.f32.mrf.mxu0
    %v2897 = vadd.f32 %v2664, %v2896
    %2898 = vmatmul.f32.gmra.mxu0 %v2294
    %v2899 = vpop.f32.mrf.mxu0
    %v2900 = vadd.f32 %v2669, %v2899
    %2901 = vmatmul.f32.gmra.mxu0 %v2298
    %v2902 = vpop.f32.mrf.mxu0
    %v2903 = vadd.f32 %v2674, %v2902
    %2904 = vmatmul.f32.gmra.mxu0 %v2302
    %v2905 = vpop.f32.mrf.mxu0
    %v2906 = vadd.f32 %v2679, %v2905
    %2907 = vmatmul.f32.gmra.mxu0 %v2306
    %v2908 = vpop.f32.mrf.mxu0
    %v2909 = vadd.f32 %v2684, %v2908
    %2910 = vmatmul.f32.gmra.mxu0 %v2310
    %v2911 = vpop.f32.mrf.mxu0
    %v2912 = vadd.f32 %v2689, %v2911
    %2913 = vmatmul.f32.gmra.mxu0 %v2314
    %v2914 = vpop.f32.mrf.mxu0
    %v2915 = vadd.f32 %v2694, %v2914
    %2916 = vmatmul.f32.gmra.mxu0 %v2318
    %v2917 = vpop.f32.mrf.mxu0
    %v2918 = vadd.f32 %v2699, %v2917
    %2919 = vmatmul.f32.gmra.mxu0 %v2322
    %v2920 = vpop.f32.mrf.mxu0
    %v2921 = vadd.f32 %v2704, %v2920
    %2922 = vmatmul.f32.gmra.mxu0 %v2326
    %v2923 = vpop.f32.mrf.mxu0
    %v2924 = vadd.f32 %v2709, %v2923
    %2925 = vmatmul.f32.gmra.mxu0 %v2330
    %v2926 = vpop.f32.mrf.mxu0
    %v2927 = vadd.f32 %v2714, %v2926
    %2928 = vmatmul.f32.gmra.mxu0 %v2334
    %v2929 = vpop.f32.mrf.mxu0
    %v2930 = vadd.f32 %v2719, %v2929
    %2931 = vmatmul.f32.gmra.mxu0 %v2338
    %v2932 = vpop.f32.mrf.mxu0
    %v2933 = vadd.f32 %v2724, %v2932
    %2934 = vdwg.mxu0
    %2935 = vmatpush.msra.mxu0 %v2053
    %2936 = vmatpush.msra.mxu0 %v2052
    %2937 = vmatpush.msra.mxu0 %v2051
    %2938 = vmatpush.msra.mxu0 %v2050
    %2939 = vmatpush.msra.mxu0 %v2049
    %2940 = vmatpush.msra.mxu0 %v2048
    %2941 = vmatpush.msra.mxu0 %v2047
    %2942 = vmatpush.msra.mxu0 %v2046
    %2943 = vmatpush.msra.mxu0 %v2045
    %2944 = vmatpush.msra.mxu0 %v2044
    %2945 = vmatpush.msra.mxu0 %v2043
    %2946 = vmatpush.msra.mxu0 %v2042
    %2947 = vmatpush.msra.mxu0 %v2041
    %2948 = vmatpush.msra.mxu0 %v2040
    %2949 = vmatpush.msra.mxu0 %v2039
    %2950 = vmatpush.msra.mxu0 %v2038
    %2951 = vmatmul.f32.gmra.mxu0 %v2087
    %v2952 = vpop.f32.mrf.mxu0
    %v2953 = vadd.f32 %v2744, %v2952
    %2954 = vmatmul.f32.gmra.mxu0 %v2091
    %v2955 = vpop.f32.mrf.mxu0
    %v2956 = vadd.f32 %v2747, %v2955
    %2957 = vmatmul.f32.gmra.mxu0 %v2095
    %v2958 = vpop.f32.mrf.mxu0
    %v2959 = vadd.f32 %v2750, %v2958
    %2960 = vmatmul.f32.gmra.mxu0 %v2099
    %v2961 = vpop.f32.mrf.mxu0
    %v2962 = vadd.f32 %v2753, %v2961
    %2963 = vmatmul.f32.gmra.mxu0 %v2103
    %v2964 = vpop.f32.mrf.mxu0
    %v2965 = vadd.f32 %v2756, %v2964
    %2966 = vmatmul.f32.gmra.mxu0 %v2107
    %v2967 = vpop.f32.mrf.mxu0
    %v2968 = vadd.f32 %v2759, %v2967
    %2969 = vmatmul.f32.gmra.mxu0 %v2111
    %v2970 = vpop.f32.mrf.mxu0
    %v2971 = vadd.f32 %v2762, %v2970
    %2972 = vmatmul.f32.gmra.mxu0 %v2115
    %v2973 = vpop.f32.mrf.mxu0
    %v2974 = vadd.f32 %v2765, %v2973
    %2975 = vmatmul.f32.gmra.mxu0 %v2119
    %v2976 = vpop.f32.mrf.mxu0
    %v2977 = vadd.f32 %v2768, %v2976
    %2978 = vmatmul.f32.gmra.mxu0 %v2123
    %v2979 = vpop.f32.mrf.mxu0
    %v2980 = vadd.f32 %v2771, %v2979
    %2981 = vmatmul.f32.gmra.mxu0 %v2127
    %v2982 = vpop.f32.mrf.mxu0
    %v2983 = vadd.f32 %v2774, %v2982
    %2984 = vmatmul.f32.gmra.mxu0 %v2131
    %v2985 = vpop.f32.mrf.mxu0
    %v2986 = vadd.f32 %v2777, %v2985
    %2987 = vmatmul.f32.gmra.mxu0 %v2135
    %v2988 = vpop.f32.mrf.mxu0
    %v2989 = vadd.f32 %v2780, %v2988
    %2990 = vmatmul.f32.gmra.mxu0 %v2139
    %v2991 = vpop.f32.mrf.mxu0
    %v2992 = vadd.f32 %v2783, %v2991
    %2993 = vmatmul.f32.gmra.mxu0 %v2143
    %v2994 = vpop.f32.mrf.mxu0
    %v2995 = vadd.f32 %v2786, %v2994
    %2996 = vmatmul.f32.gmra.mxu0 %v2147
    %v2997 = vpop.f32.mrf.mxu0
    %v2998 = vadd.f32 %v2789, %v2997
    %2999 = vmatmul.f32.gmra.mxu0 %v2151
    %v3000 = vpop.f32.mrf.mxu0
    %v3001 = vadd.f32 %v2792, %v3000
    %3002 = vmatmul.f32.gmra.mxu0 %v2155
    %v3003 = vpop.f32.mrf.mxu0
    %v3004 = vadd.f32 %v2795, %v3003
    %3005 = vmatmul.f32.gmra.mxu0 %v2159
    %v3006 = vpop.f32.mrf.mxu0
    %v3007 = vadd.f32 %v2798, %v3006
    %3008 = vmatmul.f32.gmra.mxu0 %v2163
    %v3009 = vpop.f32.mrf.mxu0
    %v3010 = vadd.f32 %v2801, %v3009
    %3011 = vmatmul.f32.gmra.mxu0 %v2167
    %v3012 = vpop.f32.mrf.mxu0
    %v3013 = vadd.f32 %v2804, %v3012
    %3014 = vmatmul.f32.gmra.mxu0 %v2171
    %v3015 = vpop.f32.mrf.mxu0
    %v3016 = vadd.f32 %v2807, %v3015
    %3017 = vmatmul.f32.gmra.mxu0 %v2175
    %v3018 = vpop.f32.mrf.mxu0
    %v3019 = vadd.f32 %v2810, %v3018
    %3020 = vmatmul.f32.gmra.mxu0 %v2179
    %v3021 = vpop.f32.mrf.mxu0
    %v3022 = vadd.f32 %v2813, %v3021
    %3023 = vmatmul.f32.gmra.mxu0 %v2183
    %v3024 = vpop.f32.mrf.mxu0
    %v3025 = vadd.f32 %v2816, %v3024
    %3026 = vmatmul.f32.gmra.mxu0 %v2187
    %v3027 = vpop.f32.mrf.mxu0
    %v3028 = vadd.f32 %v2819, %v3027
    %3029 = vmatmul.f32.gmra.mxu0 %v2191
    %v3030 = vpop.f32.mrf.mxu0
    %v3031 = vadd.f32 %v2822, %v3030
    %3032 = vmatmul.f32.gmra.mxu0 %v2195
    %v3033 = vpop.f32.mrf.mxu0
    %v3034 = vadd.f32 %v2825, %v3033
    %3035 = vmatmul.f32.gmra.mxu0 %v2199
    %v3036 = vpop.f32.mrf.mxu0
    %v3037 = vadd.f32 %v2828, %v3036
    %3038 = vmatmul.f32.gmra.mxu0 %v2203
    %v3039 = vpop.f32.mrf.mxu0
    %v3040 = vadd.f32 %v2831, %v3039
    %3041 = vmatmul.f32.gmra.mxu0 %v2207
    %v3042 = vpop.f32.mrf.mxu0
    %v3043 = vadd.f32 %v2834, %v3042
    %3044 = vmatmul.f32.gmra.mxu0 %v2211
    %v3045 = vpop.f32.mrf.mxu0
    %v3046 = vadd.f32 %v2837, %v3045
    %3047 = vmatmul.f32.gmra.mxu0 %v2215
    %v3048 = vpop.f32.mrf.mxu0
    %v3049 = vadd.f32 %v2840, %v3048
    %3050 = vmatmul.f32.gmra.mxu0 %v2219
    %v3051 = vpop.f32.mrf.mxu0
    %v3052 = vadd.f32 %v2843, %v3051
    %3053 = vmatmul.f32.gmra.mxu0 %v2223
    %v3054 = vpop.f32.mrf.mxu0
    %v3055 = vadd.f32 %v2846, %v3054
    %3056 = vmatmul.f32.gmra.mxu0 %v2227
    %v3057 = vpop.f32.mrf.mxu0
    %v3058 = vadd.f32 %v2849, %v3057
    %3059 = vmatmul.f32.gmra.mxu0 %v2231
    %v3060 = vpop.f32.mrf.mxu0
    %v3061 = vadd.f32 %v2852, %v3060
    %3062 = vmatmul.f32.gmra.mxu0 %v2235
    %v3063 = vpop.f32.mrf.mxu0
    %v3064 = vadd.f32 %v2855, %v3063
    %3065 = vmatmul.f32.gmra.mxu0 %v2239
    %v3066 = vpop.f32.mrf.mxu0
    %v3067 = vadd.f32 %v2858, %v3066
    %3068 = vmatmul.f32.gmra.mxu0 %v2243
    %v3069 = vpop.f32.mrf.mxu0
    %v3070 = vadd.f32 %v2861, %v3069
    %3071 = vmatmul.f32.gmra.mxu0 %v2247
    %v3072 = vpop.f32.mrf.mxu0
    %v3073 = vadd.f32 %v2864, %v3072
    %3074 = vmatmul.f32.gmra.mxu0 %v2251
    %v3075 = vpop.f32.mrf.mxu0
    %v3076 = vadd.f32 %v2867, %v3075
    %3077 = vmatmul.f32.gmra.mxu0 %v2255
    %v3078 = vpop.f32.mrf.mxu0
    %v3079 = vadd.f32 %v2870, %v3078
    %3080 = vmatmul.f32.gmra.mxu0 %v2259
    %v3081 = vpop.f32.mrf.mxu0
    %v3082 = vadd.f32 %v2873, %v3081
    %3083 = vmatmul.f32.gmra.mxu0 %v2263
    %v3084 = vpop.f32.mrf.mxu0
    %v3085 = vadd.f32 %v2876, %v3084
    %3086 = vmatmul.f32.gmra.mxu0 %v2267
    %v3087 = vpop.f32.mrf.mxu0
    %v3088 = vadd.f32 %v2879, %v3087
    %3089 = vmatmul.f32.gmra.mxu0 %v2271
    %v3090 = vpop.f32.mrf.mxu0
    %v3091 = vadd.f32 %v2882, %v3090
    %3092 = vmatmul.f32.gmra.mxu0 %v2275
    %v3093 = vpop.f32.mrf.mxu0
    %v3094 = vadd.f32 %v2885, %v3093
    %3095 = vmatmul.f32.gmra.mxu0 %v2279
    %v3096 = vpop.f32.mrf.mxu0
    %v3097 = vadd.f32 %v2888, %v3096
    %3098 = vmatmul.f32.gmra.mxu0 %v2283
    %v3099 = vpop.f32.mrf.mxu0
    %v3100 = vadd.f32 %v2891, %v3099
    %3101 = vmatmul.f32.gmra.mxu0 %v2287
    %v3102 = vpop.f32.mrf.mxu0
    %v3103 = vadd.f32 %v2894, %v3102
    %3104 = vmatmul.f32.gmra.mxu0 %v2291
    %v3105 = vpop.f32.mrf.mxu0
    %v3106 = vadd.f32 %v2897, %v3105
    %3107 = vmatmul.f32.gmra.mxu0 %v2295
    %v3108 = vpop.f32.mrf.mxu0
    %v3109 = vadd.f32 %v2900, %v3108
    %3110 = vmatmul.f32.gmra.mxu0 %v2299
    %v3111 = vpop.f32.mrf.mxu0
    %v3112 = vadd.f32 %v2903, %v3111
    %3113 = vmatmul.f32.gmra.mxu0 %v2303
    %v3114 = vpop.f32.mrf.mxu0
    %v3115 = vadd.f32 %v2906, %v3114
    %3116 = vmatmul.f32.gmra.mxu0 %v2307
    %v3117 = vpop.f32.mrf.mxu0
    %v3118 = vadd.f32 %v2909, %v3117
    %3119 = vmatmul.f32.gmra.mxu0 %v2311
    %v3120 = vpop.f32.mrf.mxu0
    %v3121 = vadd.f32 %v2912, %v3120
    %3122 = vmatmul.f32.gmra.mxu0 %v2315
    %v3123 = vpop.f32.mrf.mxu0
    %v3124 = vadd.f32 %v2915, %v3123
    %3125 = vmatmul.f32.gmra.mxu0 %v2319
    %v3126 = vpop.f32.mrf.mxu0
    %v3127 = vadd.f32 %v2918, %v3126
    %3128 = vmatmul.f32.gmra.mxu0 %v2323
    %v3129 = vpop.f32.mrf.mxu0
    %v3130 = vadd.f32 %v2921, %v3129
    %3131 = vmatmul.f32.gmra.mxu0 %v2327
    %v3132 = vpop.f32.mrf.mxu0
    %v3133 = vadd.f32 %v2924, %v3132
    %3134 = vmatmul.f32.gmra.mxu0 %v2331
    %v3135 = vpop.f32.mrf.mxu0
    %v3136 = vadd.f32 %v2927, %v3135
    %3137 = vmatmul.f32.gmra.mxu0 %v2335
    %v3138 = vpop.f32.mrf.mxu0
    %v3139 = vadd.f32 %v2930, %v3138
    %3140 = vmatmul.f32.gmra.mxu0 %v2339
    %v3141 = vpop.f32.mrf.mxu0
    %v3142 = vadd.f32 %v2933, %v3141
    %3143 = vdwg.mxu0
    %3144 = vmatpush.msra.mxu0 %v2069
    %3145 = vmatpush.msra.mxu0 %v2068
    %3146 = vmatpush.msra.mxu0 %v2067
    %3147 = vmatpush.msra.mxu0 %v2066
    %3148 = vmatpush.msra.mxu0 %v2065
    %3149 = vmatpush.msra.mxu0 %v2064
    %3150 = vmatpush.msra.mxu0 %v2063
    %3151 = vmatpush.msra.mxu0 %v2062
    %3152 = vmatpush.msra.mxu0 %v2061
    %3153 = vmatpush.msra.mxu0 %v2060
    %3154 = vmatpush.msra.mxu0 %v2059
    %3155 = vmatpush.msra.mxu0 %v2058
    %3156 = vmatpush.msra.mxu0 %v2057
    %3157 = vmatpush.msra.mxu0 %v2056
    %3158 = vmatpush.msra.mxu0 %v2055
    %3159 = vmatpush.msra.mxu0 %v2054
    %3160 = vmatmul.f32.gmra.mxu0 %v2088
    %v3161 = vpop.f32.mrf.mxu0
    %v3162 = vadd.f32 %v2953, %v3161
    %3163 = vmatmul.f32.gmra.mxu0 %v2092
    %v3164 = vpop.f32.mrf.mxu0
    %v3165 = vadd.f32 %v2956, %v3164
    %3166 = vmatmul.f32.gmra.mxu0 %v2096
    %v3167 = vpop.f32.mrf.mxu0
    %v3168 = vadd.f32 %v2959, %v3167
    %3169 = vmatmul.f32.gmra.mxu0 %v2100
    %v3170 = vpop.f32.mrf.mxu0
    %v3171 = vadd.f32 %v2962, %v3170
    %3172 = vmatmul.f32.gmra.mxu0 %v2104
    %v3173 = vpop.f32.mrf.mxu0
    %v3174 = vadd.f32 %v2965, %v3173
    %3175 = vmatmul.f32.gmra.mxu0 %v2108
    %v3176 = vpop.f32.mrf.mxu0
    %v3177 = vadd.f32 %v2968, %v3176
    %3178 = vmatmul.f32.gmra.mxu0 %v2112
    %v3179 = vpop.f32.mrf.mxu0
    %v3180 = vadd.f32 %v2971, %v3179
    %3181 = vmatmul.f32.gmra.mxu0 %v2116
    %v3182 = vpop.f32.mrf.mxu0
    %v3183 = vadd.f32 %v2974, %v3182
    %3184 = vmatmul.f32.gmra.mxu0 %v2120
    %v3185 = vpop.f32.mrf.mxu0
    %v3186 = vadd.f32 %v2977, %v3185
    %3187 = vmatmul.f32.gmra.mxu0 %v2124
    %v3188 = vpop.f32.mrf.mxu0
    %v3189 = vadd.f32 %v2980, %v3188
    %3190 = vmatmul.f32.gmra.mxu0 %v2128
    %v3191 = vpop.f32.mrf.mxu0
    %v3192 = vadd.f32 %v2983, %v3191
    %3193 = vmatmul.f32.gmra.mxu0 %v2132
    %v3194 = vpop.f32.mrf.mxu0
    %v3195 = vadd.f32 %v2986, %v3194
    %3196 = vmatmul.f32.gmra.mxu0 %v2136
    %v3197 = vpop.f32.mrf.mxu0
    %v3198 = vadd.f32 %v2989, %v3197
    %3199 = vmatmul.f32.gmra.mxu0 %v2140
    %v3200 = vpop.f32.mrf.mxu0
    %v3201 = vadd.f32 %v2992, %v3200
    %3202 = vmatmul.f32.gmra.mxu0 %v2144
    %v3203 = vpop.f32.mrf.mxu0
    %v3204 = vadd.f32 %v2995, %v3203
    %3205 = vmatmul.f32.gmra.mxu0 %v2148
    %v3206 = vpop.f32.mrf.mxu0
    %v3207 = vadd.f32 %v2998, %v3206
    %3208 = vmatmul.f32.gmra.mxu0 %v2152
    %v3209 = vpop.f32.mrf.mxu0
    %v3210 = vadd.f32 %v3001, %v3209
    %3211 = vmatmul.f32.gmra.mxu0 %v2156
    %v3212 = vpop.f32.mrf.mxu0
    %v3213 = vadd.f32 %v3004, %v3212
    %3214 = vmatmul.f32.gmra.mxu0 %v2160
    %v3215 = vpop.f32.mrf.mxu0
    %v3216 = vadd.f32 %v3007, %v3215
    %3217 = vmatmul.f32.gmra.mxu0 %v2164
    %v3218 = vpop.f32.mrf.mxu0
    %v3219 = vadd.f32 %v3010, %v3218
    %3220 = vmatmul.f32.gmra.mxu0 %v2168
    %v3221 = vpop.f32.mrf.mxu0
    %v3222 = vadd.f32 %v3013, %v3221
    %3223 = vmatmul.f32.gmra.mxu0 %v2172
    %v3224 = vpop.f32.mrf.mxu0
    %v3225 = vadd.f32 %v3016, %v3224
    %3226 = vmatmul.f32.gmra.mxu0 %v2176
    %v3227 = vpop.f32.mrf.mxu0
    %v3228 = vadd.f32 %v3019, %v3227
    %3229 = vmatmul.f32.gmra.mxu0 %v2180
    %v3230 = vpop.f32.mrf.mxu0
    %v3231 = vadd.f32 %v3022, %v3230
    %3232 = vmatmul.f32.gmra.mxu0 %v2184
    %v3233 = vpop.f32.mrf.mxu0
    %v3234 = vadd.f32 %v3025, %v3233
    %3235 = vmatmul.f32.gmra.mxu0 %v2188
    %v3236 = vpop.f32.mrf.mxu0
    %v3237 = vadd.f32 %v3028, %v3236
    %3238 = vmatmul.f32.gmra.mxu0 %v2192
    %v3239 = vpop.f32.mrf.mxu0
    %v3240 = vadd.f32 %v3031, %v3239
    %3241 = vmatmul.f32.gmra.mxu0 %v2196
    %v3242 = vpop.f32.mrf.mxu0
    %v3243 = vadd.f32 %v3034, %v3242
    %3244 = vmatmul.f32.gmra.mxu0 %v2200
    %v3245 = vpop.f32.mrf.mxu0
    %v3246 = vadd.f32 %v3037, %v3245
    %3247 = vmatmul.f32.gmra.mxu0 %v2204
    %v3248 = vpop.f32.mrf.mxu0
    %v3249 = vadd.f32 %v3040, %v3248
    %3250 = vmatmul.f32.gmra.mxu0 %v2208
    %v3251 = vpop.f32.mrf.mxu0
    %v3252 = vadd.f32 %v3043, %v3251
    %3253 = vmatmul.f32.gmra.mxu0 %v2212
    %v3254 = vpop.f32.mrf.mxu0
    %v3255 = vadd.f32 %v3046, %v3254
    %3256 = vmatmul.f32.gmra.mxu0 %v2216
    %v3257 = vpop.f32.mrf.mxu0
    %v3258 = vadd.f32 %v3049, %v3257
    %3259 = vmatmul.f32.gmra.mxu0 %v2220
    %v3260 = vpop.f32.mrf.mxu0
    %v3261 = vadd.f32 %v3052, %v3260
    %3262 = vmatmul.f32.gmra.mxu0 %v2224
    %v3263 = vpop.f32.mrf.mxu0
    %v3264 = vadd.f32 %v3055, %v3263
    %3265 = vmatmul.f32.gmra.mxu0 %v2228
    %v3266 = vpop.f32.mrf.mxu0
    %v3267 = vadd.f32 %v3058, %v3266
    %3268 = vmatmul.f32.gmra.mxu0 %v2232
    %v3269 = vpop.f32.mrf.mxu0
    %v3270 = vadd.f32 %v3061, %v3269
    %3271 = vmatmul.f32.gmra.mxu0 %v2236
    %v3272 = vpop.f32.mrf.mxu0
    %v3273 = vadd.f32 %v3064, %v3272
    %3274 = vmatmul.f32.gmra.mxu0 %v2240
    %v3275 = vpop.f32.mrf.mxu0
    %v3276 = vadd.f32 %v3067, %v3275
    %3277 = vmatmul.f32.gmra.mxu0 %v2244
    %v3278 = vpop.f32.mrf.mxu0
    %v3279 = vadd.f32 %v3070, %v3278
    %3280 = vmatmul.f32.gmra.mxu0 %v2248
    %v3281 = vpop.f32.mrf.mxu0
    %v3282 = vadd.f32 %v3073, %v3281
    %3283 = vmatmul.f32.gmra.mxu0 %v2252
    %v3284 = vpop.f32.mrf.mxu0
    %v3285 = vadd.f32 %v3076, %v3284
    %3286 = vmatmul.f32.gmra.mxu0 %v2256
    %v3287 = vpop.f32.mrf.mxu0
    %v3288 = vadd.f32 %v3079, %v3287
    %3289 = vmatmul.f32.gmra.mxu0 %v2260
    %v3290 = vpop.f32.mrf.mxu0
    %v3291 = vadd.f32 %v3082, %v3290
    %3292 = vmatmul.f32.gmra.mxu0 %v2264
    %v3293 = vpop.f32.mrf.mxu0
    %v3294 = vadd.f32 %v3085, %v3293
    %3295 = vmatmul.f32.gmra.mxu0 %v2268
    %v3296 = vpop.f32.mrf.mxu0
    %v3297 = vadd.f32 %v3088, %v3296
    %3298 = vmatmul.f32.gmra.mxu0 %v2272
    %v3299 = vpop.f32.mrf.mxu0
    %v3300 = vadd.f32 %v3091, %v3299
    %3301 = vmatmul.f32.gmra.mxu0 %v2276
    %v3302 = vpop.f32.mrf.mxu0
    %v3303 = vadd.f32 %v3094, %v3302
    %3304 = vmatmul.f32.gmra.mxu0 %v2280
    %v3305 = vpop.f32.mrf.mxu0
    %v3306 = vadd.f32 %v3097, %v3305
    %3307 = vmatmul.f32.gmra.mxu0 %v2284
    %v3308 = vpop.f32.mrf.mxu0
    %v3309 = vadd.f32 %v3100, %v3308
    %3310 = vmatmul.f32.gmra.mxu0 %v2288
    %v3311 = vpop.f32.mrf.mxu0
    %v3312 = vadd.f32 %v3103, %v3311
    %3313 = vmatmul.f32.gmra.mxu0 %v2292
    %v3314 = vpop.f32.mrf.mxu0
    %v3315 = vadd.f32 %v3106, %v3314
    %3316 = vmatmul.f32.gmra.mxu0 %v2296
    %v3317 = vpop.f32.mrf.mxu0
    %v3318 = vadd.f32 %v3109, %v3317
    %3319 = vmatmul.f32.gmra.mxu0 %v2300
    %v3320 = vpop.f32.mrf.mxu0
    %v3321 = vadd.f32 %v3112, %v3320
    %3322 = vmatmul.f32.gmra.mxu0 %v2304
    %v3323 = vpop.f32.mrf.mxu0
    %v3324 = vadd.f32 %v3115, %v3323
    %3325 = vmatmul.f32.gmra.mxu0 %v2308
    %v3326 = vpop.f32.mrf.mxu0
    %v3327 = vadd.f32 %v3118, %v3326
    %3328 = vmatmul.f32.gmra.mxu0 %v2312
    %v3329 = vpop.f32.mrf.mxu0
    %v3330 = vadd.f32 %v3121, %v3329
    %3331 = vmatmul.f32.gmra.mxu0 %v2316
    %v3332 = vpop.f32.mrf.mxu0
    %v3333 = vadd.f32 %v3124, %v3332
    %3334 = vmatmul.f32.gmra.mxu0 %v2320
    %v3335 = vpop.f32.mrf.mxu0
    %v3336 = vadd.f32 %v3127, %v3335
    %3337 = vmatmul.f32.gmra.mxu0 %v2324
    %v3338 = vpop.f32.mrf.mxu0
    %v3339 = vadd.f32 %v3130, %v3338
    %3340 = vmatmul.f32.gmra.mxu0 %v2328
    %v3341 = vpop.f32.mrf.mxu0
    %v3342 = vadd.f32 %v3133, %v3341
    %3343 = vmatmul.f32.gmra.mxu0 %v2332
    %v3344 = vpop.f32.mrf.mxu0
    %v3345 = vadd.f32 %v3136, %v3344
    %3346 = vmatmul.f32.gmra.mxu0 %v2336
    %v3347 = vpop.f32.mrf.mxu0
    %v3348 = vadd.f32 %v3139, %v3347
    %3349 = vmatmul.f32.gmra.mxu0 %v2340
    %v3350 = vpop.f32.mrf.mxu0
    %v3351 = vadd.f32 %v3142, %v3350
    %3352 = vdwg.mxu0
    %3353 = vmatpush.msra.mxu0 %v2085
    %3354 = vmatpush.msra.mxu0 %v2084
    %3355 = vmatpush.msra.mxu0 %v2083
    %3356 = vmatpush.msra.mxu0 %v2082
    %3357 = vmatpush.msra.mxu0 %v2081
    %3358 = vmatpush.msra.mxu0 %v2080
    %3359 = vmatpush.msra.mxu0 %v2079
    %3360 = vmatpush.msra.mxu0 %v2078
    %3361 = vmatpush.msra.mxu0 %v2077
    %3362 = vmatpush.msra.mxu0 %v2076
    %3363 = vmatpush.msra.mxu0 %v2075
    %3364 = vmatpush.msra.mxu0 %v2074
    %3365 = vmatpush.msra.mxu0 %v2073
    %3366 = vmatpush.msra.mxu0 %v2072
    %3367 = vmatpush.msra.mxu0 %v2071
    %3368 = vmatpush.msra.mxu0 %v2070
    %3369 = vmatmul.f32.gmra.mxu0 %v2089
    %v3370 = vpop.f32.mrf.mxu0
    %v3371 = vadd.f32 %v3162, %v3370
    %3372 = vmatmul.f32.gmra.mxu0 %v2093
    %v3373 = vpop.f32.mrf.mxu0
    %v3374 = vadd.f32 %v3165, %v3373
    %3375 = vmatmul.f32.gmra.mxu0 %v2097
    %v3376 = vpop.f32.mrf.mxu0
    %v3377 = vadd.f32 %v3168, %v3376
    %3378 = vmatmul.f32.gmra.mxu0 %v2101
    %v3379 = vpop.f32.mrf.mxu0
    %v3380 = vadd.f32 %v3171, %v3379
    %3381 = vmatmul.f32.gmra.mxu0 %v2105
    %v3382 = vpop.f32.mrf.mxu0
    %v3383 = vadd.f32 %v3174, %v3382
    %3384 = vmatmul.f32.gmra.mxu0 %v2109
    %v3385 = vpop.f32.mrf.mxu0
    %v3386 = vadd.f32 %v3177, %v3385
    %3387 = vmatmul.f32.gmra.mxu0 %v2113
    %v3388 = vpop.f32.mrf.mxu0
    %v3389 = vadd.f32 %v3180, %v3388
    %3390 = vmatmul.f32.gmra.mxu0 %v2117
    %v3391 = vpop.f32.mrf.mxu0
    %v3392 = vadd.f32 %v3183, %v3391
    %3393 = vmatmul.f32.gmra.mxu0 %v2121
    %v3394 = vpop.f32.mrf.mxu0
    %v3395 = vadd.f32 %v3186, %v3394
    %3396 = vmatmul.f32.gmra.mxu0 %v2125
    %v3397 = vpop.f32.mrf.mxu0
    %v3398 = vadd.f32 %v3189, %v3397
    %3399 = vmatmul.f32.gmra.mxu0 %v2129
    %v3400 = vpop.f32.mrf.mxu0
    %v3401 = vadd.f32 %v3192, %v3400
    %3402 = vmatmul.f32.gmra.mxu0 %v2133
    %v3403 = vpop.f32.mrf.mxu0
    %v3404 = vadd.f32 %v3195, %v3403
    %3405 = vmatmul.f32.gmra.mxu0 %v2137
    %v3406 = vpop.f32.mrf.mxu0
    %v3407 = vadd.f32 %v3198, %v3406
    %3408 = vmatmul.f32.gmra.mxu0 %v2141
    %v3409 = vpop.f32.mrf.mxu0
    %v3410 = vadd.f32 %v3201, %v3409
    %3411 = vmatmul.f32.gmra.mxu0 %v2145
    %v3412 = vpop.f32.mrf.mxu0
    %v3413 = vadd.f32 %v3204, %v3412
    %3414 = vmatmul.f32.gmra.mxu0 %v2149
    %v3415 = vpop.f32.mrf.mxu0
    %v3416 = vadd.f32 %v3207, %v3415
    %3417 = vmatmul.f32.gmra.mxu0 %v2153
    %v3418 = vpop.f32.mrf.mxu0
    %v3419 = vadd.f32 %v3210, %v3418
    %3420 = vmatmul.f32.gmra.mxu0 %v2157
    %v3421 = vpop.f32.mrf.mxu0
    %v3422 = vadd.f32 %v3213, %v3421
    %3423 = vmatmul.f32.gmra.mxu0 %v2161
    %v3424 = vpop.f32.mrf.mxu0
    %v3425 = vadd.f32 %v3216, %v3424
    %3426 = vmatmul.f32.gmra.mxu0 %v2165
    %v3427 = vpop.f32.mrf.mxu0
    %v3428 = vadd.f32 %v3219, %v3427
    %3429 = vmatmul.f32.gmra.mxu0 %v2169
    %v3430 = vpop.f32.mrf.mxu0
    %v3431 = vadd.f32 %v3222, %v3430
    %3432 = vmatmul.f32.gmra.mxu0 %v2173
    %v3433 = vpop.f32.mrf.mxu0
    %v3434 = vadd.f32 %v3225, %v3433
    %3435 = vmatmul.f32.gmra.mxu0 %v2177
    %v3436 = vpop.f32.mrf.mxu0
    %v3437 = vadd.f32 %v3228, %v3436
    %3438 = vmatmul.f32.gmra.mxu0 %v2181
    %v3439 = vpop.f32.mrf.mxu0
    %v3440 = vadd.f32 %v3231, %v3439
    %3441 = vmatmul.f32.gmra.mxu0 %v2185
    %v3442 = vpop.f32.mrf.mxu0
    %v3443 = vadd.f32 %v3234, %v3442
    %3444 = vmatmul.f32.gmra.mxu0 %v2189
    %v3445 = vpop.f32.mrf.mxu0
    %v3446 = vadd.f32 %v3237, %v3445
    %3447 = vmatmul.f32.gmra.mxu0 %v2193
    %v3448 = vpop.f32.mrf.mxu0
    %v3449 = vadd.f32 %v3240, %v3448
    %3450 = vmatmul.f32.gmra.mxu0 %v2197
    %v3451 = vpop.f32.mrf.mxu0
    %v3452 = vadd.f32 %v3243, %v3451
    %3453 = vmatmul.f32.gmra.mxu0 %v2201
    %v3454 = vpop.f32.mrf.mxu0
    %v3455 = vadd.f32 %v3246, %v3454
    %3456 = vmatmul.f32.gmra.mxu0 %v2205
    %v3457 = vpop.f32.mrf.mxu0
    %v3458 = vadd.f32 %v3249, %v3457
    %3459 = vmatmul.f32.gmra.mxu0 %v2209
    %v3460 = vpop.f32.mrf.mxu0
    %v3461 = vadd.f32 %v3252, %v3460
    %3462 = vmatmul.f32.gmra.mxu0 %v2213
    %v3463 = vpop.f32.mrf.mxu0
    %v3464 = vadd.f32 %v3255, %v3463
    %3465 = vmatmul.f32.gmra.mxu0 %v2217
    %v3466 = vpop.f32.mrf.mxu0
    %v3467 = vadd.f32 %v3258, %v3466
    %3468 = vmatmul.f32.gmra.mxu0 %v2221
    %v3469 = vpop.f32.mrf.mxu0
    %v3470 = vadd.f32 %v3261, %v3469
    %3471 = vmatmul.f32.gmra.mxu0 %v2225
    %v3472 = vpop.f32.mrf.mxu0
    %v3473 = vadd.f32 %v3264, %v3472
    %3474 = vmatmul.f32.gmra.mxu0 %v2229
    %v3475 = vpop.f32.mrf.mxu0
    %v3476 = vadd.f32 %v3267, %v3475
    %3477 = vmatmul.f32.gmra.mxu0 %v2233
    %v3478 = vpop.f32.mrf.mxu0
    %v3479 = vadd.f32 %v3270, %v3478
    %3480 = vmatmul.f32.gmra.mxu0 %v2237
    %v3481 = vpop.f32.mrf.mxu0
    %v3482 = vadd.f32 %v3273, %v3481
    %3483 = vmatmul.f32.gmra.mxu0 %v2241
    %v3484 = vpop.f32.mrf.mxu0
    %v3485 = vadd.f32 %v3276, %v3484
    %3486 = vmatmul.f32.gmra.mxu0 %v2245
    %v3487 = vpop.f32.mrf.mxu0
    %v3488 = vadd.f32 %v3279, %v3487
    %3489 = vmatmul.f32.gmra.mxu0 %v2249
    %v3490 = vpop.f32.mrf.mxu0
    %v3491 = vadd.f32 %v3282, %v3490
    %3492 = vmatmul.f32.gmra.mxu0 %v2253
    %v3493 = vpop.f32.mrf.mxu0
    %v3494 = vadd.f32 %v3285, %v3493
    %3495 = vmatmul.f32.gmra.mxu0 %v2257
    %v3496 = vpop.f32.mrf.mxu0
    %v3497 = vadd.f32 %v3288, %v3496
    %3498 = vmatmul.f32.gmra.mxu0 %v2261
    %v3499 = vpop.f32.mrf.mxu0
    %v3500 = vadd.f32 %v3291, %v3499
    %3501 = vmatmul.f32.gmra.mxu0 %v2265
    %v3502 = vpop.f32.mrf.mxu0
    %v3503 = vadd.f32 %v3294, %v3502
    %3504 = vmatmul.f32.gmra.mxu0 %v2269
    %v3505 = vpop.f32.mrf.mxu0
    %v3506 = vadd.f32 %v3297, %v3505
    %3507 = vmatmul.f32.gmra.mxu0 %v2273
    %v3508 = vpop.f32.mrf.mxu0
    %v3509 = vadd.f32 %v3300, %v3508
    %3510 = vmatmul.f32.gmra.mxu0 %v2277
    %v3511 = vpop.f32.mrf.mxu0
    %v3512 = vadd.f32 %v3303, %v3511
    %3513 = vmatmul.f32.gmra.mxu0 %v2281
    %v3514 = vpop.f32.mrf.mxu0
    %v3515 = vadd.f32 %v3306, %v3514
    %3516 = vmatmul.f32.gmra.mxu0 %v2285
    %v3517 = vpop.f32.mrf.mxu0
    %v3518 = vadd.f32 %v3309, %v3517
    %3519 = vmatmul.f32.gmra.mxu0 %v2289
    %v3520 = vpop.f32.mrf.mxu0
    %v3521 = vadd.f32 %v3312, %v3520
    %3522 = vmatmul.f32.gmra.mxu0 %v2293
    %v3523 = vpop.f32.mrf.mxu0
    %v3524 = vadd.f32 %v3315, %v3523
    %3525 = vmatmul.f32.gmra.mxu0 %v2297
    %v3526 = vpop.f32.mrf.mxu0
    %v3527 = vadd.f32 %v3318, %v3526
    %3528 = vmatmul.f32.gmra.mxu0 %v2301
    %v3529 = vpop.f32.mrf.mxu0
    %v3530 = vadd.f32 %v3321, %v3529
    %3531 = vmatmul.f32.gmra.mxu0 %v2305
    %v3532 = vpop.f32.mrf.mxu0
    %v3533 = vadd.f32 %v3324, %v3532
    %3534 = vmatmul.f32.gmra.mxu0 %v2309
    %v3535 = vpop.f32.mrf.mxu0
    %v3536 = vadd.f32 %v3327, %v3535
    %3537 = vmatmul.f32.gmra.mxu0 %v2313
    %v3538 = vpop.f32.mrf.mxu0
    %v3539 = vadd.f32 %v3330, %v3538
    %3540 = vmatmul.f32.gmra.mxu0 %v2317
    %v3541 = vpop.f32.mrf.mxu0
    %v3542 = vadd.f32 %v3333, %v3541
    %3543 = vmatmul.f32.gmra.mxu0 %v2321
    %v3544 = vpop.f32.mrf.mxu0
    %v3545 = vadd.f32 %v3336, %v3544
    %3546 = vmatmul.f32.gmra.mxu0 %v2325
    %v3547 = vpop.f32.mrf.mxu0
    %v3548 = vadd.f32 %v3339, %v3547
    %3549 = vmatmul.f32.gmra.mxu0 %v2329
    %v3550 = vpop.f32.mrf.mxu0
    %v3551 = vadd.f32 %v3342, %v3550
    %3552 = vmatmul.f32.gmra.mxu0 %v2333
    %v3553 = vpop.f32.mrf.mxu0
    %v3554 = vadd.f32 %v3345, %v3553
    %3555 = vmatmul.f32.gmra.mxu0 %v2337
    %v3556 = vpop.f32.mrf.mxu0
    %v3557 = vadd.f32 %v3348, %v3556
    %3558 = vmatmul.f32.gmra.mxu0 %v2341
    %v3559 = vpop.f32.mrf.mxu0
    %v3560 = vadd.f32 %v3351, %v3559
    %3561 = vdwg.mxu0
    %v3562 = vxor.u32 %v3371, 2147483648
    %v3563 = vxor.u32 %v3374, 2147483648
    %v3564 = vxor.u32 %v3377, 2147483648
    %v3565 = vxor.u32 %v3380, 2147483648
    %v3566 = vxor.u32 %v3383, 2147483648
    %v3567 = vxor.u32 %v3386, 2147483648
    %v3568 = vxor.u32 %v3389, 2147483648
    %v3569 = vxor.u32 %v3392, 2147483648
    %v3570 = vxor.u32 %v3395, 2147483648
    %v3571 = vxor.u32 %v3398, 2147483648
    %v3572 = vxor.u32 %v3401, 2147483648
    %v3573 = vxor.u32 %v3404, 2147483648
    %v3574 = vxor.u32 %v3407, 2147483648
    %v3575 = vxor.u32 %v3410, 2147483648
    %v3576 = vxor.u32 %v3413, 2147483648
    %v3577 = vxor.u32 %v3416, 2147483648
    %v3578 = vxor.u32 %v3419, 2147483648
    %v3579 = vxor.u32 %v3422, 2147483648
    %v3580 = vxor.u32 %v3425, 2147483648
    %v3581 = vxor.u32 %v3428, 2147483648
    %v3582 = vxor.u32 %v3431, 2147483648
    %v3583 = vxor.u32 %v3434, 2147483648
    %v3584 = vxor.u32 %v3437, 2147483648
    %v3585 = vxor.u32 %v3440, 2147483648
    %v3586 = vxor.u32 %v3443, 2147483648
    %v3587 = vxor.u32 %v3446, 2147483648
    %v3588 = vxor.u32 %v3449, 2147483648
    %v3589 = vxor.u32 %v3452, 2147483648
    %v3590 = vxor.u32 %v3455, 2147483648
    %v3591 = vxor.u32 %v3458, 2147483648
    %v3592 = vxor.u32 %v3461, 2147483648
    %v3593 = vxor.u32 %v3464, 2147483648
    %v3594 = vxor.u32 %v3467, 2147483648
    %v3595 = vxor.u32 %v3470, 2147483648
    %v3596 = vxor.u32 %v3473, 2147483648
    %v3597 = vxor.u32 %v3476, 2147483648
    %v3598 = vxor.u32 %v3479, 2147483648
    %v3599 = vxor.u32 %v3482, 2147483648
    %v3600 = vxor.u32 %v3485, 2147483648
    %v3601 = vxor.u32 %v3488, 2147483648
    %v3602 = vxor.u32 %v3491, 2147483648
    %v3603 = vxor.u32 %v3494, 2147483648
    %v3604 = vxor.u32 %v3497, 2147483648
    %v3605 = vxor.u32 %v3500, 2147483648
    %v3606 = vxor.u32 %v3503, 2147483648
    %v3607 = vxor.u32 %v3506, 2147483648
    %v3608 = vxor.u32 %v3509, 2147483648
    %v3609 = vxor.u32 %v3512, 2147483648
    %v3610 = vxor.u32 %v3515, 2147483648
    %v3611 = vxor.u32 %v3518, 2147483648
    %v3612 = vxor.u32 %v3521, 2147483648
    %v3613 = vxor.u32 %v3524, 2147483648
    %v3614 = vxor.u32 %v3527, 2147483648
    %v3615 = vxor.u32 %v3530, 2147483648
    %v3616 = vxor.u32 %v3533, 2147483648
    %v3617 = vxor.u32 %v3536, 2147483648
    %v3618 = vxor.u32 %v3539, 2147483648
    %v3619 = vxor.u32 %v3542, 2147483648
    %v3620 = vxor.u32 %v3545, 2147483648
    %v3621 = vxor.u32 %v3548, 2147483648
    %v3622 = vxor.u32 %v3551, 2147483648
    %v3623 = vxor.u32 %v3554, 2147483648
    %v3624 = vxor.u32 %v3557, 2147483648
    %v3625 = vxor.u32 %v3560, 2147483648
    %v3626 = vmul.f32 %v3562, 1.442695
    %v3627 = vpow.pop %v3626
    %v3628 = vmul.f32 %v3563, 1.442695
    %v3629 = vpow.pop %v3628
    %v3630 = vmul.f32 %v3564, 1.442695
    %v3631 = vpow.pop %v3630
    %v3632 = vmul.f32 %v3565, 1.442695
    %v3633 = vpow.pop %v3632
    %v3634 = vmul.f32 %v3566, 1.442695
    %v3635 = vpow.pop %v3634
    %v3636 = vmul.f32 %v3567, 1.442695
    %v3637 = vpow.pop %v3636
    %v3638 = vmul.f32 %v3568, 1.442695
    %v3639 = vpow.pop %v3638
    %v3640 = vmul.f32 %v3569, 1.442695
    %v3641 = vpow.pop %v3640
    %v3642 = vmul.f32 %v3570, 1.442695
    %v3643 = vpow.pop %v3642
    %v3644 = vmul.f32 %v3571, 1.442695
    %v3645 = vpow.pop %v3644
    %v3646 = vmul.f32 %v3572, 1.442695
    %v3647 = vpow.pop %v3646
    %v3648 = vmul.f32 %v3573, 1.442695
    %v3649 = vpow.pop %v3648
    %v3650 = vmul.f32 %v3574, 1.442695
    %v3651 = vpow.pop %v3650
    %v3652 = vmul.f32 %v3575, 1.442695
    %v3653 = vpow.pop %v3652
    %v3654 = vmul.f32 %v3576, 1.442695
    %v3655 = vpow.pop %v3654
    %v3656 = vmul.f32 %v3577, 1.442695
    %v3657 = vpow.pop %v3656
    %v3658 = vmul.f32 %v3578, 1.442695
    %v3659 = vpow.pop %v3658
    %v3660 = vmul.f32 %v3579, 1.442695
    %v3661 = vpow.pop %v3660
    %v3662 = vmul.f32 %v3580, 1.442695
    %v3663 = vpow.pop %v3662
    %v3664 = vmul.f32 %v3581, 1.442695
    %v3665 = vpow.pop %v3664
    %v3666 = vmul.f32 %v3582, 1.442695
    %v3667 = vpow.pop %v3666
    %v3668 = vmul.f32 %v3583, 1.442695
    %v3669 = vpow.pop %v3668
    %v3670 = vmul.f32 %v3584, 1.442695
    %v3671 = vpow.pop %v3670
    %v3672 = vmul.f32 %v3585, 1.442695
    %v3673 = vpow.pop %v3672
    %v3674 = vmul.f32 %v3586, 1.442695
    %v3675 = vpow.pop %v3674
    %v3676 = vmul.f32 %v3587, 1.442695
    %v3677 = vpow.pop %v3676
    %v3678 = vmul.f32 %v3588, 1.442695
    %v3679 = vpow.pop %v3678
    %v3680 = vmul.f32 %v3589, 1.442695
    %v3681 = vpow.pop %v3680
    %v3682 = vmul.f32 %v3590, 1.442695
    %v3683 = vpow.pop %v3682
    %v3684 = vmul.f32 %v3591, 1.442695
    %v3685 = vpow.pop %v3684
    %v3686 = vmul.f32 %v3592, 1.442695
    %v3687 = vpow.pop %v3686
    %v3688 = vmul.f32 %v3593, 1.442695
    %v3689 = vpow.pop %v3688
    %v3690 = vmul.f32 %v3594, 1.442695
    %v3691 = vpow.pop %v3690
    %v3692 = vmul.f32 %v3595, 1.442695
    %v3693 = vpow.pop %v3692
    %v3694 = vmul.f32 %v3596, 1.442695
    %v3695 = vpow.pop %v3694
    %v3696 = vmul.f32 %v3597, 1.442695
    %v3697 = vpow.pop %v3696
    %v3698 = vmul.f32 %v3598, 1.442695
    %v3699 = vpow.pop %v3698
    %v3700 = vmul.f32 %v3599, 1.442695
    %v3701 = vpow.pop %v3700
    %v3702 = vmul.f32 %v3600, 1.442695
    %v3703 = vpow.pop %v3702
    %v3704 = vmul.f32 %v3601, 1.442695
    %v3705 = vpow.pop %v3704
    %v3706 = vmul.f32 %v3602, 1.442695
    %v3707 = vpow.pop %v3706
    %v3708 = vmul.f32 %v3603, 1.442695
    %v3709 = vpow.pop %v3708
    %v3710 = vmul.f32 %v3604, 1.442695
    %v3711 = vpow.pop %v3710
    %v3712 = vmul.f32 %v3605, 1.442695
    %v3713 = vpow.pop %v3712
    %v3714 = vmul.f32 %v3606, 1.442695
    %v3715 = vpow.pop %v3714
    %v3716 = vmul.f32 %v3607, 1.442695
    %v3717 = vpow.pop %v3716
    %v3718 = vmul.f32 %v3608, 1.442695
    %v3719 = vpow.pop %v3718
    %v3720 = vmul.f32 %v3609, 1.442695
    %v3721 = vpow.pop %v3720
    %v3722 = vmul.f32 %v3610, 1.442695
    %v3723 = vpow.pop %v3722
    %v3724 = vmul.f32 %v3611, 1.442695
    %v3725 = vpow.pop %v3724
    %v3726 = vmul.f32 %v3612, 1.442695
    %v3727 = vpow.pop %v3726
    %v3728 = vmul.f32 %v3613, 1.442695
    %v3729 = vpow.pop %v3728
    %v3730 = vmul.f32 %v3614, 1.442695
    %v3731 = vpow.pop %v3730
    %v3732 = vmul.f32 %v3615, 1.442695
    %v3733 = vpow.pop %v3732
    %v3734 = vmul.f32 %v3616, 1.442695
    %v3735 = vpow.pop %v3734
    %v3736 = vmul.f32 %v3617, 1.442695
    %v3737 = vpow.pop %v3736
    %v3738 = vmul.f32 %v3618, 1.442695
    %v3739 = vpow.pop %v3738
    %v3740 = vmul.f32 %v3619, 1.442695
    %v3741 = vpow.pop %v3740
    %v3742 = vmul.f32 %v3620, 1.442695
    %v3743 = vpow.pop %v3742
    %v3744 = vmul.f32 %v3621, 1.442695
    %v3745 = vpow.pop %v3744
    %v3746 = vmul.f32 %v3622, 1.442695
    %v3747 = vpow.pop %v3746
    %v3748 = vmul.f32 %v3623, 1.442695
    %v3749 = vpow.pop %v3748
    %v3750 = vmul.f32 %v3624, 1.442695
    %v3751 = vpow.pop %v3750
    %v3752 = vmul.f32 %v3625, 1.442695
    %v3753 = vpow.pop %v3752
    %v3754 = vadd.f32 %v3627, 1.0
    %v3755 = vadd.f32 %v3629, 1.0
    %v3756 = vadd.f32 %v3631, 1.0
    %v3757 = vadd.f32 %v3633, 1.0
    %v3758 = vadd.f32 %v3635, 1.0
    %v3759 = vadd.f32 %v3637, 1.0
    %v3760 = vadd.f32 %v3639, 1.0
    %v3761 = vadd.f32 %v3641, 1.0
    %v3762 = vadd.f32 %v3643, 1.0
    %v3763 = vadd.f32 %v3645, 1.0
    %v3764 = vadd.f32 %v3647, 1.0
    %v3765 = vadd.f32 %v3649, 1.0
    %v3766 = vadd.f32 %v3651, 1.0
    %v3767 = vadd.f32 %v3653, 1.0
    %v3768 = vadd.f32 %v3655, 1.0
    %v3769 = vadd.f32 %v3657, 1.0
    %v3770 = vadd.f32 %v3659, 1.0
    %v3771 = vadd.f32 %v3661, 1.0
    %v3772 = vadd.f32 %v3663, 1.0
    %v3773 = vadd.f32 %v3665, 1.0
    %v3774 = vadd.f32 %v3667, 1.0
    %v3775 = vadd.f32 %v3669, 1.0
    %v3776 = vadd.f32 %v3671, 1.0
    %v3777 = vadd.f32 %v3673, 1.0
    %v3778 = vadd.f32 %v3675, 1.0
    %v3779 = vadd.f32 %v3677, 1.0
    %v3780 = vadd.f32 %v3679, 1.0
    %v3781 = vadd.f32 %v3681, 1.0
    %v3782 = vadd.f32 %v3683, 1.0
    %v3783 = vadd.f32 %v3685, 1.0
    %v3784 = vadd.f32 %v3687, 1.0
    %v3785 = vadd.f32 %v3689, 1.0
    %v3786 = vadd.f32 %v3691, 1.0
    %v3787 = vadd.f32 %v3693, 1.0
    %v3788 = vadd.f32 %v3695, 1.0
    %v3789 = vadd.f32 %v3697, 1.0
    %v3790 = vadd.f32 %v3699, 1.0
    %v3791 = vadd.f32 %v3701, 1.0
    %v3792 = vadd.f32 %v3703, 1.0
    %v3793 = vadd.f32 %v3705, 1.0
    %v3794 = vadd.f32 %v3707, 1.0
    %v3795 = vadd.f32 %v3709, 1.0
    %v3796 = vadd.f32 %v3711, 1.0
    %v3797 = vadd.f32 %v3713, 1.0
    %v3798 = vadd.f32 %v3715, 1.0
    %v3799 = vadd.f32 %v3717, 1.0
    %v3800 = vadd.f32 %v3719, 1.0
    %v3801 = vadd.f32 %v3721, 1.0
    %v3802 = vadd.f32 %v3723, 1.0
    %v3803 = vadd.f32 %v3725, 1.0
    %v3804 = vadd.f32 %v3727, 1.0
    %v3805 = vadd.f32 %v3729, 1.0
    %v3806 = vadd.f32 %v3731, 1.0
    %v3807 = vadd.f32 %v3733, 1.0
    %v3808 = vadd.f32 %v3735, 1.0
    %v3809 = vadd.f32 %v3737, 1.0
    %v3810 = vadd.f32 %v3739, 1.0
    %v3811 = vadd.f32 %v3741, 1.0
    %v3812 = vadd.f32 %v3743, 1.0
    %v3813 = vadd.f32 %v3745, 1.0
    %v3814 = vadd.f32 %v3747, 1.0
    %v3815 = vadd.f32 %v3749, 1.0
    %v3816 = vadd.f32 %v3751, 1.0
    %v3817 = vadd.f32 %v3753, 1.0
    %v3818 = vrcp.pop %v3754
    %v3819 = vmul.f32 %v3754, %v3818
    %v3820 = vsub.f32 1.0, %v3819
    %v3821 = vmul.f32 %v3818, %v3820
    %v3822 = vadd.f32 %v3818, %v3821
    %vm3823 = vweird.f32 %v3754
    %vm3824 = vweird.f32 %v3818
    %vm3825 = vmor %vm3823, %vm3824
    %v3826 = vsel %vm3825, %v3818, %v3822
    %v3827 = vand.u32 2147483647, %v3754
    %vm3828 = vcmp.eq.f32.partialorder %v3827, 8.507059e+37
    %v3829 = vand.u32 %v3754, 2147483648
    %v3830 = vor.u32 1.1754944e-38, %v3829
    %v3831 = vsel %vm3828, %v3830, %v3826
    %v3832 = vmul.f32 1.0, %v3831
    %v3833 = vrcp.pop %v3755
    %v3834 = vmul.f32 %v3755, %v3833
    %v3835 = vsub.f32 1.0, %v3834
    %v3836 = vmul.f32 %v3833, %v3835
    %v3837 = vadd.f32 %v3833, %v3836
    %vm3838 = vweird.f32 %v3755
    %vm3839 = vweird.f32 %v3833
    %vm3840 = vmor %vm3838, %vm3839
    %v3841 = vsel %vm3840, %v3833, %v3837
    %v3842 = vand.u32 2147483647, %v3755
    %vm3843 = vcmp.eq.f32.partialorder %v3842, 8.507059e+37
    %v3844 = vand.u32 %v3755, 2147483648
    %v3845 = vor.u32 1.1754944e-38, %v3844
    %v3846 = vsel %vm3843, %v3845, %v3841
    %v3847 = vmul.f32 1.0, %v3846
    %v3848 = vrcp.pop %v3756
    %v3849 = vmul.f32 %v3756, %v3848
    %v3850 = vsub.f32 1.0, %v3849
    %v3851 = vmul.f32 %v3848, %v3850
    %v3852 = vadd.f32 %v3848, %v3851
    %vm3853 = vweird.f32 %v3756
    %vm3854 = vweird.f32 %v3848
    %vm3855 = vmor %vm3853, %vm3854
    %v3856 = vsel %vm3855, %v3848, %v3852
    %v3857 = vand.u32 2147483647, %v3756
    %vm3858 = vcmp.eq.f32.partialorder %v3857, 8.507059e+37
    %v3859 = vand.u32 %v3756, 2147483648
    %v3860 = vor.u32 1.1754944e-38, %v3859
    %v3861 = vsel %vm3858, %v3860, %v3856
    %v3862 = vmul.f32 1.0, %v3861
    %v3863 = vrcp.pop %v3757
    %v3864 = vmul.f32 %v3757, %v3863
    %v3865 = vsub.f32 1.0, %v3864
    %v3866 = vmul.f32 %v3863, %v3865
    %v3867 = vadd.f32 %v3863, %v3866
    %vm3868 = vweird.f32 %v3757
    %vm3869 = vweird.f32 %v3863
    %vm3870 = vmor %vm3868, %vm3869
    %v3871 = vsel %vm3870, %v3863, %v3867
    %v3872 = vand.u32 2147483647, %v3757
    %vm3873 = vcmp.eq.f32.partialorder %v3872, 8.507059e+37
    %v3874 = vand.u32 %v3757, 2147483648
    %v3875 = vor.u32 1.1754944e-38, %v3874
    %v3876 = vsel %vm3873, %v3875, %v3871
    %v3877 = vmul.f32 1.0, %v3876
    %v3878 = vrcp.pop %v3758
    %v3879 = vmul.f32 %v3758, %v3878
    %v3880 = vsub.f32 1.0, %v3879
    %v3881 = vmul.f32 %v3878, %v3880
    %v3882 = vadd.f32 %v3878, %v3881
    %vm3883 = vweird.f32 %v3758
    %vm3884 = vweird.f32 %v3878
    %vm3885 = vmor %vm3883, %vm3884
    %v3886 = vsel %vm3885, %v3878, %v3882
    %v3887 = vand.u32 2147483647, %v3758
    %vm3888 = vcmp.eq.f32.partialorder %v3887, 8.507059e+37
    %v3889 = vand.u32 %v3758, 2147483648
    %v3890 = vor.u32 1.1754944e-38, %v3889
    %v3891 = vsel %vm3888, %v3890, %v3886
    %v3892 = vmul.f32 1.0, %v3891
    %v3893 = vrcp.pop %v3759
    %v3894 = vmul.f32 %v3759, %v3893
    %v3895 = vsub.f32 1.0, %v3894
    %v3896 = vmul.f32 %v3893, %v3895
    %v3897 = vadd.f32 %v3893, %v3896
    %vm3898 = vweird.f32 %v3759
    %vm3899 = vweird.f32 %v3893
    %vm3900 = vmor %vm3898, %vm3899
    %v3901 = vsel %vm3900, %v3893, %v3897
    %v3902 = vand.u32 2147483647, %v3759
    %vm3903 = vcmp.eq.f32.partialorder %v3902, 8.507059e+37
    %v3904 = vand.u32 %v3759, 2147483648
    %v3905 = vor.u32 1.1754944e-38, %v3904
    %v3906 = vsel %vm3903, %v3905, %v3901
    %v3907 = vmul.f32 1.0, %v3906
    %v3908 = vrcp.pop %v3760
    %v3909 = vmul.f32 %v3760, %v3908
    %v3910 = vsub.f32 1.0, %v3909
    %v3911 = vmul.f32 %v3908, %v3910
    %v3912 = vadd.f32 %v3908, %v3911
    %vm3913 = vweird.f32 %v3760
    %vm3914 = vweird.f32 %v3908
    %vm3915 = vmor %vm3913, %vm3914
    %v3916 = vsel %vm3915, %v3908, %v3912
    %v3917 = vand.u32 2147483647, %v3760
    %vm3918 = vcmp.eq.f32.partialorder %v3917, 8.507059e+37
    %v3919 = vand.u32 %v3760, 2147483648
    %v3920 = vor.u32 1.1754944e-38, %v3919
    %v3921 = vsel %vm3918, %v3920, %v3916
    %v3922 = vmul.f32 1.0, %v3921
    %v3923 = vrcp.pop %v3761
    %v3924 = vmul.f32 %v3761, %v3923
    %v3925 = vsub.f32 1.0, %v3924
    %v3926 = vmul.f32 %v3923, %v3925
    %v3927 = vadd.f32 %v3923, %v3926
    %vm3928 = vweird.f32 %v3761
    %vm3929 = vweird.f32 %v3923
    %vm3930 = vmor %vm3928, %vm3929
    %v3931 = vsel %vm3930, %v3923, %v3927
    %v3932 = vand.u32 2147483647, %v3761
    %vm3933 = vcmp.eq.f32.partialorder %v3932, 8.507059e+37
    %v3934 = vand.u32 %v3761, 2147483648
    %v3935 = vor.u32 1.1754944e-38, %v3934
    %v3936 = vsel %vm3933, %v3935, %v3931
    %v3937 = vmul.f32 1.0, %v3936
    %v3938 = vrcp.pop %v3762
    %v3939 = vmul.f32 %v3762, %v3938
    %v3940 = vsub.f32 1.0, %v3939
    %v3941 = vmul.f32 %v3938, %v3940
    %v3942 = vadd.f32 %v3938, %v3941
    %vm3943 = vweird.f32 %v3762
    %vm3944 = vweird.f32 %v3938
    %vm3945 = vmor %vm3943, %vm3944
    %v3946 = vsel %vm3945, %v3938, %v3942
    %v3947 = vand.u32 2147483647, %v3762
    %vm3948 = vcmp.eq.f32.partialorder %v3947, 8.507059e+37
    %v3949 = vand.u32 %v3762, 2147483648
    %v3950 = vor.u32 1.1754944e-38, %v3949
    %v3951 = vsel %vm3948, %v3950, %v3946
    %v3952 = vmul.f32 1.0, %v3951
    %v3953 = vrcp.pop %v3763
    %v3954 = vmul.f32 %v3763, %v3953
    %v3955 = vsub.f32 1.0, %v3954
    %v3956 = vmul.f32 %v3953, %v3955
    %v3957 = vadd.f32 %v3953, %v3956
    %vm3958 = vweird.f32 %v3763
    %vm3959 = vweird.f32 %v3953
    %vm3960 = vmor %vm3958, %vm3959
    %v3961 = vsel %vm3960, %v3953, %v3957
    %v3962 = vand.u32 2147483647, %v3763
    %vm3963 = vcmp.eq.f32.partialorder %v3962, 8.507059e+37
    %v3964 = vand.u32 %v3763, 2147483648
    %v3965 = vor.u32 1.1754944e-38, %v3964
    %v3966 = vsel %vm3963, %v3965, %v3961
    %v3967 = vmul.f32 1.0, %v3966
    %v3968 = vrcp.pop %v3764
    %v3969 = vmul.f32 %v3764, %v3968
    %v3970 = vsub.f32 1.0, %v3969
    %v3971 = vmul.f32 %v3968, %v3970
    %v3972 = vadd.f32 %v3968, %v3971
    %vm3973 = vweird.f32 %v3764
    %vm3974 = vweird.f32 %v3968
    %vm3975 = vmor %vm3973, %vm3974
    %v3976 = vsel %vm3975, %v3968, %v3972
    %v3977 = vand.u32 2147483647, %v3764
    %vm3978 = vcmp.eq.f32.partialorder %v3977, 8.507059e+37
    %v3979 = vand.u32 %v3764, 2147483648
    %v3980 = vor.u32 1.1754944e-38, %v3979
    %v3981 = vsel %vm3978, %v3980, %v3976
    %v3982 = vmul.f32 1.0, %v3981
    %v3983 = vrcp.pop %v3765
    %v3984 = vmul.f32 %v3765, %v3983
    %v3985 = vsub.f32 1.0, %v3984
    %v3986 = vmul.f32 %v3983, %v3985
    %v3987 = vadd.f32 %v3983, %v3986
    %vm3988 = vweird.f32 %v3765
    %vm3989 = vweird.f32 %v3983
    %vm3990 = vmor %vm3988, %vm3989
    %v3991 = vsel %vm3990, %v3983, %v3987
    %v3992 = vand.u32 2147483647, %v3765
    %vm3993 = vcmp.eq.f32.partialorder %v3992, 8.507059e+37
    %v3994 = vand.u32 %v3765, 2147483648
    %v3995 = vor.u32 1.1754944e-38, %v3994
    %v3996 = vsel %vm3993, %v3995, %v3991
    %v3997 = vmul.f32 1.0, %v3996
    %v3998 = vrcp.pop %v3766
    %v3999 = vmul.f32 %v3766, %v3998
    %v4000 = vsub.f32 1.0, %v3999
    %v4001 = vmul.f32 %v3998, %v4000
    %v4002 = vadd.f32 %v3998, %v4001
    %vm4003 = vweird.f32 %v3766
    %vm4004 = vweird.f32 %v3998
    %vm4005 = vmor %vm4003, %vm4004
    %v4006 = vsel %vm4005, %v3998, %v4002
    %v4007 = vand.u32 2147483647, %v3766
    %vm4008 = vcmp.eq.f32.partialorder %v4007, 8.507059e+37
    %v4009 = vand.u32 %v3766, 2147483648
    %v4010 = vor.u32 1.1754944e-38, %v4009
    %v4011 = vsel %vm4008, %v4010, %v4006
    %v4012 = vmul.f32 1.0, %v4011
    %v4013 = vrcp.pop %v3767
    %v4014 = vmul.f32 %v3767, %v4013
    %v4015 = vsub.f32 1.0, %v4014
    %v4016 = vmul.f32 %v4013, %v4015
    %v4017 = vadd.f32 %v4013, %v4016
    %vm4018 = vweird.f32 %v3767
    %vm4019 = vweird.f32 %v4013
    %vm4020 = vmor %vm4018, %vm4019
    %v4021 = vsel %vm4020, %v4013, %v4017
    %v4022 = vand.u32 2147483647, %v3767
    %vm4023 = vcmp.eq.f32.partialorder %v4022, 8.507059e+37
    %v4024 = vand.u32 %v3767, 2147483648
    %v4025 = vor.u32 1.1754944e-38, %v4024
    %v4026 = vsel %vm4023, %v4025, %v4021
    %v4027 = vmul.f32 1.0, %v4026
    %v4028 = vrcp.pop %v3768
    %v4029 = vmul.f32 %v3768, %v4028
    %v4030 = vsub.f32 1.0, %v4029
    %v4031 = vmul.f32 %v4028, %v4030
    %v4032 = vadd.f32 %v4028, %v4031
    %vm4033 = vweird.f32 %v3768
    %vm4034 = vweird.f32 %v4028
    %vm4035 = vmor %vm4033, %vm4034
    %v4036 = vsel %vm4035, %v4028, %v4032
    %v4037 = vand.u32 2147483647, %v3768
    %vm4038 = vcmp.eq.f32.partialorder %v4037, 8.507059e+37
    %v4039 = vand.u32 %v3768, 2147483648
    %v4040 = vor.u32 1.1754944e-38, %v4039
    %v4041 = vsel %vm4038, %v4040, %v4036
    %v4042 = vmul.f32 1.0, %v4041
    %v4043 = vrcp.pop %v3769
    %v4044 = vmul.f32 %v3769, %v4043
    %v4045 = vsub.f32 1.0, %v4044
    %v4046 = vmul.f32 %v4043, %v4045
    %v4047 = vadd.f32 %v4043, %v4046
    %vm4048 = vweird.f32 %v3769
    %vm4049 = vweird.f32 %v4043
    %vm4050 = vmor %vm4048, %vm4049
    %v4051 = vsel %vm4050, %v4043, %v4047
    %v4052 = vand.u32 2147483647, %v3769
    %vm4053 = vcmp.eq.f32.partialorder %v4052, 8.507059e+37
    %v4054 = vand.u32 %v3769, 2147483648
    %v4055 = vor.u32 1.1754944e-38, %v4054
    %v4056 = vsel %vm4053, %v4055, %v4051
    %v4057 = vmul.f32 1.0, %v4056
    %v4058 = vrcp.pop %v3770
    %v4059 = vmul.f32 %v3770, %v4058
    %v4060 = vsub.f32 1.0, %v4059
    %v4061 = vmul.f32 %v4058, %v4060
    %v4062 = vadd.f32 %v4058, %v4061
    %vm4063 = vweird.f32 %v3770
    %vm4064 = vweird.f32 %v4058
    %vm4065 = vmor %vm4063, %vm4064
    %v4066 = vsel %vm4065, %v4058, %v4062
    %v4067 = vand.u32 2147483647, %v3770
    %vm4068 = vcmp.eq.f32.partialorder %v4067, 8.507059e+37
    %v4069 = vand.u32 %v3770, 2147483648
    %v4070 = vor.u32 1.1754944e-38, %v4069
    %v4071 = vsel %vm4068, %v4070, %v4066
    %v4072 = vmul.f32 1.0, %v4071
    %v4073 = vrcp.pop %v3771
    %v4074 = vmul.f32 %v3771, %v4073
    %v4075 = vsub.f32 1.0, %v4074
    %v4076 = vmul.f32 %v4073, %v4075
    %v4077 = vadd.f32 %v4073, %v4076
    %vm4078 = vweird.f32 %v3771
    %vm4079 = vweird.f32 %v4073
    %vm4080 = vmor %vm4078, %vm4079
    %v4081 = vsel %vm4080, %v4073, %v4077
    %v4082 = vand.u32 2147483647, %v3771
    %vm4083 = vcmp.eq.f32.partialorder %v4082, 8.507059e+37
    %v4084 = vand.u32 %v3771, 2147483648
    %v4085 = vor.u32 1.1754944e-38, %v4084
    %v4086 = vsel %vm4083, %v4085, %v4081
    %v4087 = vmul.f32 1.0, %v4086
    %v4088 = vrcp.pop %v3772
    %v4089 = vmul.f32 %v3772, %v4088
    %v4090 = vsub.f32 1.0, %v4089
    %v4091 = vmul.f32 %v4088, %v4090
    %v4092 = vadd.f32 %v4088, %v4091
    %vm4093 = vweird.f32 %v3772
    %vm4094 = vweird.f32 %v4088
    %vm4095 = vmor %vm4093, %vm4094
    %v4096 = vsel %vm4095, %v4088, %v4092
    %v4097 = vand.u32 2147483647, %v3772
    %vm4098 = vcmp.eq.f32.partialorder %v4097, 8.507059e+37
    %v4099 = vand.u32 %v3772, 2147483648
    %v4100 = vor.u32 1.1754944e-38, %v4099
    %v4101 = vsel %vm4098, %v4100, %v4096
    %v4102 = vmul.f32 1.0, %v4101
    %v4103 = vrcp.pop %v3773
    %v4104 = vmul.f32 %v3773, %v4103
    %v4105 = vsub.f32 1.0, %v4104
    %v4106 = vmul.f32 %v4103, %v4105
    %v4107 = vadd.f32 %v4103, %v4106
    %vm4108 = vweird.f32 %v3773
    %vm4109 = vweird.f32 %v4103
    %vm4110 = vmor %vm4108, %vm4109
    %v4111 = vsel %vm4110, %v4103, %v4107
    %v4112 = vand.u32 2147483647, %v3773
    %vm4113 = vcmp.eq.f32.partialorder %v4112, 8.507059e+37
    %v4114 = vand.u32 %v3773, 2147483648
    %v4115 = vor.u32 1.1754944e-38, %v4114
    %v4116 = vsel %vm4113, %v4115, %v4111
    %v4117 = vmul.f32 1.0, %v4116
    %v4118 = vrcp.pop %v3774
    %v4119 = vmul.f32 %v3774, %v4118
    %v4120 = vsub.f32 1.0, %v4119
    %v4121 = vmul.f32 %v4118, %v4120
    %v4122 = vadd.f32 %v4118, %v4121
    %vm4123 = vweird.f32 %v3774
    %vm4124 = vweird.f32 %v4118
    %vm4125 = vmor %vm4123, %vm4124
    %v4126 = vsel %vm4125, %v4118, %v4122
    %v4127 = vand.u32 2147483647, %v3774
    %vm4128 = vcmp.eq.f32.partialorder %v4127, 8.507059e+37
    %v4129 = vand.u32 %v3774, 2147483648
    %v4130 = vor.u32 1.1754944e-38, %v4129
    %v4131 = vsel %vm4128, %v4130, %v4126
    %v4132 = vmul.f32 1.0, %v4131
    %v4133 = vrcp.pop %v3775
    %v4134 = vmul.f32 %v3775, %v4133
    %v4135 = vsub.f32 1.0, %v4134
    %v4136 = vmul.f32 %v4133, %v4135
    %v4137 = vadd.f32 %v4133, %v4136
    %vm4138 = vweird.f32 %v3775
    %vm4139 = vweird.f32 %v4133
    %vm4140 = vmor %vm4138, %vm4139
    %v4141 = vsel %vm4140, %v4133, %v4137
    %v4142 = vand.u32 2147483647, %v3775
    %vm4143 = vcmp.eq.f32.partialorder %v4142, 8.507059e+37
    %v4144 = vand.u32 %v3775, 2147483648
    %v4145 = vor.u32 1.1754944e-38, %v4144
    %v4146 = vsel %vm4143, %v4145, %v4141
    %v4147 = vmul.f32 1.0, %v4146
    %v4148 = vrcp.pop %v3776
    %v4149 = vmul.f32 %v3776, %v4148
    %v4150 = vsub.f32 1.0, %v4149
    %v4151 = vmul.f32 %v4148, %v4150
    %v4152 = vadd.f32 %v4148, %v4151
    %vm4153 = vweird.f32 %v3776
    %vm4154 = vweird.f32 %v4148
    %vm4155 = vmor %vm4153, %vm4154
    %v4156 = vsel %vm4155, %v4148, %v4152
    %v4157 = vand.u32 2147483647, %v3776
    %vm4158 = vcmp.eq.f32.partialorder %v4157, 8.507059e+37
    %v4159 = vand.u32 %v3776, 2147483648
    %v4160 = vor.u32 1.1754944e-38, %v4159
    %v4161 = vsel %vm4158, %v4160, %v4156
    %v4162 = vmul.f32 1.0, %v4161
    %v4163 = vrcp.pop %v3777
    %v4164 = vmul.f32 %v3777, %v4163
    %v4165 = vsub.f32 1.0, %v4164
    %v4166 = vmul.f32 %v4163, %v4165
    %v4167 = vadd.f32 %v4163, %v4166
    %vm4168 = vweird.f32 %v3777
    %vm4169 = vweird.f32 %v4163
    %vm4170 = vmor %vm4168, %vm4169
    %v4171 = vsel %vm4170, %v4163, %v4167
    %v4172 = vand.u32 2147483647, %v3777
    %vm4173 = vcmp.eq.f32.partialorder %v4172, 8.507059e+37
    %v4174 = vand.u32 %v3777, 2147483648
    %v4175 = vor.u32 1.1754944e-38, %v4174
    %v4176 = vsel %vm4173, %v4175, %v4171
    %v4177 = vmul.f32 1.0, %v4176
    %v4178 = vrcp.pop %v3778
    %v4179 = vmul.f32 %v3778, %v4178
    %v4180 = vsub.f32 1.0, %v4179
    %v4181 = vmul.f32 %v4178, %v4180
    %v4182 = vadd.f32 %v4178, %v4181
    %vm4183 = vweird.f32 %v3778
    %vm4184 = vweird.f32 %v4178
    %vm4185 = vmor %vm4183, %vm4184
    %v4186 = vsel %vm4185, %v4178, %v4182
    %v4187 = vand.u32 2147483647, %v3778
    %vm4188 = vcmp.eq.f32.partialorder %v4187, 8.507059e+37
    %v4189 = vand.u32 %v3778, 2147483648
    %v4190 = vor.u32 1.1754944e-38, %v4189
    %v4191 = vsel %vm4188, %v4190, %v4186
    %v4192 = vmul.f32 1.0, %v4191
    %v4193 = vrcp.pop %v3779
    %v4194 = vmul.f32 %v3779, %v4193
    %v4195 = vsub.f32 1.0, %v4194
    %v4196 = vmul.f32 %v4193, %v4195
    %v4197 = vadd.f32 %v4193, %v4196
    %vm4198 = vweird.f32 %v3779
    %vm4199 = vweird.f32 %v4193
    %vm4200 = vmor %vm4198, %vm4199
    %v4201 = vsel %vm4200, %v4193, %v4197
    %v4202 = vand.u32 2147483647, %v3779
    %vm4203 = vcmp.eq.f32.partialorder %v4202, 8.507059e+37
    %v4204 = vand.u32 %v3779, 2147483648
    %v4205 = vor.u32 1.1754944e-38, %v4204
    %v4206 = vsel %vm4203, %v4205, %v4201
    %v4207 = vmul.f32 1.0, %v4206
    %v4208 = vrcp.pop %v3780
    %v4209 = vmul.f32 %v3780, %v4208
    %v4210 = vsub.f32 1.0, %v4209
    %v4211 = vmul.f32 %v4208, %v4210
    %v4212 = vadd.f32 %v4208, %v4211
    %vm4213 = vweird.f32 %v3780
    %vm4214 = vweird.f32 %v4208
    %vm4215 = vmor %vm4213, %vm4214
    %v4216 = vsel %vm4215, %v4208, %v4212
    %v4217 = vand.u32 2147483647, %v3780
    %vm4218 = vcmp.eq.f32.partialorder %v4217, 8.507059e+37
    %v4219 = vand.u32 %v3780, 2147483648
    %v4220 = vor.u32 1.1754944e-38, %v4219
    %v4221 = vsel %vm4218, %v4220, %v4216
    %v4222 = vmul.f32 1.0, %v4221
    %v4223 = vrcp.pop %v3781
    %v4224 = vmul.f32 %v3781, %v4223
    %v4225 = vsub.f32 1.0, %v4224
    %v4226 = vmul.f32 %v4223, %v4225
    %v4227 = vadd.f32 %v4223, %v4226
    %vm4228 = vweird.f32 %v3781
    %vm4229 = vweird.f32 %v4223
    %vm4230 = vmor %vm4228, %vm4229
    %v4231 = vsel %vm4230, %v4223, %v4227
    %v4232 = vand.u32 2147483647, %v3781
    %vm4233 = vcmp.eq.f32.partialorder %v4232, 8.507059e+37
    %v4234 = vand.u32 %v3781, 2147483648
    %v4235 = vor.u32 1.1754944e-38, %v4234
    %v4236 = vsel %vm4233, %v4235, %v4231
    %v4237 = vmul.f32 1.0, %v4236
    %v4238 = vrcp.pop %v3782
    %v4239 = vmul.f32 %v3782, %v4238
    %v4240 = vsub.f32 1.0, %v4239
    %v4241 = vmul.f32 %v4238, %v4240
    %v4242 = vadd.f32 %v4238, %v4241
    %vm4243 = vweird.f32 %v3782
    %vm4244 = vweird.f32 %v4238
    %vm4245 = vmor %vm4243, %vm4244
    %v4246 = vsel %vm4245, %v4238, %v4242
    %v4247 = vand.u32 2147483647, %v3782
    %vm4248 = vcmp.eq.f32.partialorder %v4247, 8.507059e+37
    %v4249 = vand.u32 %v3782, 2147483648
    %v4250 = vor.u32 1.1754944e-38, %v4249
    %v4251 = vsel %vm4248, %v4250, %v4246
    %v4252 = vmul.f32 1.0, %v4251
    %v4253 = vrcp.pop %v3783
    %v4254 = vmul.f32 %v3783, %v4253
    %v4255 = vsub.f32 1.0, %v4254
    %v4256 = vmul.f32 %v4253, %v4255
    %v4257 = vadd.f32 %v4253, %v4256
    %vm4258 = vweird.f32 %v3783
    %vm4259 = vweird.f32 %v4253
    %vm4260 = vmor %vm4258, %vm4259
    %v4261 = vsel %vm4260, %v4253, %v4257
    %v4262 = vand.u32 2147483647, %v3783
    %vm4263 = vcmp.eq.f32.partialorder %v4262, 8.507059e+37
    %v4264 = vand.u32 %v3783, 2147483648
    %v4265 = vor.u32 1.1754944e-38, %v4264
    %v4266 = vsel %vm4263, %v4265, %v4261
    %v4267 = vmul.f32 1.0, %v4266
    %v4268 = vrcp.pop %v3784
    %v4269 = vmul.f32 %v3784, %v4268
    %v4270 = vsub.f32 1.0, %v4269
    %v4271 = vmul.f32 %v4268, %v4270
    %v4272 = vadd.f32 %v4268, %v4271
    %vm4273 = vweird.f32 %v3784
    %vm4274 = vweird.f32 %v4268
    %vm4275 = vmor %vm4273, %vm4274
    %v4276 = vsel %vm4275, %v4268, %v4272
    %v4277 = vand.u32 2147483647, %v3784
    %vm4278 = vcmp.eq.f32.partialorder %v4277, 8.507059e+37
    %v4279 = vand.u32 %v3784, 2147483648
    %v4280 = vor.u32 1.1754944e-38, %v4279
    %v4281 = vsel %vm4278, %v4280, %v4276
    %v4282 = vmul.f32 1.0, %v4281
    %v4283 = vrcp.pop %v3785
    %v4284 = vmul.f32 %v3785, %v4283
    %v4285 = vsub.f32 1.0, %v4284
    %v4286 = vmul.f32 %v4283, %v4285
    %v4287 = vadd.f32 %v4283, %v4286
    %vm4288 = vweird.f32 %v3785
    %vm4289 = vweird.f32 %v4283
    %vm4290 = vmor %vm4288, %vm4289
    %v4291 = vsel %vm4290, %v4283, %v4287
    %v4292 = vand.u32 2147483647, %v3785
    %vm4293 = vcmp.eq.f32.partialorder %v4292, 8.507059e+37
    %v4294 = vand.u32 %v3785, 2147483648
    %v4295 = vor.u32 1.1754944e-38, %v4294
    %v4296 = vsel %vm4293, %v4295, %v4291
    %v4297 = vmul.f32 1.0, %v4296
    %v4298 = vrcp.pop %v3786
    %v4299 = vmul.f32 %v3786, %v4298
    %v4300 = vsub.f32 1.0, %v4299
    %v4301 = vmul.f32 %v4298, %v4300
    %v4302 = vadd.f32 %v4298, %v4301
    %vm4303 = vweird.f32 %v3786
    %vm4304 = vweird.f32 %v4298
    %vm4305 = vmor %vm4303, %vm4304
    %v4306 = vsel %vm4305, %v4298, %v4302
    %v4307 = vand.u32 2147483647, %v3786
    %vm4308 = vcmp.eq.f32.partialorder %v4307, 8.507059e+37
    %v4309 = vand.u32 %v3786, 2147483648
    %v4310 = vor.u32 1.1754944e-38, %v4309
    %v4311 = vsel %vm4308, %v4310, %v4306
    %v4312 = vmul.f32 1.0, %v4311
    %v4313 = vrcp.pop %v3787
    %v4314 = vmul.f32 %v3787, %v4313
    %v4315 = vsub.f32 1.0, %v4314
    %v4316 = vmul.f32 %v4313, %v4315
    %v4317 = vadd.f32 %v4313, %v4316
    %vm4318 = vweird.f32 %v3787
    %vm4319 = vweird.f32 %v4313
    %vm4320 = vmor %vm4318, %vm4319
    %v4321 = vsel %vm4320, %v4313, %v4317
    %v4322 = vand.u32 2147483647, %v3787
    %vm4323 = vcmp.eq.f32.partialorder %v4322, 8.507059e+37
    %v4324 = vand.u32 %v3787, 2147483648
    %v4325 = vor.u32 1.1754944e-38, %v4324
    %v4326 = vsel %vm4323, %v4325, %v4321
    %v4327 = vmul.f32 1.0, %v4326
    %v4328 = vrcp.pop %v3788
    %v4329 = vmul.f32 %v3788, %v4328
    %v4330 = vsub.f32 1.0, %v4329
    %v4331 = vmul.f32 %v4328, %v4330
    %v4332 = vadd.f32 %v4328, %v4331
    %vm4333 = vweird.f32 %v3788
    %vm4334 = vweird.f32 %v4328
    %vm4335 = vmor %vm4333, %vm4334
    %v4336 = vsel %vm4335, %v4328, %v4332
    %v4337 = vand.u32 2147483647, %v3788
    %vm4338 = vcmp.eq.f32.partialorder %v4337, 8.507059e+37
    %v4339 = vand.u32 %v3788, 2147483648
    %v4340 = vor.u32 1.1754944e-38, %v4339
    %v4341 = vsel %vm4338, %v4340, %v4336
    %v4342 = vmul.f32 1.0, %v4341
    %v4343 = vrcp.pop %v3789
    %v4344 = vmul.f32 %v3789, %v4343
    %v4345 = vsub.f32 1.0, %v4344
    %v4346 = vmul.f32 %v4343, %v4345
    %v4347 = vadd.f32 %v4343, %v4346
    %vm4348 = vweird.f32 %v3789
    %vm4349 = vweird.f32 %v4343
    %vm4350 = vmor %vm4348, %vm4349
    %v4351 = vsel %vm4350, %v4343, %v4347
    %v4352 = vand.u32 2147483647, %v3789
    %vm4353 = vcmp.eq.f32.partialorder %v4352, 8.507059e+37
    %v4354 = vand.u32 %v3789, 2147483648
    %v4355 = vor.u32 1.1754944e-38, %v4354
    %v4356 = vsel %vm4353, %v4355, %v4351
    %v4357 = vmul.f32 1.0, %v4356
    %v4358 = vrcp.pop %v3790
    %v4359 = vmul.f32 %v3790, %v4358
    %v4360 = vsub.f32 1.0, %v4359
    %v4361 = vmul.f32 %v4358, %v4360
    %v4362 = vadd.f32 %v4358, %v4361
    %vm4363 = vweird.f32 %v3790
    %vm4364 = vweird.f32 %v4358
    %vm4365 = vmor %vm4363, %vm4364
    %v4366 = vsel %vm4365, %v4358, %v4362
    %v4367 = vand.u32 2147483647, %v3790
    %vm4368 = vcmp.eq.f32.partialorder %v4367, 8.507059e+37
    %v4369 = vand.u32 %v3790, 2147483648
    %v4370 = vor.u32 1.1754944e-38, %v4369
    %v4371 = vsel %vm4368, %v4370, %v4366
    %v4372 = vmul.f32 1.0, %v4371
    %v4373 = vrcp.pop %v3791
    %v4374 = vmul.f32 %v3791, %v4373
    %v4375 = vsub.f32 1.0, %v4374
    %v4376 = vmul.f32 %v4373, %v4375
    %v4377 = vadd.f32 %v4373, %v4376
    %vm4378 = vweird.f32 %v3791
    %vm4379 = vweird.f32 %v4373
    %vm4380 = vmor %vm4378, %vm4379
    %v4381 = vsel %vm4380, %v4373, %v4377
    %v4382 = vand.u32 2147483647, %v3791
    %vm4383 = vcmp.eq.f32.partialorder %v4382, 8.507059e+37
    %v4384 = vand.u32 %v3791, 2147483648
    %v4385 = vor.u32 1.1754944e-38, %v4384
    %v4386 = vsel %vm4383, %v4385, %v4381
    %v4387 = vmul.f32 1.0, %v4386
    %v4388 = vrcp.pop %v3792
    %v4389 = vmul.f32 %v3792, %v4388
    %v4390 = vsub.f32 1.0, %v4389
    %v4391 = vmul.f32 %v4388, %v4390
    %v4392 = vadd.f32 %v4388, %v4391
    %vm4393 = vweird.f32 %v3792
    %vm4394 = vweird.f32 %v4388
    %vm4395 = vmor %vm4393, %vm4394
    %v4396 = vsel %vm4395, %v4388, %v4392
    %v4397 = vand.u32 2147483647, %v3792
    %vm4398 = vcmp.eq.f32.partialorder %v4397, 8.507059e+37
    %v4399 = vand.u32 %v3792, 2147483648
    %v4400 = vor.u32 1.1754944e-38, %v4399
    %v4401 = vsel %vm4398, %v4400, %v4396
    %v4402 = vmul.f32 1.0, %v4401
    %v4403 = vrcp.pop %v3793
    %v4404 = vmul.f32 %v3793, %v4403
    %v4405 = vsub.f32 1.0, %v4404
    %v4406 = vmul.f32 %v4403, %v4405
    %v4407 = vadd.f32 %v4403, %v4406
    %vm4408 = vweird.f32 %v3793
    %vm4409 = vweird.f32 %v4403
    %vm4410 = vmor %vm4408, %vm4409
    %v4411 = vsel %vm4410, %v4403, %v4407
    %v4412 = vand.u32 2147483647, %v3793
    %vm4413 = vcmp.eq.f32.partialorder %v4412, 8.507059e+37
    %v4414 = vand.u32 %v3793, 2147483648
    %v4415 = vor.u32 1.1754944e-38, %v4414
    %v4416 = vsel %vm4413, %v4415, %v4411
    %v4417 = vmul.f32 1.0, %v4416
    %v4418 = vrcp.pop %v3794
    %v4419 = vmul.f32 %v3794, %v4418
    %v4420 = vsub.f32 1.0, %v4419
    %v4421 = vmul.f32 %v4418, %v4420
    %v4422 = vadd.f32 %v4418, %v4421
    %vm4423 = vweird.f32 %v3794
    %vm4424 = vweird.f32 %v4418
    %vm4425 = vmor %vm4423, %vm4424
    %v4426 = vsel %vm4425, %v4418, %v4422
    %v4427 = vand.u32 2147483647, %v3794
    %vm4428 = vcmp.eq.f32.partialorder %v4427, 8.507059e+37
    %v4429 = vand.u32 %v3794, 2147483648
    %v4430 = vor.u32 1.1754944e-38, %v4429
    %v4431 = vsel %vm4428, %v4430, %v4426
    %v4432 = vmul.f32 1.0, %v4431
    %v4433 = vrcp.pop %v3795
    %v4434 = vmul.f32 %v3795, %v4433
    %v4435 = vsub.f32 1.0, %v4434
    %v4436 = vmul.f32 %v4433, %v4435
    %v4437 = vadd.f32 %v4433, %v4436
    %vm4438 = vweird.f32 %v3795
    %vm4439 = vweird.f32 %v4433
    %vm4440 = vmor %vm4438, %vm4439
    %v4441 = vsel %vm4440, %v4433, %v4437
    %v4442 = vand.u32 2147483647, %v3795
    %vm4443 = vcmp.eq.f32.partialorder %v4442, 8.507059e+37
    %v4444 = vand.u32 %v3795, 2147483648
    %v4445 = vor.u32 1.1754944e-38, %v4444
    %v4446 = vsel %vm4443, %v4445, %v4441
    %v4447 = vmul.f32 1.0, %v4446
    %v4448 = vrcp.pop %v3796
    %v4449 = vmul.f32 %v3796, %v4448
    %v4450 = vsub.f32 1.0, %v4449
    %v4451 = vmul.f32 %v4448, %v4450
    %v4452 = vadd.f32 %v4448, %v4451
    %vm4453 = vweird.f32 %v3796
    %vm4454 = vweird.f32 %v4448
    %vm4455 = vmor %vm4453, %vm4454
    %v4456 = vsel %vm4455, %v4448, %v4452
    %v4457 = vand.u32 2147483647, %v3796
    %vm4458 = vcmp.eq.f32.partialorder %v4457, 8.507059e+37
    %v4459 = vand.u32 %v3796, 2147483648
    %v4460 = vor.u32 1.1754944e-38, %v4459
    %v4461 = vsel %vm4458, %v4460, %v4456
    %v4462 = vmul.f32 1.0, %v4461
    %v4463 = vrcp.pop %v3797
    %v4464 = vmul.f32 %v3797, %v4463
    %v4465 = vsub.f32 1.0, %v4464
    %v4466 = vmul.f32 %v4463, %v4465
    %v4467 = vadd.f32 %v4463, %v4466
    %vm4468 = vweird.f32 %v3797
    %vm4469 = vweird.f32 %v4463
    %vm4470 = vmor %vm4468, %vm4469
    %v4471 = vsel %vm4470, %v4463, %v4467
    %v4472 = vand.u32 2147483647, %v3797
    %vm4473 = vcmp.eq.f32.partialorder %v4472, 8.507059e+37
    %v4474 = vand.u32 %v3797, 2147483648
    %v4475 = vor.u32 1.1754944e-38, %v4474
    %v4476 = vsel %vm4473, %v4475, %v4471
    %v4477 = vmul.f32 1.0, %v4476
    %v4478 = vrcp.pop %v3798
    %v4479 = vmul.f32 %v3798, %v4478
    %v4480 = vsub.f32 1.0, %v4479
    %v4481 = vmul.f32 %v4478, %v4480
    %v4482 = vadd.f32 %v4478, %v4481
    %vm4483 = vweird.f32 %v3798
    %vm4484 = vweird.f32 %v4478
    %vm4485 = vmor %vm4483, %vm4484
    %v4486 = vsel %vm4485, %v4478, %v4482
    %v4487 = vand.u32 2147483647, %v3798
    %vm4488 = vcmp.eq.f32.partialorder %v4487, 8.507059e+37
    %v4489 = vand.u32 %v3798, 2147483648
    %v4490 = vor.u32 1.1754944e-38, %v4489
    %v4491 = vsel %vm4488, %v4490, %v4486
    %v4492 = vmul.f32 1.0, %v4491
    %v4493 = vrcp.pop %v3799
    %v4494 = vmul.f32 %v3799, %v4493
    %v4495 = vsub.f32 1.0, %v4494
    %v4496 = vmul.f32 %v4493, %v4495
    %v4497 = vadd.f32 %v4493, %v4496
    %vm4498 = vweird.f32 %v3799
    %vm4499 = vweird.f32 %v4493
    %vm4500 = vmor %vm4498, %vm4499
    %v4501 = vsel %vm4500, %v4493, %v4497
    %v4502 = vand.u32 2147483647, %v3799
    %vm4503 = vcmp.eq.f32.partialorder %v4502, 8.507059e+37
    %v4504 = vand.u32 %v3799, 2147483648
    %v4505 = vor.u32 1.1754944e-38, %v4504
    %v4506 = vsel %vm4503, %v4505, %v4501
    %v4507 = vmul.f32 1.0, %v4506
    %v4508 = vrcp.pop %v3800
    %v4509 = vmul.f32 %v3800, %v4508
    %v4510 = vsub.f32 1.0, %v4509
    %v4511 = vmul.f32 %v4508, %v4510
    %v4512 = vadd.f32 %v4508, %v4511
    %vm4513 = vweird.f32 %v3800
    %vm4514 = vweird.f32 %v4508
    %vm4515 = vmor %vm4513, %vm4514
    %v4516 = vsel %vm4515, %v4508, %v4512
    %v4517 = vand.u32 2147483647, %v3800
    %vm4518 = vcmp.eq.f32.partialorder %v4517, 8.507059e+37
    %v4519 = vand.u32 %v3800, 2147483648
    %v4520 = vor.u32 1.1754944e-38, %v4519
    %v4521 = vsel %vm4518, %v4520, %v4516
    %v4522 = vmul.f32 1.0, %v4521
    %v4523 = vrcp.pop %v3801
    %v4524 = vmul.f32 %v3801, %v4523
    %v4525 = vsub.f32 1.0, %v4524
    %v4526 = vmul.f32 %v4523, %v4525
    %v4527 = vadd.f32 %v4523, %v4526
    %vm4528 = vweird.f32 %v3801
    %vm4529 = vweird.f32 %v4523
    %vm4530 = vmor %vm4528, %vm4529
    %v4531 = vsel %vm4530, %v4523, %v4527
    %v4532 = vand.u32 2147483647, %v3801
    %vm4533 = vcmp.eq.f32.partialorder %v4532, 8.507059e+37
    %v4534 = vand.u32 %v3801, 2147483648
    %v4535 = vor.u32 1.1754944e-38, %v4534
    %v4536 = vsel %vm4533, %v4535, %v4531
    %v4537 = vmul.f32 1.0, %v4536
    %v4538 = vrcp.pop %v3802
    %v4539 = vmul.f32 %v3802, %v4538
    %v4540 = vsub.f32 1.0, %v4539
    %v4541 = vmul.f32 %v4538, %v4540
    %v4542 = vadd.f32 %v4538, %v4541
    %vm4543 = vweird.f32 %v3802
    %vm4544 = vweird.f32 %v4538
    %vm4545 = vmor %vm4543, %vm4544
    %v4546 = vsel %vm4545, %v4538, %v4542
    %v4547 = vand.u32 2147483647, %v3802
    %vm4548 = vcmp.eq.f32.partialorder %v4547, 8.507059e+37
    %v4549 = vand.u32 %v3802, 2147483648
    %v4550 = vor.u32 1.1754944e-38, %v4549
    %v4551 = vsel %vm4548, %v4550, %v4546
    %v4552 = vmul.f32 1.0, %v4551
    %v4553 = vrcp.pop %v3803
    %v4554 = vmul.f32 %v3803, %v4553
    %v4555 = vsub.f32 1.0, %v4554
    %v4556 = vmul.f32 %v4553, %v4555
    %v4557 = vadd.f32 %v4553, %v4556
    %vm4558 = vweird.f32 %v3803
    %vm4559 = vweird.f32 %v4553
    %vm4560 = vmor %vm4558, %vm4559
    %v4561 = vsel %vm4560, %v4553, %v4557
    %v4562 = vand.u32 2147483647, %v3803
    %vm4563 = vcmp.eq.f32.partialorder %v4562, 8.507059e+37
    %v4564 = vand.u32 %v3803, 2147483648
    %v4565 = vor.u32 1.1754944e-38, %v4564
    %v4566 = vsel %vm4563, %v4565, %v4561
    %v4567 = vmul.f32 1.0, %v4566
    %v4568 = vrcp.pop %v3804
    %v4569 = vmul.f32 %v3804, %v4568
    %v4570 = vsub.f32 1.0, %v4569
    %v4571 = vmul.f32 %v4568, %v4570
    %v4572 = vadd.f32 %v4568, %v4571
    %vm4573 = vweird.f32 %v3804
    %vm4574 = vweird.f32 %v4568
    %vm4575 = vmor %vm4573, %vm4574
    %v4576 = vsel %vm4575, %v4568, %v4572
    %v4577 = vand.u32 2147483647, %v3804
    %vm4578 = vcmp.eq.f32.partialorder %v4577, 8.507059e+37
    %v4579 = vand.u32 %v3804, 2147483648
    %v4580 = vor.u32 1.1754944e-38, %v4579
    %v4581 = vsel %vm4578, %v4580, %v4576
    %v4582 = vmul.f32 1.0, %v4581
    %v4583 = vrcp.pop %v3805
    %v4584 = vmul.f32 %v3805, %v4583
    %v4585 = vsub.f32 1.0, %v4584
    %v4586 = vmul.f32 %v4583, %v4585
    %v4587 = vadd.f32 %v4583, %v4586
    %vm4588 = vweird.f32 %v3805
    %vm4589 = vweird.f32 %v4583
    %vm4590 = vmor %vm4588, %vm4589
    %v4591 = vsel %vm4590, %v4583, %v4587
    %v4592 = vand.u32 2147483647, %v3805
    %vm4593 = vcmp.eq.f32.partialorder %v4592, 8.507059e+37
    %v4594 = vand.u32 %v3805, 2147483648
    %v4595 = vor.u32 1.1754944e-38, %v4594
    %v4596 = vsel %vm4593, %v4595, %v4591
    %v4597 = vmul.f32 1.0, %v4596
    %v4598 = vrcp.pop %v3806
    %v4599 = vmul.f32 %v3806, %v4598
    %v4600 = vsub.f32 1.0, %v4599
    %v4601 = vmul.f32 %v4598, %v4600
    %v4602 = vadd.f32 %v4598, %v4601
    %vm4603 = vweird.f32 %v3806
    %vm4604 = vweird.f32 %v4598
    %vm4605 = vmor %vm4603, %vm4604
    %v4606 = vsel %vm4605, %v4598, %v4602
    %v4607 = vand.u32 2147483647, %v3806
    %vm4608 = vcmp.eq.f32.partialorder %v4607, 8.507059e+37
    %v4609 = vand.u32 %v3806, 2147483648
    %v4610 = vor.u32 1.1754944e-38, %v4609
    %v4611 = vsel %vm4608, %v4610, %v4606
    %v4612 = vmul.f32 1.0, %v4611
    %v4613 = vrcp.pop %v3807
    %v4614 = vmul.f32 %v3807, %v4613
    %v4615 = vsub.f32 1.0, %v4614
    %v4616 = vmul.f32 %v4613, %v4615
    %v4617 = vadd.f32 %v4613, %v4616
    %vm4618 = vweird.f32 %v3807
    %vm4619 = vweird.f32 %v4613
    %vm4620 = vmor %vm4618, %vm4619
    %v4621 = vsel %vm4620, %v4613, %v4617
    %v4622 = vand.u32 2147483647, %v3807
    %vm4623 = vcmp.eq.f32.partialorder %v4622, 8.507059e+37
    %v4624 = vand.u32 %v3807, 2147483648
    %v4625 = vor.u32 1.1754944e-38, %v4624
    %v4626 = vsel %vm4623, %v4625, %v4621
    %v4627 = vmul.f32 1.0, %v4626
    %v4628 = vrcp.pop %v3808
    %v4629 = vmul.f32 %v3808, %v4628
    %v4630 = vsub.f32 1.0, %v4629
    %v4631 = vmul.f32 %v4628, %v4630
    %v4632 = vadd.f32 %v4628, %v4631
    %vm4633 = vweird.f32 %v3808
    %vm4634 = vweird.f32 %v4628
    %vm4635 = vmor %vm4633, %vm4634
    %v4636 = vsel %vm4635, %v4628, %v4632
    %v4637 = vand.u32 2147483647, %v3808
    %vm4638 = vcmp.eq.f32.partialorder %v4637, 8.507059e+37
    %v4639 = vand.u32 %v3808, 2147483648
    %v4640 = vor.u32 1.1754944e-38, %v4639
    %v4641 = vsel %vm4638, %v4640, %v4636
    %v4642 = vmul.f32 1.0, %v4641
    %v4643 = vrcp.pop %v3809
    %v4644 = vmul.f32 %v3809, %v4643
    %v4645 = vsub.f32 1.0, %v4644
    %v4646 = vmul.f32 %v4643, %v4645
    %v4647 = vadd.f32 %v4643, %v4646
    %vm4648 = vweird.f32 %v3809
    %vm4649 = vweird.f32 %v4643
    %vm4650 = vmor %vm4648, %vm4649
    %v4651 = vsel %vm4650, %v4643, %v4647
    %v4652 = vand.u32 2147483647, %v3809
    %vm4653 = vcmp.eq.f32.partialorder %v4652, 8.507059e+37
    %v4654 = vand.u32 %v3809, 2147483648
    %v4655 = vor.u32 1.1754944e-38, %v4654
    %v4656 = vsel %vm4653, %v4655, %v4651
    %v4657 = vmul.f32 1.0, %v4656
    %v4658 = vrcp.pop %v3810
    %v4659 = vmul.f32 %v3810, %v4658
    %v4660 = vsub.f32 1.0, %v4659
    %v4661 = vmul.f32 %v4658, %v4660
    %v4662 = vadd.f32 %v4658, %v4661
    %vm4663 = vweird.f32 %v3810
    %vm4664 = vweird.f32 %v4658
    %vm4665 = vmor %vm4663, %vm4664
    %v4666 = vsel %vm4665, %v4658, %v4662
    %v4667 = vand.u32 2147483647, %v3810
    %vm4668 = vcmp.eq.f32.partialorder %v4667, 8.507059e+37
    %v4669 = vand.u32 %v3810, 2147483648
    %v4670 = vor.u32 1.1754944e-38, %v4669
    %v4671 = vsel %vm4668, %v4670, %v4666
    %v4672 = vmul.f32 1.0, %v4671
    %v4673 = vrcp.pop %v3811
    %v4674 = vmul.f32 %v3811, %v4673
    %v4675 = vsub.f32 1.0, %v4674
    %v4676 = vmul.f32 %v4673, %v4675
    %v4677 = vadd.f32 %v4673, %v4676
    %vm4678 = vweird.f32 %v3811
    %vm4679 = vweird.f32 %v4673
    %vm4680 = vmor %vm4678, %vm4679
    %v4681 = vsel %vm4680, %v4673, %v4677
    %v4682 = vand.u32 2147483647, %v3811
    %vm4683 = vcmp.eq.f32.partialorder %v4682, 8.507059e+37
    %v4684 = vand.u32 %v3811, 2147483648
    %v4685 = vor.u32 1.1754944e-38, %v4684
    %v4686 = vsel %vm4683, %v4685, %v4681
    %v4687 = vmul.f32 1.0, %v4686
    %v4688 = vrcp.pop %v3812
    %v4689 = vmul.f32 %v3812, %v4688
    %v4690 = vsub.f32 1.0, %v4689
    %v4691 = vmul.f32 %v4688, %v4690
    %v4692 = vadd.f32 %v4688, %v4691
    %vm4693 = vweird.f32 %v3812
    %vm4694 = vweird.f32 %v4688
    %vm4695 = vmor %vm4693, %vm4694
    %v4696 = vsel %vm4695, %v4688, %v4692
    %v4697 = vand.u32 2147483647, %v3812
    %vm4698 = vcmp.eq.f32.partialorder %v4697, 8.507059e+37
    %v4699 = vand.u32 %v3812, 2147483648
    %v4700 = vor.u32 1.1754944e-38, %v4699
    %v4701 = vsel %vm4698, %v4700, %v4696
    %v4702 = vmul.f32 1.0, %v4701
    %v4703 = vrcp.pop %v3813
    %v4704 = vmul.f32 %v3813, %v4703
    %v4705 = vsub.f32 1.0, %v4704
    %v4706 = vmul.f32 %v4703, %v4705
    %v4707 = vadd.f32 %v4703, %v4706
    %vm4708 = vweird.f32 %v3813
    %vm4709 = vweird.f32 %v4703
    %vm4710 = vmor %vm4708, %vm4709
    %v4711 = vsel %vm4710, %v4703, %v4707
    %v4712 = vand.u32 2147483647, %v3813
    %vm4713 = vcmp.eq.f32.partialorder %v4712, 8.507059e+37
    %v4714 = vand.u32 %v3813, 2147483648
    %v4715 = vor.u32 1.1754944e-38, %v4714
    %v4716 = vsel %vm4713, %v4715, %v4711
    %v4717 = vmul.f32 1.0, %v4716
    %v4718 = vrcp.pop %v3814
    %v4719 = vmul.f32 %v3814, %v4718
    %v4720 = vsub.f32 1.0, %v4719
    %v4721 = vmul.f32 %v4718, %v4720
    %v4722 = vadd.f32 %v4718, %v4721
    %vm4723 = vweird.f32 %v3814
    %vm4724 = vweird.f32 %v4718
    %vm4725 = vmor %vm4723, %vm4724
    %v4726 = vsel %vm4725, %v4718, %v4722
    %v4727 = vand.u32 2147483647, %v3814
    %vm4728 = vcmp.eq.f32.partialorder %v4727, 8.507059e+37
    %v4729 = vand.u32 %v3814, 2147483648
    %v4730 = vor.u32 1.1754944e-38, %v4729
    %v4731 = vsel %vm4728, %v4730, %v4726
    %v4732 = vmul.f32 1.0, %v4731
    %v4733 = vrcp.pop %v3815
    %v4734 = vmul.f32 %v3815, %v4733
    %v4735 = vsub.f32 1.0, %v4734
    %v4736 = vmul.f32 %v4733, %v4735
    %v4737 = vadd.f32 %v4733, %v4736
    %vm4738 = vweird.f32 %v3815
    %vm4739 = vweird.f32 %v4733
    %vm4740 = vmor %vm4738, %vm4739
    %v4741 = vsel %vm4740, %v4733, %v4737
    %v4742 = vand.u32 2147483647, %v3815
    %vm4743 = vcmp.eq.f32.partialorder %v4742, 8.507059e+37
    %v4744 = vand.u32 %v3815, 2147483648
    %v4745 = vor.u32 1.1754944e-38, %v4744
    %v4746 = vsel %vm4743, %v4745, %v4741
    %v4747 = vmul.f32 1.0, %v4746
    %v4748 = vrcp.pop %v3816
    %v4749 = vmul.f32 %v3816, %v4748
    %v4750 = vsub.f32 1.0, %v4749
    %v4751 = vmul.f32 %v4748, %v4750
    %v4752 = vadd.f32 %v4748, %v4751
    %vm4753 = vweird.f32 %v3816
    %vm4754 = vweird.f32 %v4748
    %vm4755 = vmor %vm4753, %vm4754
    %v4756 = vsel %vm4755, %v4748, %v4752
    %v4757 = vand.u32 2147483647, %v3816
    %vm4758 = vcmp.eq.f32.partialorder %v4757, 8.507059e+37
    %v4759 = vand.u32 %v3816, 2147483648
    %v4760 = vor.u32 1.1754944e-38, %v4759
    %v4761 = vsel %vm4758, %v4760, %v4756
    %v4762 = vmul.f32 1.0, %v4761
    %v4763 = vrcp.pop %v3817
    %v4764 = vmul.f32 %v3817, %v4763
    %v4765 = vsub.f32 1.0, %v4764
    %v4766 = vmul.f32 %v4763, %v4765
    %v4767 = vadd.f32 %v4763, %v4766
    %vm4768 = vweird.f32 %v3817
    %vm4769 = vweird.f32 %v4763
    %vm4770 = vmor %vm4768, %vm4769
    %v4771 = vsel %vm4770, %v4763, %v4767
    %v4772 = vand.u32 2147483647, %v3817
    %vm4773 = vcmp.eq.f32.partialorder %v4772, 8.507059e+37
    %v4774 = vand.u32 %v3817, 2147483648
    %v4775 = vor.u32 1.1754944e-38, %v4774
    %v4776 = vsel %vm4773, %v4775, %v4771
    %v4777 = vmul.f32 1.0, %v4776
    %v4778 = vmul.f32 %v3371, %v3832
    %v4779 = vmul.f32 %v3374, %v3847
    %v4780 = vmul.f32 %v3377, %v3862
    %v4781 = vmul.f32 %v3380, %v3877
    %v4782 = vmul.f32 %v3383, %v3892
    %v4783 = vmul.f32 %v3386, %v3907
    %v4784 = vmul.f32 %v3389, %v3922
    %v4785 = vmul.f32 %v3392, %v3937
    %v4786 = vmul.f32 %v3395, %v3952
    %v4787 = vmul.f32 %v3398, %v3967
    %v4788 = vmul.f32 %v3401, %v3982
    %v4789 = vmul.f32 %v3404, %v3997
    %v4790 = vmul.f32 %v3407, %v4012
    %v4791 = vmul.f32 %v3410, %v4027
    %v4792 = vmul.f32 %v3413, %v4042
    %v4793 = vmul.f32 %v3416, %v4057
    %v4794 = vmul.f32 %v3419, %v4072
    %v4795 = vmul.f32 %v3422, %v4087
    %v4796 = vmul.f32 %v3425, %v4102
    %v4797 = vmul.f32 %v3428, %v4117
    %v4798 = vmul.f32 %v3431, %v4132
    %v4799 = vmul.f32 %v3434, %v4147
    %v4800 = vmul.f32 %v3437, %v4162
    %v4801 = vmul.f32 %v3440, %v4177
    %v4802 = vmul.f32 %v3443, %v4192
    %v4803 = vmul.f32 %v3446, %v4207
    %v4804 = vmul.f32 %v3449, %v4222
    %v4805 = vmul.f32 %v3452, %v4237
    %v4806 = vmul.f32 %v3455, %v4252
    %v4807 = vmul.f32 %v3458, %v4267
    %v4808 = vmul.f32 %v3461, %v4282
    %v4809 = vmul.f32 %v3464, %v4297
    %v4810 = vmul.f32 %v3467, %v4312
    %v4811 = vmul.f32 %v3470, %v4327
    %v4812 = vmul.f32 %v3473, %v4342
    %v4813 = vmul.f32 %v3476, %v4357
    %v4814 = vmul.f32 %v3479, %v4372
    %v4815 = vmul.f32 %v3482, %v4387
    %v4816 = vmul.f32 %v3485, %v4402
    %v4817 = vmul.f32 %v3488, %v4417
    %v4818 = vmul.f32 %v3491, %v4432
    %v4819 = vmul.f32 %v3494, %v4447
    %v4820 = vmul.f32 %v3497, %v4462
    %v4821 = vmul.f32 %v3500, %v4477
    %v4822 = vmul.f32 %v3503, %v4492
    %v4823 = vmul.f32 %v3506, %v4507
    %v4824 = vmul.f32 %v3509, %v4522
    %v4825 = vmul.f32 %v3512, %v4537
    %v4826 = vmul.f32 %v3515, %v4552
    %v4827 = vmul.f32 %v3518, %v4567
    %v4828 = vmul.f32 %v3521, %v4582
    %v4829 = vmul.f32 %v3524, %v4597
    %v4830 = vmul.f32 %v3527, %v4612
    %v4831 = vmul.f32 %v3530, %v4627
    %v4832 = vmul.f32 %v3533, %v4642
    %v4833 = vmul.f32 %v3536, %v4657
    %v4834 = vmul.f32 %v3539, %v4672
    %v4835 = vmul.f32 %v3542, %v4687
    %v4836 = vmul.f32 %v3545, %v4702
    %v4837 = vmul.f32 %v3548, %v4717
    %v4838 = vmul.f32 %v3551, %v4732
    %v4839 = vmul.f32 %v3554, %v4747
    %v4840 = vmul.f32 %v3557, %v4762
    %v4841 = vmul.f32 %v3560, %v4777
    %v4842 = vld [vmem:[#allocation9] sm:$0xff]
    %v4843 = vld [vmem:[#allocation9 + $0x8] sm:$0xff]
    %v4844 = vld [vmem:[#allocation9 + $0x10] sm:$0xff]
    %v4845 = vld [vmem:[#allocation9 + $0x18] sm:$0xff]
    %v4846 = vld [vmem:[#allocation9 + $0x20] sm:$0xff]
    %v4847 = vld [vmem:[#allocation9 + $0x28] sm:$0xff]
    %v4848 = vld [vmem:[#allocation9 + $0x30] sm:$0xff]
    %v4849 = vld [vmem:[#allocation9 + $0x38] sm:$0xff]
    %v4850 = vld [vmem:[#allocation9 + $0x40] sm:$0xff]
    %v4851 = vld [vmem:[#allocation9 + $0x48] sm:$0xff]
    %v4852 = vld [vmem:[#allocation9 + $0x50] sm:$0xff]
    %v4853 = vld [vmem:[#allocation9 + $0x58] sm:$0xff]
    %v4854 = vld [vmem:[#allocation9 + $0x60] sm:$0xff]
    %v4855 = vld [vmem:[#allocation9 + $0x68] sm:$0xff]
    %v4856 = vld [vmem:[#allocation9 + $0x70] sm:$0xff]
    %v4857 = vld [vmem:[#allocation9 + $0x78] sm:$0xff]
    %v4858 = vld [vmem:[#allocation9 + $0x80] sm:$0xff]
    %v4859 = vld [vmem:[#allocation9 + $0x88] sm:$0xff]
    %v4860 = vld [vmem:[#allocation9 + $0x90] sm:$0xff]
    %v4861 = vld [vmem:[#allocation9 + $0x98] sm:$0xff]
    %v4862 = vld [vmem:[#allocation9 + $0xa0] sm:$0xff]
    %v4863 = vld [vmem:[#allocation9 + $0xa8] sm:$0xff]
    %v4864 = vld [vmem:[#allocation9 + $0xb0] sm:$0xff]
    %v4865 = vld [vmem:[#allocation9 + $0xb8] sm:$0xff]
    %v4866 = vld [vmem:[#allocation9 + $0xc0] sm:$0xff]
    %v4867 = vld [vmem:[#allocation9 + $0xc8] sm:$0xff]
    %v4868 = vld [vmem:[#allocation9 + $0xd0] sm:$0xff]
    %v4869 = vld [vmem:[#allocation9 + $0xd8] sm:$0xff]
    %v4870 = vld [vmem:[#allocation9 + $0xe0] sm:$0xff]
    %v4871 = vld [vmem:[#allocation9 + $0xe8] sm:$0xff]
    %v4872 = vld [vmem:[#allocation9 + $0xf0] sm:$0xff]
    %v4873 = vld [vmem:[#allocation9 + $0xf8] sm:$0xff]
    %v4874 = vld [vmem:[#allocation9 + $0x100] sm:$0xff]
    %v4875 = vld [vmem:[#allocation9 + $0x108] sm:$0xff]
    %v4876 = vld [vmem:[#allocation9 + $0x110] sm:$0xff]
    %v4877 = vld [vmem:[#allocation9 + $0x118] sm:$0xff]
    %v4878 = vld [vmem:[#allocation9 + $0x120] sm:$0xff]
    %v4879 = vld [vmem:[#allocation9 + $0x128] sm:$0xff]
    %v4880 = vld [vmem:[#allocation9 + $0x130] sm:$0xff]
    %v4881 = vld [vmem:[#allocation9 + $0x138] sm:$0xff]
    %v4882 = vld [vmem:[#allocation9 + $0x140] sm:$0xff]
    %v4883 = vld [vmem:[#allocation9 + $0x148] sm:$0xff]
    %v4884 = vld [vmem:[#allocation9 + $0x150] sm:$0xff]
    %v4885 = vld [vmem:[#allocation9 + $0x158] sm:$0xff]
    %v4886 = vld [vmem:[#allocation9 + $0x160] sm:$0xff]
    %v4887 = vld [vmem:[#allocation9 + $0x168] sm:$0xff]
    %v4888 = vld [vmem:[#allocation9 + $0x170] sm:$0xff]
    %v4889 = vld [vmem:[#allocation9 + $0x178] sm:$0xff]
    %v4890 = vld [vmem:[#allocation9 + $0x180] sm:$0xff]
    %v4891 = vld [vmem:[#allocation9 + $0x188] sm:$0xff]
    %v4892 = vld [vmem:[#allocation9 + $0x190] sm:$0xff]
    %v4893 = vld [vmem:[#allocation9 + $0x198] sm:$0xff]
    %v4894 = vld [vmem:[#allocation9 + $0x1a0] sm:$0xff]
    %v4895 = vld [vmem:[#allocation9 + $0x1a8] sm:$0xff]
    %v4896 = vld [vmem:[#allocation9 + $0x1b0] sm:$0xff]
    %v4897 = vld [vmem:[#allocation9 + $0x1b8] sm:$0xff]
    %v4898 = vld [vmem:[#allocation9 + $0x1c0] sm:$0xff]
    %v4899 = vld [vmem:[#allocation9 + $0x1c8] sm:$0xff]
    %v4900 = vld [vmem:[#allocation9 + $0x1d0] sm:$0xff]
    %v4901 = vld [vmem:[#allocation9 + $0x1d8] sm:$0xff]
    %v4902 = vld [vmem:[#allocation9 + $0x1e0] sm:$0xff]
    %v4903 = vld [vmem:[#allocation9 + $0x1e8] sm:$0xff]
    %v4904 = vld [vmem:[#allocation9 + $0x1f0] sm:$0xff]
    %v4905 = vld [vmem:[#allocation9 + $0x1f8] sm:$0xff]
    %v4906 = vld [vmem:[#allocation9 + $0x200] sm:$0xff]
    %v4907 = vld [vmem:[#allocation9 + $0x208] sm:$0xff]
    %v4908 = vld [vmem:[#allocation9 + $0x210] sm:$0xff]
    %v4909 = vld [vmem:[#allocation9 + $0x218] sm:$0xff]
    %v4910 = vld [vmem:[#allocation9 + $0x220] sm:$0xff]
    %v4911 = vld [vmem:[#allocation9 + $0x228] sm:$0xff]
    %v4912 = vld [vmem:[#allocation9 + $0x230] sm:$0xff]
    %v4913 = vld [vmem:[#allocation9 + $0x238] sm:$0xff]
    %v4914 = vld [vmem:[#allocation9 + $0x240] sm:$0xff]
    %v4915 = vld [vmem:[#allocation9 + $0x248] sm:$0xff]
    %v4916 = vld [vmem:[#allocation9 + $0x250] sm:$0xff]
    %v4917 = vld [vmem:[#allocation9 + $0x258] sm:$0xff]
    %v4918 = vld [vmem:[#allocation9 + $0x260] sm:$0xff]
    %v4919 = vld [vmem:[#allocation9 + $0x268] sm:$0xff]
    %v4920 = vld [vmem:[#allocation9 + $0x270] sm:$0xff]
    %v4921 = vld [vmem:[#allocation9 + $0x278] sm:$0xff]
    %v4922 = vld [vmem:[#allocation9 + $0x280] sm:$0xff]
    %v4923 = vld [vmem:[#allocation9 + $0x288] sm:$0xff]
    %v4924 = vld [vmem:[#allocation9 + $0x290] sm:$0xff]
    %v4925 = vld [vmem:[#allocation9 + $0x298] sm:$0xff]
    %v4926 = vld [vmem:[#allocation9 + $0x2a0] sm:$0xff]
    %v4927 = vld [vmem:[#allocation9 + $0x2a8] sm:$0xff]
    %v4928 = vld [vmem:[#allocation9 + $0x2b0] sm:$0xff]
    %v4929 = vld [vmem:[#allocation9 + $0x2b8] sm:$0xff]
    %v4930 = vld [vmem:[#allocation9 + $0x2c0] sm:$0xff]
    %v4931 = vld [vmem:[#allocation9 + $0x2c8] sm:$0xff]
    %v4932 = vld [vmem:[#allocation9 + $0x2d0] sm:$0xff]
    %v4933 = vld [vmem:[#allocation9 + $0x2d8] sm:$0xff]
    %v4934 = vld [vmem:[#allocation9 + $0x2e0] sm:$0xff]
    %v4935 = vld [vmem:[#allocation9 + $0x2e8] sm:$0xff]
    %v4936 = vld [vmem:[#allocation9 + $0x2f0] sm:$0xff]
    %v4937 = vld [vmem:[#allocation9 + $0x2f8] sm:$0xff]
    %v4938 = vld [vmem:[#allocation9 + $0x300] sm:$0xff]
    %v4939 = vld [vmem:[#allocation9 + $0x308] sm:$0xff]
    %v4940 = vld [vmem:[#allocation9 + $0x310] sm:$0xff]
    %v4941 = vld [vmem:[#allocation9 + $0x318] sm:$0xff]
    %v4942 = vld [vmem:[#allocation9 + $0x320] sm:$0xff]
    %v4943 = vld [vmem:[#allocation9 + $0x328] sm:$0xff]
    %v4944 = vld [vmem:[#allocation9 + $0x330] sm:$0xff]
    %v4945 = vld [vmem:[#allocation9 + $0x338] sm:$0xff]
    %v4946 = vld [vmem:[#allocation9 + $0x340] sm:$0xff]
    %v4947 = vld [vmem:[#allocation9 + $0x348] sm:$0xff]
    %v4948 = vld [vmem:[#allocation9 + $0x350] sm:$0xff]
    %v4949 = vld [vmem:[#allocation9 + $0x358] sm:$0xff]
    %v4950 = vld [vmem:[#allocation9 + $0x360] sm:$0xff]
    %v4951 = vld [vmem:[#allocation9 + $0x368] sm:$0xff]
    %v4952 = vld [vmem:[#allocation9 + $0x370] sm:$0xff]
    %v4953 = vld [vmem:[#allocation9 + $0x378] sm:$0xff]
    %v4954 = vld [vmem:[#allocation9 + $0x380] sm:$0xff]
    %v4955 = vld [vmem:[#allocation9 + $0x388] sm:$0xff]
    %v4956 = vld [vmem:[#allocation9 + $0x390] sm:$0xff]
    %v4957 = vld [vmem:[#allocation9 + $0x398] sm:$0xff]
    %v4958 = vld [vmem:[#allocation9 + $0x3a0] sm:$0xff]
    %v4959 = vld [vmem:[#allocation9 + $0x3a8] sm:$0xff]
    %v4960 = vld [vmem:[#allocation9 + $0x3b0] sm:$0xff]
    %v4961 = vld [vmem:[#allocation9 + $0x3b8] sm:$0xff]
    %v4962 = vld [vmem:[#allocation9 + $0x3c0] sm:$0xff]
    %v4963 = vld [vmem:[#allocation9 + $0x3c8] sm:$0xff]
    %v4964 = vld [vmem:[#allocation9 + $0x3d0] sm:$0xff]
    %v4965 = vld [vmem:[#allocation9 + $0x3d8] sm:$0xff]
    %v4966 = vld [vmem:[#allocation9 + $0x3e0] sm:$0xff]
    %v4967 = vld [vmem:[#allocation9 + $0x3e8] sm:$0xff]
    %v4968 = vld [vmem:[#allocation9 + $0x3f0] sm:$0xff]
    %v4969 = vld [vmem:[#allocation9 + $0x3f8] sm:$0xff]
    %v4970 = vld [vmem:[#allocation9 + $0x400] sm:$0xff]
    %v4971 = vld [vmem:[#allocation9 + $0x408] sm:$0xff]
    %v4972 = vld [vmem:[#allocation9 + $0x410] sm:$0xff]
    %v4973 = vld [vmem:[#allocation9 + $0x418] sm:$0xff]
    %v4974 = vld [vmem:[#allocation9 + $0x420] sm:$0xff]
    %v4975 = vld [vmem:[#allocation9 + $0x428] sm:$0xff]
    %v4976 = vld [vmem:[#allocation9 + $0x430] sm:$0xff]
    %v4977 = vld [vmem:[#allocation9 + $0x438] sm:$0xff]
    %v4978 = vld [vmem:[#allocation9 + $0x440] sm:$0xff]
    %v4979 = vld [vmem:[#allocation9 + $0x448] sm:$0xff]
    %v4980 = vld [vmem:[#allocation9 + $0x450] sm:$0xff]
    %v4981 = vld [vmem:[#allocation9 + $0x458] sm:$0xff]
    %v4982 = vld [vmem:[#allocation9 + $0x460] sm:$0xff]
    %v4983 = vld [vmem:[#allocation9 + $0x468] sm:$0xff]
    %v4984 = vld [vmem:[#allocation9 + $0x470] sm:$0xff]
    %v4985 = vld [vmem:[#allocation9 + $0x478] sm:$0xff]
    %v4986 = vld [vmem:[#allocation9 + $0x480] sm:$0xff]
    %v4987 = vld [vmem:[#allocation9 + $0x488] sm:$0xff]
    %v4988 = vld [vmem:[#allocation9 + $0x490] sm:$0xff]
    %v4989 = vld [vmem:[#allocation9 + $0x498] sm:$0xff]
    %v4990 = vld [vmem:[#allocation9 + $0x4a0] sm:$0xff]
    %v4991 = vld [vmem:[#allocation9 + $0x4a8] sm:$0xff]
    %v4992 = vld [vmem:[#allocation9 + $0x4b0] sm:$0xff]
    %v4993 = vld [vmem:[#allocation9 + $0x4b8] sm:$0xff]
    %v4994 = vld [vmem:[#allocation9 + $0x4c0] sm:$0xff]
    %v4995 = vld [vmem:[#allocation9 + $0x4c8] sm:$0xff]
    %v4996 = vld [vmem:[#allocation9 + $0x4d0] sm:$0xff]
    %v4997 = vld [vmem:[#allocation9 + $0x4d8] sm:$0xff]
    %v4998 = vld [vmem:[#allocation9 + $0x4e0] sm:$0xff]
    %v4999 = vld [vmem:[#allocation9 + $0x4e8] sm:$0xff]
    %v5000 = vld [vmem:[#allocation9 + $0x4f0] sm:$0xff]
    %v5001 = vld [vmem:[#allocation9 + $0x4f8] sm:$0xff]
    %v5002 = vld [vmem:[#allocation9 + $0x500] sm:$0xff]
    %v5003 = vld [vmem:[#allocation9 + $0x508] sm:$0xff]
    %v5004 = vld [vmem:[#allocation9 + $0x510] sm:$0xff]
    %v5005 = vld [vmem:[#allocation9 + $0x518] sm:$0xff]
    %v5006 = vld [vmem:[#allocation9 + $0x520] sm:$0xff]
    %v5007 = vld [vmem:[#allocation9 + $0x528] sm:$0xff]
    %v5008 = vld [vmem:[#allocation9 + $0x530] sm:$0xff]
    %v5009 = vld [vmem:[#allocation9 + $0x538] sm:$0xff]
    %v5010 = vld [vmem:[#allocation9 + $0x540] sm:$0xff]
    %v5011 = vld [vmem:[#allocation9 + $0x548] sm:$0xff]
    %v5012 = vld [vmem:[#allocation9 + $0x550] sm:$0xff]
    %v5013 = vld [vmem:[#allocation9 + $0x558] sm:$0xff]
    %v5014 = vld [vmem:[#allocation9 + $0x560] sm:$0xff]
    %v5015 = vld [vmem:[#allocation9 + $0x568] sm:$0xff]
    %v5016 = vld [vmem:[#allocation9 + $0x570] sm:$0xff]
    %v5017 = vld [vmem:[#allocation9 + $0x578] sm:$0xff]
    %v5018 = vld [vmem:[#allocation9 + $0x580] sm:$0xff]
    %v5019 = vld [vmem:[#allocation9 + $0x588] sm:$0xff]
    %v5020 = vld [vmem:[#allocation9 + $0x590] sm:$0xff]
    %v5021 = vld [vmem:[#allocation9 + $0x598] sm:$0xff]
    %v5022 = vld [vmem:[#allocation9 + $0x5a0] sm:$0xff]
    %v5023 = vld [vmem:[#allocation9 + $0x5a8] sm:$0xff]
    %v5024 = vld [vmem:[#allocation9 + $0x5b0] sm:$0xff]
    %v5025 = vld [vmem:[#allocation9 + $0x5b8] sm:$0xff]
    %v5026 = vld [vmem:[#allocation9 + $0x5c0] sm:$0xff]
    %v5027 = vld [vmem:[#allocation9 + $0x5c8] sm:$0xff]
    %v5028 = vld [vmem:[#allocation9 + $0x5d0] sm:$0xff]
    %v5029 = vld [vmem:[#allocation9 + $0x5d8] sm:$0xff]
    %v5030 = vld [vmem:[#allocation9 + $0x5e0] sm:$0xff]
    %v5031 = vld [vmem:[#allocation9 + $0x5e8] sm:$0xff]
    %v5032 = vld [vmem:[#allocation9 + $0x5f0] sm:$0xff]
    %v5033 = vld [vmem:[#allocation9 + $0x5f8] sm:$0xff]
    %v5034 = vld [vmem:[#allocation9 + $0x600] sm:$0xff]
    %v5035 = vld [vmem:[#allocation9 + $0x608] sm:$0xff]
    %v5036 = vld [vmem:[#allocation9 + $0x610] sm:$0xff]
    %v5037 = vld [vmem:[#allocation9 + $0x618] sm:$0xff]
    %v5038 = vld [vmem:[#allocation9 + $0x620] sm:$0xff]
    %v5039 = vld [vmem:[#allocation9 + $0x628] sm:$0xff]
    %v5040 = vld [vmem:[#allocation9 + $0x630] sm:$0xff]
    %v5041 = vld [vmem:[#allocation9 + $0x638] sm:$0xff]
    %v5042 = vld [vmem:[#allocation9 + $0x640] sm:$0xff]
    %v5043 = vld [vmem:[#allocation9 + $0x648] sm:$0xff]
    %v5044 = vld [vmem:[#allocation9 + $0x650] sm:$0xff]
    %v5045 = vld [vmem:[#allocation9 + $0x658] sm:$0xff]
    %v5046 = vld [vmem:[#allocation9 + $0x660] sm:$0xff]
    %v5047 = vld [vmem:[#allocation9 + $0x668] sm:$0xff]
    %v5048 = vld [vmem:[#allocation9 + $0x670] sm:$0xff]
    %v5049 = vld [vmem:[#allocation9 + $0x678] sm:$0xff]
    %v5050 = vld [vmem:[#allocation9 + $0x680] sm:$0xff]
    %v5051 = vld [vmem:[#allocation9 + $0x688] sm:$0xff]
    %v5052 = vld [vmem:[#allocation9 + $0x690] sm:$0xff]
    %v5053 = vld [vmem:[#allocation9 + $0x698] sm:$0xff]
    %v5054 = vld [vmem:[#allocation9 + $0x6a0] sm:$0xff]
    %v5055 = vld [vmem:[#allocation9 + $0x6a8] sm:$0xff]
    %v5056 = vld [vmem:[#allocation9 + $0x6b0] sm:$0xff]
    %v5057 = vld [vmem:[#allocation9 + $0x6b8] sm:$0xff]
    %v5058 = vld [vmem:[#allocation9 + $0x6c0] sm:$0xff]
    %v5059 = vld [vmem:[#allocation9 + $0x6c8] sm:$0xff]
    %v5060 = vld [vmem:[#allocation9 + $0x6d0] sm:$0xff]
    %v5061 = vld [vmem:[#allocation9 + $0x6d8] sm:$0xff]
    %v5062 = vld [vmem:[#allocation9 + $0x6e0] sm:$0xff]
    %v5063 = vld [vmem:[#allocation9 + $0x6e8] sm:$0xff]
    %v5064 = vld [vmem:[#allocation9 + $0x6f0] sm:$0xff]
    %v5065 = vld [vmem:[#allocation9 + $0x6f8] sm:$0xff]
    %v5066 = vld [vmem:[#allocation9 + $0x700] sm:$0xff]
    %v5067 = vld [vmem:[#allocation9 + $0x708] sm:$0xff]
    %v5068 = vld [vmem:[#allocation9 + $0x710] sm:$0xff]
    %v5069 = vld [vmem:[#allocation9 + $0x718] sm:$0xff]
    %v5070 = vld [vmem:[#allocation9 + $0x720] sm:$0xff]
    %v5071 = vld [vmem:[#allocation9 + $0x728] sm:$0xff]
    %v5072 = vld [vmem:[#allocation9 + $0x730] sm:$0xff]
    %v5073 = vld [vmem:[#allocation9 + $0x738] sm:$0xff]
    %v5074 = vld [vmem:[#allocation9 + $0x740] sm:$0xff]
    %v5075 = vld [vmem:[#allocation9 + $0x748] sm:$0xff]
    %v5076 = vld [vmem:[#allocation9 + $0x750] sm:$0xff]
    %v5077 = vld [vmem:[#allocation9 + $0x758] sm:$0xff]
    %v5078 = vld [vmem:[#allocation9 + $0x760] sm:$0xff]
    %v5079 = vld [vmem:[#allocation9 + $0x768] sm:$0xff]
    %v5080 = vld [vmem:[#allocation9 + $0x770] sm:$0xff]
    %v5081 = vld [vmem:[#allocation9 + $0x778] sm:$0xff]
    %v5082 = vld [vmem:[#allocation9 + $0x780] sm:$0xff]
    %v5083 = vld [vmem:[#allocation9 + $0x788] sm:$0xff]
    %v5084 = vld [vmem:[#allocation9 + $0x790] sm:$0xff]
    %v5085 = vld [vmem:[#allocation9 + $0x798] sm:$0xff]
    %v5086 = vld [vmem:[#allocation9 + $0x7a0] sm:$0xff]
    %v5087 = vld [vmem:[#allocation9 + $0x7a8] sm:$0xff]
    %v5088 = vld [vmem:[#allocation9 + $0x7b0] sm:$0xff]
    %v5089 = vld [vmem:[#allocation9 + $0x7b8] sm:$0xff]
    %v5090 = vld [vmem:[#allocation9 + $0x7c0] sm:$0xff]
    %v5091 = vld [vmem:[#allocation9 + $0x7c8] sm:$0xff]
    %v5092 = vld [vmem:[#allocation9 + $0x7d0] sm:$0xff]
    %v5093 = vld [vmem:[#allocation9 + $0x7d8] sm:$0xff]
    %v5094 = vld [vmem:[#allocation9 + $0x7e0] sm:$0xff]
    %v5095 = vld [vmem:[#allocation9 + $0x7e8] sm:$0xff]
    %v5096 = vld [vmem:[#allocation9 + $0x7f0] sm:$0xff]
    %v5097 = vld [vmem:[#allocation9 + $0x7f8] sm:$0xff]
    %v5098 = vld [vmem:[#allocation9 + $0x800] sm:$0xff]
    %v5099 = vld [vmem:[#allocation9 + $0x808] sm:$0xff]
    %v5100 = vld [vmem:[#allocation9 + $0x810] sm:$0xff]
    %v5101 = vld [vmem:[#allocation9 + $0x818] sm:$0xff]
    %v5102 = vld [vmem:[#allocation9 + $0x820] sm:$0xff]
    %v5103 = vld [vmem:[#allocation9 + $0x828] sm:$0xff]
    %v5104 = vld [vmem:[#allocation9 + $0x830] sm:$0xff]
    %v5105 = vld [vmem:[#allocation9 + $0x838] sm:$0xff]
    %v5106 = vld [vmem:[#allocation9 + $0x840] sm:$0xff]
    %v5107 = vld [vmem:[#allocation9 + $0x848] sm:$0xff]
    %v5108 = vld [vmem:[#allocation9 + $0x850] sm:$0xff]
    %v5109 = vld [vmem:[#allocation9 + $0x858] sm:$0xff]
    %v5110 = vld [vmem:[#allocation9 + $0x860] sm:$0xff]
    %v5111 = vld [vmem:[#allocation9 + $0x868] sm:$0xff]
    %v5112 = vld [vmem:[#allocation9 + $0x870] sm:$0xff]
    %v5113 = vld [vmem:[#allocation9 + $0x878] sm:$0xff]
    %v5114 = vld [vmem:[#allocation9 + $0x880] sm:$0xff]
    %v5115 = vld [vmem:[#allocation9 + $0x888] sm:$0xff]
    %v5116 = vld [vmem:[#allocation9 + $0x890] sm:$0xff]
    %v5117 = vld [vmem:[#allocation9 + $0x898] sm:$0xff]
    %v5118 = vld [vmem:[#allocation9 + $0x8a0] sm:$0xff]
    %v5119 = vld [vmem:[#allocation9 + $0x8a8] sm:$0xff]
    %v5120 = vld [vmem:[#allocation9 + $0x8b0] sm:$0xff]
    %v5121 = vld [vmem:[#allocation9 + $0x8b8] sm:$0xff]
    %v5122 = vld [vmem:[#allocation9 + $0x8c0] sm:$0xff]
    %v5123 = vld [vmem:[#allocation9 + $0x8c8] sm:$0xff]
    %v5124 = vld [vmem:[#allocation9 + $0x8d0] sm:$0xff]
    %v5125 = vld [vmem:[#allocation9 + $0x8d8] sm:$0xff]
    %v5126 = vld [vmem:[#allocation9 + $0x8e0] sm:$0xff]
    %v5127 = vld [vmem:[#allocation9 + $0x8e8] sm:$0xff]
    %v5128 = vld [vmem:[#allocation9 + $0x8f0] sm:$0xff]
    %v5129 = vld [vmem:[#allocation9 + $0x8f8] sm:$0xff]
    %v5130 = vld [vmem:[#allocation9 + $0x900] sm:$0xff]
    %v5131 = vld [vmem:[#allocation9 + $0x908] sm:$0xff]
    %v5132 = vld [vmem:[#allocation9 + $0x910] sm:$0xff]
    %v5133 = vld [vmem:[#allocation9 + $0x918] sm:$0xff]
    %v5134 = vld [vmem:[#allocation9 + $0x920] sm:$0xff]
    %v5135 = vld [vmem:[#allocation9 + $0x928] sm:$0xff]
    %v5136 = vld [vmem:[#allocation9 + $0x930] sm:$0xff]
    %v5137 = vld [vmem:[#allocation9 + $0x938] sm:$0xff]
    %v5138 = vld [vmem:[#allocation9 + $0x940] sm:$0xff]
    %v5139 = vld [vmem:[#allocation9 + $0x948] sm:$0xff]
    %v5140 = vld [vmem:[#allocation9 + $0x950] sm:$0xff]
    %v5141 = vld [vmem:[#allocation9 + $0x958] sm:$0xff]
    %v5142 = vld [vmem:[#allocation9 + $0x960] sm:$0xff]
    %v5143 = vld [vmem:[#allocation9 + $0x968] sm:$0xff]
    %v5144 = vld [vmem:[#allocation9 + $0x970] sm:$0xff]
    %v5145 = vld [vmem:[#allocation9 + $0x978] sm:$0xff]
    %v5146 = vld [vmem:[#allocation9 + $0x980] sm:$0xff]
    %v5147 = vld [vmem:[#allocation9 + $0x988] sm:$0xff]
    %v5148 = vld [vmem:[#allocation9 + $0x990] sm:$0xff]
    %v5149 = vld [vmem:[#allocation9 + $0x998] sm:$0xff]
    %v5150 = vld [vmem:[#allocation9 + $0x9a0] sm:$0xff]
    %v5151 = vld [vmem:[#allocation9 + $0x9a8] sm:$0xff]
    %v5152 = vld [vmem:[#allocation9 + $0x9b0] sm:$0xff]
    %v5153 = vld [vmem:[#allocation9 + $0x9b8] sm:$0xff]
    %v5154 = vld [vmem:[#allocation9 + $0x9c0] sm:$0xff]
    %v5155 = vld [vmem:[#allocation9 + $0x9c8] sm:$0xff]
    %v5156 = vld [vmem:[#allocation9 + $0x9d0] sm:$0xff]
    %v5157 = vld [vmem:[#allocation9 + $0x9d8] sm:$0xff]
    %v5158 = vld [vmem:[#allocation9 + $0x9e0] sm:$0xff]
    %v5159 = vld [vmem:[#allocation9 + $0x9e8] sm:$0xff]
    %v5160 = vld [vmem:[#allocation9 + $0x9f0] sm:$0xff]
    %v5161 = vld [vmem:[#allocation9 + $0x9f8] sm:$0xff]
    %v5162 = vld [vmem:[#allocation9 + $0xa00] sm:$0xff]
    %v5163 = vld [vmem:[#allocation9 + $0xa08] sm:$0xff]
    %v5164 = vld [vmem:[#allocation9 + $0xa10] sm:$0xff]
    %v5165 = vld [vmem:[#allocation9 + $0xa18] sm:$0xff]
    %v5166 = vld [vmem:[#allocation9 + $0xa20] sm:$0xff]
    %v5167 = vld [vmem:[#allocation9 + $0xa28] sm:$0xff]
    %v5168 = vld [vmem:[#allocation9 + $0xa30] sm:$0xff]
    %v5169 = vld [vmem:[#allocation9 + $0xa38] sm:$0xff]
    %v5170 = vld [vmem:[#allocation9 + $0xa40] sm:$0xff]
    %v5171 = vld [vmem:[#allocation9 + $0xa48] sm:$0xff]
    %v5172 = vld [vmem:[#allocation9 + $0xa50] sm:$0xff]
    %v5173 = vld [vmem:[#allocation9 + $0xa58] sm:$0xff]
    %v5174 = vld [vmem:[#allocation9 + $0xa60] sm:$0xff]
    %v5175 = vld [vmem:[#allocation9 + $0xa68] sm:$0xff]
    %v5176 = vld [vmem:[#allocation9 + $0xa70] sm:$0xff]
    %v5177 = vld [vmem:[#allocation9 + $0xa78] sm:$0xff]
    %v5178 = vld [vmem:[#allocation9 + $0xa80] sm:$0xff]
    %v5179 = vld [vmem:[#allocation9 + $0xa88] sm:$0xff]
    %v5180 = vld [vmem:[#allocation9 + $0xa90] sm:$0xff]
    %v5181 = vld [vmem:[#allocation9 + $0xa98] sm:$0xff]
    %v5182 = vld [vmem:[#allocation9 + $0xaa0] sm:$0xff]
    %v5183 = vld [vmem:[#allocation9 + $0xaa8] sm:$0xff]
    %v5184 = vld [vmem:[#allocation9 + $0xab0] sm:$0xff]
    %v5185 = vld [vmem:[#allocation9 + $0xab8] sm:$0xff]
    %v5186 = vld [vmem:[#allocation9 + $0xac0] sm:$0xff]
    %v5187 = vld [vmem:[#allocation9 + $0xac8] sm:$0xff]
    %v5188 = vld [vmem:[#allocation9 + $0xad0] sm:$0xff]
    %v5189 = vld [vmem:[#allocation9 + $0xad8] sm:$0xff]
    %v5190 = vld [vmem:[#allocation9 + $0xae0] sm:$0xff]
    %v5191 = vld [vmem:[#allocation9 + $0xae8] sm:$0xff]
    %v5192 = vld [vmem:[#allocation9 + $0xaf0] sm:$0xff]
    %v5193 = vld [vmem:[#allocation9 + $0xaf8] sm:$0xff]
    %v5194 = vld [vmem:[#allocation9 + $0xb00] sm:$0xff]
    %v5195 = vld [vmem:[#allocation9 + $0xb08] sm:$0xff]
    %v5196 = vld [vmem:[#allocation9 + $0xb10] sm:$0xff]
    %v5197 = vld [vmem:[#allocation9 + $0xb18] sm:$0xff]
    %v5198 = vld [vmem:[#allocation9 + $0xb20] sm:$0xff]
    %v5199 = vld [vmem:[#allocation9 + $0xb28] sm:$0xff]
    %v5200 = vld [vmem:[#allocation9 + $0xb30] sm:$0xff]
    %v5201 = vld [vmem:[#allocation9 + $0xb38] sm:$0xff]
    %v5202 = vld [vmem:[#allocation9 + $0xb40] sm:$0xff]
    %v5203 = vld [vmem:[#allocation9 + $0xb48] sm:$0xff]
    %v5204 = vld [vmem:[#allocation9 + $0xb50] sm:$0xff]
    %v5205 = vld [vmem:[#allocation9 + $0xb58] sm:$0xff]
    %v5206 = vld [vmem:[#allocation9 + $0xb60] sm:$0xff]
    %v5207 = vld [vmem:[#allocation9 + $0xb68] sm:$0xff]
    %v5208 = vld [vmem:[#allocation9 + $0xb70] sm:$0xff]
    %v5209 = vld [vmem:[#allocation9 + $0xb78] sm:$0xff]
    %v5210 = vld [vmem:[#allocation9 + $0xb80] sm:$0xff]
    %v5211 = vld [vmem:[#allocation9 + $0xb88] sm:$0xff]
    %v5212 = vld [vmem:[#allocation9 + $0xb90] sm:$0xff]
    %v5213 = vld [vmem:[#allocation9 + $0xb98] sm:$0xff]
    %v5214 = vld [vmem:[#allocation9 + $0xba0] sm:$0xff]
    %v5215 = vld [vmem:[#allocation9 + $0xba8] sm:$0xff]
    %v5216 = vld [vmem:[#allocation9 + $0xbb0] sm:$0xff]
    %v5217 = vld [vmem:[#allocation9 + $0xbb8] sm:$0xff]
    %v5218 = vld [vmem:[#allocation9 + $0xbc0] sm:$0xff]
    %v5219 = vld [vmem:[#allocation9 + $0xbc8] sm:$0xff]
    %v5220 = vld [vmem:[#allocation9 + $0xbd0] sm:$0xff]
    %v5221 = vld [vmem:[#allocation9 + $0xbd8] sm:$0xff]
    %v5222 = vld [vmem:[#allocation9 + $0xbe0] sm:$0xff]
    %v5223 = vld [vmem:[#allocation9 + $0xbe8] sm:$0xff]
    %v5224 = vld [vmem:[#allocation9 + $0xbf0] sm:$0xff]
    %v5225 = vld [vmem:[#allocation9 + $0xbf8] sm:$0xff]
    %v5226 = vld [vmem:[#allocation9 + $0xc00] sm:$0xff]
    %v5227 = vld [vmem:[#allocation9 + $0xc08] sm:$0xff]
    %v5228 = vld [vmem:[#allocation9 + $0xc10] sm:$0xff]
    %v5229 = vld [vmem:[#allocation9 + $0xc18] sm:$0xff]
    %v5230 = vld [vmem:[#allocation9 + $0xc20] sm:$0xff]
    %v5231 = vld [vmem:[#allocation9 + $0xc28] sm:$0xff]
    %v5232 = vld [vmem:[#allocation9 + $0xc30] sm:$0xff]
    %v5233 = vld [vmem:[#allocation9 + $0xc38] sm:$0xff]
    %v5234 = vld [vmem:[#allocation9 + $0xc40] sm:$0xff]
    %v5235 = vld [vmem:[#allocation9 + $0xc48] sm:$0xff]
    %v5236 = vld [vmem:[#allocation9 + $0xc50] sm:$0xff]
    %v5237 = vld [vmem:[#allocation9 + $0xc58] sm:$0xff]
    %v5238 = vld [vmem:[#allocation9 + $0xc60] sm:$0xff]
    %v5239 = vld [vmem:[#allocation9 + $0xc68] sm:$0xff]
    %v5240 = vld [vmem:[#allocation9 + $0xc70] sm:$0xff]
    %v5241 = vld [vmem:[#allocation9 + $0xc78] sm:$0xff]
    %v5242 = vld [vmem:[#allocation9 + $0xc80] sm:$0xff]
    %v5243 = vld [vmem:[#allocation9 + $0xc88] sm:$0xff]
    %v5244 = vld [vmem:[#allocation9 + $0xc90] sm:$0xff]
    %v5245 = vld [vmem:[#allocation9 + $0xc98] sm:$0xff]
    %v5246 = vld [vmem:[#allocation9 + $0xca0] sm:$0xff]
    %v5247 = vld [vmem:[#allocation9 + $0xca8] sm:$0xff]
    %v5248 = vld [vmem:[#allocation9 + $0xcb0] sm:$0xff]
    %v5249 = vld [vmem:[#allocation9 + $0xcb8] sm:$0xff]
    %v5250 = vld [vmem:[#allocation9 + $0xcc0] sm:$0xff]
    %v5251 = vld [vmem:[#allocation9 + $0xcc8] sm:$0xff]
    %v5252 = vld [vmem:[#allocation9 + $0xcd0] sm:$0xff]
    %v5253 = vld [vmem:[#allocation9 + $0xcd8] sm:$0xff]
    %v5254 = vld [vmem:[#allocation9 + $0xce0] sm:$0xff]
    %v5255 = vld [vmem:[#allocation9 + $0xce8] sm:$0xff]
    %v5256 = vld [vmem:[#allocation9 + $0xcf0] sm:$0xff]
    %v5257 = vld [vmem:[#allocation9 + $0xcf8] sm:$0xff]
    %v5258 = vld [vmem:[#allocation9 + $0xd00] sm:$0xff]
    %v5259 = vld [vmem:[#allocation9 + $0xd08] sm:$0xff]
    %v5260 = vld [vmem:[#allocation9 + $0xd10] sm:$0xff]
    %v5261 = vld [vmem:[#allocation9 + $0xd18] sm:$0xff]
    %v5262 = vld [vmem:[#allocation9 + $0xd20] sm:$0xff]
    %v5263 = vld [vmem:[#allocation9 + $0xd28] sm:$0xff]
    %v5264 = vld [vmem:[#allocation9 + $0xd30] sm:$0xff]
    %v5265 = vld [vmem:[#allocation9 + $0xd38] sm:$0xff]
    %v5266 = vld [vmem:[#allocation9 + $0xd40] sm:$0xff]
    %v5267 = vld [vmem:[#allocation9 + $0xd48] sm:$0xff]
    %v5268 = vld [vmem:[#allocation9 + $0xd50] sm:$0xff]
    %v5269 = vld [vmem:[#allocation9 + $0xd58] sm:$0xff]
    %v5270 = vld [vmem:[#allocation9 + $0xd60] sm:$0xff]
    %v5271 = vld [vmem:[#allocation9 + $0xd68] sm:$0xff]
    %v5272 = vld [vmem:[#allocation9 + $0xd70] sm:$0xff]
    %v5273 = vld [vmem:[#allocation9 + $0xd78] sm:$0xff]
    %v5274 = vld [vmem:[#allocation9 + $0xd80] sm:$0xff]
    %v5275 = vld [vmem:[#allocation9 + $0xd88] sm:$0xff]
    %v5276 = vld [vmem:[#allocation9 + $0xd90] sm:$0xff]
    %v5277 = vld [vmem:[#allocation9 + $0xd98] sm:$0xff]
    %v5278 = vld [vmem:[#allocation9 + $0xda0] sm:$0xff]
    %v5279 = vld [vmem:[#allocation9 + $0xda8] sm:$0xff]
    %v5280 = vld [vmem:[#allocation9 + $0xdb0] sm:$0xff]
    %v5281 = vld [vmem:[#allocation9 + $0xdb8] sm:$0xff]
    %v5282 = vld [vmem:[#allocation9 + $0xdc0] sm:$0xff]
    %v5283 = vld [vmem:[#allocation9 + $0xdc8] sm:$0xff]
    %v5284 = vld [vmem:[#allocation9 + $0xdd0] sm:$0xff]
    %v5285 = vld [vmem:[#allocation9 + $0xdd8] sm:$0xff]
    %v5286 = vld [vmem:[#allocation9 + $0xde0] sm:$0xff]
    %v5287 = vld [vmem:[#allocation9 + $0xde8] sm:$0xff]
    %v5288 = vld [vmem:[#allocation9 + $0xdf0] sm:$0xff]
    %v5289 = vld [vmem:[#allocation9 + $0xdf8] sm:$0xff]
    %v5290 = vld [vmem:[#allocation9 + $0xe00] sm:$0xff]
    %v5291 = vld [vmem:[#allocation9 + $0xe08] sm:$0xff]
    %v5292 = vld [vmem:[#allocation9 + $0xe10] sm:$0xff]
    %v5293 = vld [vmem:[#allocation9 + $0xe18] sm:$0xff]
    %v5294 = vld [vmem:[#allocation9 + $0xe20] sm:$0xff]
    %v5295 = vld [vmem:[#allocation9 + $0xe28] sm:$0xff]
    %v5296 = vld [vmem:[#allocation9 + $0xe30] sm:$0xff]
    %v5297 = vld [vmem:[#allocation9 + $0xe38] sm:$0xff]
    %v5298 = vld [vmem:[#allocation9 + $0xe40] sm:$0xff]
    %v5299 = vld [vmem:[#allocation9 + $0xe48] sm:$0xff]
    %v5300 = vld [vmem:[#allocation9 + $0xe50] sm:$0xff]
    %v5301 = vld [vmem:[#allocation9 + $0xe58] sm:$0xff]
    %v5302 = vld [vmem:[#allocation9 + $0xe60] sm:$0xff]
    %v5303 = vld [vmem:[#allocation9 + $0xe68] sm:$0xff]
    %v5304 = vld [vmem:[#allocation9 + $0xe70] sm:$0xff]
    %v5305 = vld [vmem:[#allocation9 + $0xe78] sm:$0xff]
    %v5306 = vld [vmem:[#allocation9 + $0xe80] sm:$0xff]
    %v5307 = vld [vmem:[#allocation9 + $0xe88] sm:$0xff]
    %v5308 = vld [vmem:[#allocation9 + $0xe90] sm:$0xff]
    %v5309 = vld [vmem:[#allocation9 + $0xe98] sm:$0xff]
    %v5310 = vld [vmem:[#allocation9 + $0xea0] sm:$0xff]
    %v5311 = vld [vmem:[#allocation9 + $0xea8] sm:$0xff]
    %v5312 = vld [vmem:[#allocation9 + $0xeb0] sm:$0xff]
    %v5313 = vld [vmem:[#allocation9 + $0xeb8] sm:$0xff]
    %v5314 = vld [vmem:[#allocation9 + $0xec0] sm:$0xff]
    %v5315 = vld [vmem:[#allocation9 + $0xec8] sm:$0xff]
    %v5316 = vld [vmem:[#allocation9 + $0xed0] sm:$0xff]
    %v5317 = vld [vmem:[#allocation9 + $0xed8] sm:$0xff]
    %v5318 = vld [vmem:[#allocation9 + $0xee0] sm:$0xff]
    %v5319 = vld [vmem:[#allocation9 + $0xee8] sm:$0xff]
    %v5320 = vld [vmem:[#allocation9 + $0xef0] sm:$0xff]
    %v5321 = vld [vmem:[#allocation9 + $0xef8] sm:$0xff]
    %v5322 = vld [vmem:[#allocation9 + $0xf00] sm:$0xff]
    %v5323 = vld [vmem:[#allocation9 + $0xf08] sm:$0xff]
    %v5324 = vld [vmem:[#allocation9 + $0xf10] sm:$0xff]
    %v5325 = vld [vmem:[#allocation9 + $0xf18] sm:$0xff]
    %v5326 = vld [vmem:[#allocation9 + $0xf20] sm:$0xff]
    %v5327 = vld [vmem:[#allocation9 + $0xf28] sm:$0xff]
    %v5328 = vld [vmem:[#allocation9 + $0xf30] sm:$0xff]
    %v5329 = vld [vmem:[#allocation9 + $0xf38] sm:$0xff]
    %v5330 = vld [vmem:[#allocation9 + $0xf40] sm:$0xff]
    %v5331 = vld [vmem:[#allocation9 + $0xf48] sm:$0xff]
    %v5332 = vld [vmem:[#allocation9 + $0xf50] sm:$0xff]
    %v5333 = vld [vmem:[#allocation9 + $0xf58] sm:$0xff]
    %v5334 = vld [vmem:[#allocation9 + $0xf60] sm:$0xff]
    %v5335 = vld [vmem:[#allocation9 + $0xf68] sm:$0xff]
    %v5336 = vld [vmem:[#allocation9 + $0xf70] sm:$0xff]
    %v5337 = vld [vmem:[#allocation9 + $0xf78] sm:$0xff]
    %v5338 = vld [vmem:[#allocation9 + $0xf80] sm:$0xff]
    %v5339 = vld [vmem:[#allocation9 + $0xf88] sm:$0xff]
    %v5340 = vld [vmem:[#allocation9 + $0xf90] sm:$0xff]
    %v5341 = vld [vmem:[#allocation9 + $0xf98] sm:$0xff]
    %v5342 = vld [vmem:[#allocation9 + $0xfa0] sm:$0xff]
    %v5343 = vld [vmem:[#allocation9 + $0xfa8] sm:$0xff]
    %v5344 = vld [vmem:[#allocation9 + $0xfb0] sm:$0xff]
    %v5345 = vld [vmem:[#allocation9 + $0xfb8] sm:$0xff]
    %v5346 = vld [vmem:[#allocation9 + $0xfc0] sm:$0xff]
    %v5347 = vld [vmem:[#allocation9 + $0xfc8] sm:$0xff]
    %v5348 = vld [vmem:[#allocation9 + $0xfd0] sm:$0xff]
    %v5349 = vld [vmem:[#allocation9 + $0xfd8] sm:$0xff]
    %v5350 = vld [vmem:[#allocation9 + $0xfe0] sm:$0xff]
    %v5351 = vld [vmem:[#allocation9 + $0xfe8] sm:$0xff]
    %v5352 = vld [vmem:[#allocation9 + $0xff0] sm:$0xff]
    %v5353 = vld [vmem:[#allocation9 + $0xff8] sm:$0xff]
    %v5354 = vld [vmem:[%s6] sm:$0xff]
    %v5355 = vld [vmem:[%s6 + $0x8] sm:$0xff]
    %v5356 = vld [vmem:[%s6 + $0x10] sm:$0xff]
    %v5357 = vld [vmem:[%s6 + $0x18] sm:$0xff]
    %v5358 = vld [vmem:[%s6 + $0x20] sm:$0xff]
    %v5359 = vld [vmem:[%s6 + $0x28] sm:$0xff]
    %v5360 = vld [vmem:[%s6 + $0x30] sm:$0xff]
    %v5361 = vld [vmem:[%s6 + $0x38] sm:$0xff]
    %v5362 = vld [vmem:[%s6 + $0x40] sm:$0xff]
    %v5363 = vld [vmem:[%s6 + $0x48] sm:$0xff]
    %v5364 = vld [vmem:[%s6 + $0x50] sm:$0xff]
    %v5365 = vld [vmem:[%s6 + $0x58] sm:$0xff]
    %v5366 = vld [vmem:[%s6 + $0x60] sm:$0xff]
    %v5367 = vld [vmem:[%s6 + $0x68] sm:$0xff]
    %v5368 = vld [vmem:[%s6 + $0x70] sm:$0xff]
    %v5369 = vld [vmem:[%s6 + $0x78] sm:$0xff]
    %v5370 = vld [vmem:[%s6 + $0x80] sm:$0xff]
    %v5371 = vld [vmem:[%s6 + $0x88] sm:$0xff]
    %v5372 = vld [vmem:[%s6 + $0x90] sm:$0xff]
    %v5373 = vld [vmem:[%s6 + $0x98] sm:$0xff]
    %v5374 = vld [vmem:[%s6 + $0xa0] sm:$0xff]
    %v5375 = vld [vmem:[%s6 + $0xa8] sm:$0xff]
    %v5376 = vld [vmem:[%s6 + $0xb0] sm:$0xff]
    %v5377 = vld [vmem:[%s6 + $0xb8] sm:$0xff]
    %v5378 = vld [vmem:[%s6 + $0xc0] sm:$0xff]
    %v5379 = vld [vmem:[%s6 + $0xc8] sm:$0xff]
    %v5380 = vld [vmem:[%s6 + $0xd0] sm:$0xff]
    %v5381 = vld [vmem:[%s6 + $0xd8] sm:$0xff]
    %v5382 = vld [vmem:[%s6 + $0xe0] sm:$0xff]
    %v5383 = vld [vmem:[%s6 + $0xe8] sm:$0xff]
    %v5384 = vld [vmem:[%s6 + $0xf0] sm:$0xff]
    %v5385 = vld [vmem:[%s6 + $0xf8] sm:$0xff]
    %v5386 = vld [vmem:[%s6 + $0x100] sm:$0xff]
    %v5387 = vld [vmem:[%s6 + $0x108] sm:$0xff]
    %v5388 = vld [vmem:[%s6 + $0x110] sm:$0xff]
    %v5389 = vld [vmem:[%s6 + $0x118] sm:$0xff]
    %v5390 = vld [vmem:[%s6 + $0x120] sm:$0xff]
    %v5391 = vld [vmem:[%s6 + $0x128] sm:$0xff]
    %v5392 = vld [vmem:[%s6 + $0x130] sm:$0xff]
    %v5393 = vld [vmem:[%s6 + $0x138] sm:$0xff]
    %v5394 = vld [vmem:[%s6 + $0x140] sm:$0xff]
    %v5395 = vld [vmem:[%s6 + $0x148] sm:$0xff]
    %v5396 = vld [vmem:[%s6 + $0x150] sm:$0xff]
    %v5397 = vld [vmem:[%s6 + $0x158] sm:$0xff]
    %v5398 = vld [vmem:[%s6 + $0x160] sm:$0xff]
    %v5399 = vld [vmem:[%s6 + $0x168] sm:$0xff]
    %v5400 = vld [vmem:[%s6 + $0x170] sm:$0xff]
    %v5401 = vld [vmem:[%s6 + $0x178] sm:$0xff]
    %v5402 = vld [vmem:[%s6 + $0x180] sm:$0xff]
    %v5403 = vld [vmem:[%s6 + $0x188] sm:$0xff]
    %v5404 = vld [vmem:[%s6 + $0x190] sm:$0xff]
    %v5405 = vld [vmem:[%s6 + $0x198] sm:$0xff]
    %v5406 = vld [vmem:[%s6 + $0x1a0] sm:$0xff]
    %v5407 = vld [vmem:[%s6 + $0x1a8] sm:$0xff]
    %v5408 = vld [vmem:[%s6 + $0x1b0] sm:$0xff]
    %v5409 = vld [vmem:[%s6 + $0x1b8] sm:$0xff]
    %v5410 = vld [vmem:[%s6 + $0x1c0] sm:$0xff]
    %v5411 = vld [vmem:[%s6 + $0x1c8] sm:$0xff]
    %v5412 = vld [vmem:[%s6 + $0x1d0] sm:$0xff]
    %v5413 = vld [vmem:[%s6 + $0x1d8] sm:$0xff]
    %v5414 = vld [vmem:[%s6 + $0x1e0] sm:$0xff]
    %v5415 = vld [vmem:[%s6 + $0x1e8] sm:$0xff]
    %v5416 = vld [vmem:[%s6 + $0x1f0] sm:$0xff]
    %v5417 = vld [vmem:[%s6 + $0x1f8] sm:$0xff]
    %v5418 = vld [vmem:[%s6 + $0x200] sm:$0xff]
    %v5419 = vld [vmem:[%s6 + $0x208] sm:$0xff]
    %v5420 = vld [vmem:[%s6 + $0x210] sm:$0xff]
    %v5421 = vld [vmem:[%s6 + $0x218] sm:$0xff]
    %v5422 = vld [vmem:[%s6 + $0x220] sm:$0xff]
    %v5423 = vld [vmem:[%s6 + $0x228] sm:$0xff]
    %v5424 = vld [vmem:[%s6 + $0x230] sm:$0xff]
    %v5425 = vld [vmem:[%s6 + $0x238] sm:$0xff]
    %v5426 = vld [vmem:[%s6 + $0x240] sm:$0xff]
    %v5427 = vld [vmem:[%s6 + $0x248] sm:$0xff]
    %v5428 = vld [vmem:[%s6 + $0x250] sm:$0xff]
    %v5429 = vld [vmem:[%s6 + $0x258] sm:$0xff]
    %v5430 = vld [vmem:[%s6 + $0x260] sm:$0xff]
    %v5431 = vld [vmem:[%s6 + $0x268] sm:$0xff]
    %v5432 = vld [vmem:[%s6 + $0x270] sm:$0xff]
    %v5433 = vld [vmem:[%s6 + $0x278] sm:$0xff]
    %v5434 = vld [vmem:[%s6 + $0x280] sm:$0xff]
    %v5435 = vld [vmem:[%s6 + $0x288] sm:$0xff]
    %v5436 = vld [vmem:[%s6 + $0x290] sm:$0xff]
    %v5437 = vld [vmem:[%s6 + $0x298] sm:$0xff]
    %v5438 = vld [vmem:[%s6 + $0x2a0] sm:$0xff]
    %v5439 = vld [vmem:[%s6 + $0x2a8] sm:$0xff]
    %v5440 = vld [vmem:[%s6 + $0x2b0] sm:$0xff]
    %v5441 = vld [vmem:[%s6 + $0x2b8] sm:$0xff]
    %v5442 = vld [vmem:[%s6 + $0x2c0] sm:$0xff]
    %v5443 = vld [vmem:[%s6 + $0x2c8] sm:$0xff]
    %v5444 = vld [vmem:[%s6 + $0x2d0] sm:$0xff]
    %v5445 = vld [vmem:[%s6 + $0x2d8] sm:$0xff]
    %v5446 = vld [vmem:[%s6 + $0x2e0] sm:$0xff]
    %v5447 = vld [vmem:[%s6 + $0x2e8] sm:$0xff]
    %v5448 = vld [vmem:[%s6 + $0x2f0] sm:$0xff]
    %v5449 = vld [vmem:[%s6 + $0x2f8] sm:$0xff]
    %v5450 = vld [vmem:[%s6 + $0x300] sm:$0xff]
    %v5451 = vld [vmem:[%s6 + $0x308] sm:$0xff]
    %v5452 = vld [vmem:[%s6 + $0x310] sm:$0xff]
    %v5453 = vld [vmem:[%s6 + $0x318] sm:$0xff]
    %v5454 = vld [vmem:[%s6 + $0x320] sm:$0xff]
    %v5455 = vld [vmem:[%s6 + $0x328] sm:$0xff]
    %v5456 = vld [vmem:[%s6 + $0x330] sm:$0xff]
    %v5457 = vld [vmem:[%s6 + $0x338] sm:$0xff]
    %v5458 = vld [vmem:[%s6 + $0x340] sm:$0xff]
    %v5459 = vld [vmem:[%s6 + $0x348] sm:$0xff]
    %v5460 = vld [vmem:[%s6 + $0x350] sm:$0xff]
    %v5461 = vld [vmem:[%s6 + $0x358] sm:$0xff]
    %v5462 = vld [vmem:[%s6 + $0x360] sm:$0xff]
    %v5463 = vld [vmem:[%s6 + $0x368] sm:$0xff]
    %v5464 = vld [vmem:[%s6 + $0x370] sm:$0xff]
    %v5465 = vld [vmem:[%s6 + $0x378] sm:$0xff]
    %v5466 = vld [vmem:[%s6 + $0x380] sm:$0xff]
    %v5467 = vld [vmem:[%s6 + $0x388] sm:$0xff]
    %v5468 = vld [vmem:[%s6 + $0x390] sm:$0xff]
    %v5469 = vld [vmem:[%s6 + $0x398] sm:$0xff]
    %v5470 = vld [vmem:[%s6 + $0x3a0] sm:$0xff]
    %v5471 = vld [vmem:[%s6 + $0x3a8] sm:$0xff]
    %v5472 = vld [vmem:[%s6 + $0x3b0] sm:$0xff]
    %v5473 = vld [vmem:[%s6 + $0x3b8] sm:$0xff]
    %v5474 = vld [vmem:[%s6 + $0x3c0] sm:$0xff]
    %v5475 = vld [vmem:[%s6 + $0x3c8] sm:$0xff]
    %v5476 = vld [vmem:[%s6 + $0x3d0] sm:$0xff]
    %v5477 = vld [vmem:[%s6 + $0x3d8] sm:$0xff]
    %v5478 = vld [vmem:[%s6 + $0x3e0] sm:$0xff]
    %v5479 = vld [vmem:[%s6 + $0x3e8] sm:$0xff]
    %v5480 = vld [vmem:[%s6 + $0x3f0] sm:$0xff]
    %v5481 = vld [vmem:[%s6 + $0x3f8] sm:$0xff]
    %5483 = vset.pattern.permute.xlu0 0
    %5484 = vperm.xlu0 %5483, %v5354
    %v5485 = vpop.permute.xlu0 %5484
    %5488 = vset.pattern.permute.xlu0 0
    %5489 = vperm.xlu0 %5488, %v5355
    %v5490 = vpop.permute.xlu0 %5489
    %5493 = vset.pattern.permute.xlu0 0
    %5494 = vperm.xlu0 %5493, %v5356
    %v5495 = vpop.permute.xlu0 %5494
    %5498 = vset.pattern.permute.xlu0 0
    %5499 = vperm.xlu0 %5498, %v5357
    %v5500 = vpop.permute.xlu0 %5499
    %5503 = vset.pattern.permute.xlu0 0
    %5504 = vperm.xlu0 %5503, %v5358
    %v5505 = vpop.permute.xlu0 %5504
    %5508 = vset.pattern.permute.xlu0 0
    %5509 = vperm.xlu0 %5508, %v5359
    %v5510 = vpop.permute.xlu0 %5509
    %5513 = vset.pattern.permute.xlu0 0
    %5514 = vperm.xlu0 %5513, %v5360
    %v5515 = vpop.permute.xlu0 %5514
    %5518 = vset.pattern.permute.xlu0 0
    %5519 = vperm.xlu0 %5518, %v5361
    %v5520 = vpop.permute.xlu0 %5519
    %5523 = vset.pattern.permute.xlu0 0
    %5524 = vperm.xlu0 %5523, %v5362
    %v5525 = vpop.permute.xlu0 %5524
    %5528 = vset.pattern.permute.xlu0 0
    %5529 = vperm.xlu0 %5528, %v5363
    %v5530 = vpop.permute.xlu0 %5529
    %5533 = vset.pattern.permute.xlu0 0
    %5534 = vperm.xlu0 %5533, %v5364
    %v5535 = vpop.permute.xlu0 %5534
    %5538 = vset.pattern.permute.xlu0 0
    %5539 = vperm.xlu0 %5538, %v5365
    %v5540 = vpop.permute.xlu0 %5539
    %5543 = vset.pattern.permute.xlu0 0
    %5544 = vperm.xlu0 %5543, %v5366
    %v5545 = vpop.permute.xlu0 %5544
    %5548 = vset.pattern.permute.xlu0 0
    %5549 = vperm.xlu0 %5548, %v5367
    %v5550 = vpop.permute.xlu0 %5549
    %5553 = vset.pattern.permute.xlu0 0
    %5554 = vperm.xlu0 %5553, %v5368
    %v5555 = vpop.permute.xlu0 %5554
    %5558 = vset.pattern.permute.xlu0 0
    %5559 = vperm.xlu0 %5558, %v5369
    %v5560 = vpop.permute.xlu0 %5559
    %5563 = vset.pattern.permute.xlu0 0
    %5564 = vperm.xlu0 %5563, %v5370
    %v5565 = vpop.permute.xlu0 %5564
    %5568 = vset.pattern.permute.xlu0 0
    %5569 = vperm.xlu0 %5568, %v5371
    %v5570 = vpop.permute.xlu0 %5569
    %5573 = vset.pattern.permute.xlu0 0
    %5574 = vperm.xlu0 %5573, %v5372
    %v5575 = vpop.permute.xlu0 %5574
    %5578 = vset.pattern.permute.xlu0 0
    %5579 = vperm.xlu0 %5578, %v5373
    %v5580 = vpop.permute.xlu0 %5579
    %5583 = vset.pattern.permute.xlu0 0
    %5584 = vperm.xlu0 %5583, %v5374
    %v5585 = vpop.permute.xlu0 %5584
    %5588 = vset.pattern.permute.xlu0 0
    %5589 = vperm.xlu0 %5588, %v5375
    %v5590 = vpop.permute.xlu0 %5589
    %5593 = vset.pattern.permute.xlu0 0
    %5594 = vperm.xlu0 %5593, %v5376
    %v5595 = vpop.permute.xlu0 %5594
    %5598 = vset.pattern.permute.xlu0 0
    %5599 = vperm.xlu0 %5598, %v5377
    %v5600 = vpop.permute.xlu0 %5599
    %5603 = vset.pattern.permute.xlu0 0
    %5604 = vperm.xlu0 %5603, %v5378
    %v5605 = vpop.permute.xlu0 %5604
    %5608 = vset.pattern.permute.xlu0 0
    %5609 = vperm.xlu0 %5608, %v5379
    %v5610 = vpop.permute.xlu0 %5609
    %5613 = vset.pattern.permute.xlu0 0
    %5614 = vperm.xlu0 %5613, %v5380
    %v5615 = vpop.permute.xlu0 %5614
    %5618 = vset.pattern.permute.xlu0 0
    %5619 = vperm.xlu0 %5618, %v5381
    %v5620 = vpop.permute.xlu0 %5619
    %5623 = vset.pattern.permute.xlu0 0
    %5624 = vperm.xlu0 %5623, %v5382
    %v5625 = vpop.permute.xlu0 %5624
    %5628 = vset.pattern.permute.xlu0 0
    %5629 = vperm.xlu0 %5628, %v5383
    %v5630 = vpop.permute.xlu0 %5629
    %5633 = vset.pattern.permute.xlu0 0
    %5634 = vperm.xlu0 %5633, %v5384
    %v5635 = vpop.permute.xlu0 %5634
    %5638 = vset.pattern.permute.xlu0 0
    %5639 = vperm.xlu0 %5638, %v5385
    %v5640 = vpop.permute.xlu0 %5639
    %5643 = vset.pattern.permute.xlu0 0
    %5644 = vperm.xlu0 %5643, %v5386
    %v5645 = vpop.permute.xlu0 %5644
    %5648 = vset.pattern.permute.xlu0 0
    %5649 = vperm.xlu0 %5648, %v5387
    %v5650 = vpop.permute.xlu0 %5649
    %5653 = vset.pattern.permute.xlu0 0
    %5654 = vperm.xlu0 %5653, %v5388
    %v5655 = vpop.permute.xlu0 %5654
    %5658 = vset.pattern.permute.xlu0 0
    %5659 = vperm.xlu0 %5658, %v5389
    %v5660 = vpop.permute.xlu0 %5659
    %5663 = vset.pattern.permute.xlu0 0
    %5664 = vperm.xlu0 %5663, %v5390
    %v5665 = vpop.permute.xlu0 %5664
    %5668 = vset.pattern.permute.xlu0 0
    %5669 = vperm.xlu0 %5668, %v5391
    %v5670 = vpop.permute.xlu0 %5669
    %5673 = vset.pattern.permute.xlu0 0
    %5674 = vperm.xlu0 %5673, %v5392
    %v5675 = vpop.permute.xlu0 %5674
    %5678 = vset.pattern.permute.xlu0 0
    %5679 = vperm.xlu0 %5678, %v5393
    %v5680 = vpop.permute.xlu0 %5679
    %5683 = vset.pattern.permute.xlu0 0
    %5684 = vperm.xlu0 %5683, %v5394
    %v5685 = vpop.permute.xlu0 %5684
    %5688 = vset.pattern.permute.xlu0 0
    %5689 = vperm.xlu0 %5688, %v5395
    %v5690 = vpop.permute.xlu0 %5689
    %5693 = vset.pattern.permute.xlu0 0
    %5694 = vperm.xlu0 %5693, %v5396
    %v5695 = vpop.permute.xlu0 %5694
    %5698 = vset.pattern.permute.xlu0 0
    %5699 = vperm.xlu0 %5698, %v5397
    %v5700 = vpop.permute.xlu0 %5699
    %5703 = vset.pattern.permute.xlu0 0
    %5704 = vperm.xlu0 %5703, %v5398
    %v5705 = vpop.permute.xlu0 %5704
    %5708 = vset.pattern.permute.xlu0 0
    %5709 = vperm.xlu0 %5708, %v5399
    %v5710 = vpop.permute.xlu0 %5709
    %5713 = vset.pattern.permute.xlu0 0
    %5714 = vperm.xlu0 %5713, %v5400
    %v5715 = vpop.permute.xlu0 %5714
    %5718 = vset.pattern.permute.xlu0 0
    %5719 = vperm.xlu0 %5718, %v5401
    %v5720 = vpop.permute.xlu0 %5719
    %5723 = vset.pattern.permute.xlu0 0
    %5724 = vperm.xlu0 %5723, %v5402
    %v5725 = vpop.permute.xlu0 %5724
    %5728 = vset.pattern.permute.xlu0 0
    %5729 = vperm.xlu0 %5728, %v5403
    %v5730 = vpop.permute.xlu0 %5729
    %5733 = vset.pattern.permute.xlu0 0
    %5734 = vperm.xlu0 %5733, %v5404
    %v5735 = vpop.permute.xlu0 %5734
    %5738 = vset.pattern.permute.xlu0 0
    %5739 = vperm.xlu0 %5738, %v5405
    %v5740 = vpop.permute.xlu0 %5739
    %5743 = vset.pattern.permute.xlu0 0
    %5744 = vperm.xlu0 %5743, %v5406
    %v5745 = vpop.permute.xlu0 %5744
    %5748 = vset.pattern.permute.xlu0 0
    %5749 = vperm.xlu0 %5748, %v5407
    %v5750 = vpop.permute.xlu0 %5749
    %5753 = vset.pattern.permute.xlu0 0
    %5754 = vperm.xlu0 %5753, %v5408
    %v5755 = vpop.permute.xlu0 %5754
    %5758 = vset.pattern.permute.xlu0 0
    %5759 = vperm.xlu0 %5758, %v5409
    %v5760 = vpop.permute.xlu0 %5759
    %5763 = vset.pattern.permute.xlu0 0
    %5764 = vperm.xlu0 %5763, %v5410
    %v5765 = vpop.permute.xlu0 %5764
    %5768 = vset.pattern.permute.xlu0 0
    %5769 = vperm.xlu0 %5768, %v5411
    %v5770 = vpop.permute.xlu0 %5769
    %5773 = vset.pattern.permute.xlu0 0
    %5774 = vperm.xlu0 %5773, %v5412
    %v5775 = vpop.permute.xlu0 %5774
    %5778 = vset.pattern.permute.xlu0 0
    %5779 = vperm.xlu0 %5778, %v5413
    %v5780 = vpop.permute.xlu0 %5779
    %5783 = vset.pattern.permute.xlu0 0
    %5784 = vperm.xlu0 %5783, %v5414
    %v5785 = vpop.permute.xlu0 %5784
    %5788 = vset.pattern.permute.xlu0 0
    %5789 = vperm.xlu0 %5788, %v5415
    %v5790 = vpop.permute.xlu0 %5789
    %5793 = vset.pattern.permute.xlu0 0
    %5794 = vperm.xlu0 %5793, %v5416
    %v5795 = vpop.permute.xlu0 %5794
    %5798 = vset.pattern.permute.xlu0 0
    %5799 = vperm.xlu0 %5798, %v5417
    %v5800 = vpop.permute.xlu0 %5799
    %5803 = vset.pattern.permute.xlu0 0
    %5804 = vperm.xlu0 %5803, %v5418
    %v5805 = vpop.permute.xlu0 %5804
    %5808 = vset.pattern.permute.xlu0 0
    %5809 = vperm.xlu0 %5808, %v5419
    %v5810 = vpop.permute.xlu0 %5809
    %5813 = vset.pattern.permute.xlu0 0
    %5814 = vperm.xlu0 %5813, %v5420
    %v5815 = vpop.permute.xlu0 %5814
    %5818 = vset.pattern.permute.xlu0 0
    %5819 = vperm.xlu0 %5818, %v5421
    %v5820 = vpop.permute.xlu0 %5819
    %5823 = vset.pattern.permute.xlu0 0
    %5824 = vperm.xlu0 %5823, %v5422
    %v5825 = vpop.permute.xlu0 %5824
    %5828 = vset.pattern.permute.xlu0 0
    %5829 = vperm.xlu0 %5828, %v5423
    %v5830 = vpop.permute.xlu0 %5829
    %5833 = vset.pattern.permute.xlu0 0
    %5834 = vperm.xlu0 %5833, %v5424
    %v5835 = vpop.permute.xlu0 %5834
    %5838 = vset.pattern.permute.xlu0 0
    %5839 = vperm.xlu0 %5838, %v5425
    %v5840 = vpop.permute.xlu0 %5839
    %5843 = vset.pattern.permute.xlu0 0
    %5844 = vperm.xlu0 %5843, %v5426
    %v5845 = vpop.permute.xlu0 %5844
    %5848 = vset.pattern.permute.xlu0 0
    %5849 = vperm.xlu0 %5848, %v5427
    %v5850 = vpop.permute.xlu0 %5849
    %5853 = vset.pattern.permute.xlu0 0
    %5854 = vperm.xlu0 %5853, %v5428
    %v5855 = vpop.permute.xlu0 %5854
    %5858 = vset.pattern.permute.xlu0 0
    %5859 = vperm.xlu0 %5858, %v5429
    %v5860 = vpop.permute.xlu0 %5859
    %5863 = vset.pattern.permute.xlu0 0
    %5864 = vperm.xlu0 %5863, %v5430
    %v5865 = vpop.permute.xlu0 %5864
    %5868 = vset.pattern.permute.xlu0 0
    %5869 = vperm.xlu0 %5868, %v5431
    %v5870 = vpop.permute.xlu0 %5869
    %5873 = vset.pattern.permute.xlu0 0
    %5874 = vperm.xlu0 %5873, %v5432
    %v5875 = vpop.permute.xlu0 %5874
    %5878 = vset.pattern.permute.xlu0 0
    %5879 = vperm.xlu0 %5878, %v5433
    %v5880 = vpop.permute.xlu0 %5879
    %5883 = vset.pattern.permute.xlu0 0
    %5884 = vperm.xlu0 %5883, %v5434
    %v5885 = vpop.permute.xlu0 %5884
    %5888 = vset.pattern.permute.xlu0 0
    %5889 = vperm.xlu0 %5888, %v5435
    %v5890 = vpop.permute.xlu0 %5889
    %5893 = vset.pattern.permute.xlu0 0
    %5894 = vperm.xlu0 %5893, %v5436
    %v5895 = vpop.permute.xlu0 %5894
    %5898 = vset.pattern.permute.xlu0 0
    %5899 = vperm.xlu0 %5898, %v5437
    %v5900 = vpop.permute.xlu0 %5899
    %5903 = vset.pattern.permute.xlu0 0
    %5904 = vperm.xlu0 %5903, %v5438
    %v5905 = vpop.permute.xlu0 %5904
    %5908 = vset.pattern.permute.xlu0 0
    %5909 = vperm.xlu0 %5908, %v5439
    %v5910 = vpop.permute.xlu0 %5909
    %5913 = vset.pattern.permute.xlu0 0
    %5914 = vperm.xlu0 %5913, %v5440
    %v5915 = vpop.permute.xlu0 %5914
    %5918 = vset.pattern.permute.xlu0 0
    %5919 = vperm.xlu0 %5918, %v5441
    %v5920 = vpop.permute.xlu0 %5919
    %5923 = vset.pattern.permute.xlu0 0
    %5924 = vperm.xlu0 %5923, %v5442
    %v5925 = vpop.permute.xlu0 %5924
    %5928 = vset.pattern.permute.xlu0 0
    %5929 = vperm.xlu0 %5928, %v5443
    %v5930 = vpop.permute.xlu0 %5929
    %5933 = vset.pattern.permute.xlu0 0
    %5934 = vperm.xlu0 %5933, %v5444
    %v5935 = vpop.permute.xlu0 %5934
    %5938 = vset.pattern.permute.xlu0 0
    %5939 = vperm.xlu0 %5938, %v5445
    %v5940 = vpop.permute.xlu0 %5939
    %5943 = vset.pattern.permute.xlu0 0
    %5944 = vperm.xlu0 %5943, %v5446
    %v5945 = vpop.permute.xlu0 %5944
    %5948 = vset.pattern.permute.xlu0 0
    %5949 = vperm.xlu0 %5948, %v5447
    %v5950 = vpop.permute.xlu0 %5949
    %5953 = vset.pattern.permute.xlu0 0
    %5954 = vperm.xlu0 %5953, %v5448
    %v5955 = vpop.permute.xlu0 %5954
    %5958 = vset.pattern.permute.xlu0 0
    %5959 = vperm.xlu0 %5958, %v5449
    %v5960 = vpop.permute.xlu0 %5959
    %5963 = vset.pattern.permute.xlu0 0
    %5964 = vperm.xlu0 %5963, %v5450
    %v5965 = vpop.permute.xlu0 %5964
    %5968 = vset.pattern.permute.xlu0 0
    %5969 = vperm.xlu0 %5968, %v5451
    %v5970 = vpop.permute.xlu0 %5969
    %5973 = vset.pattern.permute.xlu0 0
    %5974 = vperm.xlu0 %5973, %v5452
    %v5975 = vpop.permute.xlu0 %5974
    %5978 = vset.pattern.permute.xlu0 0
    %5979 = vperm.xlu0 %5978, %v5453
    %v5980 = vpop.permute.xlu0 %5979
    %5983 = vset.pattern.permute.xlu0 0
    %5984 = vperm.xlu0 %5983, %v5454
    %v5985 = vpop.permute.xlu0 %5984
    %5988 = vset.pattern.permute.xlu0 0
    %5989 = vperm.xlu0 %5988, %v5455
    %v5990 = vpop.permute.xlu0 %5989
    %5993 = vset.pattern.permute.xlu0 0
    %5994 = vperm.xlu0 %5993, %v5456
    %v5995 = vpop.permute.xlu0 %5994
    %5998 = vset.pattern.permute.xlu0 0
    %5999 = vperm.xlu0 %5998, %v5457
    %v6000 = vpop.permute.xlu0 %5999
    %6003 = vset.pattern.permute.xlu0 0
    %6004 = vperm.xlu0 %6003, %v5458
    %v6005 = vpop.permute.xlu0 %6004
    %6008 = vset.pattern.permute.xlu0 0
    %6009 = vperm.xlu0 %6008, %v5459
    %v6010 = vpop.permute.xlu0 %6009
    %6013 = vset.pattern.permute.xlu0 0
    %6014 = vperm.xlu0 %6013, %v5460
    %v6015 = vpop.permute.xlu0 %6014
    %6018 = vset.pattern.permute.xlu0 0
    %6019 = vperm.xlu0 %6018, %v5461
    %v6020 = vpop.permute.xlu0 %6019
    %6023 = vset.pattern.permute.xlu0 0
    %6024 = vperm.xlu0 %6023, %v5462
    %v6025 = vpop.permute.xlu0 %6024
    %6028 = vset.pattern.permute.xlu0 0
    %6029 = vperm.xlu0 %6028, %v5463
    %v6030 = vpop.permute.xlu0 %6029
    %6033 = vset.pattern.permute.xlu0 0
    %6034 = vperm.xlu0 %6033, %v5464
    %v6035 = vpop.permute.xlu0 %6034
    %6038 = vset.pattern.permute.xlu0 0
    %6039 = vperm.xlu0 %6038, %v5465
    %v6040 = vpop.permute.xlu0 %6039
    %6043 = vset.pattern.permute.xlu0 0
    %6044 = vperm.xlu0 %6043, %v5466
    %v6045 = vpop.permute.xlu0 %6044
    %6048 = vset.pattern.permute.xlu0 0
    %6049 = vperm.xlu0 %6048, %v5467
    %v6050 = vpop.permute.xlu0 %6049
    %6053 = vset.pattern.permute.xlu0 0
    %6054 = vperm.xlu0 %6053, %v5468
    %v6055 = vpop.permute.xlu0 %6054
    %6058 = vset.pattern.permute.xlu0 0
    %6059 = vperm.xlu0 %6058, %v5469
    %v6060 = vpop.permute.xlu0 %6059
    %6063 = vset.pattern.permute.xlu0 0
    %6064 = vperm.xlu0 %6063, %v5470
    %v6065 = vpop.permute.xlu0 %6064
    %6068 = vset.pattern.permute.xlu0 0
    %6069 = vperm.xlu0 %6068, %v5471
    %v6070 = vpop.permute.xlu0 %6069
    %6073 = vset.pattern.permute.xlu0 0
    %6074 = vperm.xlu0 %6073, %v5472
    %v6075 = vpop.permute.xlu0 %6074
    %6078 = vset.pattern.permute.xlu0 0
    %6079 = vperm.xlu0 %6078, %v5473
    %v6080 = vpop.permute.xlu0 %6079
    %6083 = vset.pattern.permute.xlu0 0
    %6084 = vperm.xlu0 %6083, %v5474
    %v6085 = vpop.permute.xlu0 %6084
    %6088 = vset.pattern.permute.xlu0 0
    %6089 = vperm.xlu0 %6088, %v5475
    %v6090 = vpop.permute.xlu0 %6089
    %6093 = vset.pattern.permute.xlu0 0
    %6094 = vperm.xlu0 %6093, %v5476
    %v6095 = vpop.permute.xlu0 %6094
    %6098 = vset.pattern.permute.xlu0 0
    %6099 = vperm.xlu0 %6098, %v5477
    %v6100 = vpop.permute.xlu0 %6099
    %6103 = vset.pattern.permute.xlu0 0
    %6104 = vperm.xlu0 %6103, %v5478
    %v6105 = vpop.permute.xlu0 %6104
    %6108 = vset.pattern.permute.xlu0 0
    %6109 = vperm.xlu0 %6108, %v5479
    %v6110 = vpop.permute.xlu0 %6109
    %6113 = vset.pattern.permute.xlu0 0
    %6114 = vperm.xlu0 %6113, %v5480
    %v6115 = vpop.permute.xlu0 %6114
    %6118 = vset.pattern.permute.xlu0 0
    %6119 = vperm.xlu0 %6118, %v5481
    %v6120 = vpop.permute.xlu0 %6119
    %6122 = vmatpush.msra.mxu0 %v4793
    %6123 = vmatpush.msra.mxu0 %v4792
    %6124 = vmatpush.msra.mxu0 %v4791
    %6125 = vmatpush.msra.mxu0 %v4790
    %6126 = vmatpush.msra.mxu0 %v4789
    %6127 = vmatpush.msra.mxu0 %v4788
    %6128 = vmatpush.msra.mxu0 %v4787
    %6129 = vmatpush.msra.mxu0 %v4786
    %6130 = vmatpush.msra.mxu0 %v4785
    %6131 = vmatpush.msra.mxu0 %v4784
    %6132 = vmatpush.msra.mxu0 %v4783
    %6133 = vmatpush.msra.mxu0 %v4782
    %6134 = vmatpush.msra.mxu0 %v4781
    %6135 = vmatpush.msra.mxu0 %v4780
    %6136 = vmatpush.msra.mxu0 %v4779
    %6137 = vmatpush.msra.mxu0 %v4778
    %6138 = vmatmul.f32.gmra.mxu0 %v4842
    %v6139 = vpop.f32.mrf.mxu0
    %v6140 = vadd.f32 %v5485, %v6139
    %6141 = vmatmul.f32.gmra.mxu0 %v4846
    %v6142 = vpop.f32.mrf.mxu0
    %v6143 = vadd.f32 %v5490, %v6142
    %6144 = vmatmul.f32.gmra.mxu0 %v4850
    %v6145 = vpop.f32.mrf.mxu0
    %v6146 = vadd.f32 %v5495, %v6145
    %6147 = vmatmul.f32.gmra.mxu0 %v4854
    %v6148 = vpop.f32.mrf.mxu0
    %v6149 = vadd.f32 %v5500, %v6148
    %6150 = vmatmul.f32.gmra.mxu0 %v4858
    %v6151 = vpop.f32.mrf.mxu0
    %v6152 = vadd.f32 %v5505, %v6151
    %6153 = vmatmul.f32.gmra.mxu0 %v4862
    %v6154 = vpop.f32.mrf.mxu0
    %v6155 = vadd.f32 %v5510, %v6154
    %6156 = vmatmul.f32.gmra.mxu0 %v4866
    %v6157 = vpop.f32.mrf.mxu0
    %v6158 = vadd.f32 %v5515, %v6157
    %6159 = vmatmul.f32.gmra.mxu0 %v4870
    %v6160 = vpop.f32.mrf.mxu0
    %v6161 = vadd.f32 %v5520, %v6160
    %6162 = vmatmul.f32.gmra.mxu0 %v4874
    %v6163 = vpop.f32.mrf.mxu0
    %v6164 = vadd.f32 %v5525, %v6163
    %6165 = vmatmul.f32.gmra.mxu0 %v4878
    %v6166 = vpop.f32.mrf.mxu0
    %v6167 = vadd.f32 %v5530, %v6166
    %6168 = vmatmul.f32.gmra.mxu0 %v4882
    %v6169 = vpop.f32.mrf.mxu0
    %v6170 = vadd.f32 %v5535, %v6169
    %6171 = vmatmul.f32.gmra.mxu0 %v4886
    %v6172 = vpop.f32.mrf.mxu0
    %v6173 = vadd.f32 %v5540, %v6172
    %6174 = vmatmul.f32.gmra.mxu0 %v4890
    %v6175 = vpop.f32.mrf.mxu0
    %v6176 = vadd.f32 %v5545, %v6175
    %6177 = vmatmul.f32.gmra.mxu0 %v4894
    %v6178 = vpop.f32.mrf.mxu0
    %v6179 = vadd.f32 %v5550, %v6178
    %6180 = vmatmul.f32.gmra.mxu0 %v4898
    %v6181 = vpop.f32.mrf.mxu0
    %v6182 = vadd.f32 %v5555, %v6181
    %6183 = vmatmul.f32.gmra.mxu0 %v4902
    %v6184 = vpop.f32.mrf.mxu0
    %v6185 = vadd.f32 %v5560, %v6184
    %6186 = vmatmul.f32.gmra.mxu0 %v4906
    %v6187 = vpop.f32.mrf.mxu0
    %v6188 = vadd.f32 %v5565, %v6187
    %6189 = vmatmul.f32.gmra.mxu0 %v4910
    %v6190 = vpop.f32.mrf.mxu0
    %v6191 = vadd.f32 %v5570, %v6190
    %6192 = vmatmul.f32.gmra.mxu0 %v4914
    %v6193 = vpop.f32.mrf.mxu0
    %v6194 = vadd.f32 %v5575, %v6193
    %6195 = vmatmul.f32.gmra.mxu0 %v4918
    %v6196 = vpop.f32.mrf.mxu0
    %v6197 = vadd.f32 %v5580, %v6196
    %6198 = vmatmul.f32.gmra.mxu0 %v4922
    %v6199 = vpop.f32.mrf.mxu0
    %v6200 = vadd.f32 %v5585, %v6199
    %6201 = vmatmul.f32.gmra.mxu0 %v4926
    %v6202 = vpop.f32.mrf.mxu0
    %v6203 = vadd.f32 %v5590, %v6202
    %6204 = vmatmul.f32.gmra.mxu0 %v4930
    %v6205 = vpop.f32.mrf.mxu0
    %v6206 = vadd.f32 %v5595, %v6205
    %6207 = vmatmul.f32.gmra.mxu0 %v4934
    %v6208 = vpop.f32.mrf.mxu0
    %v6209 = vadd.f32 %v5600, %v6208
    %6210 = vmatmul.f32.gmra.mxu0 %v4938
    %v6211 = vpop.f32.mrf.mxu0
    %v6212 = vadd.f32 %v5605, %v6211
    %6213 = vmatmul.f32.gmra.mxu0 %v4942
    %v6214 = vpop.f32.mrf.mxu0
    %v6215 = vadd.f32 %v5610, %v6214
    %6216 = vmatmul.f32.gmra.mxu0 %v4946
    %v6217 = vpop.f32.mrf.mxu0
    %v6218 = vadd.f32 %v5615, %v6217
    %6219 = vmatmul.f32.gmra.mxu0 %v4950
    %v6220 = vpop.f32.mrf.mxu0
    %v6221 = vadd.f32 %v5620, %v6220
    %6222 = vmatmul.f32.gmra.mxu0 %v4954
    %v6223 = vpop.f32.mrf.mxu0
    %v6224 = vadd.f32 %v5625, %v6223
    %6225 = vmatmul.f32.gmra.mxu0 %v4958
    %v6226 = vpop.f32.mrf.mxu0
    %v6227 = vadd.f32 %v5630, %v6226
    %6228 = vmatmul.f32.gmra.mxu0 %v4962
    %v6229 = vpop.f32.mrf.mxu0
    %v6230 = vadd.f32 %v5635, %v6229
    %6231 = vmatmul.f32.gmra.mxu0 %v4966
    %v6232 = vpop.f32.mrf.mxu0
    %v6233 = vadd.f32 %v5640, %v6232
    %6234 = vmatmul.f32.gmra.mxu0 %v4970
    %v6235 = vpop.f32.mrf.mxu0
    %v6236 = vadd.f32 %v5645, %v6235
    %6237 = vmatmul.f32.gmra.mxu0 %v4974
    %v6238 = vpop.f32.mrf.mxu0
    %v6239 = vadd.f32 %v5650, %v6238
    %6240 = vmatmul.f32.gmra.mxu0 %v4978
    %v6241 = vpop.f32.mrf.mxu0
    %v6242 = vadd.f32 %v5655, %v6241
    %6243 = vmatmul.f32.gmra.mxu0 %v4982
    %v6244 = vpop.f32.mrf.mxu0
    %v6245 = vadd.f32 %v5660, %v6244
    %6246 = vmatmul.f32.gmra.mxu0 %v4986
    %v6247 = vpop.f32.mrf.mxu0
    %v6248 = vadd.f32 %v5665, %v6247
    %6249 = vmatmul.f32.gmra.mxu0 %v4990
    %v6250 = vpop.f32.mrf.mxu0
    %v6251 = vadd.f32 %v5670, %v6250
    %6252 = vmatmul.f32.gmra.mxu0 %v4994
    %v6253 = vpop.f32.mrf.mxu0
    %v6254 = vadd.f32 %v5675, %v6253
    %6255 = vmatmul.f32.gmra.mxu0 %v4998
    %v6256 = vpop.f32.mrf.mxu0
    %v6257 = vadd.f32 %v5680, %v6256
    %6258 = vmatmul.f32.gmra.mxu0 %v5002
    %v6259 = vpop.f32.mrf.mxu0
    %v6260 = vadd.f32 %v5685, %v6259
    %6261 = vmatmul.f32.gmra.mxu0 %v5006
    %v6262 = vpop.f32.mrf.mxu0
    %v6263 = vadd.f32 %v5690, %v6262
    %6264 = vmatmul.f32.gmra.mxu0 %v5010
    %v6265 = vpop.f32.mrf.mxu0
    %v6266 = vadd.f32 %v5695, %v6265
    %6267 = vmatmul.f32.gmra.mxu0 %v5014
    %v6268 = vpop.f32.mrf.mxu0
    %v6269 = vadd.f32 %v5700, %v6268
    %6270 = vmatmul.f32.gmra.mxu0 %v5018
    %v6271 = vpop.f32.mrf.mxu0
    %v6272 = vadd.f32 %v5705, %v6271
    %6273 = vmatmul.f32.gmra.mxu0 %v5022
    %v6274 = vpop.f32.mrf.mxu0
    %v6275 = vadd.f32 %v5710, %v6274
    %6276 = vmatmul.f32.gmra.mxu0 %v5026
    %v6277 = vpop.f32.mrf.mxu0
    %v6278 = vadd.f32 %v5715, %v6277
    %6279 = vmatmul.f32.gmra.mxu0 %v5030
    %v6280 = vpop.f32.mrf.mxu0
    %v6281 = vadd.f32 %v5720, %v6280
    %6282 = vmatmul.f32.gmra.mxu0 %v5034
    %v6283 = vpop.f32.mrf.mxu0
    %v6284 = vadd.f32 %v5725, %v6283
    %6285 = vmatmul.f32.gmra.mxu0 %v5038
    %v6286 = vpop.f32.mrf.mxu0
    %v6287 = vadd.f32 %v5730, %v6286
    %6288 = vmatmul.f32.gmra.mxu0 %v5042
    %v6289 = vpop.f32.mrf.mxu0
    %v6290 = vadd.f32 %v5735, %v6289
    %6291 = vmatmul.f32.gmra.mxu0 %v5046
    %v6292 = vpop.f32.mrf.mxu0
    %v6293 = vadd.f32 %v5740, %v6292
    %6294 = vmatmul.f32.gmra.mxu0 %v5050
    %v6295 = vpop.f32.mrf.mxu0
    %v6296 = vadd.f32 %v5745, %v6295
    %6297 = vmatmul.f32.gmra.mxu0 %v5054
    %v6298 = vpop.f32.mrf.mxu0
    %v6299 = vadd.f32 %v5750, %v6298
    %6300 = vmatmul.f32.gmra.mxu0 %v5058
    %v6301 = vpop.f32.mrf.mxu0
    %v6302 = vadd.f32 %v5755, %v6301
    %6303 = vmatmul.f32.gmra.mxu0 %v5062
    %v6304 = vpop.f32.mrf.mxu0
    %v6305 = vadd.f32 %v5760, %v6304
    %6306 = vmatmul.f32.gmra.mxu0 %v5066
    %v6307 = vpop.f32.mrf.mxu0
    %v6308 = vadd.f32 %v5765, %v6307
    %6309 = vmatmul.f32.gmra.mxu0 %v5070
    %v6310 = vpop.f32.mrf.mxu0
    %v6311 = vadd.f32 %v5770, %v6310
    %6312 = vmatmul.f32.gmra.mxu0 %v5074
    %v6313 = vpop.f32.mrf.mxu0
    %v6314 = vadd.f32 %v5775, %v6313
    %6315 = vmatmul.f32.gmra.mxu0 %v5078
    %v6316 = vpop.f32.mrf.mxu0
    %v6317 = vadd.f32 %v5780, %v6316
    %6318 = vmatmul.f32.gmra.mxu0 %v5082
    %v6319 = vpop.f32.mrf.mxu0
    %v6320 = vadd.f32 %v5785, %v6319
    %6321 = vmatmul.f32.gmra.mxu0 %v5086
    %v6322 = vpop.f32.mrf.mxu0
    %v6323 = vadd.f32 %v5790, %v6322
    %6324 = vmatmul.f32.gmra.mxu0 %v5090
    %v6325 = vpop.f32.mrf.mxu0
    %v6326 = vadd.f32 %v5795, %v6325
    %6327 = vmatmul.f32.gmra.mxu0 %v5094
    %v6328 = vpop.f32.mrf.mxu0
    %v6329 = vadd.f32 %v5800, %v6328
    %6330 = vmatmul.f32.gmra.mxu0 %v5098
    %v6331 = vpop.f32.mrf.mxu0
    %v6332 = vadd.f32 %v5805, %v6331
    %6333 = vmatmul.f32.gmra.mxu0 %v5102
    %v6334 = vpop.f32.mrf.mxu0
    %v6335 = vadd.f32 %v5810, %v6334
    %6336 = vmatmul.f32.gmra.mxu0 %v5106
    %v6337 = vpop.f32.mrf.mxu0
    %v6338 = vadd.f32 %v5815, %v6337
    %6339 = vmatmul.f32.gmra.mxu0 %v5110
    %v6340 = vpop.f32.mrf.mxu0
    %v6341 = vadd.f32 %v5820, %v6340
    %6342 = vmatmul.f32.gmra.mxu0 %v5114
    %v6343 = vpop.f32.mrf.mxu0
    %v6344 = vadd.f32 %v5825, %v6343
    %6345 = vmatmul.f32.gmra.mxu0 %v5118
    %v6346 = vpop.f32.mrf.mxu0
    %v6347 = vadd.f32 %v5830, %v6346
    %6348 = vmatmul.f32.gmra.mxu0 %v5122
    %v6349 = vpop.f32.mrf.mxu0
    %v6350 = vadd.f32 %v5835, %v6349
    %6351 = vmatmul.f32.gmra.mxu0 %v5126
    %v6352 = vpop.f32.mrf.mxu0
    %v6353 = vadd.f32 %v5840, %v6352
    %6354 = vmatmul.f32.gmra.mxu0 %v5130
    %v6355 = vpop.f32.mrf.mxu0
    %v6356 = vadd.f32 %v5845, %v6355
    %6357 = vmatmul.f32.gmra.mxu0 %v5134
    %v6358 = vpop.f32.mrf.mxu0
    %v6359 = vadd.f32 %v5850, %v6358
    %6360 = vmatmul.f32.gmra.mxu0 %v5138
    %v6361 = vpop.f32.mrf.mxu0
    %v6362 = vadd.f32 %v5855, %v6361
    %6363 = vmatmul.f32.gmra.mxu0 %v5142
    %v6364 = vpop.f32.mrf.mxu0
    %v6365 = vadd.f32 %v5860, %v6364
    %6366 = vmatmul.f32.gmra.mxu0 %v5146
    %v6367 = vpop.f32.mrf.mxu0
    %v6368 = vadd.f32 %v5865, %v6367
    %6369 = vmatmul.f32.gmra.mxu0 %v5150
    %v6370 = vpop.f32.mrf.mxu0
    %v6371 = vadd.f32 %v5870, %v6370
    %6372 = vmatmul.f32.gmra.mxu0 %v5154
    %v6373 = vpop.f32.mrf.mxu0
    %v6374 = vadd.f32 %v5875, %v6373
    %6375 = vmatmul.f32.gmra.mxu0 %v5158
    %v6376 = vpop.f32.mrf.mxu0
    %v6377 = vadd.f32 %v5880, %v6376
    %6378 = vmatmul.f32.gmra.mxu0 %v5162
    %v6379 = vpop.f32.mrf.mxu0
    %v6380 = vadd.f32 %v5885, %v6379
    %6381 = vmatmul.f32.gmra.mxu0 %v5166
    %v6382 = vpop.f32.mrf.mxu0
    %v6383 = vadd.f32 %v5890, %v6382
    %6384 = vmatmul.f32.gmra.mxu0 %v5170
    %v6385 = vpop.f32.mrf.mxu0
    %v6386 = vadd.f32 %v5895, %v6385
    %6387 = vmatmul.f32.gmra.mxu0 %v5174
    %v6388 = vpop.f32.mrf.mxu0
    %v6389 = vadd.f32 %v5900, %v6388
    %6390 = vmatmul.f32.gmra.mxu0 %v5178
    %v6391 = vpop.f32.mrf.mxu0
    %v6392 = vadd.f32 %v5905, %v6391
    %6393 = vmatmul.f32.gmra.mxu0 %v5182
    %v6394 = vpop.f32.mrf.mxu0
    %v6395 = vadd.f32 %v5910, %v6394
    %6396 = vmatmul.f32.gmra.mxu0 %v5186
    %v6397 = vpop.f32.mrf.mxu0
    %v6398 = vadd.f32 %v5915, %v6397
    %6399 = vmatmul.f32.gmra.mxu0 %v5190
    %v6400 = vpop.f32.mrf.mxu0
    %v6401 = vadd.f32 %v5920, %v6400
    %6402 = vmatmul.f32.gmra.mxu0 %v5194
    %v6403 = vpop.f32.mrf.mxu0
    %v6404 = vadd.f32 %v5925, %v6403
    %6405 = vmatmul.f32.gmra.mxu0 %v5198
    %v6406 = vpop.f32.mrf.mxu0
    %v6407 = vadd.f32 %v5930, %v6406
    %6408 = vmatmul.f32.gmra.mxu0 %v5202
    %v6409 = vpop.f32.mrf.mxu0
    %v6410 = vadd.f32 %v5935, %v6409
    %6411 = vmatmul.f32.gmra.mxu0 %v5206
    %v6412 = vpop.f32.mrf.mxu0
    %v6413 = vadd.f32 %v5940, %v6412
    %6414 = vmatmul.f32.gmra.mxu0 %v5210
    %v6415 = vpop.f32.mrf.mxu0
    %v6416 = vadd.f32 %v5945, %v6415
    %6417 = vmatmul.f32.gmra.mxu0 %v5214
    %v6418 = vpop.f32.mrf.mxu0
    %v6419 = vadd.f32 %v5950, %v6418
    %6420 = vmatmul.f32.gmra.mxu0 %v5218
    %v6421 = vpop.f32.mrf.mxu0
    %v6422 = vadd.f32 %v5955, %v6421
    %6423 = vmatmul.f32.gmra.mxu0 %v5222
    %v6424 = vpop.f32.mrf.mxu0
    %v6425 = vadd.f32 %v5960, %v6424
    %6426 = vmatmul.f32.gmra.mxu0 %v5226
    %v6427 = vpop.f32.mrf.mxu0
    %v6428 = vadd.f32 %v5965, %v6427
    %6429 = vmatmul.f32.gmra.mxu0 %v5230
    %v6430 = vpop.f32.mrf.mxu0
    %v6431 = vadd.f32 %v5970, %v6430
    %6432 = vmatmul.f32.gmra.mxu0 %v5234
    %v6433 = vpop.f32.mrf.mxu0
    %v6434 = vadd.f32 %v5975, %v6433
    %6435 = vmatmul.f32.gmra.mxu0 %v5238
    %v6436 = vpop.f32.mrf.mxu0
    %v6437 = vadd.f32 %v5980, %v6436
    %6438 = vmatmul.f32.gmra.mxu0 %v5242
    %v6439 = vpop.f32.mrf.mxu0
    %v6440 = vadd.f32 %v5985, %v6439
    %6441 = vmatmul.f32.gmra.mxu0 %v5246
    %v6442 = vpop.f32.mrf.mxu0
    %v6443 = vadd.f32 %v5990, %v6442
    %6444 = vmatmul.f32.gmra.mxu0 %v5250
    %v6445 = vpop.f32.mrf.mxu0
    %v6446 = vadd.f32 %v5995, %v6445
    %6447 = vmatmul.f32.gmra.mxu0 %v5254
    %v6448 = vpop.f32.mrf.mxu0
    %v6449 = vadd.f32 %v6000, %v6448
    %6450 = vmatmul.f32.gmra.mxu0 %v5258
    %v6451 = vpop.f32.mrf.mxu0
    %v6452 = vadd.f32 %v6005, %v6451
    %6453 = vmatmul.f32.gmra.mxu0 %v5262
    %v6454 = vpop.f32.mrf.mxu0
    %v6455 = vadd.f32 %v6010, %v6454
    %6456 = vmatmul.f32.gmra.mxu0 %v5266
    %v6457 = vpop.f32.mrf.mxu0
    %v6458 = vadd.f32 %v6015, %v6457
    %6459 = vmatmul.f32.gmra.mxu0 %v5270
    %v6460 = vpop.f32.mrf.mxu0
    %v6461 = vadd.f32 %v6020, %v6460
    %6462 = vmatmul.f32.gmra.mxu0 %v5274
    %v6463 = vpop.f32.mrf.mxu0
    %v6464 = vadd.f32 %v6025, %v6463
    %6465 = vmatmul.f32.gmra.mxu0 %v5278
    %v6466 = vpop.f32.mrf.mxu0
    %v6467 = vadd.f32 %v6030, %v6466
    %6468 = vmatmul.f32.gmra.mxu0 %v5282
    %v6469 = vpop.f32.mrf.mxu0
    %v6470 = vadd.f32 %v6035, %v6469
    %6471 = vmatmul.f32.gmra.mxu0 %v5286
    %v6472 = vpop.f32.mrf.mxu0
    %v6473 = vadd.f32 %v6040, %v6472
    %6474 = vmatmul.f32.gmra.mxu0 %v5290
    %v6475 = vpop.f32.mrf.mxu0
    %v6476 = vadd.f32 %v6045, %v6475
    %6477 = vmatmul.f32.gmra.mxu0 %v5294
    %v6478 = vpop.f32.mrf.mxu0
    %v6479 = vadd.f32 %v6050, %v6478
    %6480 = vmatmul.f32.gmra.mxu0 %v5298
    %v6481 = vpop.f32.mrf.mxu0
    %v6482 = vadd.f32 %v6055, %v6481
    %6483 = vmatmul.f32.gmra.mxu0 %v5302
    %v6484 = vpop.f32.mrf.mxu0
    %v6485 = vadd.f32 %v6060, %v6484
    %6486 = vmatmul.f32.gmra.mxu0 %v5306
    %v6487 = vpop.f32.mrf.mxu0
    %v6488 = vadd.f32 %v6065, %v6487
    %6489 = vmatmul.f32.gmra.mxu0 %v5310
    %v6490 = vpop.f32.mrf.mxu0
    %v6491 = vadd.f32 %v6070, %v6490
    %6492 = vmatmul.f32.gmra.mxu0 %v5314
    %v6493 = vpop.f32.mrf.mxu0
    %v6494 = vadd.f32 %v6075, %v6493
    %6495 = vmatmul.f32.gmra.mxu0 %v5318
    %v6496 = vpop.f32.mrf.mxu0
    %v6497 = vadd.f32 %v6080, %v6496
    %6498 = vmatmul.f32.gmra.mxu0 %v5322
    %v6499 = vpop.f32.mrf.mxu0
    %v6500 = vadd.f32 %v6085, %v6499
    %6501 = vmatmul.f32.gmra.mxu0 %v5326
    %v6502 = vpop.f32.mrf.mxu0
    %v6503 = vadd.f32 %v6090, %v6502
    %6504 = vmatmul.f32.gmra.mxu0 %v5330
    %v6505 = vpop.f32.mrf.mxu0
    %v6506 = vadd.f32 %v6095, %v6505
    %6507 = vmatmul.f32.gmra.mxu0 %v5334
    %v6508 = vpop.f32.mrf.mxu0
    %v6509 = vadd.f32 %v6100, %v6508
    %6510 = vmatmul.f32.gmra.mxu0 %v5338
    %v6511 = vpop.f32.mrf.mxu0
    %v6512 = vadd.f32 %v6105, %v6511
    %6513 = vmatmul.f32.gmra.mxu0 %v5342
    %v6514 = vpop.f32.mrf.mxu0
    %v6515 = vadd.f32 %v6110, %v6514
    %6516 = vmatmul.f32.gmra.mxu0 %v5346
    %v6517 = vpop.f32.mrf.mxu0
    %v6518 = vadd.f32 %v6115, %v6517
    %6519 = vmatmul.f32.gmra.mxu0 %v5350
    %v6520 = vpop.f32.mrf.mxu0
    %v6521 = vadd.f32 %v6120, %v6520
    %6522 = vdwg.mxu0
    %6523 = vmatpush.msra.mxu0 %v4809
    %6524 = vmatpush.msra.mxu0 %v4808
    %6525 = vmatpush.msra.mxu0 %v4807
    %6526 = vmatpush.msra.mxu0 %v4806
    %6527 = vmatpush.msra.mxu0 %v4805
    %6528 = vmatpush.msra.mxu0 %v4804
    %6529 = vmatpush.msra.mxu0 %v4803
    %6530 = vmatpush.msra.mxu0 %v4802
    %6531 = vmatpush.msra.mxu0 %v4801
    %6532 = vmatpush.msra.mxu0 %v4800
    %6533 = vmatpush.msra.mxu0 %v4799
    %6534 = vmatpush.msra.mxu0 %v4798
    %6535 = vmatpush.msra.mxu0 %v4797
    %6536 = vmatpush.msra.mxu0 %v4796
    %6537 = vmatpush.msra.mxu0 %v4795
    %6538 = vmatpush.msra.mxu0 %v4794
    %6539 = vmatmul.f32.gmra.mxu0 %v4843
    %v6540 = vpop.f32.mrf.mxu0
    %v6541 = vadd.f32 %v6140, %v6540
    %6542 = vmatmul.f32.gmra.mxu0 %v4847
    %v6543 = vpop.f32.mrf.mxu0
    %v6544 = vadd.f32 %v6143, %v6543
    %6545 = vmatmul.f32.gmra.mxu0 %v4851
    %v6546 = vpop.f32.mrf.mxu0
    %v6547 = vadd.f32 %v6146, %v6546
    %6548 = vmatmul.f32.gmra.mxu0 %v4855
    %v6549 = vpop.f32.mrf.mxu0
    %v6550 = vadd.f32 %v6149, %v6549
    %6551 = vmatmul.f32.gmra.mxu0 %v4859
    %v6552 = vpop.f32.mrf.mxu0
    %v6553 = vadd.f32 %v6152, %v6552
    %6554 = vmatmul.f32.gmra.mxu0 %v4863
    %v6555 = vpop.f32.mrf.mxu0
    %v6556 = vadd.f32 %v6155, %v6555
    %6557 = vmatmul.f32.gmra.mxu0 %v4867
    %v6558 = vpop.f32.mrf.mxu0
    %v6559 = vadd.f32 %v6158, %v6558
    %6560 = vmatmul.f32.gmra.mxu0 %v4871
    %v6561 = vpop.f32.mrf.mxu0
    %v6562 = vadd.f32 %v6161, %v6561
    %6563 = vmatmul.f32.gmra.mxu0 %v4875
    %v6564 = vpop.f32.mrf.mxu0
    %v6565 = vadd.f32 %v6164, %v6564
    %6566 = vmatmul.f32.gmra.mxu0 %v4879
    %v6567 = vpop.f32.mrf.mxu0
    %v6568 = vadd.f32 %v6167, %v6567
    %6569 = vmatmul.f32.gmra.mxu0 %v4883
    %v6570 = vpop.f32.mrf.mxu0
    %v6571 = vadd.f32 %v6170, %v6570
    %6572 = vmatmul.f32.gmra.mxu0 %v4887
    %v6573 = vpop.f32.mrf.mxu0
    %v6574 = vadd.f32 %v6173, %v6573
    %6575 = vmatmul.f32.gmra.mxu0 %v4891
    %v6576 = vpop.f32.mrf.mxu0
    %v6577 = vadd.f32 %v6176, %v6576
    %6578 = vmatmul.f32.gmra.mxu0 %v4895
    %v6579 = vpop.f32.mrf.mxu0
    %v6580 = vadd.f32 %v6179, %v6579
    %6581 = vmatmul.f32.gmra.mxu0 %v4899
    %v6582 = vpop.f32.mrf.mxu0
    %v6583 = vadd.f32 %v6182, %v6582
    %6584 = vmatmul.f32.gmra.mxu0 %v4903
    %v6585 = vpop.f32.mrf.mxu0
    %v6586 = vadd.f32 %v6185, %v6585
    %6587 = vmatmul.f32.gmra.mxu0 %v4907
    %v6588 = vpop.f32.mrf.mxu0
    %v6589 = vadd.f32 %v6188, %v6588
    %6590 = vmatmul.f32.gmra.mxu0 %v4911
    %v6591 = vpop.f32.mrf.mxu0
    %v6592 = vadd.f32 %v6191, %v6591
    %6593 = vmatmul.f32.gmra.mxu0 %v4915
    %v6594 = vpop.f32.mrf.mxu0
    %v6595 = vadd.f32 %v6194, %v6594
    %6596 = vmatmul.f32.gmra.mxu0 %v4919
    %v6597 = vpop.f32.mrf.mxu0
    %v6598 = vadd.f32 %v6197, %v6597
    %6599 = vmatmul.f32.gmra.mxu0 %v4923
    %v6600 = vpop.f32.mrf.mxu0
    %v6601 = vadd.f32 %v6200, %v6600
    %6602 = vmatmul.f32.gmra.mxu0 %v4927
    %v6603 = vpop.f32.mrf.mxu0
    %v6604 = vadd.f32 %v6203, %v6603
    %6605 = vmatmul.f32.gmra.mxu0 %v4931
    %v6606 = vpop.f32.mrf.mxu0
    %v6607 = vadd.f32 %v6206, %v6606
    %6608 = vmatmul.f32.gmra.mxu0 %v4935
    %v6609 = vpop.f32.mrf.mxu0
    %v6610 = vadd.f32 %v6209, %v6609
    %6611 = vmatmul.f32.gmra.mxu0 %v4939
    %v6612 = vpop.f32.mrf.mxu0
    %v6613 = vadd.f32 %v6212, %v6612
    %6614 = vmatmul.f32.gmra.mxu0 %v4943
    %v6615 = vpop.f32.mrf.mxu0
    %v6616 = vadd.f32 %v6215, %v6615
    %6617 = vmatmul.f32.gmra.mxu0 %v4947
    %v6618 = vpop.f32.mrf.mxu0
    %v6619 = vadd.f32 %v6218, %v6618
    %6620 = vmatmul.f32.gmra.mxu0 %v4951
    %v6621 = vpop.f32.mrf.mxu0
    %v6622 = vadd.f32 %v6221, %v6621
    %6623 = vmatmul.f32.gmra.mxu0 %v4955
    %v6624 = vpop.f32.mrf.mxu0
    %v6625 = vadd.f32 %v6224, %v6624
    %6626 = vmatmul.f32.gmra.mxu0 %v4959
    %v6627 = vpop.f32.mrf.mxu0
    %v6628 = vadd.f32 %v6227, %v6627
    %6629 = vmatmul.f32.gmra.mxu0 %v4963
    %v6630 = vpop.f32.mrf.mxu0
    %v6631 = vadd.f32 %v6230, %v6630
    %6632 = vmatmul.f32.gmra.mxu0 %v4967
    %v6633 = vpop.f32.mrf.mxu0
    %v6634 = vadd.f32 %v6233, %v6633
    %6635 = vmatmul.f32.gmra.mxu0 %v4971
    %v6636 = vpop.f32.mrf.mxu0
    %v6637 = vadd.f32 %v6236, %v6636
    %6638 = vmatmul.f32.gmra.mxu0 %v4975
    %v6639 = vpop.f32.mrf.mxu0
    %v6640 = vadd.f32 %v6239, %v6639
    %6641 = vmatmul.f32.gmra.mxu0 %v4979
    %v6642 = vpop.f32.mrf.mxu0
    %v6643 = vadd.f32 %v6242, %v6642
    %6644 = vmatmul.f32.gmra.mxu0 %v4983
    %v6645 = vpop.f32.mrf.mxu0
    %v6646 = vadd.f32 %v6245, %v6645
    %6647 = vmatmul.f32.gmra.mxu0 %v4987
    %v6648 = vpop.f32.mrf.mxu0
    %v6649 = vadd.f32 %v6248, %v6648
    %6650 = vmatmul.f32.gmra.mxu0 %v4991
    %v6651 = vpop.f32.mrf.mxu0
    %v6652 = vadd.f32 %v6251, %v6651
    %6653 = vmatmul.f32.gmra.mxu0 %v4995
    %v6654 = vpop.f32.mrf.mxu0
    %v6655 = vadd.f32 %v6254, %v6654
    %6656 = vmatmul.f32.gmra.mxu0 %v4999
    %v6657 = vpop.f32.mrf.mxu0
    %v6658 = vadd.f32 %v6257, %v6657
    %6659 = vmatmul.f32.gmra.mxu0 %v5003
    %v6660 = vpop.f32.mrf.mxu0
    %v6661 = vadd.f32 %v6260, %v6660
    %6662 = vmatmul.f32.gmra.mxu0 %v5007
    %v6663 = vpop.f32.mrf.mxu0
    %v6664 = vadd.f32 %v6263, %v6663
    %6665 = vmatmul.f32.gmra.mxu0 %v5011
    %v6666 = vpop.f32.mrf.mxu0
    %v6667 = vadd.f32 %v6266, %v6666
    %6668 = vmatmul.f32.gmra.mxu0 %v5015
    %v6669 = vpop.f32.mrf.mxu0
    %v6670 = vadd.f32 %v6269, %v6669
    %6671 = vmatmul.f32.gmra.mxu0 %v5019
    %v6672 = vpop.f32.mrf.mxu0
    %v6673 = vadd.f32 %v6272, %v6672
    %6674 = vmatmul.f32.gmra.mxu0 %v5023
    %v6675 = vpop.f32.mrf.mxu0
    %v6676 = vadd.f32 %v6275, %v6675
    %6677 = vmatmul.f32.gmra.mxu0 %v5027
    %v6678 = vpop.f32.mrf.mxu0
    %v6679 = vadd.f32 %v6278, %v6678
    %6680 = vmatmul.f32.gmra.mxu0 %v5031
    %v6681 = vpop.f32.mrf.mxu0
    %v6682 = vadd.f32 %v6281, %v6681
    %6683 = vmatmul.f32.gmra.mxu0 %v5035
    %v6684 = vpop.f32.mrf.mxu0
    %v6685 = vadd.f32 %v6284, %v6684
    %6686 = vmatmul.f32.gmra.mxu0 %v5039
    %v6687 = vpop.f32.mrf.mxu0
    %v6688 = vadd.f32 %v6287, %v6687
    %6689 = vmatmul.f32.gmra.mxu0 %v5043
    %v6690 = vpop.f32.mrf.mxu0
    %v6691 = vadd.f32 %v6290, %v6690
    %6692 = vmatmul.f32.gmra.mxu0 %v5047
    %v6693 = vpop.f32.mrf.mxu0
    %v6694 = vadd.f32 %v6293, %v6693
    %6695 = vmatmul.f32.gmra.mxu0 %v5051
    %v6696 = vpop.f32.mrf.mxu0
    %v6697 = vadd.f32 %v6296, %v6696
    %6698 = vmatmul.f32.gmra.mxu0 %v5055
    %v6699 = vpop.f32.mrf.mxu0
    %v6700 = vadd.f32 %v6299, %v6699
    %6701 = vmatmul.f32.gmra.mxu0 %v5059
    %v6702 = vpop.f32.mrf.mxu0
    %v6703 = vadd.f32 %v6302, %v6702
    %6704 = vmatmul.f32.gmra.mxu0 %v5063
    %v6705 = vpop.f32.mrf.mxu0
    %v6706 = vadd.f32 %v6305, %v6705
    %6707 = vmatmul.f32.gmra.mxu0 %v5067
    %v6708 = vpop.f32.mrf.mxu0
    %v6709 = vadd.f32 %v6308, %v6708
    %6710 = vmatmul.f32.gmra.mxu0 %v5071
    %v6711 = vpop.f32.mrf.mxu0
    %v6712 = vadd.f32 %v6311, %v6711
    %6713 = vmatmul.f32.gmra.mxu0 %v5075
    %v6714 = vpop.f32.mrf.mxu0
    %v6715 = vadd.f32 %v6314, %v6714
    %6716 = vmatmul.f32.gmra.mxu0 %v5079
    %v6717 = vpop.f32.mrf.mxu0
    %v6718 = vadd.f32 %v6317, %v6717
    %6719 = vmatmul.f32.gmra.mxu0 %v5083
    %v6720 = vpop.f32.mrf.mxu0
    %v6721 = vadd.f32 %v6320, %v6720
    %6722 = vmatmul.f32.gmra.mxu0 %v5087
    %v6723 = vpop.f32.mrf.mxu0
    %v6724 = vadd.f32 %v6323, %v6723
    %6725 = vmatmul.f32.gmra.mxu0 %v5091
    %v6726 = vpop.f32.mrf.mxu0
    %v6727 = vadd.f32 %v6326, %v6726
    %6728 = vmatmul.f32.gmra.mxu0 %v5095
    %v6729 = vpop.f32.mrf.mxu0
    %v6730 = vadd.f32 %v6329, %v6729
    %6731 = vmatmul.f32.gmra.mxu0 %v5099
    %v6732 = vpop.f32.mrf.mxu0
    %v6733 = vadd.f32 %v6332, %v6732
    %6734 = vmatmul.f32.gmra.mxu0 %v5103
    %v6735 = vpop.f32.mrf.mxu0
    %v6736 = vadd.f32 %v6335, %v6735
    %6737 = vmatmul.f32.gmra.mxu0 %v5107
    %v6738 = vpop.f32.mrf.mxu0
    %v6739 = vadd.f32 %v6338, %v6738
    %6740 = vmatmul.f32.gmra.mxu0 %v5111
    %v6741 = vpop.f32.mrf.mxu0
    %v6742 = vadd.f32 %v6341, %v6741
    %6743 = vmatmul.f32.gmra.mxu0 %v5115
    %v6744 = vpop.f32.mrf.mxu0
    %v6745 = vadd.f32 %v6344, %v6744
    %6746 = vmatmul.f32.gmra.mxu0 %v5119
    %v6747 = vpop.f32.mrf.mxu0
    %v6748 = vadd.f32 %v6347, %v6747
    %6749 = vmatmul.f32.gmra.mxu0 %v5123
    %v6750 = vpop.f32.mrf.mxu0
    %v6751 = vadd.f32 %v6350, %v6750
    %6752 = vmatmul.f32.gmra.mxu0 %v5127
    %v6753 = vpop.f32.mrf.mxu0
    %v6754 = vadd.f32 %v6353, %v6753
    %6755 = vmatmul.f32.gmra.mxu0 %v5131
    %v6756 = vpop.f32.mrf.mxu0
    %v6757 = vadd.f32 %v6356, %v6756
    %6758 = vmatmul.f32.gmra.mxu0 %v5135
    %v6759 = vpop.f32.mrf.mxu0
    %v6760 = vadd.f32 %v6359, %v6759
    %6761 = vmatmul.f32.gmra.mxu0 %v5139
    %v6762 = vpop.f32.mrf.mxu0
    %v6763 = vadd.f32 %v6362, %v6762
    %6764 = vmatmul.f32.gmra.mxu0 %v5143
    %v6765 = vpop.f32.mrf.mxu0
    %v6766 = vadd.f32 %v6365, %v6765
    %6767 = vmatmul.f32.gmra.mxu0 %v5147
    %v6768 = vpop.f32.mrf.mxu0
    %v6769 = vadd.f32 %v6368, %v6768
    %6770 = vmatmul.f32.gmra.mxu0 %v5151
    %v6771 = vpop.f32.mrf.mxu0
    %v6772 = vadd.f32 %v6371, %v6771
    %6773 = vmatmul.f32.gmra.mxu0 %v5155
    %v6774 = vpop.f32.mrf.mxu0
    %v6775 = vadd.f32 %v6374, %v6774
    %6776 = vmatmul.f32.gmra.mxu0 %v5159
    %v6777 = vpop.f32.mrf.mxu0
    %v6778 = vadd.f32 %v6377, %v6777
    %6779 = vmatmul.f32.gmra.mxu0 %v5163
    %v6780 = vpop.f32.mrf.mxu0
    %v6781 = vadd.f32 %v6380, %v6780
    %6782 = vmatmul.f32.gmra.mxu0 %v5167
    %v6783 = vpop.f32.mrf.mxu0
    %v6784 = vadd.f32 %v6383, %v6783
    %6785 = vmatmul.f32.gmra.mxu0 %v5171
    %v6786 = vpop.f32.mrf.mxu0
    %v6787 = vadd.f32 %v6386, %v6786
    %6788 = vmatmul.f32.gmra.mxu0 %v5175
    %v6789 = vpop.f32.mrf.mxu0
    %v6790 = vadd.f32 %v6389, %v6789
    %6791 = vmatmul.f32.gmra.mxu0 %v5179
    %v6792 = vpop.f32.mrf.mxu0
    %v6793 = vadd.f32 %v6392, %v6792
    %6794 = vmatmul.f32.gmra.mxu0 %v5183
    %v6795 = vpop.f32.mrf.mxu0
    %v6796 = vadd.f32 %v6395, %v6795
    %6797 = vmatmul.f32.gmra.mxu0 %v5187
    %v6798 = vpop.f32.mrf.mxu0
    %v6799 = vadd.f32 %v6398, %v6798
    %6800 = vmatmul.f32.gmra.mxu0 %v5191
    %v6801 = vpop.f32.mrf.mxu0
    %v6802 = vadd.f32 %v6401, %v6801
    %6803 = vmatmul.f32.gmra.mxu0 %v5195
    %v6804 = vpop.f32.mrf.mxu0
    %v6805 = vadd.f32 %v6404, %v6804
    %6806 = vmatmul.f32.gmra.mxu0 %v5199
    %v6807 = vpop.f32.mrf.mxu0
    %v6808 = vadd.f32 %v6407, %v6807
    %6809 = vmatmul.f32.gmra.mxu0 %v5203
    %v6810 = vpop.f32.mrf.mxu0
    %v6811 = vadd.f32 %v6410, %v6810
    %6812 = vmatmul.f32.gmra.mxu0 %v5207
    %v6813 = vpop.f32.mrf.mxu0
    %v6814 = vadd.f32 %v6413, %v6813
    %6815 = vmatmul.f32.gmra.mxu0 %v5211
    %v6816 = vpop.f32.mrf.mxu0
    %v6817 = vadd.f32 %v6416, %v6816
    %6818 = vmatmul.f32.gmra.mxu0 %v5215
    %v6819 = vpop.f32.mrf.mxu0
    %v6820 = vadd.f32 %v6419, %v6819
    %6821 = vmatmul.f32.gmra.mxu0 %v5219
    %v6822 = vpop.f32.mrf.mxu0
    %v6823 = vadd.f32 %v6422, %v6822
    %6824 = vmatmul.f32.gmra.mxu0 %v5223
    %v6825 = vpop.f32.mrf.mxu0
    %v6826 = vadd.f32 %v6425, %v6825
    %6827 = vmatmul.f32.gmra.mxu0 %v5227
    %v6828 = vpop.f32.mrf.mxu0
    %v6829 = vadd.f32 %v6428, %v6828
    %6830 = vmatmul.f32.gmra.mxu0 %v5231
    %v6831 = vpop.f32.mrf.mxu0
    %v6832 = vadd.f32 %v6431, %v6831
    %6833 = vmatmul.f32.gmra.mxu0 %v5235
    %v6834 = vpop.f32.mrf.mxu0
    %v6835 = vadd.f32 %v6434, %v6834
    %6836 = vmatmul.f32.gmra.mxu0 %v5239
    %v6837 = vpop.f32.mrf.mxu0
    %v6838 = vadd.f32 %v6437, %v6837
    %6839 = vmatmul.f32.gmra.mxu0 %v5243
    %v6840 = vpop.f32.mrf.mxu0
    %v6841 = vadd.f32 %v6440, %v6840
    %6842 = vmatmul.f32.gmra.mxu0 %v5247
    %v6843 = vpop.f32.mrf.mxu0
    %v6844 = vadd.f32 %v6443, %v6843
    %6845 = vmatmul.f32.gmra.mxu0 %v5251
    %v6846 = vpop.f32.mrf.mxu0
    %v6847 = vadd.f32 %v6446, %v6846
    %6848 = vmatmul.f32.gmra.mxu0 %v5255
    %v6849 = vpop.f32.mrf.mxu0
    %v6850 = vadd.f32 %v6449, %v6849
    %6851 = vmatmul.f32.gmra.mxu0 %v5259
    %v6852 = vpop.f32.mrf.mxu0
    %v6853 = vadd.f32 %v6452, %v6852
    %6854 = vmatmul.f32.gmra.mxu0 %v5263
    %v6855 = vpop.f32.mrf.mxu0
    %v6856 = vadd.f32 %v6455, %v6855
    %6857 = vmatmul.f32.gmra.mxu0 %v5267
    %v6858 = vpop.f32.mrf.mxu0
    %v6859 = vadd.f32 %v6458, %v6858
    %6860 = vmatmul.f32.gmra.mxu0 %v5271
    %v6861 = vpop.f32.mrf.mxu0
    %v6862 = vadd.f32 %v6461, %v6861
    %6863 = vmatmul.f32.gmra.mxu0 %v5275
    %v6864 = vpop.f32.mrf.mxu0
    %v6865 = vadd.f32 %v6464, %v6864
    %6866 = vmatmul.f32.gmra.mxu0 %v5279
    %v6867 = vpop.f32.mrf.mxu0
    %v6868 = vadd.f32 %v6467, %v6867
    %6869 = vmatmul.f32.gmra.mxu0 %v5283
    %v6870 = vpop.f32.mrf.mxu0
    %v6871 = vadd.f32 %v6470, %v6870
    %6872 = vmatmul.f32.gmra.mxu0 %v5287
    %v6873 = vpop.f32.mrf.mxu0
    %v6874 = vadd.f32 %v6473, %v6873
    %6875 = vmatmul.f32.gmra.mxu0 %v5291
    %v6876 = vpop.f32.mrf.mxu0
    %v6877 = vadd.f32 %v6476, %v6876
    %6878 = vmatmul.f32.gmra.mxu0 %v5295
    %v6879 = vpop.f32.mrf.mxu0
    %v6880 = vadd.f32 %v6479, %v6879
    %6881 = vmatmul.f32.gmra.mxu0 %v5299
    %v6882 = vpop.f32.mrf.mxu0
    %v6883 = vadd.f32 %v6482, %v6882
    %6884 = vmatmul.f32.gmra.mxu0 %v5303
    %v6885 = vpop.f32.mrf.mxu0
    %v6886 = vadd.f32 %v6485, %v6885
    %6887 = vmatmul.f32.gmra.mxu0 %v5307
    %v6888 = vpop.f32.mrf.mxu0
    %v6889 = vadd.f32 %v6488, %v6888
    %6890 = vmatmul.f32.gmra.mxu0 %v5311
    %v6891 = vpop.f32.mrf.mxu0
    %v6892 = vadd.f32 %v6491, %v6891
    %6893 = vmatmul.f32.gmra.mxu0 %v5315
    %v6894 = vpop.f32.mrf.mxu0
    %v6895 = vadd.f32 %v6494, %v6894
    %6896 = vmatmul.f32.gmra.mxu0 %v5319
    %v6897 = vpop.f32.mrf.mxu0
    %v6898 = vadd.f32 %v6497, %v6897
    %6899 = vmatmul.f32.gmra.mxu0 %v5323
    %v6900 = vpop.f32.mrf.mxu0
    %v6901 = vadd.f32 %v6500, %v6900
    %6902 = vmatmul.f32.gmra.mxu0 %v5327
    %v6903 = vpop.f32.mrf.mxu0
    %v6904 = vadd.f32 %v6503, %v6903
    %6905 = vmatmul.f32.gmra.mxu0 %v5331
    %v6906 = vpop.f32.mrf.mxu0
    %v6907 = vadd.f32 %v6506, %v6906
    %6908 = vmatmul.f32.gmra.mxu0 %v5335
    %v6909 = vpop.f32.mrf.mxu0
    %v6910 = vadd.f32 %v6509, %v6909
    %6911 = vmatmul.f32.gmra.mxu0 %v5339
    %v6912 = vpop.f32.mrf.mxu0
    %v6913 = vadd.f32 %v6512, %v6912
    %6914 = vmatmul.f32.gmra.mxu0 %v5343
    %v6915 = vpop.f32.mrf.mxu0
    %v6916 = vadd.f32 %v6515, %v6915
    %6917 = vmatmul.f32.gmra.mxu0 %v5347
    %v6918 = vpop.f32.mrf.mxu0
    %v6919 = vadd.f32 %v6518, %v6918
    %6920 = vmatmul.f32.gmra.mxu0 %v5351
    %v6921 = vpop.f32.mrf.mxu0
    %v6922 = vadd.f32 %v6521, %v6921
    %6923 = vdwg.mxu0
    %6924 = vmatpush.msra.mxu0 %v4825
    %6925 = vmatpush.msra.mxu0 %v4824
    %6926 = vmatpush.msra.mxu0 %v4823
    %6927 = vmatpush.msra.mxu0 %v4822
    %6928 = vmatpush.msra.mxu0 %v4821
    %6929 = vmatpush.msra.mxu0 %v4820
    %6930 = vmatpush.msra.mxu0 %v4819
    %6931 = vmatpush.msra.mxu0 %v4818
    %6932 = vmatpush.msra.mxu0 %v4817
    %6933 = vmatpush.msra.mxu0 %v4816
    %6934 = vmatpush.msra.mxu0 %v4815
    %6935 = vmatpush.msra.mxu0 %v4814
    %6936 = vmatpush.msra.mxu0 %v4813
    %6937 = vmatpush.msra.mxu0 %v4812
    %6938 = vmatpush.msra.mxu0 %v4811
    %6939 = vmatpush.msra.mxu0 %v4810
    %6940 = vmatmul.f32.gmra.mxu0 %v4844
    %v6941 = vpop.f32.mrf.mxu0
    %v6942 = vadd.f32 %v6541, %v6941
    %6943 = vmatmul.f32.gmra.mxu0 %v4848
    %v6944 = vpop.f32.mrf.mxu0
    %v6945 = vadd.f32 %v6544, %v6944
    %6946 = vmatmul.f32.gmra.mxu0 %v4852
    %v6947 = vpop.f32.mrf.mxu0
    %v6948 = vadd.f32 %v6547, %v6947
    %6949 = vmatmul.f32.gmra.mxu0 %v4856
    %v6950 = vpop.f32.mrf.mxu0
    %v6951 = vadd.f32 %v6550, %v6950
    %6952 = vmatmul.f32.gmra.mxu0 %v4860
    %v6953 = vpop.f32.mrf.mxu0
    %v6954 = vadd.f32 %v6553, %v6953
    %6955 = vmatmul.f32.gmra.mxu0 %v4864
    %v6956 = vpop.f32.mrf.mxu0
    %v6957 = vadd.f32 %v6556, %v6956
    %6958 = vmatmul.f32.gmra.mxu0 %v4868
    %v6959 = vpop.f32.mrf.mxu0
    %v6960 = vadd.f32 %v6559, %v6959
    %6961 = vmatmul.f32.gmra.mxu0 %v4872
    %v6962 = vpop.f32.mrf.mxu0
    %v6963 = vadd.f32 %v6562, %v6962
    %6964 = vmatmul.f32.gmra.mxu0 %v4876
    %v6965 = vpop.f32.mrf.mxu0
    %v6966 = vadd.f32 %v6565, %v6965
    %6967 = vmatmul.f32.gmra.mxu0 %v4880
    %v6968 = vpop.f32.mrf.mxu0
    %v6969 = vadd.f32 %v6568, %v6968
    %6970 = vmatmul.f32.gmra.mxu0 %v4884
    %v6971 = vpop.f32.mrf.mxu0
    %v6972 = vadd.f32 %v6571, %v6971
    %6973 = vmatmul.f32.gmra.mxu0 %v4888
    %v6974 = vpop.f32.mrf.mxu0
    %v6975 = vadd.f32 %v6574, %v6974
    %6976 = vmatmul.f32.gmra.mxu0 %v4892
    %v6977 = vpop.f32.mrf.mxu0
    %v6978 = vadd.f32 %v6577, %v6977
    %6979 = vmatmul.f32.gmra.mxu0 %v4896
    %v6980 = vpop.f32.mrf.mxu0
    %v6981 = vadd.f32 %v6580, %v6980
    %6982 = vmatmul.f32.gmra.mxu0 %v4900
    %v6983 = vpop.f32.mrf.mxu0
    %v6984 = vadd.f32 %v6583, %v6983
    %6985 = vmatmul.f32.gmra.mxu0 %v4904
    %v6986 = vpop.f32.mrf.mxu0
    %v6987 = vadd.f32 %v6586, %v6986
    %6988 = vmatmul.f32.gmra.mxu0 %v4908
    %v6989 = vpop.f32.mrf.mxu0
    %v6990 = vadd.f32 %v6589, %v6989
    %6991 = vmatmul.f32.gmra.mxu0 %v4912
    %v6992 = vpop.f32.mrf.mxu0
    %v6993 = vadd.f32 %v6592, %v6992
    %6994 = vmatmul.f32.gmra.mxu0 %v4916
    %v6995 = vpop.f32.mrf.mxu0
    %v6996 = vadd.f32 %v6595, %v6995
    %6997 = vmatmul.f32.gmra.mxu0 %v4920
    %v6998 = vpop.f32.mrf.mxu0
    %v6999 = vadd.f32 %v6598, %v6998
    %7000 = vmatmul.f32.gmra.mxu0 %v4924
    %v7001 = vpop.f32.mrf.mxu0
    %v7002 = vadd.f32 %v6601, %v7001
    %7003 = vmatmul.f32.gmra.mxu0 %v4928
    %v7004 = vpop.f32.mrf.mxu0
    %v7005 = vadd.f32 %v6604, %v7004
    %7006 = vmatmul.f32.gmra.mxu0 %v4932
    %v7007 = vpop.f32.mrf.mxu0
    %v7008 = vadd.f32 %v6607, %v7007
    %7009 = vmatmul.f32.gmra.mxu0 %v4936
    %v7010 = vpop.f32.mrf.mxu0
    %v7011 = vadd.f32 %v6610, %v7010
    %7012 = vmatmul.f32.gmra.mxu0 %v4940
    %v7013 = vpop.f32.mrf.mxu0
    %v7014 = vadd.f32 %v6613, %v7013
    %7015 = vmatmul.f32.gmra.mxu0 %v4944
    %v7016 = vpop.f32.mrf.mxu0
    %v7017 = vadd.f32 %v6616, %v7016
    %7018 = vmatmul.f32.gmra.mxu0 %v4948
    %v7019 = vpop.f32.mrf.mxu0
    %v7020 = vadd.f32 %v6619, %v7019
    %7021 = vmatmul.f32.gmra.mxu0 %v4952
    %v7022 = vpop.f32.mrf.mxu0
    %v7023 = vadd.f32 %v6622, %v7022
    %7024 = vmatmul.f32.gmra.mxu0 %v4956
    %v7025 = vpop.f32.mrf.mxu0
    %v7026 = vadd.f32 %v6625, %v7025
    %7027 = vmatmul.f32.gmra.mxu0 %v4960
    %v7028 = vpop.f32.mrf.mxu0
    %v7029 = vadd.f32 %v6628, %v7028
    %7030 = vmatmul.f32.gmra.mxu0 %v4964
    %v7031 = vpop.f32.mrf.mxu0
    %v7032 = vadd.f32 %v6631, %v7031
    %7033 = vmatmul.f32.gmra.mxu0 %v4968
    %v7034 = vpop.f32.mrf.mxu0
    %v7035 = vadd.f32 %v6634, %v7034
    %7036 = vmatmul.f32.gmra.mxu0 %v4972
    %v7037 = vpop.f32.mrf.mxu0
    %v7038 = vadd.f32 %v6637, %v7037
    %7039 = vmatmul.f32.gmra.mxu0 %v4976
    %v7040 = vpop.f32.mrf.mxu0
    %v7041 = vadd.f32 %v6640, %v7040
    %7042 = vmatmul.f32.gmra.mxu0 %v4980
    %v7043 = vpop.f32.mrf.mxu0
    %v7044 = vadd.f32 %v6643, %v7043
    %7045 = vmatmul.f32.gmra.mxu0 %v4984
    %v7046 = vpop.f32.mrf.mxu0
    %v7047 = vadd.f32 %v6646, %v7046
    %7048 = vmatmul.f32.gmra.mxu0 %v4988
    %v7049 = vpop.f32.mrf.mxu0
    %v7050 = vadd.f32 %v6649, %v7049
    %7051 = vmatmul.f32.gmra.mxu0 %v4992
    %v7052 = vpop.f32.mrf.mxu0
    %v7053 = vadd.f32 %v6652, %v7052
    %7054 = vmatmul.f32.gmra.mxu0 %v4996
    %v7055 = vpop.f32.mrf.mxu0
    %v7056 = vadd.f32 %v6655, %v7055
    %7057 = vmatmul.f32.gmra.mxu0 %v5000
    %v7058 = vpop.f32.mrf.mxu0
    %v7059 = vadd.f32 %v6658, %v7058
    %7060 = vmatmul.f32.gmra.mxu0 %v5004
    %v7061 = vpop.f32.mrf.mxu0
    %v7062 = vadd.f32 %v6661, %v7061
    %7063 = vmatmul.f32.gmra.mxu0 %v5008
    %v7064 = vpop.f32.mrf.mxu0
    %v7065 = vadd.f32 %v6664, %v7064
    %7066 = vmatmul.f32.gmra.mxu0 %v5012
    %v7067 = vpop.f32.mrf.mxu0
    %v7068 = vadd.f32 %v6667, %v7067
    %7069 = vmatmul.f32.gmra.mxu0 %v5016
    %v7070 = vpop.f32.mrf.mxu0
    %v7071 = vadd.f32 %v6670, %v7070
    %7072 = vmatmul.f32.gmra.mxu0 %v5020
    %v7073 = vpop.f32.mrf.mxu0
    %v7074 = vadd.f32 %v6673, %v7073
    %7075 = vmatmul.f32.gmra.mxu0 %v5024
    %v7076 = vpop.f32.mrf.mxu0
    %v7077 = vadd.f32 %v6676, %v7076
    %7078 = vmatmul.f32.gmra.mxu0 %v5028
    %v7079 = vpop.f32.mrf.mxu0
    %v7080 = vadd.f32 %v6679, %v7079
    %7081 = vmatmul.f32.gmra.mxu0 %v5032
    %v7082 = vpop.f32.mrf.mxu0
    %v7083 = vadd.f32 %v6682, %v7082
    %7084 = vmatmul.f32.gmra.mxu0 %v5036
    %v7085 = vpop.f32.mrf.mxu0
    %v7086 = vadd.f32 %v6685, %v7085
    %7087 = vmatmul.f32.gmra.mxu0 %v5040
    %v7088 = vpop.f32.mrf.mxu0
    %v7089 = vadd.f32 %v6688, %v7088
    %7090 = vmatmul.f32.gmra.mxu0 %v5044
    %v7091 = vpop.f32.mrf.mxu0
    %v7092 = vadd.f32 %v6691, %v7091
    %7093 = vmatmul.f32.gmra.mxu0 %v5048
    %v7094 = vpop.f32.mrf.mxu0
    %v7095 = vadd.f32 %v6694, %v7094
    %7096 = vmatmul.f32.gmra.mxu0 %v5052
    %v7097 = vpop.f32.mrf.mxu0
    %v7098 = vadd.f32 %v6697, %v7097
    %7099 = vmatmul.f32.gmra.mxu0 %v5056
    %v7100 = vpop.f32.mrf.mxu0
    %v7101 = vadd.f32 %v6700, %v7100
    %7102 = vmatmul.f32.gmra.mxu0 %v5060
    %v7103 = vpop.f32.mrf.mxu0
    %v7104 = vadd.f32 %v6703, %v7103
    %7105 = vmatmul.f32.gmra.mxu0 %v5064
    %v7106 = vpop.f32.mrf.mxu0
    %v7107 = vadd.f32 %v6706, %v7106
    %7108 = vmatmul.f32.gmra.mxu0 %v5068
    %v7109 = vpop.f32.mrf.mxu0
    %v7110 = vadd.f32 %v6709, %v7109
    %7111 = vmatmul.f32.gmra.mxu0 %v5072
    %v7112 = vpop.f32.mrf.mxu0
    %v7113 = vadd.f32 %v6712, %v7112
    %7114 = vmatmul.f32.gmra.mxu0 %v5076
    %v7115 = vpop.f32.mrf.mxu0
    %v7116 = vadd.f32 %v6715, %v7115
    %7117 = vmatmul.f32.gmra.mxu0 %v5080
    %v7118 = vpop.f32.mrf.mxu0
    %v7119 = vadd.f32 %v6718, %v7118
    %7120 = vmatmul.f32.gmra.mxu0 %v5084
    %v7121 = vpop.f32.mrf.mxu0
    %v7122 = vadd.f32 %v6721, %v7121
    %7123 = vmatmul.f32.gmra.mxu0 %v5088
    %v7124 = vpop.f32.mrf.mxu0
    %v7125 = vadd.f32 %v6724, %v7124
    %7126 = vmatmul.f32.gmra.mxu0 %v5092
    %v7127 = vpop.f32.mrf.mxu0
    %v7128 = vadd.f32 %v6727, %v7127
    %7129 = vmatmul.f32.gmra.mxu0 %v5096
    %v7130 = vpop.f32.mrf.mxu0
    %v7131 = vadd.f32 %v6730, %v7130
    %7132 = vmatmul.f32.gmra.mxu0 %v5100
    %v7133 = vpop.f32.mrf.mxu0
    %v7134 = vadd.f32 %v6733, %v7133
    %7135 = vmatmul.f32.gmra.mxu0 %v5104
    %v7136 = vpop.f32.mrf.mxu0
    %v7137 = vadd.f32 %v6736, %v7136
    %7138 = vmatmul.f32.gmra.mxu0 %v5108
    %v7139 = vpop.f32.mrf.mxu0
    %v7140 = vadd.f32 %v6739, %v7139
    %7141 = vmatmul.f32.gmra.mxu0 %v5112
    %v7142 = vpop.f32.mrf.mxu0
    %v7143 = vadd.f32 %v6742, %v7142
    %7144 = vmatmul.f32.gmra.mxu0 %v5116
    %v7145 = vpop.f32.mrf.mxu0
    %v7146 = vadd.f32 %v6745, %v7145
    %7147 = vmatmul.f32.gmra.mxu0 %v5120
    %v7148 = vpop.f32.mrf.mxu0
    %v7149 = vadd.f32 %v6748, %v7148
    %7150 = vmatmul.f32.gmra.mxu0 %v5124
    %v7151 = vpop.f32.mrf.mxu0
    %v7152 = vadd.f32 %v6751, %v7151
    %7153 = vmatmul.f32.gmra.mxu0 %v5128
    %v7154 = vpop.f32.mrf.mxu0
    %v7155 = vadd.f32 %v6754, %v7154
    %7156 = vmatmul.f32.gmra.mxu0 %v5132
    %v7157 = vpop.f32.mrf.mxu0
    %v7158 = vadd.f32 %v6757, %v7157
    %7159 = vmatmul.f32.gmra.mxu0 %v5136
    %v7160 = vpop.f32.mrf.mxu0
    %v7161 = vadd.f32 %v6760, %v7160
    %7162 = vmatmul.f32.gmra.mxu0 %v5140
    %v7163 = vpop.f32.mrf.mxu0
    %v7164 = vadd.f32 %v6763, %v7163
    %7165 = vmatmul.f32.gmra.mxu0 %v5144
    %v7166 = vpop.f32.mrf.mxu0
    %v7167 = vadd.f32 %v6766, %v7166
    %7168 = vmatmul.f32.gmra.mxu0 %v5148
    %v7169 = vpop.f32.mrf.mxu0
    %v7170 = vadd.f32 %v6769, %v7169
    %7171 = vmatmul.f32.gmra.mxu0 %v5152
    %v7172 = vpop.f32.mrf.mxu0
    %v7173 = vadd.f32 %v6772, %v7172
    %7174 = vmatmul.f32.gmra.mxu0 %v5156
    %v7175 = vpop.f32.mrf.mxu0
    %v7176 = vadd.f32 %v6775, %v7175
    %7177 = vmatmul.f32.gmra.mxu0 %v5160
    %v7178 = vpop.f32.mrf.mxu0
    %v7179 = vadd.f32 %v6778, %v7178
    %7180 = vmatmul.f32.gmra.mxu0 %v5164
    %v7181 = vpop.f32.mrf.mxu0
    %v7182 = vadd.f32 %v6781, %v7181
    %7183 = vmatmul.f32.gmra.mxu0 %v5168
    %v7184 = vpop.f32.mrf.mxu0
    %v7185 = vadd.f32 %v6784, %v7184
    %7186 = vmatmul.f32.gmra.mxu0 %v5172
    %v7187 = vpop.f32.mrf.mxu0
    %v7188 = vadd.f32 %v6787, %v7187
    %7189 = vmatmul.f32.gmra.mxu0 %v5176
    %v7190 = vpop.f32.mrf.mxu0
    %v7191 = vadd.f32 %v6790, %v7190
    %7192 = vmatmul.f32.gmra.mxu0 %v5180
    %v7193 = vpop.f32.mrf.mxu0
    %v7194 = vadd.f32 %v6793, %v7193
    %7195 = vmatmul.f32.gmra.mxu0 %v5184
    %v7196 = vpop.f32.mrf.mxu0
    %v7197 = vadd.f32 %v6796, %v7196
    %7198 = vmatmul.f32.gmra.mxu0 %v5188
    %v7199 = vpop.f32.mrf.mxu0
    %v7200 = vadd.f32 %v6799, %v7199
    %7201 = vmatmul.f32.gmra.mxu0 %v5192
    %v7202 = vpop.f32.mrf.mxu0
    %v7203 = vadd.f32 %v6802, %v7202
    %7204 = vmatmul.f32.gmra.mxu0 %v5196
    %v7205 = vpop.f32.mrf.mxu0
    %v7206 = vadd.f32 %v6805, %v7205
    %7207 = vmatmul.f32.gmra.mxu0 %v5200
    %v7208 = vpop.f32.mrf.mxu0
    %v7209 = vadd.f32 %v6808, %v7208
    %7210 = vmatmul.f32.gmra.mxu0 %v5204
    %v7211 = vpop.f32.mrf.mxu0
    %v7212 = vadd.f32 %v6811, %v7211
    %7213 = vmatmul.f32.gmra.mxu0 %v5208
    %v7214 = vpop.f32.mrf.mxu0
    %v7215 = vadd.f32 %v6814, %v7214
    %7216 = vmatmul.f32.gmra.mxu0 %v5212
    %v7217 = vpop.f32.mrf.mxu0
    %v7218 = vadd.f32 %v6817, %v7217
    %7219 = vmatmul.f32.gmra.mxu0 %v5216
    %v7220 = vpop.f32.mrf.mxu0
    %v7221 = vadd.f32 %v6820, %v7220
    %7222 = vmatmul.f32.gmra.mxu0 %v5220
    %v7223 = vpop.f32.mrf.mxu0
    %v7224 = vadd.f32 %v6823, %v7223
    %7225 = vmatmul.f32.gmra.mxu0 %v5224
    %v7226 = vpop.f32.mrf.mxu0
    %v7227 = vadd.f32 %v6826, %v7226
    %7228 = vmatmul.f32.gmra.mxu0 %v5228
    %v7229 = vpop.f32.mrf.mxu0
    %v7230 = vadd.f32 %v6829, %v7229
    %7231 = vmatmul.f32.gmra.mxu0 %v5232
    %v7232 = vpop.f32.mrf.mxu0
    %v7233 = vadd.f32 %v6832, %v7232
    %7234 = vmatmul.f32.gmra.mxu0 %v5236
    %v7235 = vpop.f32.mrf.mxu0
    %v7236 = vadd.f32 %v6835, %v7235
    %7237 = vmatmul.f32.gmra.mxu0 %v5240
    %v7238 = vpop.f32.mrf.mxu0
    %v7239 = vadd.f32 %v6838, %v7238
    %7240 = vmatmul.f32.gmra.mxu0 %v5244
    %v7241 = vpop.f32.mrf.mxu0
    %v7242 = vadd.f32 %v6841, %v7241
    %7243 = vmatmul.f32.gmra.mxu0 %v5248
    %v7244 = vpop.f32.mrf.mxu0
    %v7245 = vadd.f32 %v6844, %v7244
    %7246 = vmatmul.f32.gmra.mxu0 %v5252
    %v7247 = vpop.f32.mrf.mxu0
    %v7248 = vadd.f32 %v6847, %v7247
    %7249 = vmatmul.f32.gmra.mxu0 %v5256
    %v7250 = vpop.f32.mrf.mxu0
    %v7251 = vadd.f32 %v6850, %v7250
    %7252 = vmatmul.f32.gmra.mxu0 %v5260
    %v7253 = vpop.f32.mrf.mxu0
    %v7254 = vadd.f32 %v6853, %v7253
    %7255 = vmatmul.f32.gmra.mxu0 %v5264
    %v7256 = vpop.f32.mrf.mxu0
    %v7257 = vadd.f32 %v6856, %v7256
    %7258 = vmatmul.f32.gmra.mxu0 %v5268
    %v7259 = vpop.f32.mrf.mxu0
    %v7260 = vadd.f32 %v6859, %v7259
    %7261 = vmatmul.f32.gmra.mxu0 %v5272
    %v7262 = vpop.f32.mrf.mxu0
    %v7263 = vadd.f32 %v6862, %v7262
    %7264 = vmatmul.f32.gmra.mxu0 %v5276
    %v7265 = vpop.f32.mrf.mxu0
    %v7266 = vadd.f32 %v6865, %v7265
    %7267 = vmatmul.f32.gmra.mxu0 %v5280
    %v7268 = vpop.f32.mrf.mxu0
    %v7269 = vadd.f32 %v6868, %v7268
    %7270 = vmatmul.f32.gmra.mxu0 %v5284
    %v7271 = vpop.f32.mrf.mxu0
    %v7272 = vadd.f32 %v6871, %v7271
    %7273 = vmatmul.f32.gmra.mxu0 %v5288
    %v7274 = vpop.f32.mrf.mxu0
    %v7275 = vadd.f32 %v6874, %v7274
    %7276 = vmatmul.f32.gmra.mxu0 %v5292
    %v7277 = vpop.f32.mrf.mxu0
    %v7278 = vadd.f32 %v6877, %v7277
    %7279 = vmatmul.f32.gmra.mxu0 %v5296
    %v7280 = vpop.f32.mrf.mxu0
    %v7281 = vadd.f32 %v6880, %v7280
    %7282 = vmatmul.f32.gmra.mxu0 %v5300
    %v7283 = vpop.f32.mrf.mxu0
    %v7284 = vadd.f32 %v6883, %v7283
    %7285 = vmatmul.f32.gmra.mxu0 %v5304
    %v7286 = vpop.f32.mrf.mxu0
    %v7287 = vadd.f32 %v6886, %v7286
    %7288 = vmatmul.f32.gmra.mxu0 %v5308
    %v7289 = vpop.f32.mrf.mxu0
    %v7290 = vadd.f32 %v6889, %v7289
    %7291 = vmatmul.f32.gmra.mxu0 %v5312
    %v7292 = vpop.f32.mrf.mxu0
    %v7293 = vadd.f32 %v6892, %v7292
    %7294 = vmatmul.f32.gmra.mxu0 %v5316
    %v7295 = vpop.f32.mrf.mxu0
    %v7296 = vadd.f32 %v6895, %v7295
    %7297 = vmatmul.f32.gmra.mxu0 %v5320
    %v7298 = vpop.f32.mrf.mxu0
    %v7299 = vadd.f32 %v6898, %v7298
    %7300 = vmatmul.f32.gmra.mxu0 %v5324
    %v7301 = vpop.f32.mrf.mxu0
    %v7302 = vadd.f32 %v6901, %v7301
    %7303 = vmatmul.f32.gmra.mxu0 %v5328
    %v7304 = vpop.f32.mrf.mxu0
    %v7305 = vadd.f32 %v6904, %v7304
    %7306 = vmatmul.f32.gmra.mxu0 %v5332
    %v7307 = vpop.f32.mrf.mxu0
    %v7308 = vadd.f32 %v6907, %v7307
    %7309 = vmatmul.f32.gmra.mxu0 %v5336
    %v7310 = vpop.f32.mrf.mxu0
    %v7311 = vadd.f32 %v6910, %v7310
    %7312 = vmatmul.f32.gmra.mxu0 %v5340
    %v7313 = vpop.f32.mrf.mxu0
    %v7314 = vadd.f32 %v6913, %v7313
    %7315 = vmatmul.f32.gmra.mxu0 %v5344
    %v7316 = vpop.f32.mrf.mxu0
    %v7317 = vadd.f32 %v6916, %v7316
    %7318 = vmatmul.f32.gmra.mxu0 %v5348
    %v7319 = vpop.f32.mrf.mxu0
    %v7320 = vadd.f32 %v6919, %v7319
    %7321 = vmatmul.f32.gmra.mxu0 %v5352
    %v7322 = vpop.f32.mrf.mxu0
    %v7323 = vadd.f32 %v6922, %v7322
    %7324 = vdwg.mxu0
    %7325 = vmatpush.msra.mxu0 %v4841
    %7326 = vmatpush.msra.mxu0 %v4840
    %7327 = vmatpush.msra.mxu0 %v4839
    %7328 = vmatpush.msra.mxu0 %v4838
    %7329 = vmatpush.msra.mxu0 %v4837
    %7330 = vmatpush.msra.mxu0 %v4836
    %7331 = vmatpush.msra.mxu0 %v4835
    %7332 = vmatpush.msra.mxu0 %v4834
    %7333 = vmatpush.msra.mxu0 %v4833
    %7334 = vmatpush.msra.mxu0 %v4832
    %7335 = vmatpush.msra.mxu0 %v4831
    %7336 = vmatpush.msra.mxu0 %v4830
    %7337 = vmatpush.msra.mxu0 %v4829
    %7338 = vmatpush.msra.mxu0 %v4828
    %7339 = vmatpush.msra.mxu0 %v4827
    %7340 = vmatpush.msra.mxu0 %v4826
    %7341 = vmatmul.f32.gmra.mxu0 %v4845
    %v7342 = vpop.f32.mrf.mxu0
    %v7343 = vadd.f32 %v6942, %v7342
    %7344 = vmatmul.f32.gmra.mxu0 %v4849
    %v7345 = vpop.f32.mrf.mxu0
    %v7346 = vadd.f32 %v6945, %v7345
    %7347 = vmatmul.f32.gmra.mxu0 %v4853
    %v7348 = vpop.f32.mrf.mxu0
    %v7349 = vadd.f32 %v6948, %v7348
    %7350 = vmatmul.f32.gmra.mxu0 %v4857
    %v7351 = vpop.f32.mrf.mxu0
    %v7352 = vadd.f32 %v6951, %v7351
    %7353 = vmatmul.f32.gmra.mxu0 %v4861
    %v7354 = vpop.f32.mrf.mxu0
    %v7355 = vadd.f32 %v6954, %v7354
    %7356 = vmatmul.f32.gmra.mxu0 %v4865
    %v7357 = vpop.f32.mrf.mxu0
    %v7358 = vadd.f32 %v6957, %v7357
    %7359 = vmatmul.f32.gmra.mxu0 %v4869
    %v7360 = vpop.f32.mrf.mxu0
    %v7361 = vadd.f32 %v6960, %v7360
    %7362 = vmatmul.f32.gmra.mxu0 %v4873
    %v7363 = vpop.f32.mrf.mxu0
    %v7364 = vadd.f32 %v6963, %v7363
    %7365 = vmatmul.f32.gmra.mxu0 %v4877
    %v7366 = vpop.f32.mrf.mxu0
    %v7367 = vadd.f32 %v6966, %v7366
    %7368 = vmatmul.f32.gmra.mxu0 %v4881
    %v7369 = vpop.f32.mrf.mxu0
    %v7370 = vadd.f32 %v6969, %v7369
    %7371 = vmatmul.f32.gmra.mxu0 %v4885
    %v7372 = vpop.f32.mrf.mxu0
    %v7373 = vadd.f32 %v6972, %v7372
    %7374 = vmatmul.f32.gmra.mxu0 %v4889
    %v7375 = vpop.f32.mrf.mxu0
    %v7376 = vadd.f32 %v6975, %v7375
    %7377 = vmatmul.f32.gmra.mxu0 %v4893
    %v7378 = vpop.f32.mrf.mxu0
    %v7379 = vadd.f32 %v6978, %v7378
    %7380 = vmatmul.f32.gmra.mxu0 %v4897
    %v7381 = vpop.f32.mrf.mxu0
    %v7382 = vadd.f32 %v6981, %v7381
    %7383 = vmatmul.f32.gmra.mxu0 %v4901
    %v7384 = vpop.f32.mrf.mxu0
    %v7385 = vadd.f32 %v6984, %v7384
    %7386 = vmatmul.f32.gmra.mxu0 %v4905
    %v7387 = vpop.f32.mrf.mxu0
    %v7388 = vadd.f32 %v6987, %v7387
    %7389 = vmatmul.f32.gmra.mxu0 %v4909
    %v7390 = vpop.f32.mrf.mxu0
    %v7391 = vadd.f32 %v6990, %v7390
    %7392 = vmatmul.f32.gmra.mxu0 %v4913
    %v7393 = vpop.f32.mrf.mxu0
    %v7394 = vadd.f32 %v6993, %v7393
    %7395 = vmatmul.f32.gmra.mxu0 %v4917
    %v7396 = vpop.f32.mrf.mxu0
    %v7397 = vadd.f32 %v6996, %v7396
    %7398 = vmatmul.f32.gmra.mxu0 %v4921
    %v7399 = vpop.f32.mrf.mxu0
    %v7400 = vadd.f32 %v6999, %v7399
    %7401 = vmatmul.f32.gmra.mxu0 %v4925
    %v7402 = vpop.f32.mrf.mxu0
    %v7403 = vadd.f32 %v7002, %v7402
    %7404 = vmatmul.f32.gmra.mxu0 %v4929
    %v7405 = vpop.f32.mrf.mxu0
    %v7406 = vadd.f32 %v7005, %v7405
    %7407 = vmatmul.f32.gmra.mxu0 %v4933
    %v7408 = vpop.f32.mrf.mxu0
    %v7409 = vadd.f32 %v7008, %v7408
    %7410 = vmatmul.f32.gmra.mxu0 %v4937
    %v7411 = vpop.f32.mrf.mxu0
    %v7412 = vadd.f32 %v7011, %v7411
    %7413 = vmatmul.f32.gmra.mxu0 %v4941
    %v7414 = vpop.f32.mrf.mxu0
    %v7415 = vadd.f32 %v7014, %v7414
    %7416 = vmatmul.f32.gmra.mxu0 %v4945
    %v7417 = vpop.f32.mrf.mxu0
    %v7418 = vadd.f32 %v7017, %v7417
    %7419 = vmatmul.f32.gmra.mxu0 %v4949
    %v7420 = vpop.f32.mrf.mxu0
    %v7421 = vadd.f32 %v7020, %v7420
    %7422 = vmatmul.f32.gmra.mxu0 %v4953
    %v7423 = vpop.f32.mrf.mxu0
    %v7424 = vadd.f32 %v7023, %v7423
    %7425 = vmatmul.f32.gmra.mxu0 %v4957
    %v7426 = vpop.f32.mrf.mxu0
    %v7427 = vadd.f32 %v7026, %v7426
    %7428 = vmatmul.f32.gmra.mxu0 %v4961
    %v7429 = vpop.f32.mrf.mxu0
    %v7430 = vadd.f32 %v7029, %v7429
    %7431 = vmatmul.f32.gmra.mxu0 %v4965
    %v7432 = vpop.f32.mrf.mxu0
    %v7433 = vadd.f32 %v7032, %v7432
    %7434 = vmatmul.f32.gmra.mxu0 %v4969
    %v7435 = vpop.f32.mrf.mxu0
    %v7436 = vadd.f32 %v7035, %v7435
    %7437 = vmatmul.f32.gmra.mxu0 %v4973
    %v7438 = vpop.f32.mrf.mxu0
    %v7439 = vadd.f32 %v7038, %v7438
    %7440 = vmatmul.f32.gmra.mxu0 %v4977
    %v7441 = vpop.f32.mrf.mxu0
    %v7442 = vadd.f32 %v7041, %v7441
    %7443 = vmatmul.f32.gmra.mxu0 %v4981
    %v7444 = vpop.f32.mrf.mxu0
    %v7445 = vadd.f32 %v7044, %v7444
    %7446 = vmatmul.f32.gmra.mxu0 %v4985
    %v7447 = vpop.f32.mrf.mxu0
    %v7448 = vadd.f32 %v7047, %v7447
    %7449 = vmatmul.f32.gmra.mxu0 %v4989
    %v7450 = vpop.f32.mrf.mxu0
    %v7451 = vadd.f32 %v7050, %v7450
    %7452 = vmatmul.f32.gmra.mxu0 %v4993
    %v7453 = vpop.f32.mrf.mxu0
    %v7454 = vadd.f32 %v7053, %v7453
    %7455 = vmatmul.f32.gmra.mxu0 %v4997
    %v7456 = vpop.f32.mrf.mxu0
    %v7457 = vadd.f32 %v7056, %v7456
    %7458 = vmatmul.f32.gmra.mxu0 %v5001
    %v7459 = vpop.f32.mrf.mxu0
    %v7460 = vadd.f32 %v7059, %v7459
    %7461 = vmatmul.f32.gmra.mxu0 %v5005
    %v7462 = vpop.f32.mrf.mxu0
    %v7463 = vadd.f32 %v7062, %v7462
    %7464 = vmatmul.f32.gmra.mxu0 %v5009
    %v7465 = vpop.f32.mrf.mxu0
    %v7466 = vadd.f32 %v7065, %v7465
    %7467 = vmatmul.f32.gmra.mxu0 %v5013
    %v7468 = vpop.f32.mrf.mxu0
    %v7469 = vadd.f32 %v7068, %v7468
    %7470 = vmatmul.f32.gmra.mxu0 %v5017
    %v7471 = vpop.f32.mrf.mxu0
    %v7472 = vadd.f32 %v7071, %v7471
    %7473 = vmatmul.f32.gmra.mxu0 %v5021
    %v7474 = vpop.f32.mrf.mxu0
    %v7475 = vadd.f32 %v7074, %v7474
    %7476 = vmatmul.f32.gmra.mxu0 %v5025
    %v7477 = vpop.f32.mrf.mxu0
    %v7478 = vadd.f32 %v7077, %v7477
    %7479 = vmatmul.f32.gmra.mxu0 %v5029
    %v7480 = vpop.f32.mrf.mxu0
    %v7481 = vadd.f32 %v7080, %v7480
    %7482 = vmatmul.f32.gmra.mxu0 %v5033
    %v7483 = vpop.f32.mrf.mxu0
    %v7484 = vadd.f32 %v7083, %v7483
    %7485 = vmatmul.f32.gmra.mxu0 %v5037
    %v7486 = vpop.f32.mrf.mxu0
    %v7487 = vadd.f32 %v7086, %v7486
    %7488 = vmatmul.f32.gmra.mxu0 %v5041
    %v7489 = vpop.f32.mrf.mxu0
    %v7490 = vadd.f32 %v7089, %v7489
    %7491 = vmatmul.f32.gmra.mxu0 %v5045
    %v7492 = vpop.f32.mrf.mxu0
    %v7493 = vadd.f32 %v7092, %v7492
    %7494 = vmatmul.f32.gmra.mxu0 %v5049
    %v7495 = vpop.f32.mrf.mxu0
    %v7496 = vadd.f32 %v7095, %v7495
    %7497 = vmatmul.f32.gmra.mxu0 %v5053
    %v7498 = vpop.f32.mrf.mxu0
    %v7499 = vadd.f32 %v7098, %v7498
    %7500 = vmatmul.f32.gmra.mxu0 %v5057
    %v7501 = vpop.f32.mrf.mxu0
    %v7502 = vadd.f32 %v7101, %v7501
    %7503 = vmatmul.f32.gmra.mxu0 %v5061
    %v7504 = vpop.f32.mrf.mxu0
    %v7505 = vadd.f32 %v7104, %v7504
    %7506 = vmatmul.f32.gmra.mxu0 %v5065
    %v7507 = vpop.f32.mrf.mxu0
    %v7508 = vadd.f32 %v7107, %v7507
    %7509 = vmatmul.f32.gmra.mxu0 %v5069
    %v7510 = vpop.f32.mrf.mxu0
    %v7511 = vadd.f32 %v7110, %v7510
    %7512 = vmatmul.f32.gmra.mxu0 %v5073
    %v7513 = vpop.f32.mrf.mxu0
    %v7514 = vadd.f32 %v7113, %v7513
    %7515 = vmatmul.f32.gmra.mxu0 %v5077
    %v7516 = vpop.f32.mrf.mxu0
    %v7517 = vadd.f32 %v7116, %v7516
    %7518 = vmatmul.f32.gmra.mxu0 %v5081
    %v7519 = vpop.f32.mrf.mxu0
    %v7520 = vadd.f32 %v7119, %v7519
    %7521 = vmatmul.f32.gmra.mxu0 %v5085
    %v7522 = vpop.f32.mrf.mxu0
    %v7523 = vadd.f32 %v7122, %v7522
    %7524 = vmatmul.f32.gmra.mxu0 %v5089
    %v7525 = vpop.f32.mrf.mxu0
    %v7526 = vadd.f32 %v7125, %v7525
    %7527 = vmatmul.f32.gmra.mxu0 %v5093
    %v7528 = vpop.f32.mrf.mxu0
    %v7529 = vadd.f32 %v7128, %v7528
    %7530 = vmatmul.f32.gmra.mxu0 %v5097
    %v7531 = vpop.f32.mrf.mxu0
    %v7532 = vadd.f32 %v7131, %v7531
    %7533 = vmatmul.f32.gmra.mxu0 %v5101
    %v7534 = vpop.f32.mrf.mxu0
    %v7535 = vadd.f32 %v7134, %v7534
    %7536 = vmatmul.f32.gmra.mxu0 %v5105
    %v7537 = vpop.f32.mrf.mxu0
    %v7538 = vadd.f32 %v7137, %v7537
    %7539 = vmatmul.f32.gmra.mxu0 %v5109
    %v7540 = vpop.f32.mrf.mxu0
    %v7541 = vadd.f32 %v7140, %v7540
    %7542 = vmatmul.f32.gmra.mxu0 %v5113
    %v7543 = vpop.f32.mrf.mxu0
    %v7544 = vadd.f32 %v7143, %v7543
    %7545 = vmatmul.f32.gmra.mxu0 %v5117
    %v7546 = vpop.f32.mrf.mxu0
    %v7547 = vadd.f32 %v7146, %v7546
    %7548 = vmatmul.f32.gmra.mxu0 %v5121
    %v7549 = vpop.f32.mrf.mxu0
    %v7550 = vadd.f32 %v7149, %v7549
    %7551 = vmatmul.f32.gmra.mxu0 %v5125
    %v7552 = vpop.f32.mrf.mxu0
    %v7553 = vadd.f32 %v7152, %v7552
    %7554 = vmatmul.f32.gmra.mxu0 %v5129
    %v7555 = vpop.f32.mrf.mxu0
    %v7556 = vadd.f32 %v7155, %v7555
    %7557 = vmatmul.f32.gmra.mxu0 %v5133
    %v7558 = vpop.f32.mrf.mxu0
    %v7559 = vadd.f32 %v7158, %v7558
    %7560 = vmatmul.f32.gmra.mxu0 %v5137
    %v7561 = vpop.f32.mrf.mxu0
    %v7562 = vadd.f32 %v7161, %v7561
    %7563 = vmatmul.f32.gmra.mxu0 %v5141
    %v7564 = vpop.f32.mrf.mxu0
    %v7565 = vadd.f32 %v7164, %v7564
    %7566 = vmatmul.f32.gmra.mxu0 %v5145
    %v7567 = vpop.f32.mrf.mxu0
    %v7568 = vadd.f32 %v7167, %v7567
    %7569 = vmatmul.f32.gmra.mxu0 %v5149
    %v7570 = vpop.f32.mrf.mxu0
    %v7571 = vadd.f32 %v7170, %v7570
    %7572 = vmatmul.f32.gmra.mxu0 %v5153
    %v7573 = vpop.f32.mrf.mxu0
    %v7574 = vadd.f32 %v7173, %v7573
    %7575 = vmatmul.f32.gmra.mxu0 %v5157
    %v7576 = vpop.f32.mrf.mxu0
    %v7577 = vadd.f32 %v7176, %v7576
    %7578 = vmatmul.f32.gmra.mxu0 %v5161
    %v7579 = vpop.f32.mrf.mxu0
    %v7580 = vadd.f32 %v7179, %v7579
    %7581 = vmatmul.f32.gmra.mxu0 %v5165
    %v7582 = vpop.f32.mrf.mxu0
    %v7583 = vadd.f32 %v7182, %v7582
    %7584 = vmatmul.f32.gmra.mxu0 %v5169
    %v7585 = vpop.f32.mrf.mxu0
    %v7586 = vadd.f32 %v7185, %v7585
    %7587 = vmatmul.f32.gmra.mxu0 %v5173
    %v7588 = vpop.f32.mrf.mxu0
    %v7589 = vadd.f32 %v7188, %v7588
    %7590 = vmatmul.f32.gmra.mxu0 %v5177
    %v7591 = vpop.f32.mrf.mxu0
    %v7592 = vadd.f32 %v7191, %v7591
    %7593 = vmatmul.f32.gmra.mxu0 %v5181
    %v7594 = vpop.f32.mrf.mxu0
    %v7595 = vadd.f32 %v7194, %v7594
    %7596 = vmatmul.f32.gmra.mxu0 %v5185
    %v7597 = vpop.f32.mrf.mxu0
    %v7598 = vadd.f32 %v7197, %v7597
    %7599 = vmatmul.f32.gmra.mxu0 %v5189
    %v7600 = vpop.f32.mrf.mxu0
    %v7601 = vadd.f32 %v7200, %v7600
    %7602 = vmatmul.f32.gmra.mxu0 %v5193
    %v7603 = vpop.f32.mrf.mxu0
    %v7604 = vadd.f32 %v7203, %v7603
    %7605 = vmatmul.f32.gmra.mxu0 %v5197
    %v7606 = vpop.f32.mrf.mxu0
    %v7607 = vadd.f32 %v7206, %v7606
    %7608 = vmatmul.f32.gmra.mxu0 %v5201
    %v7609 = vpop.f32.mrf.mxu0
    %v7610 = vadd.f32 %v7209, %v7609
    %7611 = vmatmul.f32.gmra.mxu0 %v5205
    %v7612 = vpop.f32.mrf.mxu0
    %v7613 = vadd.f32 %v7212, %v7612
    %7614 = vmatmul.f32.gmra.mxu0 %v5209
    %v7615 = vpop.f32.mrf.mxu0
    %v7616 = vadd.f32 %v7215, %v7615
    %7617 = vmatmul.f32.gmra.mxu0 %v5213
    %v7618 = vpop.f32.mrf.mxu0
    %v7619 = vadd.f32 %v7218, %v7618
    %7620 = vmatmul.f32.gmra.mxu0 %v5217
    %v7621 = vpop.f32.mrf.mxu0
    %v7622 = vadd.f32 %v7221, %v7621
    %7623 = vmatmul.f32.gmra.mxu0 %v5221
    %v7624 = vpop.f32.mrf.mxu0
    %v7625 = vadd.f32 %v7224, %v7624
    %7626 = vmatmul.f32.gmra.mxu0 %v5225
    %v7627 = vpop.f32.mrf.mxu0
    %v7628 = vadd.f32 %v7227, %v7627
    %7629 = vmatmul.f32.gmra.mxu0 %v5229
    %v7630 = vpop.f32.mrf.mxu0
    %v7631 = vadd.f32 %v7230, %v7630
    %7632 = vmatmul.f32.gmra.mxu0 %v5233
    %v7633 = vpop.f32.mrf.mxu0
    %v7634 = vadd.f32 %v7233, %v7633
    %7635 = vmatmul.f32.gmra.mxu0 %v5237
    %v7636 = vpop.f32.mrf.mxu0
    %v7637 = vadd.f32 %v7236, %v7636
    %7638 = vmatmul.f32.gmra.mxu0 %v5241
    %v7639 = vpop.f32.mrf.mxu0
    %v7640 = vadd.f32 %v7239, %v7639
    %7641 = vmatmul.f32.gmra.mxu0 %v5245
    %v7642 = vpop.f32.mrf.mxu0
    %v7643 = vadd.f32 %v7242, %v7642
    %7644 = vmatmul.f32.gmra.mxu0 %v5249
    %v7645 = vpop.f32.mrf.mxu0
    %v7646 = vadd.f32 %v7245, %v7645
    %7647 = vmatmul.f32.gmra.mxu0 %v5253
    %v7648 = vpop.f32.mrf.mxu0
    %v7649 = vadd.f32 %v7248, %v7648
    %7650 = vmatmul.f32.gmra.mxu0 %v5257
    %v7651 = vpop.f32.mrf.mxu0
    %v7652 = vadd.f32 %v7251, %v7651
    %7653 = vmatmul.f32.gmra.mxu0 %v5261
    %v7654 = vpop.f32.mrf.mxu0
    %v7655 = vadd.f32 %v7254, %v7654
    %7656 = vmatmul.f32.gmra.mxu0 %v5265
    %v7657 = vpop.f32.mrf.mxu0
    %v7658 = vadd.f32 %v7257, %v7657
    %7659 = vmatmul.f32.gmra.mxu0 %v5269
    %v7660 = vpop.f32.mrf.mxu0
    %v7661 = vadd.f32 %v7260, %v7660
    %7662 = vmatmul.f32.gmra.mxu0 %v5273
    %v7663 = vpop.f32.mrf.mxu0
    %v7664 = vadd.f32 %v7263, %v7663
    %7665 = vmatmul.f32.gmra.mxu0 %v5277
    %v7666 = vpop.f32.mrf.mxu0
    %v7667 = vadd.f32 %v7266, %v7666
    %7668 = vmatmul.f32.gmra.mxu0 %v5281
    %v7669 = vpop.f32.mrf.mxu0
    %v7670 = vadd.f32 %v7269, %v7669
    %7671 = vmatmul.f32.gmra.mxu0 %v5285
    %v7672 = vpop.f32.mrf.mxu0
    %v7673 = vadd.f32 %v7272, %v7672
    %7674 = vmatmul.f32.gmra.mxu0 %v5289
    %v7675 = vpop.f32.mrf.mxu0
    %v7676 = vadd.f32 %v7275, %v7675
    %7677 = vmatmul.f32.gmra.mxu0 %v5293
    %v7678 = vpop.f32.mrf.mxu0
    %v7679 = vadd.f32 %v7278, %v7678
    %7680 = vmatmul.f32.gmra.mxu0 %v5297
    %v7681 = vpop.f32.mrf.mxu0
    %v7682 = vadd.f32 %v7281, %v7681
    %7683 = vmatmul.f32.gmra.mxu0 %v5301
    %v7684 = vpop.f32.mrf.mxu0
    %v7685 = vadd.f32 %v7284, %v7684
    %7686 = vmatmul.f32.gmra.mxu0 %v5305
    %v7687 = vpop.f32.mrf.mxu0
    %v7688 = vadd.f32 %v7287, %v7687
    %7689 = vmatmul.f32.gmra.mxu0 %v5309
    %v7690 = vpop.f32.mrf.mxu0
    %v7691 = vadd.f32 %v7290, %v7690
    %7692 = vmatmul.f32.gmra.mxu0 %v5313
    %v7693 = vpop.f32.mrf.mxu0
    %v7694 = vadd.f32 %v7293, %v7693
    %7695 = vmatmul.f32.gmra.mxu0 %v5317
    %v7696 = vpop.f32.mrf.mxu0
    %v7697 = vadd.f32 %v7296, %v7696
    %7698 = vmatmul.f32.gmra.mxu0 %v5321
    %v7699 = vpop.f32.mrf.mxu0
    %v7700 = vadd.f32 %v7299, %v7699
    %7701 = vmatmul.f32.gmra.mxu0 %v5325
    %v7702 = vpop.f32.mrf.mxu0
    %v7703 = vadd.f32 %v7302, %v7702
    %7704 = vmatmul.f32.gmra.mxu0 %v5329
    %v7705 = vpop.f32.mrf.mxu0
    %v7706 = vadd.f32 %v7305, %v7705
    %7707 = vmatmul.f32.gmra.mxu0 %v5333
    %v7708 = vpop.f32.mrf.mxu0
    %v7709 = vadd.f32 %v7308, %v7708
    %7710 = vmatmul.f32.gmra.mxu0 %v5337
    %v7711 = vpop.f32.mrf.mxu0
    %v7712 = vadd.f32 %v7311, %v7711
    %7713 = vmatmul.f32.gmra.mxu0 %v5341
    %v7714 = vpop.f32.mrf.mxu0
    %v7715 = vadd.f32 %v7314, %v7714
    %7716 = vmatmul.f32.gmra.mxu0 %v5345
    %v7717 = vpop.f32.mrf.mxu0
    %v7718 = vadd.f32 %v7317, %v7717
    %7719 = vmatmul.f32.gmra.mxu0 %v5349
    %v7720 = vpop.f32.mrf.mxu0
    %v7721 = vadd.f32 %v7320, %v7720
    %7722 = vmatmul.f32.gmra.mxu0 %v5353
    %v7723 = vpop.f32.mrf.mxu0
    %v7724 = vadd.f32 %v7323, %v7723
    %7725 = vdwg.mxu0
    %v7726 = vxor.u32 %v7343, 2147483648
    %v7727 = vxor.u32 %v7346, 2147483648
    %v7728 = vxor.u32 %v7349, 2147483648
    %v7729 = vxor.u32 %v7352, 2147483648
    %v7730 = vxor.u32 %v7355, 2147483648
    %v7731 = vxor.u32 %v7358, 2147483648
    %v7732 = vxor.u32 %v7361, 2147483648
    %v7733 = vxor.u32 %v7364, 2147483648
    %v7734 = vxor.u32 %v7367, 2147483648
    %v7735 = vxor.u32 %v7370, 2147483648
    %v7736 = vxor.u32 %v7373, 2147483648
    %v7737 = vxor.u32 %v7376, 2147483648
    %v7738 = vxor.u32 %v7379, 2147483648
    %v7739 = vxor.u32 %v7382, 2147483648
    %v7740 = vxor.u32 %v7385, 2147483648
    %v7741 = vxor.u32 %v7388, 2147483648
    %v7742 = vxor.u32 %v7391, 2147483648
    %v7743 = vxor.u32 %v7394, 2147483648
    %v7744 = vxor.u32 %v7397, 2147483648
    %v7745 = vxor.u32 %v7400, 2147483648
    %v7746 = vxor.u32 %v7403, 2147483648
    %v7747 = vxor.u32 %v7406, 2147483648
    %v7748 = vxor.u32 %v7409, 2147483648
    %v7749 = vxor.u32 %v7412, 2147483648
    %v7750 = vxor.u32 %v7415, 2147483648
    %v7751 = vxor.u32 %v7418, 2147483648
    %v7752 = vxor.u32 %v7421, 2147483648
    %v7753 = vxor.u32 %v7424, 2147483648
    %v7754 = vxor.u32 %v7427, 2147483648
    %v7755 = vxor.u32 %v7430, 2147483648
    %v7756 = vxor.u32 %v7433, 2147483648
    %v7757 = vxor.u32 %v7436, 2147483648
    %v7758 = vxor.u32 %v7439, 2147483648
    %v7759 = vxor.u32 %v7442, 2147483648
    %v7760 = vxor.u32 %v7445, 2147483648
    %v7761 = vxor.u32 %v7448, 2147483648
    %v7762 = vxor.u32 %v7451, 2147483648
    %v7763 = vxor.u32 %v7454, 2147483648
    %v7764 = vxor.u32 %v7457, 2147483648
    %v7765 = vxor.u32 %v7460, 2147483648
    %v7766 = vxor.u32 %v7463, 2147483648
    %v7767 = vxor.u32 %v7466, 2147483648
    %v7768 = vxor.u32 %v7469, 2147483648
    %v7769 = vxor.u32 %v7472, 2147483648
    %v7770 = vxor.u32 %v7475, 2147483648
    %v7771 = vxor.u32 %v7478, 2147483648
    %v7772 = vxor.u32 %v7481, 2147483648
    %v7773 = vxor.u32 %v7484, 2147483648
    %v7774 = vxor.u32 %v7487, 2147483648
    %v7775 = vxor.u32 %v7490, 2147483648
    %v7776 = vxor.u32 %v7493, 2147483648
    %v7777 = vxor.u32 %v7496, 2147483648
    %v7778 = vxor.u32 %v7499, 2147483648
    %v7779 = vxor.u32 %v7502, 2147483648
    %v7780 = vxor.u32 %v7505, 2147483648
    %v7781 = vxor.u32 %v7508, 2147483648
    %v7782 = vxor.u32 %v7511, 2147483648
    %v7783 = vxor.u32 %v7514, 2147483648
    %v7784 = vxor.u32 %v7517, 2147483648
    %v7785 = vxor.u32 %v7520, 2147483648
    %v7786 = vxor.u32 %v7523, 2147483648
    %v7787 = vxor.u32 %v7526, 2147483648
    %v7788 = vxor.u32 %v7529, 2147483648
    %v7789 = vxor.u32 %v7532, 2147483648
    %v7790 = vxor.u32 %v7535, 2147483648
    %v7791 = vxor.u32 %v7538, 2147483648
    %v7792 = vxor.u32 %v7541, 2147483648
    %v7793 = vxor.u32 %v7544, 2147483648
    %v7794 = vxor.u32 %v7547, 2147483648
    %v7795 = vxor.u32 %v7550, 2147483648
    %v7796 = vxor.u32 %v7553, 2147483648
    %v7797 = vxor.u32 %v7556, 2147483648
    %v7798 = vxor.u32 %v7559, 2147483648
    %v7799 = vxor.u32 %v7562, 2147483648
    %v7800 = vxor.u32 %v7565, 2147483648
    %v7801 = vxor.u32 %v7568, 2147483648
    %v7802 = vxor.u32 %v7571, 2147483648
    %v7803 = vxor.u32 %v7574, 2147483648
    %v7804 = vxor.u32 %v7577, 2147483648
    %v7805 = vxor.u32 %v7580, 2147483648
    %v7806 = vxor.u32 %v7583, 2147483648
    %v7807 = vxor.u32 %v7586, 2147483648
    %v7808 = vxor.u32 %v7589, 2147483648
    %v7809 = vxor.u32 %v7592, 2147483648
    %v7810 = vxor.u32 %v7595, 2147483648
    %v7811 = vxor.u32 %v7598, 2147483648
    %v7812 = vxor.u32 %v7601, 2147483648
    %v7813 = vxor.u32 %v7604, 2147483648
    %v7814 = vxor.u32 %v7607, 2147483648
    %v7815 = vxor.u32 %v7610, 2147483648
    %v7816 = vxor.u32 %v7613, 2147483648
    %v7817 = vxor.u32 %v7616, 2147483648
    %v7818 = vxor.u32 %v7619, 2147483648
    %v7819 = vxor.u32 %v7622, 2147483648
    %v7820 = vxor.u32 %v7625, 2147483648
    %v7821 = vxor.u32 %v7628, 2147483648
    %v7822 = vxor.u32 %v7631, 2147483648
    %v7823 = vxor.u32 %v7634, 2147483648
    %v7824 = vxor.u32 %v7637, 2147483648
    %v7825 = vxor.u32 %v7640, 2147483648
    %v7826 = vxor.u32 %v7643, 2147483648
    %v7827 = vxor.u32 %v7646, 2147483648
    %v7828 = vxor.u32 %v7649, 2147483648
    %v7829 = vxor.u32 %v7652, 2147483648
    %v7830 = vxor.u32 %v7655, 2147483648
    %v7831 = vxor.u32 %v7658, 2147483648
    %v7832 = vxor.u32 %v7661, 2147483648
    %v7833 = vxor.u32 %v7664, 2147483648
    %v7834 = vxor.u32 %v7667, 2147483648
    %v7835 = vxor.u32 %v7670, 2147483648
    %v7836 = vxor.u32 %v7673, 2147483648
    %v7837 = vxor.u32 %v7676, 2147483648
    %v7838 = vxor.u32 %v7679, 2147483648
    %v7839 = vxor.u32 %v7682, 2147483648
    %v7840 = vxor.u32 %v7685, 2147483648
    %v7841 = vxor.u32 %v7688, 2147483648
    %v7842 = vxor.u32 %v7691, 2147483648
    %v7843 = vxor.u32 %v7694, 2147483648
    %v7844 = vxor.u32 %v7697, 2147483648
    %v7845 = vxor.u32 %v7700, 2147483648
    %v7846 = vxor.u32 %v7703, 2147483648
    %v7847 = vxor.u32 %v7706, 2147483648
    %v7848 = vxor.u32 %v7709, 2147483648
    %v7849 = vxor.u32 %v7712, 2147483648
    %v7850 = vxor.u32 %v7715, 2147483648
    %v7851 = vxor.u32 %v7718, 2147483648
    %v7852 = vxor.u32 %v7721, 2147483648
    %v7853 = vxor.u32 %v7724, 2147483648
    %v7854 = vmul.f32 %v7726, 1.442695
    %v7855 = vpow.pop %v7854
    %v7856 = vmul.f32 %v7727, 1.442695
    %v7857 = vpow.pop %v7856
    %v7858 = vmul.f32 %v7728, 1.442695
    %v7859 = vpow.pop %v7858
    %v7860 = vmul.f32 %v7729, 1.442695
    %v7861 = vpow.pop %v7860
    %v7862 = vmul.f32 %v7730, 1.442695
    %v7863 = vpow.pop %v7862
    %v7864 = vmul.f32 %v7731, 1.442695
    %v7865 = vpow.pop %v7864
    %v7866 = vmul.f32 %v7732, 1.442695
    %v7867 = vpow.pop %v7866
    %v7868 = vmul.f32 %v7733, 1.442695
    %v7869 = vpow.pop %v7868
    %v7870 = vmul.f32 %v7734, 1.442695
    %v7871 = vpow.pop %v7870
    %v7872 = vmul.f32 %v7735, 1.442695
    %v7873 = vpow.pop %v7872
    %v7874 = vmul.f32 %v7736, 1.442695
    %v7875 = vpow.pop %v7874
    %v7876 = vmul.f32 %v7737, 1.442695
    %v7877 = vpow.pop %v7876
    %v7878 = vmul.f32 %v7738, 1.442695
    %v7879 = vpow.pop %v7878
    %v7880 = vmul.f32 %v7739, 1.442695
    %v7881 = vpow.pop %v7880
    %v7882 = vmul.f32 %v7740, 1.442695
    %v7883 = vpow.pop %v7882
    %v7884 = vmul.f32 %v7741, 1.442695
    %v7885 = vpow.pop %v7884
    %v7886 = vmul.f32 %v7742, 1.442695
    %v7887 = vpow.pop %v7886
    %v7888 = vmul.f32 %v7743, 1.442695
    %v7889 = vpow.pop %v7888
    %v7890 = vmul.f32 %v7744, 1.442695
    %v7891 = vpow.pop %v7890
    %v7892 = vmul.f32 %v7745, 1.442695
    %v7893 = vpow.pop %v7892
    %v7894 = vmul.f32 %v7746, 1.442695
    %v7895 = vpow.pop %v7894
    %v7896 = vmul.f32 %v7747, 1.442695
    %v7897 = vpow.pop %v7896
    %v7898 = vmul.f32 %v7748, 1.442695
    %v7899 = vpow.pop %v7898
    %v7900 = vmul.f32 %v7749, 1.442695
    %v7901 = vpow.pop %v7900
    %v7902 = vmul.f32 %v7750, 1.442695
    %v7903 = vpow.pop %v7902
    %v7904 = vmul.f32 %v7751, 1.442695
    %v7905 = vpow.pop %v7904
    %v7906 = vmul.f32 %v7752, 1.442695
    %v7907 = vpow.pop %v7906
    %v7908 = vmul.f32 %v7753, 1.442695
    %v7909 = vpow.pop %v7908
    %v7910 = vmul.f32 %v7754, 1.442695
    %v7911 = vpow.pop %v7910
    %v7912 = vmul.f32 %v7755, 1.442695
    %v7913 = vpow.pop %v7912
    %v7914 = vmul.f32 %v7756, 1.442695
    %v7915 = vpow.pop %v7914
    %v7916 = vmul.f32 %v7757, 1.442695
    %v7917 = vpow.pop %v7916
    %v7918 = vmul.f32 %v7758, 1.442695
    %v7919 = vpow.pop %v7918
    %v7920 = vmul.f32 %v7759, 1.442695
    %v7921 = vpow.pop %v7920
    %v7922 = vmul.f32 %v7760, 1.442695
    %v7923 = vpow.pop %v7922
    %v7924 = vmul.f32 %v7761, 1.442695
    %v7925 = vpow.pop %v7924
    %v7926 = vmul.f32 %v7762, 1.442695
    %v7927 = vpow.pop %v7926
    %v7928 = vmul.f32 %v7763, 1.442695
    %v7929 = vpow.pop %v7928
    %v7930 = vmul.f32 %v7764, 1.442695
    %v7931 = vpow.pop %v7930
    %v7932 = vmul.f32 %v7765, 1.442695
    %v7933 = vpow.pop %v7932
    %v7934 = vmul.f32 %v7766, 1.442695
    %v7935 = vpow.pop %v7934
    %v7936 = vmul.f32 %v7767, 1.442695
    %v7937 = vpow.pop %v7936
    %v7938 = vmul.f32 %v7768, 1.442695
    %v7939 = vpow.pop %v7938
    %v7940 = vmul.f32 %v7769, 1.442695
    %v7941 = vpow.pop %v7940
    %v7942 = vmul.f32 %v7770, 1.442695
    %v7943 = vpow.pop %v7942
    %v7944 = vmul.f32 %v7771, 1.442695
    %v7945 = vpow.pop %v7944
    %v7946 = vmul.f32 %v7772, 1.442695
    %v7947 = vpow.pop %v7946
    %v7948 = vmul.f32 %v7773, 1.442695
    %v7949 = vpow.pop %v7948
    %v7950 = vmul.f32 %v7774, 1.442695
    %v7951 = vpow.pop %v7950
    %v7952 = vmul.f32 %v7775, 1.442695
    %v7953 = vpow.pop %v7952
    %v7954 = vmul.f32 %v7776, 1.442695
    %v7955 = vpow.pop %v7954
    %v7956 = vmul.f32 %v7777, 1.442695
    %v7957 = vpow.pop %v7956
    %v7958 = vmul.f32 %v7778, 1.442695
    %v7959 = vpow.pop %v7958
    %v7960 = vmul.f32 %v7779, 1.442695
    %v7961 = vpow.pop %v7960
    %v7962 = vmul.f32 %v7780, 1.442695
    %v7963 = vpow.pop %v7962
    %v7964 = vmul.f32 %v7781, 1.442695
    %v7965 = vpow.pop %v7964
    %v7966 = vmul.f32 %v7782, 1.442695
    %v7967 = vpow.pop %v7966
    %v7968 = vmul.f32 %v7783, 1.442695
    %v7969 = vpow.pop %v7968
    %v7970 = vmul.f32 %v7784, 1.442695
    %v7971 = vpow.pop %v7970
    %v7972 = vmul.f32 %v7785, 1.442695
    %v7973 = vpow.pop %v7972
    %v7974 = vmul.f32 %v7786, 1.442695
    %v7975 = vpow.pop %v7974
    %v7976 = vmul.f32 %v7787, 1.442695
    %v7977 = vpow.pop %v7976
    %v7978 = vmul.f32 %v7788, 1.442695
    %v7979 = vpow.pop %v7978
    %v7980 = vmul.f32 %v7789, 1.442695
    %v7981 = vpow.pop %v7980
    %v7982 = vmul.f32 %v7790, 1.442695
    %v7983 = vpow.pop %v7982
    %v7984 = vmul.f32 %v7791, 1.442695
    %v7985 = vpow.pop %v7984
    %v7986 = vmul.f32 %v7792, 1.442695
    %v7987 = vpow.pop %v7986
    %v7988 = vmul.f32 %v7793, 1.442695
    %v7989 = vpow.pop %v7988
    %v7990 = vmul.f32 %v7794, 1.442695
    %v7991 = vpow.pop %v7990
    %v7992 = vmul.f32 %v7795, 1.442695
    %v7993 = vpow.pop %v7992
    %v7994 = vmul.f32 %v7796, 1.442695
    %v7995 = vpow.pop %v7994
    %v7996 = vmul.f32 %v7797, 1.442695
    %v7997 = vpow.pop %v7996
    %v7998 = vmul.f32 %v7798, 1.442695
    %v7999 = vpow.pop %v7998
    %v8000 = vmul.f32 %v7799, 1.442695
    %v8001 = vpow.pop %v8000
    %v8002 = vmul.f32 %v7800, 1.442695
    %v8003 = vpow.pop %v8002
    %v8004 = vmul.f32 %v7801, 1.442695
    %v8005 = vpow.pop %v8004
    %v8006 = vmul.f32 %v7802, 1.442695
    %v8007 = vpow.pop %v8006
    %v8008 = vmul.f32 %v7803, 1.442695
    %v8009 = vpow.pop %v8008
    %v8010 = vmul.f32 %v7804, 1.442695
    %v8011 = vpow.pop %v8010
    %v8012 = vmul.f32 %v7805, 1.442695
    %v8013 = vpow.pop %v8012
    %v8014 = vmul.f32 %v7806, 1.442695
    %v8015 = vpow.pop %v8014
    %v8016 = vmul.f32 %v7807, 1.442695
    %v8017 = vpow.pop %v8016
    %v8018 = vmul.f32 %v7808, 1.442695
    %v8019 = vpow.pop %v8018
    %v8020 = vmul.f32 %v7809, 1.442695
    %v8021 = vpow.pop %v8020
    %v8022 = vmul.f32 %v7810, 1.442695
    %v8023 = vpow.pop %v8022
    %v8024 = vmul.f32 %v7811, 1.442695
    %v8025 = vpow.pop %v8024
    %v8026 = vmul.f32 %v7812, 1.442695
    %v8027 = vpow.pop %v8026
    %v8028 = vmul.f32 %v7813, 1.442695
    %v8029 = vpow.pop %v8028
    %v8030 = vmul.f32 %v7814, 1.442695
    %v8031 = vpow.pop %v8030
    %v8032 = vmul.f32 %v7815, 1.442695
    %v8033 = vpow.pop %v8032
    %v8034 = vmul.f32 %v7816, 1.442695
    %v8035 = vpow.pop %v8034
    %v8036 = vmul.f32 %v7817, 1.442695
    %v8037 = vpow.pop %v8036
    %v8038 = vmul.f32 %v7818, 1.442695
    %v8039 = vpow.pop %v8038
    %v8040 = vmul.f32 %v7819, 1.442695
    %v8041 = vpow.pop %v8040
    %v8042 = vmul.f32 %v7820, 1.442695
    %v8043 = vpow.pop %v8042
    %v8044 = vmul.f32 %v7821, 1.442695
    %v8045 = vpow.pop %v8044
    %v8046 = vmul.f32 %v7822, 1.442695
    %v8047 = vpow.pop %v8046
    %v8048 = vmul.f32 %v7823, 1.442695
    %v8049 = vpow.pop %v8048
    %v8050 = vmul.f32 %v7824, 1.442695
    %v8051 = vpow.pop %v8050
    %v8052 = vmul.f32 %v7825, 1.442695
    %v8053 = vpow.pop %v8052
    %v8054 = vmul.f32 %v7826, 1.442695
    %v8055 = vpow.pop %v8054
    %v8056 = vmul.f32 %v7827, 1.442695
    %v8057 = vpow.pop %v8056
    %v8058 = vmul.f32 %v7828, 1.442695
    %v8059 = vpow.pop %v8058
    %v8060 = vmul.f32 %v7829, 1.442695
    %v8061 = vpow.pop %v8060
    %v8062 = vmul.f32 %v7830, 1.442695
    %v8063 = vpow.pop %v8062
    %v8064 = vmul.f32 %v7831, 1.442695
    %v8065 = vpow.pop %v8064
    %v8066 = vmul.f32 %v7832, 1.442695
    %v8067 = vpow.pop %v8066
    %v8068 = vmul.f32 %v7833, 1.442695
    %v8069 = vpow.pop %v8068
    %v8070 = vmul.f32 %v7834, 1.442695
    %v8071 = vpow.pop %v8070
    %v8072 = vmul.f32 %v7835, 1.442695
    %v8073 = vpow.pop %v8072
    %v8074 = vmul.f32 %v7836, 1.442695
    %v8075 = vpow.pop %v8074
    %v8076 = vmul.f32 %v7837, 1.442695
    %v8077 = vpow.pop %v8076
    %v8078 = vmul.f32 %v7838, 1.442695
    %v8079 = vpow.pop %v8078
    %v8080 = vmul.f32 %v7839, 1.442695
    %v8081 = vpow.pop %v8080
    %v8082 = vmul.f32 %v7840, 1.442695
    %v8083 = vpow.pop %v8082
    %v8084 = vmul.f32 %v7841, 1.442695
    %v8085 = vpow.pop %v8084
    %v8086 = vmul.f32 %v7842, 1.442695
    %v8087 = vpow.pop %v8086
    %v8088 = vmul.f32 %v7843, 1.442695
    %v8089 = vpow.pop %v8088
    %v8090 = vmul.f32 %v7844, 1.442695
    %v8091 = vpow.pop %v8090
    %v8092 = vmul.f32 %v7845, 1.442695
    %v8093 = vpow.pop %v8092
    %v8094 = vmul.f32 %v7846, 1.442695
    %v8095 = vpow.pop %v8094
    %v8096 = vmul.f32 %v7847, 1.442695
    %v8097 = vpow.pop %v8096
    %v8098 = vmul.f32 %v7848, 1.442695
    %v8099 = vpow.pop %v8098
    %v8100 = vmul.f32 %v7849, 1.442695
    %v8101 = vpow.pop %v8100
    %v8102 = vmul.f32 %v7850, 1.442695
    %v8103 = vpow.pop %v8102
    %v8104 = vmul.f32 %v7851, 1.442695
    %v8105 = vpow.pop %v8104
    %v8106 = vmul.f32 %v7852, 1.442695
    %v8107 = vpow.pop %v8106
    %v8108 = vmul.f32 %v7853, 1.442695
    %v8109 = vpow.pop %v8108
    %v8110 = vadd.f32 %v7855, 1.0
    %v8111 = vadd.f32 %v7857, 1.0
    %v8112 = vadd.f32 %v7859, 1.0
    %v8113 = vadd.f32 %v7861, 1.0
    %v8114 = vadd.f32 %v7863, 1.0
    %v8115 = vadd.f32 %v7865, 1.0
    %v8116 = vadd.f32 %v7867, 1.0
    %v8117 = vadd.f32 %v7869, 1.0
    %v8118 = vadd.f32 %v7871, 1.0
    %v8119 = vadd.f32 %v7873, 1.0
    %v8120 = vadd.f32 %v7875, 1.0
    %v8121 = vadd.f32 %v7877, 1.0
    %v8122 = vadd.f32 %v7879, 1.0
    %v8123 = vadd.f32 %v7881, 1.0
    %v8124 = vadd.f32 %v7883, 1.0
    %v8125 = vadd.f32 %v7885, 1.0
    %v8126 = vadd.f32 %v7887, 1.0
    %v8127 = vadd.f32 %v7889, 1.0
    %v8128 = vadd.f32 %v7891, 1.0
    %v8129 = vadd.f32 %v7893, 1.0
    %v8130 = vadd.f32 %v7895, 1.0
    %v8131 = vadd.f32 %v7897, 1.0
    %v8132 = vadd.f32 %v7899, 1.0
    %v8133 = vadd.f32 %v7901, 1.0
    %v8134 = vadd.f32 %v7903, 1.0
    %v8135 = vadd.f32 %v7905, 1.0
    %v8136 = vadd.f32 %v7907, 1.0
    %v8137 = vadd.f32 %v7909, 1.0
    %v8138 = vadd.f32 %v7911, 1.0
    %v8139 = vadd.f32 %v7913, 1.0
    %v8140 = vadd.f32 %v7915, 1.0
    %v8141 = vadd.f32 %v7917, 1.0
    %v8142 = vadd.f32 %v7919, 1.0
    %v8143 = vadd.f32 %v7921, 1.0
    %v8144 = vadd.f32 %v7923, 1.0
    %v8145 = vadd.f32 %v7925, 1.0
    %v8146 = vadd.f32 %v7927, 1.0
    %v8147 = vadd.f32 %v7929, 1.0
    %v8148 = vadd.f32 %v7931, 1.0
    %v8149 = vadd.f32 %v7933, 1.0
    %v8150 = vadd.f32 %v7935, 1.0
    %v8151 = vadd.f32 %v7937, 1.0
    %v8152 = vadd.f32 %v7939, 1.0
    %v8153 = vadd.f32 %v7941, 1.0
    %v8154 = vadd.f32 %v7943, 1.0
    %v8155 = vadd.f32 %v7945, 1.0
    %v8156 = vadd.f32 %v7947, 1.0
    %v8157 = vadd.f32 %v7949, 1.0
    %v8158 = vadd.f32 %v7951, 1.0
    %v8159 = vadd.f32 %v7953, 1.0
    %v8160 = vadd.f32 %v7955, 1.0
    %v8161 = vadd.f32 %v7957, 1.0
    %v8162 = vadd.f32 %v7959, 1.0
    %v8163 = vadd.f32 %v7961, 1.0
    %v8164 = vadd.f32 %v7963, 1.0
    %v8165 = vadd.f32 %v7965, 1.0
    %v8166 = vadd.f32 %v7967, 1.0
    %v8167 = vadd.f32 %v7969, 1.0
    %v8168 = vadd.f32 %v7971, 1.0
    %v8169 = vadd.f32 %v7973, 1.0
    %v8170 = vadd.f32 %v7975, 1.0
    %v8171 = vadd.f32 %v7977, 1.0
    %v8172 = vadd.f32 %v7979, 1.0
    %v8173 = vadd.f32 %v7981, 1.0
    %v8174 = vadd.f32 %v7983, 1.0
    %v8175 = vadd.f32 %v7985, 1.0
    %v8176 = vadd.f32 %v7987, 1.0
    %v8177 = vadd.f32 %v7989, 1.0
    %v8178 = vadd.f32 %v7991, 1.0
    %v8179 = vadd.f32 %v7993, 1.0
    %v8180 = vadd.f32 %v7995, 1.0
    %v8181 = vadd.f32 %v7997, 1.0
    %v8182 = vadd.f32 %v7999, 1.0
    %v8183 = vadd.f32 %v8001, 1.0
    %v8184 = vadd.f32 %v8003, 1.0
    %v8185 = vadd.f32 %v8005, 1.0
    %v8186 = vadd.f32 %v8007, 1.0
    %v8187 = vadd.f32 %v8009, 1.0
    %v8188 = vadd.f32 %v8011, 1.0
    %v8189 = vadd.f32 %v8013, 1.0
    %v8190 = vadd.f32 %v8015, 1.0
    %v8191 = vadd.f32 %v8017, 1.0
    %v8192 = vadd.f32 %v8019, 1.0
    %v8193 = vadd.f32 %v8021, 1.0
    %v8194 = vadd.f32 %v8023, 1.0
    %v8195 = vadd.f32 %v8025, 1.0
    %v8196 = vadd.f32 %v8027, 1.0
    %v8197 = vadd.f32 %v8029, 1.0
    %v8198 = vadd.f32 %v8031, 1.0
    %v8199 = vadd.f32 %v8033, 1.0
    %v8200 = vadd.f32 %v8035, 1.0
    %v8201 = vadd.f32 %v8037, 1.0
    %v8202 = vadd.f32 %v8039, 1.0
    %v8203 = vadd.f32 %v8041, 1.0
    %v8204 = vadd.f32 %v8043, 1.0
    %v8205 = vadd.f32 %v8045, 1.0
    %v8206 = vadd.f32 %v8047, 1.0
    %v8207 = vadd.f32 %v8049, 1.0
    %v8208 = vadd.f32 %v8051, 1.0
    %v8209 = vadd.f32 %v8053, 1.0
    %v8210 = vadd.f32 %v8055, 1.0
    %v8211 = vadd.f32 %v8057, 1.0
    %v8212 = vadd.f32 %v8059, 1.0
    %v8213 = vadd.f32 %v8061, 1.0
    %v8214 = vadd.f32 %v8063, 1.0
    %v8215 = vadd.f32 %v8065, 1.0
    %v8216 = vadd.f32 %v8067, 1.0
    %v8217 = vadd.f32 %v8069, 1.0
    %v8218 = vadd.f32 %v8071, 1.0
    %v8219 = vadd.f32 %v8073, 1.0
    %v8220 = vadd.f32 %v8075, 1.0
    %v8221 = vadd.f32 %v8077, 1.0
    %v8222 = vadd.f32 %v8079, 1.0
    %v8223 = vadd.f32 %v8081, 1.0
    %v8224 = vadd.f32 %v8083, 1.0
    %v8225 = vadd.f32 %v8085, 1.0
    %v8226 = vadd.f32 %v8087, 1.0
    %v8227 = vadd.f32 %v8089, 1.0
    %v8228 = vadd.f32 %v8091, 1.0
    %v8229 = vadd.f32 %v8093, 1.0
    %v8230 = vadd.f32 %v8095, 1.0
    %v8231 = vadd.f32 %v8097, 1.0
    %v8232 = vadd.f32 %v8099, 1.0
    %v8233 = vadd.f32 %v8101, 1.0
    %v8234 = vadd.f32 %v8103, 1.0
    %v8235 = vadd.f32 %v8105, 1.0
    %v8236 = vadd.f32 %v8107, 1.0
    %v8237 = vadd.f32 %v8109, 1.0
    %v8238 = vrcp.pop %v8110
    %v8239 = vmul.f32 %v8110, %v8238
    %v8240 = vsub.f32 1.0, %v8239
    %v8241 = vmul.f32 %v8238, %v8240
    %v8242 = vadd.f32 %v8238, %v8241
    %vm8243 = vweird.f32 %v8110
    %vm8244 = vweird.f32 %v8238
    %vm8245 = vmor %vm8243, %vm8244
    %v8246 = vsel %vm8245, %v8238, %v8242
    %v8247 = vand.u32 2147483647, %v8110
    %vm8248 = vcmp.eq.f32.partialorder %v8247, 8.507059e+37
    %v8249 = vand.u32 %v8110, 2147483648
    %v8250 = vor.u32 1.1754944e-38, %v8249
    %v8251 = vsel %vm8248, %v8250, %v8246
    %v8252 = vmul.f32 1.0, %v8251
    %v8253 = vrcp.pop %v8111
    %v8254 = vmul.f32 %v8111, %v8253
    %v8255 = vsub.f32 1.0, %v8254
    %v8256 = vmul.f32 %v8253, %v8255
    %v8257 = vadd.f32 %v8253, %v8256
    %vm8258 = vweird.f32 %v8111
    %vm8259 = vweird.f32 %v8253
    %vm8260 = vmor %vm8258, %vm8259
    %v8261 = vsel %vm8260, %v8253, %v8257
    %v8262 = vand.u32 2147483647, %v8111
    %vm8263 = vcmp.eq.f32.partialorder %v8262, 8.507059e+37
    %v8264 = vand.u32 %v8111, 2147483648
    %v8265 = vor.u32 1.1754944e-38, %v8264
    %v8266 = vsel %vm8263, %v8265, %v8261
    %v8267 = vmul.f32 1.0, %v8266
    %v8268 = vrcp.pop %v8112
    %v8269 = vmul.f32 %v8112, %v8268
    %v8270 = vsub.f32 1.0, %v8269
    %v8271 = vmul.f32 %v8268, %v8270
    %v8272 = vadd.f32 %v8268, %v8271
    %vm8273 = vweird.f32 %v8112
    %vm8274 = vweird.f32 %v8268
    %vm8275 = vmor %vm8273, %vm8274
    %v8276 = vsel %vm8275, %v8268, %v8272
    %v8277 = vand.u32 2147483647, %v8112
    %vm8278 = vcmp.eq.f32.partialorder %v8277, 8.507059e+37
    %v8279 = vand.u32 %v8112, 2147483648
    %v8280 = vor.u32 1.1754944e-38, %v8279
    %v8281 = vsel %vm8278, %v8280, %v8276
    %v8282 = vmul.f32 1.0, %v8281
    %v8283 = vrcp.pop %v8113
    %v8284 = vmul.f32 %v8113, %v8283
    %v8285 = vsub.f32 1.0, %v8284
    %v8286 = vmul.f32 %v8283, %v8285
    %v8287 = vadd.f32 %v8283, %v8286
    %vm8288 = vweird.f32 %v8113
    %vm8289 = vweird.f32 %v8283
    %vm8290 = vmor %vm8288, %vm8289
    %v8291 = vsel %vm8290, %v8283, %v8287
    %v8292 = vand.u32 2147483647, %v8113
    %vm8293 = vcmp.eq.f32.partialorder %v8292, 8.507059e+37
    %v8294 = vand.u32 %v8113, 2147483648
    %v8295 = vor.u32 1.1754944e-38, %v8294
    %v8296 = vsel %vm8293, %v8295, %v8291
    %v8297 = vmul.f32 1.0, %v8296
    %v8298 = vrcp.pop %v8114
    %v8299 = vmul.f32 %v8114, %v8298
    %v8300 = vsub.f32 1.0, %v8299
    %v8301 = vmul.f32 %v8298, %v8300
    %v8302 = vadd.f32 %v8298, %v8301
    %vm8303 = vweird.f32 %v8114
    %vm8304 = vweird.f32 %v8298
    %vm8305 = vmor %vm8303, %vm8304
    %v8306 = vsel %vm8305, %v8298, %v8302
    %v8307 = vand.u32 2147483647, %v8114
    %vm8308 = vcmp.eq.f32.partialorder %v8307, 8.507059e+37
    %v8309 = vand.u32 %v8114, 2147483648
    %v8310 = vor.u32 1.1754944e-38, %v8309
    %v8311 = vsel %vm8308, %v8310, %v8306
    %v8312 = vmul.f32 1.0, %v8311
    %v8313 = vrcp.pop %v8115
    %v8314 = vmul.f32 %v8115, %v8313
    %v8315 = vsub.f32 1.0, %v8314
    %v8316 = vmul.f32 %v8313, %v8315
    %v8317 = vadd.f32 %v8313, %v8316
    %vm8318 = vweird.f32 %v8115
    %vm8319 = vweird.f32 %v8313
    %vm8320 = vmor %vm8318, %vm8319
    %v8321 = vsel %vm8320, %v8313, %v8317
    %v8322 = vand.u32 2147483647, %v8115
    %vm8323 = vcmp.eq.f32.partialorder %v8322, 8.507059e+37
    %v8324 = vand.u32 %v8115, 2147483648
    %v8325 = vor.u32 1.1754944e-38, %v8324
    %v8326 = vsel %vm8323, %v8325, %v8321
    %v8327 = vmul.f32 1.0, %v8326
    %v8328 = vrcp.pop %v8116
    %v8329 = vmul.f32 %v8116, %v8328
    %v8330 = vsub.f32 1.0, %v8329
    %v8331 = vmul.f32 %v8328, %v8330
    %v8332 = vadd.f32 %v8328, %v8331
    %vm8333 = vweird.f32 %v8116
    %vm8334 = vweird.f32 %v8328
    %vm8335 = vmor %vm8333, %vm8334
    %v8336 = vsel %vm8335, %v8328, %v8332
    %v8337 = vand.u32 2147483647, %v8116
    %vm8338 = vcmp.eq.f32.partialorder %v8337, 8.507059e+37
    %v8339 = vand.u32 %v8116, 2147483648
    %v8340 = vor.u32 1.1754944e-38, %v8339
    %v8341 = vsel %vm8338, %v8340, %v8336
    %v8342 = vmul.f32 1.0, %v8341
    %v8343 = vrcp.pop %v8117
    %v8344 = vmul.f32 %v8117, %v8343
    %v8345 = vsub.f32 1.0, %v8344
    %v8346 = vmul.f32 %v8343, %v8345
    %v8347 = vadd.f32 %v8343, %v8346
    %vm8348 = vweird.f32 %v8117
    %vm8349 = vweird.f32 %v8343
    %vm8350 = vmor %vm8348, %vm8349
    %v8351 = vsel %vm8350, %v8343, %v8347
    %v8352 = vand.u32 2147483647, %v8117
    %vm8353 = vcmp.eq.f32.partialorder %v8352, 8.507059e+37
    %v8354 = vand.u32 %v8117, 2147483648
    %v8355 = vor.u32 1.1754944e-38, %v8354
    %v8356 = vsel %vm8353, %v8355, %v8351
    %v8357 = vmul.f32 1.0, %v8356
    %v8358 = vrcp.pop %v8118
    %v8359 = vmul.f32 %v8118, %v8358
    %v8360 = vsub.f32 1.0, %v8359
    %v8361 = vmul.f32 %v8358, %v8360
    %v8362 = vadd.f32 %v8358, %v8361
    %vm8363 = vweird.f32 %v8118
    %vm8364 = vweird.f32 %v8358
    %vm8365 = vmor %vm8363, %vm8364
    %v8366 = vsel %vm8365, %v8358, %v8362
    %v8367 = vand.u32 2147483647, %v8118
    %vm8368 = vcmp.eq.f32.partialorder %v8367, 8.507059e+37
    %v8369 = vand.u32 %v8118, 2147483648
    %v8370 = vor.u32 1.1754944e-38, %v8369
    %v8371 = vsel %vm8368, %v8370, %v8366
    %v8372 = vmul.f32 1.0, %v8371
    %v8373 = vrcp.pop %v8119
    %v8374 = vmul.f32 %v8119, %v8373
    %v8375 = vsub.f32 1.0, %v8374
    %v8376 = vmul.f32 %v8373, %v8375
    %v8377 = vadd.f32 %v8373, %v8376
    %vm8378 = vweird.f32 %v8119
    %vm8379 = vweird.f32 %v8373
    %vm8380 = vmor %vm8378, %vm8379
    %v8381 = vsel %vm8380, %v8373, %v8377
    %v8382 = vand.u32 2147483647, %v8119
    %vm8383 = vcmp.eq.f32.partialorder %v8382, 8.507059e+37
    %v8384 = vand.u32 %v8119, 2147483648
    %v8385 = vor.u32 1.1754944e-38, %v8384
    %v8386 = vsel %vm8383, %v8385, %v8381
    %v8387 = vmul.f32 1.0, %v8386
    %v8388 = vrcp.pop %v8120
    %v8389 = vmul.f32 %v8120, %v8388
    %v8390 = vsub.f32 1.0, %v8389
    %v8391 = vmul.f32 %v8388, %v8390
    %v8392 = vadd.f32 %v8388, %v8391
    %vm8393 = vweird.f32 %v8120
    %vm8394 = vweird.f32 %v8388
    %vm8395 = vmor %vm8393, %vm8394
    %v8396 = vsel %vm8395, %v8388, %v8392
    %v8397 = vand.u32 2147483647, %v8120
    %vm8398 = vcmp.eq.f32.partialorder %v8397, 8.507059e+37
    %v8399 = vand.u32 %v8120, 2147483648
    %v8400 = vor.u32 1.1754944e-38, %v8399
    %v8401 = vsel %vm8398, %v8400, %v8396
    %v8402 = vmul.f32 1.0, %v8401
    %v8403 = vrcp.pop %v8121
    %v8404 = vmul.f32 %v8121, %v8403
    %v8405 = vsub.f32 1.0, %v8404
    %v8406 = vmul.f32 %v8403, %v8405
    %v8407 = vadd.f32 %v8403, %v8406
    %vm8408 = vweird.f32 %v8121
    %vm8409 = vweird.f32 %v8403
    %vm8410 = vmor %vm8408, %vm8409
    %v8411 = vsel %vm8410, %v8403, %v8407
    %v8412 = vand.u32 2147483647, %v8121
    %vm8413 = vcmp.eq.f32.partialorder %v8412, 8.507059e+37
    %v8414 = vand.u32 %v8121, 2147483648
    %v8415 = vor.u32 1.1754944e-38, %v8414
    %v8416 = vsel %vm8413, %v8415, %v8411
    %v8417 = vmul.f32 1.0, %v8416
    %v8418 = vrcp.pop %v8122
    %v8419 = vmul.f32 %v8122, %v8418
    %v8420 = vsub.f32 1.0, %v8419
    %v8421 = vmul.f32 %v8418, %v8420
    %v8422 = vadd.f32 %v8418, %v8421
    %vm8423 = vweird.f32 %v8122
    %vm8424 = vweird.f32 %v8418
    %vm8425 = vmor %vm8423, %vm8424
    %v8426 = vsel %vm8425, %v8418, %v8422
    %v8427 = vand.u32 2147483647, %v8122
    %vm8428 = vcmp.eq.f32.partialorder %v8427, 8.507059e+37
    %v8429 = vand.u32 %v8122, 2147483648
    %v8430 = vor.u32 1.1754944e-38, %v8429
    %v8431 = vsel %vm8428, %v8430, %v8426
    %v8432 = vmul.f32 1.0, %v8431
    %v8433 = vrcp.pop %v8123
    %v8434 = vmul.f32 %v8123, %v8433
    %v8435 = vsub.f32 1.0, %v8434
    %v8436 = vmul.f32 %v8433, %v8435
    %v8437 = vadd.f32 %v8433, %v8436
    %vm8438 = vweird.f32 %v8123
    %vm8439 = vweird.f32 %v8433
    %vm8440 = vmor %vm8438, %vm8439
    %v8441 = vsel %vm8440, %v8433, %v8437
    %v8442 = vand.u32 2147483647, %v8123
    %vm8443 = vcmp.eq.f32.partialorder %v8442, 8.507059e+37
    %v8444 = vand.u32 %v8123, 2147483648
    %v8445 = vor.u32 1.1754944e-38, %v8444
    %v8446 = vsel %vm8443, %v8445, %v8441
    %v8447 = vmul.f32 1.0, %v8446
    %v8448 = vrcp.pop %v8124
    %v8449 = vmul.f32 %v8124, %v8448
    %v8450 = vsub.f32 1.0, %v8449
    %v8451 = vmul.f32 %v8448, %v8450
    %v8452 = vadd.f32 %v8448, %v8451
    %vm8453 = vweird.f32 %v8124
    %vm8454 = vweird.f32 %v8448
    %vm8455 = vmor %vm8453, %vm8454
    %v8456 = vsel %vm8455, %v8448, %v8452
    %v8457 = vand.u32 2147483647, %v8124
    %vm8458 = vcmp.eq.f32.partialorder %v8457, 8.507059e+37
    %v8459 = vand.u32 %v8124, 2147483648
    %v8460 = vor.u32 1.1754944e-38, %v8459
    %v8461 = vsel %vm8458, %v8460, %v8456
    %v8462 = vmul.f32 1.0, %v8461
    %v8463 = vrcp.pop %v8125
    %v8464 = vmul.f32 %v8125, %v8463
    %v8465 = vsub.f32 1.0, %v8464
    %v8466 = vmul.f32 %v8463, %v8465
    %v8467 = vadd.f32 %v8463, %v8466
    %vm8468 = vweird.f32 %v8125
    %vm8469 = vweird.f32 %v8463
    %vm8470 = vmor %vm8468, %vm8469
    %v8471 = vsel %vm8470, %v8463, %v8467
    %v8472 = vand.u32 2147483647, %v8125
    %vm8473 = vcmp.eq.f32.partialorder %v8472, 8.507059e+37
    %v8474 = vand.u32 %v8125, 2147483648
    %v8475 = vor.u32 1.1754944e-38, %v8474
    %v8476 = vsel %vm8473, %v8475, %v8471
    %v8477 = vmul.f32 1.0, %v8476
    %v8478 = vrcp.pop %v8126
    %v8479 = vmul.f32 %v8126, %v8478
    %v8480 = vsub.f32 1.0, %v8479
    %v8481 = vmul.f32 %v8478, %v8480
    %v8482 = vadd.f32 %v8478, %v8481
    %vm8483 = vweird.f32 %v8126
    %vm8484 = vweird.f32 %v8478
    %vm8485 = vmor %vm8483, %vm8484
    %v8486 = vsel %vm8485, %v8478, %v8482
    %v8487 = vand.u32 2147483647, %v8126
    %vm8488 = vcmp.eq.f32.partialorder %v8487, 8.507059e+37
    %v8489 = vand.u32 %v8126, 2147483648
    %v8490 = vor.u32 1.1754944e-38, %v8489
    %v8491 = vsel %vm8488, %v8490, %v8486
    %v8492 = vmul.f32 1.0, %v8491
    %v8493 = vrcp.pop %v8127
    %v8494 = vmul.f32 %v8127, %v8493
    %v8495 = vsub.f32 1.0, %v8494
    %v8496 = vmul.f32 %v8493, %v8495
    %v8497 = vadd.f32 %v8493, %v8496
    %vm8498 = vweird.f32 %v8127
    %vm8499 = vweird.f32 %v8493
    %vm8500 = vmor %vm8498, %vm8499
    %v8501 = vsel %vm8500, %v8493, %v8497
    %v8502 = vand.u32 2147483647, %v8127
    %vm8503 = vcmp.eq.f32.partialorder %v8502, 8.507059e+37
    %v8504 = vand.u32 %v8127, 2147483648
    %v8505 = vor.u32 1.1754944e-38, %v8504
    %v8506 = vsel %vm8503, %v8505, %v8501
    %v8507 = vmul.f32 1.0, %v8506
    %v8508 = vrcp.pop %v8128
    %v8509 = vmul.f32 %v8128, %v8508
    %v8510 = vsub.f32 1.0, %v8509
    %v8511 = vmul.f32 %v8508, %v8510
    %v8512 = vadd.f32 %v8508, %v8511
    %vm8513 = vweird.f32 %v8128
    %vm8514 = vweird.f32 %v8508
    %vm8515 = vmor %vm8513, %vm8514
    %v8516 = vsel %vm8515, %v8508, %v8512
    %v8517 = vand.u32 2147483647, %v8128
    %vm8518 = vcmp.eq.f32.partialorder %v8517, 8.507059e+37
    %v8519 = vand.u32 %v8128, 2147483648
    %v8520 = vor.u32 1.1754944e-38, %v8519
    %v8521 = vsel %vm8518, %v8520, %v8516
    %v8522 = vmul.f32 1.0, %v8521
    %v8523 = vrcp.pop %v8129
    %v8524 = vmul.f32 %v8129, %v8523
    %v8525 = vsub.f32 1.0, %v8524
    %v8526 = vmul.f32 %v8523, %v8525
    %v8527 = vadd.f32 %v8523, %v8526
    %vm8528 = vweird.f32 %v8129
    %vm8529 = vweird.f32 %v8523
    %vm8530 = vmor %vm8528, %vm8529
    %v8531 = vsel %vm8530, %v8523, %v8527
    %v8532 = vand.u32 2147483647, %v8129
    %vm8533 = vcmp.eq.f32.partialorder %v8532, 8.507059e+37
    %v8534 = vand.u32 %v8129, 2147483648
    %v8535 = vor.u32 1.1754944e-38, %v8534
    %v8536 = vsel %vm8533, %v8535, %v8531
    %v8537 = vmul.f32 1.0, %v8536
    %v8538 = vrcp.pop %v8130
    %v8539 = vmul.f32 %v8130, %v8538
    %v8540 = vsub.f32 1.0, %v8539
    %v8541 = vmul.f32 %v8538, %v8540
    %v8542 = vadd.f32 %v8538, %v8541
    %vm8543 = vweird.f32 %v8130
    %vm8544 = vweird.f32 %v8538
    %vm8545 = vmor %vm8543, %vm8544
    %v8546 = vsel %vm8545, %v8538, %v8542
    %v8547 = vand.u32 2147483647, %v8130
    %vm8548 = vcmp.eq.f32.partialorder %v8547, 8.507059e+37
    %v8549 = vand.u32 %v8130, 2147483648
    %v8550 = vor.u32 1.1754944e-38, %v8549
    %v8551 = vsel %vm8548, %v8550, %v8546
    %v8552 = vmul.f32 1.0, %v8551
    %v8553 = vrcp.pop %v8131
    %v8554 = vmul.f32 %v8131, %v8553
    %v8555 = vsub.f32 1.0, %v8554
    %v8556 = vmul.f32 %v8553, %v8555
    %v8557 = vadd.f32 %v8553, %v8556
    %vm8558 = vweird.f32 %v8131
    %vm8559 = vweird.f32 %v8553
    %vm8560 = vmor %vm8558, %vm8559
    %v8561 = vsel %vm8560, %v8553, %v8557
    %v8562 = vand.u32 2147483647, %v8131
    %vm8563 = vcmp.eq.f32.partialorder %v8562, 8.507059e+37
    %v8564 = vand.u32 %v8131, 2147483648
    %v8565 = vor.u32 1.1754944e-38, %v8564
    %v8566 = vsel %vm8563, %v8565, %v8561
    %v8567 = vmul.f32 1.0, %v8566
    %v8568 = vrcp.pop %v8132
    %v8569 = vmul.f32 %v8132, %v8568
    %v8570 = vsub.f32 1.0, %v8569
    %v8571 = vmul.f32 %v8568, %v8570
    %v8572 = vadd.f32 %v8568, %v8571
    %vm8573 = vweird.f32 %v8132
    %vm8574 = vweird.f32 %v8568
    %vm8575 = vmor %vm8573, %vm8574
    %v8576 = vsel %vm8575, %v8568, %v8572
    %v8577 = vand.u32 2147483647, %v8132
    %vm8578 = vcmp.eq.f32.partialorder %v8577, 8.507059e+37
    %v8579 = vand.u32 %v8132, 2147483648
    %v8580 = vor.u32 1.1754944e-38, %v8579
    %v8581 = vsel %vm8578, %v8580, %v8576
    %v8582 = vmul.f32 1.0, %v8581
    %v8583 = vrcp.pop %v8133
    %v8584 = vmul.f32 %v8133, %v8583
    %v8585 = vsub.f32 1.0, %v8584
    %v8586 = vmul.f32 %v8583, %v8585
    %v8587 = vadd.f32 %v8583, %v8586
    %vm8588 = vweird.f32 %v8133
    %vm8589 = vweird.f32 %v8583
    %vm8590 = vmor %vm8588, %vm8589
    %v8591 = vsel %vm8590, %v8583, %v8587
    %v8592 = vand.u32 2147483647, %v8133
    %vm8593 = vcmp.eq.f32.partialorder %v8592, 8.507059e+37
    %v8594 = vand.u32 %v8133, 2147483648
    %v8595 = vor.u32 1.1754944e-38, %v8594
    %v8596 = vsel %vm8593, %v8595, %v8591
    %v8597 = vmul.f32 1.0, %v8596
    %v8598 = vrcp.pop %v8134
    %v8599 = vmul.f32 %v8134, %v8598
    %v8600 = vsub.f32 1.0, %v8599
    %v8601 = vmul.f32 %v8598, %v8600
    %v8602 = vadd.f32 %v8598, %v8601
    %vm8603 = vweird.f32 %v8134
    %vm8604 = vweird.f32 %v8598
    %vm8605 = vmor %vm8603, %vm8604
    %v8606 = vsel %vm8605, %v8598, %v8602
    %v8607 = vand.u32 2147483647, %v8134
    %vm8608 = vcmp.eq.f32.partialorder %v8607, 8.507059e+37
    %v8609 = vand.u32 %v8134, 2147483648
    %v8610 = vor.u32 1.1754944e-38, %v8609
    %v8611 = vsel %vm8608, %v8610, %v8606
    %v8612 = vmul.f32 1.0, %v8611
    %v8613 = vrcp.pop %v8135
    %v8614 = vmul.f32 %v8135, %v8613
    %v8615 = vsub.f32 1.0, %v8614
    %v8616 = vmul.f32 %v8613, %v8615
    %v8617 = vadd.f32 %v8613, %v8616
    %vm8618 = vweird.f32 %v8135
    %vm8619 = vweird.f32 %v8613
    %vm8620 = vmor %vm8618, %vm8619
    %v8621 = vsel %vm8620, %v8613, %v8617
    %v8622 = vand.u32 2147483647, %v8135
    %vm8623 = vcmp.eq.f32.partialorder %v8622, 8.507059e+37
    %v8624 = vand.u32 %v8135, 2147483648
    %v8625 = vor.u32 1.1754944e-38, %v8624
    %v8626 = vsel %vm8623, %v8625, %v8621
    %v8627 = vmul.f32 1.0, %v8626
    %v8628 = vrcp.pop %v8136
    %v8629 = vmul.f32 %v8136, %v8628
    %v8630 = vsub.f32 1.0, %v8629
    %v8631 = vmul.f32 %v8628, %v8630
    %v8632 = vadd.f32 %v8628, %v8631
    %vm8633 = vweird.f32 %v8136
    %vm8634 = vweird.f32 %v8628
    %vm8635 = vmor %vm8633, %vm8634
    %v8636 = vsel %vm8635, %v8628, %v8632
    %v8637 = vand.u32 2147483647, %v8136
    %vm8638 = vcmp.eq.f32.partialorder %v8637, 8.507059e+37
    %v8639 = vand.u32 %v8136, 2147483648
    %v8640 = vor.u32 1.1754944e-38, %v8639
    %v8641 = vsel %vm8638, %v8640, %v8636
    %v8642 = vmul.f32 1.0, %v8641
    %v8643 = vrcp.pop %v8137
    %v8644 = vmul.f32 %v8137, %v8643
    %v8645 = vsub.f32 1.0, %v8644
    %v8646 = vmul.f32 %v8643, %v8645
    %v8647 = vadd.f32 %v8643, %v8646
    %vm8648 = vweird.f32 %v8137
    %vm8649 = vweird.f32 %v8643
    %vm8650 = vmor %vm8648, %vm8649
    %v8651 = vsel %vm8650, %v8643, %v8647
    %v8652 = vand.u32 2147483647, %v8137
    %vm8653 = vcmp.eq.f32.partialorder %v8652, 8.507059e+37
    %v8654 = vand.u32 %v8137, 2147483648
    %v8655 = vor.u32 1.1754944e-38, %v8654
    %v8656 = vsel %vm8653, %v8655, %v8651
    %v8657 = vmul.f32 1.0, %v8656
    %v8658 = vrcp.pop %v8138
    %v8659 = vmul.f32 %v8138, %v8658
    %v8660 = vsub.f32 1.0, %v8659
    %v8661 = vmul.f32 %v8658, %v8660
    %v8662 = vadd.f32 %v8658, %v8661
    %vm8663 = vweird.f32 %v8138
    %vm8664 = vweird.f32 %v8658
    %vm8665 = vmor %vm8663, %vm8664
    %v8666 = vsel %vm8665, %v8658, %v8662
    %v8667 = vand.u32 2147483647, %v8138
    %vm8668 = vcmp.eq.f32.partialorder %v8667, 8.507059e+37
    %v8669 = vand.u32 %v8138, 2147483648
    %v8670 = vor.u32 1.1754944e-38, %v8669
    %v8671 = vsel %vm8668, %v8670, %v8666
    %v8672 = vmul.f32 1.0, %v8671
    %v8673 = vrcp.pop %v8139
    %v8674 = vmul.f32 %v8139, %v8673
    %v8675 = vsub.f32 1.0, %v8674
    %v8676 = vmul.f32 %v8673, %v8675
    %v8677 = vadd.f32 %v8673, %v8676
    %vm8678 = vweird.f32 %v8139
    %vm8679 = vweird.f32 %v8673
    %vm8680 = vmor %vm8678, %vm8679
    %v8681 = vsel %vm8680, %v8673, %v8677
    %v8682 = vand.u32 2147483647, %v8139
    %vm8683 = vcmp.eq.f32.partialorder %v8682, 8.507059e+37
    %v8684 = vand.u32 %v8139, 2147483648
    %v8685 = vor.u32 1.1754944e-38, %v8684
    %v8686 = vsel %vm8683, %v8685, %v8681
    %v8687 = vmul.f32 1.0, %v8686
    %v8688 = vrcp.pop %v8140
    %v8689 = vmul.f32 %v8140, %v8688
    %v8690 = vsub.f32 1.0, %v8689
    %v8691 = vmul.f32 %v8688, %v8690
    %v8692 = vadd.f32 %v8688, %v8691
    %vm8693 = vweird.f32 %v8140
    %vm8694 = vweird.f32 %v8688
    %vm8695 = vmor %vm8693, %vm8694
    %v8696 = vsel %vm8695, %v8688, %v8692
    %v8697 = vand.u32 2147483647, %v8140
    %vm8698 = vcmp.eq.f32.partialorder %v8697, 8.507059e+37
    %v8699 = vand.u32 %v8140, 2147483648
    %v8700 = vor.u32 1.1754944e-38, %v8699
    %v8701 = vsel %vm8698, %v8700, %v8696
    %v8702 = vmul.f32 1.0, %v8701
    %v8703 = vrcp.pop %v8141
    %v8704 = vmul.f32 %v8141, %v8703
    %v8705 = vsub.f32 1.0, %v8704
    %v8706 = vmul.f32 %v8703, %v8705
    %v8707 = vadd.f32 %v8703, %v8706
    %vm8708 = vweird.f32 %v8141
    %vm8709 = vweird.f32 %v8703
    %vm8710 = vmor %vm8708, %vm8709
    %v8711 = vsel %vm8710, %v8703, %v8707
    %v8712 = vand.u32 2147483647, %v8141
    %vm8713 = vcmp.eq.f32.partialorder %v8712, 8.507059e+37
    %v8714 = vand.u32 %v8141, 2147483648
    %v8715 = vor.u32 1.1754944e-38, %v8714
    %v8716 = vsel %vm8713, %v8715, %v8711
    %v8717 = vmul.f32 1.0, %v8716
    %v8718 = vrcp.pop %v8142
    %v8719 = vmul.f32 %v8142, %v8718
    %v8720 = vsub.f32 1.0, %v8719
    %v8721 = vmul.f32 %v8718, %v8720
    %v8722 = vadd.f32 %v8718, %v8721
    %vm8723 = vweird.f32 %v8142
    %vm8724 = vweird.f32 %v8718
    %vm8725 = vmor %vm8723, %vm8724
    %v8726 = vsel %vm8725, %v8718, %v8722
    %v8727 = vand.u32 2147483647, %v8142
    %vm8728 = vcmp.eq.f32.partialorder %v8727, 8.507059e+37
    %v8729 = vand.u32 %v8142, 2147483648
    %v8730 = vor.u32 1.1754944e-38, %v8729
    %v8731 = vsel %vm8728, %v8730, %v8726
    %v8732 = vmul.f32 1.0, %v8731
    %v8733 = vrcp.pop %v8143
    %v8734 = vmul.f32 %v8143, %v8733
    %v8735 = vsub.f32 1.0, %v8734
    %v8736 = vmul.f32 %v8733, %v8735
    %v8737 = vadd.f32 %v8733, %v8736
    %vm8738 = vweird.f32 %v8143
    %vm8739 = vweird.f32 %v8733
    %vm8740 = vmor %vm8738, %vm8739
    %v8741 = vsel %vm8740, %v8733, %v8737
    %v8742 = vand.u32 2147483647, %v8143
    %vm8743 = vcmp.eq.f32.partialorder %v8742, 8.507059e+37
    %v8744 = vand.u32 %v8143, 2147483648
    %v8745 = vor.u32 1.1754944e-38, %v8744
    %v8746 = vsel %vm8743, %v8745, %v8741
    %v8747 = vmul.f32 1.0, %v8746
    %v8748 = vrcp.pop %v8144
    %v8749 = vmul.f32 %v8144, %v8748
    %v8750 = vsub.f32 1.0, %v8749
    %v8751 = vmul.f32 %v8748, %v8750
    %v8752 = vadd.f32 %v8748, %v8751
    %vm8753 = vweird.f32 %v8144
    %vm8754 = vweird.f32 %v8748
    %vm8755 = vmor %vm8753, %vm8754
    %v8756 = vsel %vm8755, %v8748, %v8752
    %v8757 = vand.u32 2147483647, %v8144
    %vm8758 = vcmp.eq.f32.partialorder %v8757, 8.507059e+37
    %v8759 = vand.u32 %v8144, 2147483648
    %v8760 = vor.u32 1.1754944e-38, %v8759
    %v8761 = vsel %vm8758, %v8760, %v8756
    %v8762 = vmul.f32 1.0, %v8761
    %v8763 = vrcp.pop %v8145
    %v8764 = vmul.f32 %v8145, %v8763
    %v8765 = vsub.f32 1.0, %v8764
    %v8766 = vmul.f32 %v8763, %v8765
    %v8767 = vadd.f32 %v8763, %v8766
    %vm8768 = vweird.f32 %v8145
    %vm8769 = vweird.f32 %v8763
    %vm8770 = vmor %vm8768, %vm8769
    %v8771 = vsel %vm8770, %v8763, %v8767
    %v8772 = vand.u32 2147483647, %v8145
    %vm8773 = vcmp.eq.f32.partialorder %v8772, 8.507059e+37
    %v8774 = vand.u32 %v8145, 2147483648
    %v8775 = vor.u32 1.1754944e-38, %v8774
    %v8776 = vsel %vm8773, %v8775, %v8771
    %v8777 = vmul.f32 1.0, %v8776
    %v8778 = vrcp.pop %v8146
    %v8779 = vmul.f32 %v8146, %v8778
    %v8780 = vsub.f32 1.0, %v8779
    %v8781 = vmul.f32 %v8778, %v8780
    %v8782 = vadd.f32 %v8778, %v8781
    %vm8783 = vweird.f32 %v8146
    %vm8784 = vweird.f32 %v8778
    %vm8785 = vmor %vm8783, %vm8784
    %v8786 = vsel %vm8785, %v8778, %v8782
    %v8787 = vand.u32 2147483647, %v8146
    %vm8788 = vcmp.eq.f32.partialorder %v8787, 8.507059e+37
    %v8789 = vand.u32 %v8146, 2147483648
    %v8790 = vor.u32 1.1754944e-38, %v8789
    %v8791 = vsel %vm8788, %v8790, %v8786
    %v8792 = vmul.f32 1.0, %v8791
    %v8793 = vrcp.pop %v8147
    %v8794 = vmul.f32 %v8147, %v8793
    %v8795 = vsub.f32 1.0, %v8794
    %v8796 = vmul.f32 %v8793, %v8795
    %v8797 = vadd.f32 %v8793, %v8796
    %vm8798 = vweird.f32 %v8147
    %vm8799 = vweird.f32 %v8793
    %vm8800 = vmor %vm8798, %vm8799
    %v8801 = vsel %vm8800, %v8793, %v8797
    %v8802 = vand.u32 2147483647, %v8147
    %vm8803 = vcmp.eq.f32.partialorder %v8802, 8.507059e+37
    %v8804 = vand.u32 %v8147, 2147483648
    %v8805 = vor.u32 1.1754944e-38, %v8804
    %v8806 = vsel %vm8803, %v8805, %v8801
    %v8807 = vmul.f32 1.0, %v8806
    %v8808 = vrcp.pop %v8148
    %v8809 = vmul.f32 %v8148, %v8808
    %v8810 = vsub.f32 1.0, %v8809
    %v8811 = vmul.f32 %v8808, %v8810
    %v8812 = vadd.f32 %v8808, %v8811
    %vm8813 = vweird.f32 %v8148
    %vm8814 = vweird.f32 %v8808
    %vm8815 = vmor %vm8813, %vm8814
    %v8816 = vsel %vm8815, %v8808, %v8812
    %v8817 = vand.u32 2147483647, %v8148
    %vm8818 = vcmp.eq.f32.partialorder %v8817, 8.507059e+37
    %v8819 = vand.u32 %v8148, 2147483648
    %v8820 = vor.u32 1.1754944e-38, %v8819
    %v8821 = vsel %vm8818, %v8820, %v8816
    %v8822 = vmul.f32 1.0, %v8821
    %v8823 = vrcp.pop %v8149
    %v8824 = vmul.f32 %v8149, %v8823
    %v8825 = vsub.f32 1.0, %v8824
    %v8826 = vmul.f32 %v8823, %v8825
    %v8827 = vadd.f32 %v8823, %v8826
    %vm8828 = vweird.f32 %v8149
    %vm8829 = vweird.f32 %v8823
    %vm8830 = vmor %vm8828, %vm8829
    %v8831 = vsel %vm8830, %v8823, %v8827
    %v8832 = vand.u32 2147483647, %v8149
    %vm8833 = vcmp.eq.f32.partialorder %v8832, 8.507059e+37
    %v8834 = vand.u32 %v8149, 2147483648
    %v8835 = vor.u32 1.1754944e-38, %v8834
    %v8836 = vsel %vm8833, %v8835, %v8831
    %v8837 = vmul.f32 1.0, %v8836
    %v8838 = vrcp.pop %v8150
    %v8839 = vmul.f32 %v8150, %v8838
    %v8840 = vsub.f32 1.0, %v8839
    %v8841 = vmul.f32 %v8838, %v8840
    %v8842 = vadd.f32 %v8838, %v8841
    %vm8843 = vweird.f32 %v8150
    %vm8844 = vweird.f32 %v8838
    %vm8845 = vmor %vm8843, %vm8844
    %v8846 = vsel %vm8845, %v8838, %v8842
    %v8847 = vand.u32 2147483647, %v8150
    %vm8848 = vcmp.eq.f32.partialorder %v8847, 8.507059e+37
    %v8849 = vand.u32 %v8150, 2147483648
    %v8850 = vor.u32 1.1754944e-38, %v8849
    %v8851 = vsel %vm8848, %v8850, %v8846
    %v8852 = vmul.f32 1.0, %v8851
    %v8853 = vrcp.pop %v8151
    %v8854 = vmul.f32 %v8151, %v8853
    %v8855 = vsub.f32 1.0, %v8854
    %v8856 = vmul.f32 %v8853, %v8855
    %v8857 = vadd.f32 %v8853, %v8856
    %vm8858 = vweird.f32 %v8151
    %vm8859 = vweird.f32 %v8853
    %vm8860 = vmor %vm8858, %vm8859
    %v8861 = vsel %vm8860, %v8853, %v8857
    %v8862 = vand.u32 2147483647, %v8151
    %vm8863 = vcmp.eq.f32.partialorder %v8862, 8.507059e+37
    %v8864 = vand.u32 %v8151, 2147483648
    %v8865 = vor.u32 1.1754944e-38, %v8864
    %v8866 = vsel %vm8863, %v8865, %v8861
    %v8867 = vmul.f32 1.0, %v8866
    %v8868 = vrcp.pop %v8152
    %v8869 = vmul.f32 %v8152, %v8868
    %v8870 = vsub.f32 1.0, %v8869
    %v8871 = vmul.f32 %v8868, %v8870
    %v8872 = vadd.f32 %v8868, %v8871
    %vm8873 = vweird.f32 %v8152
    %vm8874 = vweird.f32 %v8868
    %vm8875 = vmor %vm8873, %vm8874
    %v8876 = vsel %vm8875, %v8868, %v8872
    %v8877 = vand.u32 2147483647, %v8152
    %vm8878 = vcmp.eq.f32.partialorder %v8877, 8.507059e+37
    %v8879 = vand.u32 %v8152, 2147483648
    %v8880 = vor.u32 1.1754944e-38, %v8879
    %v8881 = vsel %vm8878, %v8880, %v8876
    %v8882 = vmul.f32 1.0, %v8881
    %v8883 = vrcp.pop %v8153
    %v8884 = vmul.f32 %v8153, %v8883
    %v8885 = vsub.f32 1.0, %v8884
    %v8886 = vmul.f32 %v8883, %v8885
    %v8887 = vadd.f32 %v8883, %v8886
    %vm8888 = vweird.f32 %v8153
    %vm8889 = vweird.f32 %v8883
    %vm8890 = vmor %vm8888, %vm8889
    %v8891 = vsel %vm8890, %v8883, %v8887
    %v8892 = vand.u32 2147483647, %v8153
    %vm8893 = vcmp.eq.f32.partialorder %v8892, 8.507059e+37
    %v8894 = vand.u32 %v8153, 2147483648
    %v8895 = vor.u32 1.1754944e-38, %v8894
    %v8896 = vsel %vm8893, %v8895, %v8891
    %v8897 = vmul.f32 1.0, %v8896
    %v8898 = vrcp.pop %v8154
    %v8899 = vmul.f32 %v8154, %v8898
    %v8900 = vsub.f32 1.0, %v8899
    %v8901 = vmul.f32 %v8898, %v8900
    %v8902 = vadd.f32 %v8898, %v8901
    %vm8903 = vweird.f32 %v8154
    %vm8904 = vweird.f32 %v8898
    %vm8905 = vmor %vm8903, %vm8904
    %v8906 = vsel %vm8905, %v8898, %v8902
    %v8907 = vand.u32 2147483647, %v8154
    %vm8908 = vcmp.eq.f32.partialorder %v8907, 8.507059e+37
    %v8909 = vand.u32 %v8154, 2147483648
    %v8910 = vor.u32 1.1754944e-38, %v8909
    %v8911 = vsel %vm8908, %v8910, %v8906
    %v8912 = vmul.f32 1.0, %v8911
    %v8913 = vrcp.pop %v8155
    %v8914 = vmul.f32 %v8155, %v8913
    %v8915 = vsub.f32 1.0, %v8914
    %v8916 = vmul.f32 %v8913, %v8915
    %v8917 = vadd.f32 %v8913, %v8916
    %vm8918 = vweird.f32 %v8155
    %vm8919 = vweird.f32 %v8913
    %vm8920 = vmor %vm8918, %vm8919
    %v8921 = vsel %vm8920, %v8913, %v8917
    %v8922 = vand.u32 2147483647, %v8155
    %vm8923 = vcmp.eq.f32.partialorder %v8922, 8.507059e+37
    %v8924 = vand.u32 %v8155, 2147483648
    %v8925 = vor.u32 1.1754944e-38, %v8924
    %v8926 = vsel %vm8923, %v8925, %v8921
    %v8927 = vmul.f32 1.0, %v8926
    %v8928 = vrcp.pop %v8156
    %v8929 = vmul.f32 %v8156, %v8928
    %v8930 = vsub.f32 1.0, %v8929
    %v8931 = vmul.f32 %v8928, %v8930
    %v8932 = vadd.f32 %v8928, %v8931
    %vm8933 = vweird.f32 %v8156
    %vm8934 = vweird.f32 %v8928
    %vm8935 = vmor %vm8933, %vm8934
    %v8936 = vsel %vm8935, %v8928, %v8932
    %v8937 = vand.u32 2147483647, %v8156
    %vm8938 = vcmp.eq.f32.partialorder %v8937, 8.507059e+37
    %v8939 = vand.u32 %v8156, 2147483648
    %v8940 = vor.u32 1.1754944e-38, %v8939
    %v8941 = vsel %vm8938, %v8940, %v8936
    %v8942 = vmul.f32 1.0, %v8941
    %v8943 = vrcp.pop %v8157
    %v8944 = vmul.f32 %v8157, %v8943
    %v8945 = vsub.f32 1.0, %v8944
    %v8946 = vmul.f32 %v8943, %v8945
    %v8947 = vadd.f32 %v8943, %v8946
    %vm8948 = vweird.f32 %v8157
    %vm8949 = vweird.f32 %v8943
    %vm8950 = vmor %vm8948, %vm8949
    %v8951 = vsel %vm8950, %v8943, %v8947
    %v8952 = vand.u32 2147483647, %v8157
    %vm8953 = vcmp.eq.f32.partialorder %v8952, 8.507059e+37
    %v8954 = vand.u32 %v8157, 2147483648
    %v8955 = vor.u32 1.1754944e-38, %v8954
    %v8956 = vsel %vm8953, %v8955, %v8951
    %v8957 = vmul.f32 1.0, %v8956
    %v8958 = vrcp.pop %v8158
    %v8959 = vmul.f32 %v8158, %v8958
    %v8960 = vsub.f32 1.0, %v8959
    %v8961 = vmul.f32 %v8958, %v8960
    %v8962 = vadd.f32 %v8958, %v8961
    %vm8963 = vweird.f32 %v8158
    %vm8964 = vweird.f32 %v8958
    %vm8965 = vmor %vm8963, %vm8964
    %v8966 = vsel %vm8965, %v8958, %v8962
    %v8967 = vand.u32 2147483647, %v8158
    %vm8968 = vcmp.eq.f32.partialorder %v8967, 8.507059e+37
    %v8969 = vand.u32 %v8158, 2147483648
    %v8970 = vor.u32 1.1754944e-38, %v8969
    %v8971 = vsel %vm8968, %v8970, %v8966
    %v8972 = vmul.f32 1.0, %v8971
    %v8973 = vrcp.pop %v8159
    %v8974 = vmul.f32 %v8159, %v8973
    %v8975 = vsub.f32 1.0, %v8974
    %v8976 = vmul.f32 %v8973, %v8975
    %v8977 = vadd.f32 %v8973, %v8976
    %vm8978 = vweird.f32 %v8159
    %vm8979 = vweird.f32 %v8973
    %vm8980 = vmor %vm8978, %vm8979
    %v8981 = vsel %vm8980, %v8973, %v8977
    %v8982 = vand.u32 2147483647, %v8159
    %vm8983 = vcmp.eq.f32.partialorder %v8982, 8.507059e+37
    %v8984 = vand.u32 %v8159, 2147483648
    %v8985 = vor.u32 1.1754944e-38, %v8984
    %v8986 = vsel %vm8983, %v8985, %v8981
    %v8987 = vmul.f32 1.0, %v8986
    %v8988 = vrcp.pop %v8160
    %v8989 = vmul.f32 %v8160, %v8988
    %v8990 = vsub.f32 1.0, %v8989
    %v8991 = vmul.f32 %v8988, %v8990
    %v8992 = vadd.f32 %v8988, %v8991
    %vm8993 = vweird.f32 %v8160
    %vm8994 = vweird.f32 %v8988
    %vm8995 = vmor %vm8993, %vm8994
    %v8996 = vsel %vm8995, %v8988, %v8992
    %v8997 = vand.u32 2147483647, %v8160
    %vm8998 = vcmp.eq.f32.partialorder %v8997, 8.507059e+37
    %v8999 = vand.u32 %v8160, 2147483648
    %v9000 = vor.u32 1.1754944e-38, %v8999
    %v9001 = vsel %vm8998, %v9000, %v8996
    %v9002 = vmul.f32 1.0, %v9001
    %v9003 = vrcp.pop %v8161
    %v9004 = vmul.f32 %v8161, %v9003
    %v9005 = vsub.f32 1.0, %v9004
    %v9006 = vmul.f32 %v9003, %v9005
    %v9007 = vadd.f32 %v9003, %v9006
    %vm9008 = vweird.f32 %v8161
    %vm9009 = vweird.f32 %v9003
    %vm9010 = vmor %vm9008, %vm9009
    %v9011 = vsel %vm9010, %v9003, %v9007
    %v9012 = vand.u32 2147483647, %v8161
    %vm9013 = vcmp.eq.f32.partialorder %v9012, 8.507059e+37
    %v9014 = vand.u32 %v8161, 2147483648
    %v9015 = vor.u32 1.1754944e-38, %v9014
    %v9016 = vsel %vm9013, %v9015, %v9011
    %v9017 = vmul.f32 1.0, %v9016
    %v9018 = vrcp.pop %v8162
    %v9019 = vmul.f32 %v8162, %v9018
    %v9020 = vsub.f32 1.0, %v9019
    %v9021 = vmul.f32 %v9018, %v9020
    %v9022 = vadd.f32 %v9018, %v9021
    %vm9023 = vweird.f32 %v8162
    %vm9024 = vweird.f32 %v9018
    %vm9025 = vmor %vm9023, %vm9024
    %v9026 = vsel %vm9025, %v9018, %v9022
    %v9027 = vand.u32 2147483647, %v8162
    %vm9028 = vcmp.eq.f32.partialorder %v9027, 8.507059e+37
    %v9029 = vand.u32 %v8162, 2147483648
    %v9030 = vor.u32 1.1754944e-38, %v9029
    %v9031 = vsel %vm9028, %v9030, %v9026
    %v9032 = vmul.f32 1.0, %v9031
    %v9033 = vrcp.pop %v8163
    %v9034 = vmul.f32 %v8163, %v9033
    %v9035 = vsub.f32 1.0, %v9034
    %v9036 = vmul.f32 %v9033, %v9035
    %v9037 = vadd.f32 %v9033, %v9036
    %vm9038 = vweird.f32 %v8163
    %vm9039 = vweird.f32 %v9033
    %vm9040 = vmor %vm9038, %vm9039
    %v9041 = vsel %vm9040, %v9033, %v9037
    %v9042 = vand.u32 2147483647, %v8163
    %vm9043 = vcmp.eq.f32.partialorder %v9042, 8.507059e+37
    %v9044 = vand.u32 %v8163, 2147483648
    %v9045 = vor.u32 1.1754944e-38, %v9044
    %v9046 = vsel %vm9043, %v9045, %v9041
    %v9047 = vmul.f32 1.0, %v9046
    %v9048 = vrcp.pop %v8164
    %v9049 = vmul.f32 %v8164, %v9048
    %v9050 = vsub.f32 1.0, %v9049
    %v9051 = vmul.f32 %v9048, %v9050
    %v9052 = vadd.f32 %v9048, %v9051
    %vm9053 = vweird.f32 %v8164
    %vm9054 = vweird.f32 %v9048
    %vm9055 = vmor %vm9053, %vm9054
    %v9056 = vsel %vm9055, %v9048, %v9052
    %v9057 = vand.u32 2147483647, %v8164
    %vm9058 = vcmp.eq.f32.partialorder %v9057, 8.507059e+37
    %v9059 = vand.u32 %v8164, 2147483648
    %v9060 = vor.u32 1.1754944e-38, %v9059
    %v9061 = vsel %vm9058, %v9060, %v9056
    %v9062 = vmul.f32 1.0, %v9061
    %v9063 = vrcp.pop %v8165
    %v9064 = vmul.f32 %v8165, %v9063
    %v9065 = vsub.f32 1.0, %v9064
    %v9066 = vmul.f32 %v9063, %v9065
    %v9067 = vadd.f32 %v9063, %v9066
    %vm9068 = vweird.f32 %v8165
    %vm9069 = vweird.f32 %v9063
    %vm9070 = vmor %vm9068, %vm9069
    %v9071 = vsel %vm9070, %v9063, %v9067
    %v9072 = vand.u32 2147483647, %v8165
    %vm9073 = vcmp.eq.f32.partialorder %v9072, 8.507059e+37
    %v9074 = vand.u32 %v8165, 2147483648
    %v9075 = vor.u32 1.1754944e-38, %v9074
    %v9076 = vsel %vm9073, %v9075, %v9071
    %v9077 = vmul.f32 1.0, %v9076
    %v9078 = vrcp.pop %v8166
    %v9079 = vmul.f32 %v8166, %v9078
    %v9080 = vsub.f32 1.0, %v9079
    %v9081 = vmul.f32 %v9078, %v9080
    %v9082 = vadd.f32 %v9078, %v9081
    %vm9083 = vweird.f32 %v8166
    %vm9084 = vweird.f32 %v9078
    %vm9085 = vmor %vm9083, %vm9084
    %v9086 = vsel %vm9085, %v9078, %v9082
    %v9087 = vand.u32 2147483647, %v8166
    %vm9088 = vcmp.eq.f32.partialorder %v9087, 8.507059e+37
    %v9089 = vand.u32 %v8166, 2147483648
    %v9090 = vor.u32 1.1754944e-38, %v9089
    %v9091 = vsel %vm9088, %v9090, %v9086
    %v9092 = vmul.f32 1.0, %v9091
    %v9093 = vrcp.pop %v8167
    %v9094 = vmul.f32 %v8167, %v9093
    %v9095 = vsub.f32 1.0, %v9094
    %v9096 = vmul.f32 %v9093, %v9095
    %v9097 = vadd.f32 %v9093, %v9096
    %vm9098 = vweird.f32 %v8167
    %vm9099 = vweird.f32 %v9093
    %vm9100 = vmor %vm9098, %vm9099
    %v9101 = vsel %vm9100, %v9093, %v9097
    %v9102 = vand.u32 2147483647, %v8167
    %vm9103 = vcmp.eq.f32.partialorder %v9102, 8.507059e+37
    %v9104 = vand.u32 %v8167, 2147483648
    %v9105 = vor.u32 1.1754944e-38, %v9104
    %v9106 = vsel %vm9103, %v9105, %v9101
    %v9107 = vmul.f32 1.0, %v9106
    %v9108 = vrcp.pop %v8168
    %v9109 = vmul.f32 %v8168, %v9108
    %v9110 = vsub.f32 1.0, %v9109
    %v9111 = vmul.f32 %v9108, %v9110
    %v9112 = vadd.f32 %v9108, %v9111
    %vm9113 = vweird.f32 %v8168
    %vm9114 = vweird.f32 %v9108
    %vm9115 = vmor %vm9113, %vm9114
    %v9116 = vsel %vm9115, %v9108, %v9112
    %v9117 = vand.u32 2147483647, %v8168
    %vm9118 = vcmp.eq.f32.partialorder %v9117, 8.507059e+37
    %v9119 = vand.u32 %v8168, 2147483648
    %v9120 = vor.u32 1.1754944e-38, %v9119
    %v9121 = vsel %vm9118, %v9120, %v9116
    %v9122 = vmul.f32 1.0, %v9121
    %v9123 = vrcp.pop %v8169
    %v9124 = vmul.f32 %v8169, %v9123
    %v9125 = vsub.f32 1.0, %v9124
    %v9126 = vmul.f32 %v9123, %v9125
    %v9127 = vadd.f32 %v9123, %v9126
    %vm9128 = vweird.f32 %v8169
    %vm9129 = vweird.f32 %v9123
    %vm9130 = vmor %vm9128, %vm9129
    %v9131 = vsel %vm9130, %v9123, %v9127
    %v9132 = vand.u32 2147483647, %v8169
    %vm9133 = vcmp.eq.f32.partialorder %v9132, 8.507059e+37
    %v9134 = vand.u32 %v8169, 2147483648
    %v9135 = vor.u32 1.1754944e-38, %v9134
    %v9136 = vsel %vm9133, %v9135, %v9131
    %v9137 = vmul.f32 1.0, %v9136
    %v9138 = vrcp.pop %v8170
    %v9139 = vmul.f32 %v8170, %v9138
    %v9140 = vsub.f32 1.0, %v9139
    %v9141 = vmul.f32 %v9138, %v9140
    %v9142 = vadd.f32 %v9138, %v9141
    %vm9143 = vweird.f32 %v8170
    %vm9144 = vweird.f32 %v9138
    %vm9145 = vmor %vm9143, %vm9144
    %v9146 = vsel %vm9145, %v9138, %v9142
    %v9147 = vand.u32 2147483647, %v8170
    %vm9148 = vcmp.eq.f32.partialorder %v9147, 8.507059e+37
    %v9149 = vand.u32 %v8170, 2147483648
    %v9150 = vor.u32 1.1754944e-38, %v9149
    %v9151 = vsel %vm9148, %v9150, %v9146
    %v9152 = vmul.f32 1.0, %v9151
    %v9153 = vrcp.pop %v8171
    %v9154 = vmul.f32 %v8171, %v9153
    %v9155 = vsub.f32 1.0, %v9154
    %v9156 = vmul.f32 %v9153, %v9155
    %v9157 = vadd.f32 %v9153, %v9156
    %vm9158 = vweird.f32 %v8171
    %vm9159 = vweird.f32 %v9153
    %vm9160 = vmor %vm9158, %vm9159
    %v9161 = vsel %vm9160, %v9153, %v9157
    %v9162 = vand.u32 2147483647, %v8171
    %vm9163 = vcmp.eq.f32.partialorder %v9162, 8.507059e+37
    %v9164 = vand.u32 %v8171, 2147483648
    %v9165 = vor.u32 1.1754944e-38, %v9164
    %v9166 = vsel %vm9163, %v9165, %v9161
    %v9167 = vmul.f32 1.0, %v9166
    %v9168 = vrcp.pop %v8172
    %v9169 = vmul.f32 %v8172, %v9168
    %v9170 = vsub.f32 1.0, %v9169
    %v9171 = vmul.f32 %v9168, %v9170
    %v9172 = vadd.f32 %v9168, %v9171
    %vm9173 = vweird.f32 %v8172
    %vm9174 = vweird.f32 %v9168
    %vm9175 = vmor %vm9173, %vm9174
    %v9176 = vsel %vm9175, %v9168, %v9172
    %v9177 = vand.u32 2147483647, %v8172
    %vm9178 = vcmp.eq.f32.partialorder %v9177, 8.507059e+37
    %v9179 = vand.u32 %v8172, 2147483648
    %v9180 = vor.u32 1.1754944e-38, %v9179
    %v9181 = vsel %vm9178, %v9180, %v9176
    %v9182 = vmul.f32 1.0, %v9181
    %v9183 = vrcp.pop %v8173
    %v9184 = vmul.f32 %v8173, %v9183
    %v9185 = vsub.f32 1.0, %v9184
    %v9186 = vmul.f32 %v9183, %v9185
    %v9187 = vadd.f32 %v9183, %v9186
    %vm9188 = vweird.f32 %v8173
    %vm9189 = vweird.f32 %v9183
    %vm9190 = vmor %vm9188, %vm9189
    %v9191 = vsel %vm9190, %v9183, %v9187
    %v9192 = vand.u32 2147483647, %v8173
    %vm9193 = vcmp.eq.f32.partialorder %v9192, 8.507059e+37
    %v9194 = vand.u32 %v8173, 2147483648
    %v9195 = vor.u32 1.1754944e-38, %v9194
    %v9196 = vsel %vm9193, %v9195, %v9191
    %v9197 = vmul.f32 1.0, %v9196
    %v9198 = vrcp.pop %v8174
    %v9199 = vmul.f32 %v8174, %v9198
    %v9200 = vsub.f32 1.0, %v9199
    %v9201 = vmul.f32 %v9198, %v9200
    %v9202 = vadd.f32 %v9198, %v9201
    %vm9203 = vweird.f32 %v8174
    %vm9204 = vweird.f32 %v9198
    %vm9205 = vmor %vm9203, %vm9204
    %v9206 = vsel %vm9205, %v9198, %v9202
    %v9207 = vand.u32 2147483647, %v8174
    %vm9208 = vcmp.eq.f32.partialorder %v9207, 8.507059e+37
    %v9209 = vand.u32 %v8174, 2147483648
    %v9210 = vor.u32 1.1754944e-38, %v9209
    %v9211 = vsel %vm9208, %v9210, %v9206
    %v9212 = vmul.f32 1.0, %v9211
    %v9213 = vrcp.pop %v8175
    %v9214 = vmul.f32 %v8175, %v9213
    %v9215 = vsub.f32 1.0, %v9214
    %v9216 = vmul.f32 %v9213, %v9215
    %v9217 = vadd.f32 %v9213, %v9216
    %vm9218 = vweird.f32 %v8175
    %vm9219 = vweird.f32 %v9213
    %vm9220 = vmor %vm9218, %vm9219
    %v9221 = vsel %vm9220, %v9213, %v9217
    %v9222 = vand.u32 2147483647, %v8175
    %vm9223 = vcmp.eq.f32.partialorder %v9222, 8.507059e+37
    %v9224 = vand.u32 %v8175, 2147483648
    %v9225 = vor.u32 1.1754944e-38, %v9224
    %v9226 = vsel %vm9223, %v9225, %v9221
    %v9227 = vmul.f32 1.0, %v9226
    %v9228 = vrcp.pop %v8176
    %v9229 = vmul.f32 %v8176, %v9228
    %v9230 = vsub.f32 1.0, %v9229
    %v9231 = vmul.f32 %v9228, %v9230
    %v9232 = vadd.f32 %v9228, %v9231
    %vm9233 = vweird.f32 %v8176
    %vm9234 = vweird.f32 %v9228
    %vm9235 = vmor %vm9233, %vm9234
    %v9236 = vsel %vm9235, %v9228, %v9232
    %v9237 = vand.u32 2147483647, %v8176
    %vm9238 = vcmp.eq.f32.partialorder %v9237, 8.507059e+37
    %v9239 = vand.u32 %v8176, 2147483648
    %v9240 = vor.u32 1.1754944e-38, %v9239
    %v9241 = vsel %vm9238, %v9240, %v9236
    %v9242 = vmul.f32 1.0, %v9241
    %v9243 = vrcp.pop %v8177
    %v9244 = vmul.f32 %v8177, %v9243
    %v9245 = vsub.f32 1.0, %v9244
    %v9246 = vmul.f32 %v9243, %v9245
    %v9247 = vadd.f32 %v9243, %v9246
    %vm9248 = vweird.f32 %v8177
    %vm9249 = vweird.f32 %v9243
    %vm9250 = vmor %vm9248, %vm9249
    %v9251 = vsel %vm9250, %v9243, %v9247
    %v9252 = vand.u32 2147483647, %v8177
    %vm9253 = vcmp.eq.f32.partialorder %v9252, 8.507059e+37
    %v9254 = vand.u32 %v8177, 2147483648
    %v9255 = vor.u32 1.1754944e-38, %v9254
    %v9256 = vsel %vm9253, %v9255, %v9251
    %v9257 = vmul.f32 1.0, %v9256
    %v9258 = vrcp.pop %v8178
    %v9259 = vmul.f32 %v8178, %v9258
    %v9260 = vsub.f32 1.0, %v9259
    %v9261 = vmul.f32 %v9258, %v9260
    %v9262 = vadd.f32 %v9258, %v9261
    %vm9263 = vweird.f32 %v8178
    %vm9264 = vweird.f32 %v9258
    %vm9265 = vmor %vm9263, %vm9264
    %v9266 = vsel %vm9265, %v9258, %v9262
    %v9267 = vand.u32 2147483647, %v8178
    %vm9268 = vcmp.eq.f32.partialorder %v9267, 8.507059e+37
    %v9269 = vand.u32 %v8178, 2147483648
    %v9270 = vor.u32 1.1754944e-38, %v9269
    %v9271 = vsel %vm9268, %v9270, %v9266
    %v9272 = vmul.f32 1.0, %v9271
    %v9273 = vrcp.pop %v8179
    %v9274 = vmul.f32 %v8179, %v9273
    %v9275 = vsub.f32 1.0, %v9274
    %v9276 = vmul.f32 %v9273, %v9275
    %v9277 = vadd.f32 %v9273, %v9276
    %vm9278 = vweird.f32 %v8179
    %vm9279 = vweird.f32 %v9273
    %vm9280 = vmor %vm9278, %vm9279
    %v9281 = vsel %vm9280, %v9273, %v9277
    %v9282 = vand.u32 2147483647, %v8179
    %vm9283 = vcmp.eq.f32.partialorder %v9282, 8.507059e+37
    %v9284 = vand.u32 %v8179, 2147483648
    %v9285 = vor.u32 1.1754944e-38, %v9284
    %v9286 = vsel %vm9283, %v9285, %v9281
    %v9287 = vmul.f32 1.0, %v9286
    %v9288 = vrcp.pop %v8180
    %v9289 = vmul.f32 %v8180, %v9288
    %v9290 = vsub.f32 1.0, %v9289
    %v9291 = vmul.f32 %v9288, %v9290
    %v9292 = vadd.f32 %v9288, %v9291
    %vm9293 = vweird.f32 %v8180
    %vm9294 = vweird.f32 %v9288
    %vm9295 = vmor %vm9293, %vm9294
    %v9296 = vsel %vm9295, %v9288, %v9292
    %v9297 = vand.u32 2147483647, %v8180
    %vm9298 = vcmp.eq.f32.partialorder %v9297, 8.507059e+37
    %v9299 = vand.u32 %v8180, 2147483648
    %v9300 = vor.u32 1.1754944e-38, %v9299
    %v9301 = vsel %vm9298, %v9300, %v9296
    %v9302 = vmul.f32 1.0, %v9301
    %v9303 = vrcp.pop %v8181
    %v9304 = vmul.f32 %v8181, %v9303
    %v9305 = vsub.f32 1.0, %v9304
    %v9306 = vmul.f32 %v9303, %v9305
    %v9307 = vadd.f32 %v9303, %v9306
    %vm9308 = vweird.f32 %v8181
    %vm9309 = vweird.f32 %v9303
    %vm9310 = vmor %vm9308, %vm9309
    %v9311 = vsel %vm9310, %v9303, %v9307
    %v9312 = vand.u32 2147483647, %v8181
    %vm9313 = vcmp.eq.f32.partialorder %v9312, 8.507059e+37
    %v9314 = vand.u32 %v8181, 2147483648
    %v9315 = vor.u32 1.1754944e-38, %v9314
    %v9316 = vsel %vm9313, %v9315, %v9311
    %v9317 = vmul.f32 1.0, %v9316
    %v9318 = vrcp.pop %v8182
    %v9319 = vmul.f32 %v8182, %v9318
    %v9320 = vsub.f32 1.0, %v9319
    %v9321 = vmul.f32 %v9318, %v9320
    %v9322 = vadd.f32 %v9318, %v9321
    %vm9323 = vweird.f32 %v8182
    %vm9324 = vweird.f32 %v9318
    %vm9325 = vmor %vm9323, %vm9324
    %v9326 = vsel %vm9325, %v9318, %v9322
    %v9327 = vand.u32 2147483647, %v8182
    %vm9328 = vcmp.eq.f32.partialorder %v9327, 8.507059e+37
    %v9329 = vand.u32 %v8182, 2147483648
    %v9330 = vor.u32 1.1754944e-38, %v9329
    %v9331 = vsel %vm9328, %v9330, %v9326
    %v9332 = vmul.f32 1.0, %v9331
    %v9333 = vrcp.pop %v8183
    %v9334 = vmul.f32 %v8183, %v9333
    %v9335 = vsub.f32 1.0, %v9334
    %v9336 = vmul.f32 %v9333, %v9335
    %v9337 = vadd.f32 %v9333, %v9336
    %vm9338 = vweird.f32 %v8183
    %vm9339 = vweird.f32 %v9333
    %vm9340 = vmor %vm9338, %vm9339
    %v9341 = vsel %vm9340, %v9333, %v9337
    %v9342 = vand.u32 2147483647, %v8183
    %vm9343 = vcmp.eq.f32.partialorder %v9342, 8.507059e+37
    %v9344 = vand.u32 %v8183, 2147483648
    %v9345 = vor.u32 1.1754944e-38, %v9344
    %v9346 = vsel %vm9343, %v9345, %v9341
    %v9347 = vmul.f32 1.0, %v9346
    %v9348 = vrcp.pop %v8184
    %v9349 = vmul.f32 %v8184, %v9348
    %v9350 = vsub.f32 1.0, %v9349
    %v9351 = vmul.f32 %v9348, %v9350
    %v9352 = vadd.f32 %v9348, %v9351
    %vm9353 = vweird.f32 %v8184
    %vm9354 = vweird.f32 %v9348
    %vm9355 = vmor %vm9353, %vm9354
    %v9356 = vsel %vm9355, %v9348, %v9352
    %v9357 = vand.u32 2147483647, %v8184
    %vm9358 = vcmp.eq.f32.partialorder %v9357, 8.507059e+37
    %v9359 = vand.u32 %v8184, 2147483648
    %v9360 = vor.u32 1.1754944e-38, %v9359
    %v9361 = vsel %vm9358, %v9360, %v9356
    %v9362 = vmul.f32 1.0, %v9361
    %v9363 = vrcp.pop %v8185
    %v9364 = vmul.f32 %v8185, %v9363
    %v9365 = vsub.f32 1.0, %v9364
    %v9366 = vmul.f32 %v9363, %v9365
    %v9367 = vadd.f32 %v9363, %v9366
    %vm9368 = vweird.f32 %v8185
    %vm9369 = vweird.f32 %v9363
    %vm9370 = vmor %vm9368, %vm9369
    %v9371 = vsel %vm9370, %v9363, %v9367
    %v9372 = vand.u32 2147483647, %v8185
    %vm9373 = vcmp.eq.f32.partialorder %v9372, 8.507059e+37
    %v9374 = vand.u32 %v8185, 2147483648
    %v9375 = vor.u32 1.1754944e-38, %v9374
    %v9376 = vsel %vm9373, %v9375, %v9371
    %v9377 = vmul.f32 1.0, %v9376
    %v9378 = vrcp.pop %v8186
    %v9379 = vmul.f32 %v8186, %v9378
    %v9380 = vsub.f32 1.0, %v9379
    %v9381 = vmul.f32 %v9378, %v9380
    %v9382 = vadd.f32 %v9378, %v9381
    %vm9383 = vweird.f32 %v8186
    %vm9384 = vweird.f32 %v9378
    %vm9385 = vmor %vm9383, %vm9384
    %v9386 = vsel %vm9385, %v9378, %v9382
    %v9387 = vand.u32 2147483647, %v8186
    %vm9388 = vcmp.eq.f32.partialorder %v9387, 8.507059e+37
    %v9389 = vand.u32 %v8186, 2147483648
    %v9390 = vor.u32 1.1754944e-38, %v9389
    %v9391 = vsel %vm9388, %v9390, %v9386
    %v9392 = vmul.f32 1.0, %v9391
    %v9393 = vrcp.pop %v8187
    %v9394 = vmul.f32 %v8187, %v9393
    %v9395 = vsub.f32 1.0, %v9394
    %v9396 = vmul.f32 %v9393, %v9395
    %v9397 = vadd.f32 %v9393, %v9396
    %vm9398 = vweird.f32 %v8187
    %vm9399 = vweird.f32 %v9393
    %vm9400 = vmor %vm9398, %vm9399
    %v9401 = vsel %vm9400, %v9393, %v9397
    %v9402 = vand.u32 2147483647, %v8187
    %vm9403 = vcmp.eq.f32.partialorder %v9402, 8.507059e+37
    %v9404 = vand.u32 %v8187, 2147483648
    %v9405 = vor.u32 1.1754944e-38, %v9404
    %v9406 = vsel %vm9403, %v9405, %v9401
    %v9407 = vmul.f32 1.0, %v9406
    %v9408 = vrcp.pop %v8188
    %v9409 = vmul.f32 %v8188, %v9408
    %v9410 = vsub.f32 1.0, %v9409
    %v9411 = vmul.f32 %v9408, %v9410
    %v9412 = vadd.f32 %v9408, %v9411
    %vm9413 = vweird.f32 %v8188
    %vm9414 = vweird.f32 %v9408
    %vm9415 = vmor %vm9413, %vm9414
    %v9416 = vsel %vm9415, %v9408, %v9412
    %v9417 = vand.u32 2147483647, %v8188
    %vm9418 = vcmp.eq.f32.partialorder %v9417, 8.507059e+37
    %v9419 = vand.u32 %v8188, 2147483648
    %v9420 = vor.u32 1.1754944e-38, %v9419
    %v9421 = vsel %vm9418, %v9420, %v9416
    %v9422 = vmul.f32 1.0, %v9421
    %v9423 = vrcp.pop %v8189
    %v9424 = vmul.f32 %v8189, %v9423
    %v9425 = vsub.f32 1.0, %v9424
    %v9426 = vmul.f32 %v9423, %v9425
    %v9427 = vadd.f32 %v9423, %v9426
    %vm9428 = vweird.f32 %v8189
    %vm9429 = vweird.f32 %v9423
    %vm9430 = vmor %vm9428, %vm9429
    %v9431 = vsel %vm9430, %v9423, %v9427
    %v9432 = vand.u32 2147483647, %v8189
    %vm9433 = vcmp.eq.f32.partialorder %v9432, 8.507059e+37
    %v9434 = vand.u32 %v8189, 2147483648
    %v9435 = vor.u32 1.1754944e-38, %v9434
    %v9436 = vsel %vm9433, %v9435, %v9431
    %v9437 = vmul.f32 1.0, %v9436
    %v9438 = vrcp.pop %v8190
    %v9439 = vmul.f32 %v8190, %v9438
    %v9440 = vsub.f32 1.0, %v9439
    %v9441 = vmul.f32 %v9438, %v9440
    %v9442 = vadd.f32 %v9438, %v9441
    %vm9443 = vweird.f32 %v8190
    %vm9444 = vweird.f32 %v9438
    %vm9445 = vmor %vm9443, %vm9444
    %v9446 = vsel %vm9445, %v9438, %v9442
    %v9447 = vand.u32 2147483647, %v8190
    %vm9448 = vcmp.eq.f32.partialorder %v9447, 8.507059e+37
    %v9449 = vand.u32 %v8190, 2147483648
    %v9450 = vor.u32 1.1754944e-38, %v9449
    %v9451 = vsel %vm9448, %v9450, %v9446
    %v9452 = vmul.f32 1.0, %v9451
    %v9453 = vrcp.pop %v8191
    %v9454 = vmul.f32 %v8191, %v9453
    %v9455 = vsub.f32 1.0, %v9454
    %v9456 = vmul.f32 %v9453, %v9455
    %v9457 = vadd.f32 %v9453, %v9456
    %vm9458 = vweird.f32 %v8191
    %vm9459 = vweird.f32 %v9453
    %vm9460 = vmor %vm9458, %vm9459
    %v9461 = vsel %vm9460, %v9453, %v9457
    %v9462 = vand.u32 2147483647, %v8191
    %vm9463 = vcmp.eq.f32.partialorder %v9462, 8.507059e+37
    %v9464 = vand.u32 %v8191, 2147483648
    %v9465 = vor.u32 1.1754944e-38, %v9464
    %v9466 = vsel %vm9463, %v9465, %v9461
    %v9467 = vmul.f32 1.0, %v9466
    %v9468 = vrcp.pop %v8192
    %v9469 = vmul.f32 %v8192, %v9468
    %v9470 = vsub.f32 1.0, %v9469
    %v9471 = vmul.f32 %v9468, %v9470
    %v9472 = vadd.f32 %v9468, %v9471
    %vm9473 = vweird.f32 %v8192
    %vm9474 = vweird.f32 %v9468
    %vm9475 = vmor %vm9473, %vm9474
    %v9476 = vsel %vm9475, %v9468, %v9472
    %v9477 = vand.u32 2147483647, %v8192
    %vm9478 = vcmp.eq.f32.partialorder %v9477, 8.507059e+37
    %v9479 = vand.u32 %v8192, 2147483648
    %v9480 = vor.u32 1.1754944e-38, %v9479
    %v9481 = vsel %vm9478, %v9480, %v9476
    %v9482 = vmul.f32 1.0, %v9481
    %v9483 = vrcp.pop %v8193
    %v9484 = vmul.f32 %v8193, %v9483
    %v9485 = vsub.f32 1.0, %v9484
    %v9486 = vmul.f32 %v9483, %v9485
    %v9487 = vadd.f32 %v9483, %v9486
    %vm9488 = vweird.f32 %v8193
    %vm9489 = vweird.f32 %v9483
    %vm9490 = vmor %vm9488, %vm9489
    %v9491 = vsel %vm9490, %v9483, %v9487
    %v9492 = vand.u32 2147483647, %v8193
    %vm9493 = vcmp.eq.f32.partialorder %v9492, 8.507059e+37
    %v9494 = vand.u32 %v8193, 2147483648
    %v9495 = vor.u32 1.1754944e-38, %v9494
    %v9496 = vsel %vm9493, %v9495, %v9491
    %v9497 = vmul.f32 1.0, %v9496
    %v9498 = vrcp.pop %v8194
    %v9499 = vmul.f32 %v8194, %v9498
    %v9500 = vsub.f32 1.0, %v9499
    %v9501 = vmul.f32 %v9498, %v9500
    %v9502 = vadd.f32 %v9498, %v9501
    %vm9503 = vweird.f32 %v8194
    %vm9504 = vweird.f32 %v9498
    %vm9505 = vmor %vm9503, %vm9504
    %v9506 = vsel %vm9505, %v9498, %v9502
    %v9507 = vand.u32 2147483647, %v8194
    %vm9508 = vcmp.eq.f32.partialorder %v9507, 8.507059e+37
    %v9509 = vand.u32 %v8194, 2147483648
    %v9510 = vor.u32 1.1754944e-38, %v9509
    %v9511 = vsel %vm9508, %v9510, %v9506
    %v9512 = vmul.f32 1.0, %v9511
    %v9513 = vrcp.pop %v8195
    %v9514 = vmul.f32 %v8195, %v9513
    %v9515 = vsub.f32 1.0, %v9514
    %v9516 = vmul.f32 %v9513, %v9515
    %v9517 = vadd.f32 %v9513, %v9516
    %vm9518 = vweird.f32 %v8195
    %vm9519 = vweird.f32 %v9513
    %vm9520 = vmor %vm9518, %vm9519
    %v9521 = vsel %vm9520, %v9513, %v9517
    %v9522 = vand.u32 2147483647, %v8195
    %vm9523 = vcmp.eq.f32.partialorder %v9522, 8.507059e+37
    %v9524 = vand.u32 %v8195, 2147483648
    %v9525 = vor.u32 1.1754944e-38, %v9524
    %v9526 = vsel %vm9523, %v9525, %v9521
    %v9527 = vmul.f32 1.0, %v9526
    %v9528 = vrcp.pop %v8196
    %v9529 = vmul.f32 %v8196, %v9528
    %v9530 = vsub.f32 1.0, %v9529
    %v9531 = vmul.f32 %v9528, %v9530
    %v9532 = vadd.f32 %v9528, %v9531
    %vm9533 = vweird.f32 %v8196
    %vm9534 = vweird.f32 %v9528
    %vm9535 = vmor %vm9533, %vm9534
    %v9536 = vsel %vm9535, %v9528, %v9532
    %v9537 = vand.u32 2147483647, %v8196
    %vm9538 = vcmp.eq.f32.partialorder %v9537, 8.507059e+37
    %v9539 = vand.u32 %v8196, 2147483648
    %v9540 = vor.u32 1.1754944e-38, %v9539
    %v9541 = vsel %vm9538, %v9540, %v9536
    %v9542 = vmul.f32 1.0, %v9541
    %v9543 = vrcp.pop %v8197
    %v9544 = vmul.f32 %v8197, %v9543
    %v9545 = vsub.f32 1.0, %v9544
    %v9546 = vmul.f32 %v9543, %v9545
    %v9547 = vadd.f32 %v9543, %v9546
    %vm9548 = vweird.f32 %v8197
    %vm9549 = vweird.f32 %v9543
    %vm9550 = vmor %vm9548, %vm9549
    %v9551 = vsel %vm9550, %v9543, %v9547
    %v9552 = vand.u32 2147483647, %v8197
    %vm9553 = vcmp.eq.f32.partialorder %v9552, 8.507059e+37
    %v9554 = vand.u32 %v8197, 2147483648
    %v9555 = vor.u32 1.1754944e-38, %v9554
    %v9556 = vsel %vm9553, %v9555, %v9551
    %v9557 = vmul.f32 1.0, %v9556
    %v9558 = vrcp.pop %v8198
    %v9559 = vmul.f32 %v8198, %v9558
    %v9560 = vsub.f32 1.0, %v9559
    %v9561 = vmul.f32 %v9558, %v9560
    %v9562 = vadd.f32 %v9558, %v9561
    %vm9563 = vweird.f32 %v8198
    %vm9564 = vweird.f32 %v9558
    %vm9565 = vmor %vm9563, %vm9564
    %v9566 = vsel %vm9565, %v9558, %v9562
    %v9567 = vand.u32 2147483647, %v8198
    %vm9568 = vcmp.eq.f32.partialorder %v9567, 8.507059e+37
    %v9569 = vand.u32 %v8198, 2147483648
    %v9570 = vor.u32 1.1754944e-38, %v9569
    %v9571 = vsel %vm9568, %v9570, %v9566
    %v9572 = vmul.f32 1.0, %v9571
    %v9573 = vrcp.pop %v8199
    %v9574 = vmul.f32 %v8199, %v9573
    %v9575 = vsub.f32 1.0, %v9574
    %v9576 = vmul.f32 %v9573, %v9575
    %v9577 = vadd.f32 %v9573, %v9576
    %vm9578 = vweird.f32 %v8199
    %vm9579 = vweird.f32 %v9573
    %vm9580 = vmor %vm9578, %vm9579
    %v9581 = vsel %vm9580, %v9573, %v9577
    %v9582 = vand.u32 2147483647, %v8199
    %vm9583 = vcmp.eq.f32.partialorder %v9582, 8.507059e+37
    %v9584 = vand.u32 %v8199, 2147483648
    %v9585 = vor.u32 1.1754944e-38, %v9584
    %v9586 = vsel %vm9583, %v9585, %v9581
    %v9587 = vmul.f32 1.0, %v9586
    %v9588 = vrcp.pop %v8200
    %v9589 = vmul.f32 %v8200, %v9588
    %v9590 = vsub.f32 1.0, %v9589
    %v9591 = vmul.f32 %v9588, %v9590
    %v9592 = vadd.f32 %v9588, %v9591
    %vm9593 = vweird.f32 %v8200
    %vm9594 = vweird.f32 %v9588
    %vm9595 = vmor %vm9593, %vm9594
    %v9596 = vsel %vm9595, %v9588, %v9592
    %v9597 = vand.u32 2147483647, %v8200
    %vm9598 = vcmp.eq.f32.partialorder %v9597, 8.507059e+37
    %v9599 = vand.u32 %v8200, 2147483648
    %v9600 = vor.u32 1.1754944e-38, %v9599
    %v9601 = vsel %vm9598, %v9600, %v9596
    %v9602 = vmul.f32 1.0, %v9601
    %v9603 = vrcp.pop %v8201
    %v9604 = vmul.f32 %v8201, %v9603
    %v9605 = vsub.f32 1.0, %v9604
    %v9606 = vmul.f32 %v9603, %v9605
    %v9607 = vadd.f32 %v9603, %v9606
    %vm9608 = vweird.f32 %v8201
    %vm9609 = vweird.f32 %v9603
    %vm9610 = vmor %vm9608, %vm9609
    %v9611 = vsel %vm9610, %v9603, %v9607
    %v9612 = vand.u32 2147483647, %v8201
    %vm9613 = vcmp.eq.f32.partialorder %v9612, 8.507059e+37
    %v9614 = vand.u32 %v8201, 2147483648
    %v9615 = vor.u32 1.1754944e-38, %v9614
    %v9616 = vsel %vm9613, %v9615, %v9611
    %v9617 = vmul.f32 1.0, %v9616
    %v9618 = vrcp.pop %v8202
    %v9619 = vmul.f32 %v8202, %v9618
    %v9620 = vsub.f32 1.0, %v9619
    %v9621 = vmul.f32 %v9618, %v9620
    %v9622 = vadd.f32 %v9618, %v9621
    %vm9623 = vweird.f32 %v8202
    %vm9624 = vweird.f32 %v9618
    %vm9625 = vmor %vm9623, %vm9624
    %v9626 = vsel %vm9625, %v9618, %v9622
    %v9627 = vand.u32 2147483647, %v8202
    %vm9628 = vcmp.eq.f32.partialorder %v9627, 8.507059e+37
    %v9629 = vand.u32 %v8202, 2147483648
    %v9630 = vor.u32 1.1754944e-38, %v9629
    %v9631 = vsel %vm9628, %v9630, %v9626
    %v9632 = vmul.f32 1.0, %v9631
    %v9633 = vrcp.pop %v8203
    %v9634 = vmul.f32 %v8203, %v9633
    %v9635 = vsub.f32 1.0, %v9634
    %v9636 = vmul.f32 %v9633, %v9635
    %v9637 = vadd.f32 %v9633, %v9636
    %vm9638 = vweird.f32 %v8203
    %vm9639 = vweird.f32 %v9633
    %vm9640 = vmor %vm9638, %vm9639
    %v9641 = vsel %vm9640, %v9633, %v9637
    %v9642 = vand.u32 2147483647, %v8203
    %vm9643 = vcmp.eq.f32.partialorder %v9642, 8.507059e+37
    %v9644 = vand.u32 %v8203, 2147483648
    %v9645 = vor.u32 1.1754944e-38, %v9644
    %v9646 = vsel %vm9643, %v9645, %v9641
    %v9647 = vmul.f32 1.0, %v9646
    %v9648 = vrcp.pop %v8204
    %v9649 = vmul.f32 %v8204, %v9648
    %v9650 = vsub.f32 1.0, %v9649
    %v9651 = vmul.f32 %v9648, %v9650
    %v9652 = vadd.f32 %v9648, %v9651
    %vm9653 = vweird.f32 %v8204
    %vm9654 = vweird.f32 %v9648
    %vm9655 = vmor %vm9653, %vm9654
    %v9656 = vsel %vm9655, %v9648, %v9652
    %v9657 = vand.u32 2147483647, %v8204
    %vm9658 = vcmp.eq.f32.partialorder %v9657, 8.507059e+37
    %v9659 = vand.u32 %v8204, 2147483648
    %v9660 = vor.u32 1.1754944e-38, %v9659
    %v9661 = vsel %vm9658, %v9660, %v9656
    %v9662 = vmul.f32 1.0, %v9661
    %v9663 = vrcp.pop %v8205
    %v9664 = vmul.f32 %v8205, %v9663
    %v9665 = vsub.f32 1.0, %v9664
    %v9666 = vmul.f32 %v9663, %v9665
    %v9667 = vadd.f32 %v9663, %v9666
    %vm9668 = vweird.f32 %v8205
    %vm9669 = vweird.f32 %v9663
    %vm9670 = vmor %vm9668, %vm9669
    %v9671 = vsel %vm9670, %v9663, %v9667
    %v9672 = vand.u32 2147483647, %v8205
    %vm9673 = vcmp.eq.f32.partialorder %v9672, 8.507059e+37
    %v9674 = vand.u32 %v8205, 2147483648
    %v9675 = vor.u32 1.1754944e-38, %v9674
    %v9676 = vsel %vm9673, %v9675, %v9671
    %v9677 = vmul.f32 1.0, %v9676
    %v9678 = vrcp.pop %v8206
    %v9679 = vmul.f32 %v8206, %v9678
    %v9680 = vsub.f32 1.0, %v9679
    %v9681 = vmul.f32 %v9678, %v9680
    %v9682 = vadd.f32 %v9678, %v9681
    %vm9683 = vweird.f32 %v8206
    %vm9684 = vweird.f32 %v9678
    %vm9685 = vmor %vm9683, %vm9684
    %v9686 = vsel %vm9685, %v9678, %v9682
    %v9687 = vand.u32 2147483647, %v8206
    %vm9688 = vcmp.eq.f32.partialorder %v9687, 8.507059e+37
    %v9689 = vand.u32 %v8206, 2147483648
    %v9690 = vor.u32 1.1754944e-38, %v9689
    %v9691 = vsel %vm9688, %v9690, %v9686
    %v9692 = vmul.f32 1.0, %v9691
    %v9693 = vrcp.pop %v8207
    %v9694 = vmul.f32 %v8207, %v9693
    %v9695 = vsub.f32 1.0, %v9694
    %v9696 = vmul.f32 %v9693, %v9695
    %v9697 = vadd.f32 %v9693, %v9696
    %vm9698 = vweird.f32 %v8207
    %vm9699 = vweird.f32 %v9693
    %vm9700 = vmor %vm9698, %vm9699
    %v9701 = vsel %vm9700, %v9693, %v9697
    %v9702 = vand.u32 2147483647, %v8207
    %vm9703 = vcmp.eq.f32.partialorder %v9702, 8.507059e+37
    %v9704 = vand.u32 %v8207, 2147483648
    %v9705 = vor.u32 1.1754944e-38, %v9704
    %v9706 = vsel %vm9703, %v9705, %v9701
    %v9707 = vmul.f32 1.0, %v9706
    %v9708 = vrcp.pop %v8208
    %v9709 = vmul.f32 %v8208, %v9708
    %v9710 = vsub.f32 1.0, %v9709
    %v9711 = vmul.f32 %v9708, %v9710
    %v9712 = vadd.f32 %v9708, %v9711
    %vm9713 = vweird.f32 %v8208
    %vm9714 = vweird.f32 %v9708
    %vm9715 = vmor %vm9713, %vm9714
    %v9716 = vsel %vm9715, %v9708, %v9712
    %v9717 = vand.u32 2147483647, %v8208
    %vm9718 = vcmp.eq.f32.partialorder %v9717, 8.507059e+37
    %v9719 = vand.u32 %v8208, 2147483648
    %v9720 = vor.u32 1.1754944e-38, %v9719
    %v9721 = vsel %vm9718, %v9720, %v9716
    %v9722 = vmul.f32 1.0, %v9721
    %v9723 = vrcp.pop %v8209
    %v9724 = vmul.f32 %v8209, %v9723
    %v9725 = vsub.f32 1.0, %v9724
    %v9726 = vmul.f32 %v9723, %v9725
    %v9727 = vadd.f32 %v9723, %v9726
    %vm9728 = vweird.f32 %v8209
    %vm9729 = vweird.f32 %v9723
    %vm9730 = vmor %vm9728, %vm9729
    %v9731 = vsel %vm9730, %v9723, %v9727
    %v9732 = vand.u32 2147483647, %v8209
    %vm9733 = vcmp.eq.f32.partialorder %v9732, 8.507059e+37
    %v9734 = vand.u32 %v8209, 2147483648
    %v9735 = vor.u32 1.1754944e-38, %v9734
    %v9736 = vsel %vm9733, %v9735, %v9731
    %v9737 = vmul.f32 1.0, %v9736
    %v9738 = vrcp.pop %v8210
    %v9739 = vmul.f32 %v8210, %v9738
    %v9740 = vsub.f32 1.0, %v9739
    %v9741 = vmul.f32 %v9738, %v9740
    %v9742 = vadd.f32 %v9738, %v9741
    %vm9743 = vweird.f32 %v8210
    %vm9744 = vweird.f32 %v9738
    %vm9745 = vmor %vm9743, %vm9744
    %v9746 = vsel %vm9745, %v9738, %v9742
    %v9747 = vand.u32 2147483647, %v8210
    %vm9748 = vcmp.eq.f32.partialorder %v9747, 8.507059e+37
    %v9749 = vand.u32 %v8210, 2147483648
    %v9750 = vor.u32 1.1754944e-38, %v9749
    %v9751 = vsel %vm9748, %v9750, %v9746
    %v9752 = vmul.f32 1.0, %v9751
    %v9753 = vrcp.pop %v8211
    %v9754 = vmul.f32 %v8211, %v9753
    %v9755 = vsub.f32 1.0, %v9754
    %v9756 = vmul.f32 %v9753, %v9755
    %v9757 = vadd.f32 %v9753, %v9756
    %vm9758 = vweird.f32 %v8211
    %vm9759 = vweird.f32 %v9753
    %vm9760 = vmor %vm9758, %vm9759
    %v9761 = vsel %vm9760, %v9753, %v9757
    %v9762 = vand.u32 2147483647, %v8211
    %vm9763 = vcmp.eq.f32.partialorder %v9762, 8.507059e+37
    %v9764 = vand.u32 %v8211, 2147483648
    %v9765 = vor.u32 1.1754944e-38, %v9764
    %v9766 = vsel %vm9763, %v9765, %v9761
    %v9767 = vmul.f32 1.0, %v9766
    %v9768 = vrcp.pop %v8212
    %v9769 = vmul.f32 %v8212, %v9768
    %v9770 = vsub.f32 1.0, %v9769
    %v9771 = vmul.f32 %v9768, %v9770
    %v9772 = vadd.f32 %v9768, %v9771
    %vm9773 = vweird.f32 %v8212
    %vm9774 = vweird.f32 %v9768
    %vm9775 = vmor %vm9773, %vm9774
    %v9776 = vsel %vm9775, %v9768, %v9772
    %v9777 = vand.u32 2147483647, %v8212
    %vm9778 = vcmp.eq.f32.partialorder %v9777, 8.507059e+37
    %v9779 = vand.u32 %v8212, 2147483648
    %v9780 = vor.u32 1.1754944e-38, %v9779
    %v9781 = vsel %vm9778, %v9780, %v9776
    %v9782 = vmul.f32 1.0, %v9781
    %v9783 = vrcp.pop %v8213
    %v9784 = vmul.f32 %v8213, %v9783
    %v9785 = vsub.f32 1.0, %v9784
    %v9786 = vmul.f32 %v9783, %v9785
    %v9787 = vadd.f32 %v9783, %v9786
    %vm9788 = vweird.f32 %v8213
    %vm9789 = vweird.f32 %v9783
    %vm9790 = vmor %vm9788, %vm9789
    %v9791 = vsel %vm9790, %v9783, %v9787
    %v9792 = vand.u32 2147483647, %v8213
    %vm9793 = vcmp.eq.f32.partialorder %v9792, 8.507059e+37
    %v9794 = vand.u32 %v8213, 2147483648
    %v9795 = vor.u32 1.1754944e-38, %v9794
    %v9796 = vsel %vm9793, %v9795, %v9791
    %v9797 = vmul.f32 1.0, %v9796
    %v9798 = vrcp.pop %v8214
    %v9799 = vmul.f32 %v8214, %v9798
    %v9800 = vsub.f32 1.0, %v9799
    %v9801 = vmul.f32 %v9798, %v9800
    %v9802 = vadd.f32 %v9798, %v9801
    %vm9803 = vweird.f32 %v8214
    %vm9804 = vweird.f32 %v9798
    %vm9805 = vmor %vm9803, %vm9804
    %v9806 = vsel %vm9805, %v9798, %v9802
    %v9807 = vand.u32 2147483647, %v8214
    %vm9808 = vcmp.eq.f32.partialorder %v9807, 8.507059e+37
    %v9809 = vand.u32 %v8214, 2147483648
    %v9810 = vor.u32 1.1754944e-38, %v9809
    %v9811 = vsel %vm9808, %v9810, %v9806
    %v9812 = vmul.f32 1.0, %v9811
    %v9813 = vrcp.pop %v8215
    %v9814 = vmul.f32 %v8215, %v9813
    %v9815 = vsub.f32 1.0, %v9814
    %v9816 = vmul.f32 %v9813, %v9815
    %v9817 = vadd.f32 %v9813, %v9816
    %vm9818 = vweird.f32 %v8215
    %vm9819 = vweird.f32 %v9813
    %vm9820 = vmor %vm9818, %vm9819
    %v9821 = vsel %vm9820, %v9813, %v9817
    %v9822 = vand.u32 2147483647, %v8215
    %vm9823 = vcmp.eq.f32.partialorder %v9822, 8.507059e+37
    %v9824 = vand.u32 %v8215, 2147483648
    %v9825 = vor.u32 1.1754944e-38, %v9824
    %v9826 = vsel %vm9823, %v9825, %v9821
    %v9827 = vmul.f32 1.0, %v9826
    %v9828 = vrcp.pop %v8216
    %v9829 = vmul.f32 %v8216, %v9828
    %v9830 = vsub.f32 1.0, %v9829
    %v9831 = vmul.f32 %v9828, %v9830
    %v9832 = vadd.f32 %v9828, %v9831
    %vm9833 = vweird.f32 %v8216
    %vm9834 = vweird.f32 %v9828
    %vm9835 = vmor %vm9833, %vm9834
    %v9836 = vsel %vm9835, %v9828, %v9832
    %v9837 = vand.u32 2147483647, %v8216
    %vm9838 = vcmp.eq.f32.partialorder %v9837, 8.507059e+37
    %v9839 = vand.u32 %v8216, 2147483648
    %v9840 = vor.u32 1.1754944e-38, %v9839
    %v9841 = vsel %vm9838, %v9840, %v9836
    %v9842 = vmul.f32 1.0, %v9841
    %v9843 = vrcp.pop %v8217
    %v9844 = vmul.f32 %v8217, %v9843
    %v9845 = vsub.f32 1.0, %v9844
    %v9846 = vmul.f32 %v9843, %v9845
    %v9847 = vadd.f32 %v9843, %v9846
    %vm9848 = vweird.f32 %v8217
    %vm9849 = vweird.f32 %v9843
    %vm9850 = vmor %vm9848, %vm9849
    %v9851 = vsel %vm9850, %v9843, %v9847
    %v9852 = vand.u32 2147483647, %v8217
    %vm9853 = vcmp.eq.f32.partialorder %v9852, 8.507059e+37
    %v9854 = vand.u32 %v8217, 2147483648
    %v9855 = vor.u32 1.1754944e-38, %v9854
    %v9856 = vsel %vm9853, %v9855, %v9851
    %v9857 = vmul.f32 1.0, %v9856
    %v9858 = vrcp.pop %v8218
    %v9859 = vmul.f32 %v8218, %v9858
    %v9860 = vsub.f32 1.0, %v9859
    %v9861 = vmul.f32 %v9858, %v9860
    %v9862 = vadd.f32 %v9858, %v9861
    %vm9863 = vweird.f32 %v8218
    %vm9864 = vweird.f32 %v9858
    %vm9865 = vmor %vm9863, %vm9864
    %v9866 = vsel %vm9865, %v9858, %v9862
    %v9867 = vand.u32 2147483647, %v8218
    %vm9868 = vcmp.eq.f32.partialorder %v9867, 8.507059e+37
    %v9869 = vand.u32 %v8218, 2147483648
    %v9870 = vor.u32 1.1754944e-38, %v9869
    %v9871 = vsel %vm9868, %v9870, %v9866
    %v9872 = vmul.f32 1.0, %v9871
    %v9873 = vrcp.pop %v8219
    %v9874 = vmul.f32 %v8219, %v9873
    %v9875 = vsub.f32 1.0, %v9874
    %v9876 = vmul.f32 %v9873, %v9875
    %v9877 = vadd.f32 %v9873, %v9876
    %vm9878 = vweird.f32 %v8219
    %vm9879 = vweird.f32 %v9873
    %vm9880 = vmor %vm9878, %vm9879
    %v9881 = vsel %vm9880, %v9873, %v9877
    %v9882 = vand.u32 2147483647, %v8219
    %vm9883 = vcmp.eq.f32.partialorder %v9882, 8.507059e+37
    %v9884 = vand.u32 %v8219, 2147483648
    %v9885 = vor.u32 1.1754944e-38, %v9884
    %v9886 = vsel %vm9883, %v9885, %v9881
    %v9887 = vmul.f32 1.0, %v9886
    %v9888 = vrcp.pop %v8220
    %v9889 = vmul.f32 %v8220, %v9888
    %v9890 = vsub.f32 1.0, %v9889
    %v9891 = vmul.f32 %v9888, %v9890
    %v9892 = vadd.f32 %v9888, %v9891
    %vm9893 = vweird.f32 %v8220
    %vm9894 = vweird.f32 %v9888
    %vm9895 = vmor %vm9893, %vm9894
    %v9896 = vsel %vm9895, %v9888, %v9892
    %v9897 = vand.u32 2147483647, %v8220
    %vm9898 = vcmp.eq.f32.partialorder %v9897, 8.507059e+37
    %v9899 = vand.u32 %v8220, 2147483648
    %v9900 = vor.u32 1.1754944e-38, %v9899
    %v9901 = vsel %vm9898, %v9900, %v9896
    %v9902 = vmul.f32 1.0, %v9901
    %v9903 = vrcp.pop %v8221
    %v9904 = vmul.f32 %v8221, %v9903
    %v9905 = vsub.f32 1.0, %v9904
    %v9906 = vmul.f32 %v9903, %v9905
    %v9907 = vadd.f32 %v9903, %v9906
    %vm9908 = vweird.f32 %v8221
    %vm9909 = vweird.f32 %v9903
    %vm9910 = vmor %vm9908, %vm9909
    %v9911 = vsel %vm9910, %v9903, %v9907
    %v9912 = vand.u32 2147483647, %v8221
    %vm9913 = vcmp.eq.f32.partialorder %v9912, 8.507059e+37
    %v9914 = vand.u32 %v8221, 2147483648
    %v9915 = vor.u32 1.1754944e-38, %v9914
    %v9916 = vsel %vm9913, %v9915, %v9911
    %v9917 = vmul.f32 1.0, %v9916
    %v9918 = vrcp.pop %v8222
    %v9919 = vmul.f32 %v8222, %v9918
    %v9920 = vsub.f32 1.0, %v9919
    %v9921 = vmul.f32 %v9918, %v9920
    %v9922 = vadd.f32 %v9918, %v9921
    %vm9923 = vweird.f32 %v8222
    %vm9924 = vweird.f32 %v9918
    %vm9925 = vmor %vm9923, %vm9924
    %v9926 = vsel %vm9925, %v9918, %v9922
    %v9927 = vand.u32 2147483647, %v8222
    %vm9928 = vcmp.eq.f32.partialorder %v9927, 8.507059e+37
    %v9929 = vand.u32 %v8222, 2147483648
    %v9930 = vor.u32 1.1754944e-38, %v9929
    %v9931 = vsel %vm9928, %v9930, %v9926
    %v9932 = vmul.f32 1.0, %v9931
    %v9933 = vrcp.pop %v8223
    %v9934 = vmul.f32 %v8223, %v9933
    %v9935 = vsub.f32 1.0, %v9934
    %v9936 = vmul.f32 %v9933, %v9935
    %v9937 = vadd.f32 %v9933, %v9936
    %vm9938 = vweird.f32 %v8223
    %vm9939 = vweird.f32 %v9933
    %vm9940 = vmor %vm9938, %vm9939
    %v9941 = vsel %vm9940, %v9933, %v9937
    %v9942 = vand.u32 2147483647, %v8223
    %vm9943 = vcmp.eq.f32.partialorder %v9942, 8.507059e+37
    %v9944 = vand.u32 %v8223, 2147483648
    %v9945 = vor.u32 1.1754944e-38, %v9944
    %v9946 = vsel %vm9943, %v9945, %v9941
    %v9947 = vmul.f32 1.0, %v9946
    %v9948 = vrcp.pop %v8224
    %v9949 = vmul.f32 %v8224, %v9948
    %v9950 = vsub.f32 1.0, %v9949
    %v9951 = vmul.f32 %v9948, %v9950
    %v9952 = vadd.f32 %v9948, %v9951
    %vm9953 = vweird.f32 %v8224
    %vm9954 = vweird.f32 %v9948
    %vm9955 = vmor %vm9953, %vm9954
    %v9956 = vsel %vm9955, %v9948, %v9952
    %v9957 = vand.u32 2147483647, %v8224
    %vm9958 = vcmp.eq.f32.partialorder %v9957, 8.507059e+37
    %v9959 = vand.u32 %v8224, 2147483648
    %v9960 = vor.u32 1.1754944e-38, %v9959
    %v9961 = vsel %vm9958, %v9960, %v9956
    %v9962 = vmul.f32 1.0, %v9961
    %v9963 = vrcp.pop %v8225
    %v9964 = vmul.f32 %v8225, %v9963
    %v9965 = vsub.f32 1.0, %v9964
    %v9966 = vmul.f32 %v9963, %v9965
    %v9967 = vadd.f32 %v9963, %v9966
    %vm9968 = vweird.f32 %v8225
    %vm9969 = vweird.f32 %v9963
    %vm9970 = vmor %vm9968, %vm9969
    %v9971 = vsel %vm9970, %v9963, %v9967
    %v9972 = vand.u32 2147483647, %v8225
    %vm9973 = vcmp.eq.f32.partialorder %v9972, 8.507059e+37
    %v9974 = vand.u32 %v8225, 2147483648
    %v9975 = vor.u32 1.1754944e-38, %v9974
    %v9976 = vsel %vm9973, %v9975, %v9971
    %v9977 = vmul.f32 1.0, %v9976
    %v9978 = vrcp.pop %v8226
    %v9979 = vmul.f32 %v8226, %v9978
    %v9980 = vsub.f32 1.0, %v9979
    %v9981 = vmul.f32 %v9978, %v9980
    %v9982 = vadd.f32 %v9978, %v9981
    %vm9983 = vweird.f32 %v8226
    %vm9984 = vweird.f32 %v9978
    %vm9985 = vmor %vm9983, %vm9984
    %v9986 = vsel %vm9985, %v9978, %v9982
    %v9987 = vand.u32 2147483647, %v8226
    %vm9988 = vcmp.eq.f32.partialorder %v9987, 8.507059e+37
    %v9989 = vand.u32 %v8226, 2147483648
    %v9990 = vor.u32 1.1754944e-38, %v9989
    %v9991 = vsel %vm9988, %v9990, %v9986
    %v9992 = vmul.f32 1.0, %v9991
    %v9993 = vrcp.pop %v8227
    %v9994 = vmul.f32 %v8227, %v9993
    %v9995 = vsub.f32 1.0, %v9994
    %v9996 = vmul.f32 %v9993, %v9995
    %v9997 = vadd.f32 %v9993, %v9996
    %vm9998 = vweird.f32 %v8227
    %vm9999 = vweird.f32 %v9993
    %vm10000 = vmor %vm9998, %vm9999
    %v10001 = vsel %vm10000, %v9993, %v9997
    %v10002 = vand.u32 2147483647, %v8227
    %vm10003 = vcmp.eq.f32.partialorder %v10002, 8.507059e+37
    %v10004 = vand.u32 %v8227, 2147483648
    %v10005 = vor.u32 1.1754944e-38, %v10004
    %v10006 = vsel %vm10003, %v10005, %v10001
    %v10007 = vmul.f32 1.0, %v10006
    %v10008 = vrcp.pop %v8228
    %v10009 = vmul.f32 %v8228, %v10008
    %v10010 = vsub.f32 1.0, %v10009
    %v10011 = vmul.f32 %v10008, %v10010
    %v10012 = vadd.f32 %v10008, %v10011
    %vm10013 = vweird.f32 %v8228
    %vm10014 = vweird.f32 %v10008
    %vm10015 = vmor %vm10013, %vm10014
    %v10016 = vsel %vm10015, %v10008, %v10012
    %v10017 = vand.u32 2147483647, %v8228
    %vm10018 = vcmp.eq.f32.partialorder %v10017, 8.507059e+37
    %v10019 = vand.u32 %v8228, 2147483648
    %v10020 = vor.u32 1.1754944e-38, %v10019
    %v10021 = vsel %vm10018, %v10020, %v10016
    %v10022 = vmul.f32 1.0, %v10021
    %v10023 = vrcp.pop %v8229
    %v10024 = vmul.f32 %v8229, %v10023
    %v10025 = vsub.f32 1.0, %v10024
    %v10026 = vmul.f32 %v10023, %v10025
    %v10027 = vadd.f32 %v10023, %v10026
    %vm10028 = vweird.f32 %v8229
    %vm10029 = vweird.f32 %v10023
    %vm10030 = vmor %vm10028, %vm10029
    %v10031 = vsel %vm10030, %v10023, %v10027
    %v10032 = vand.u32 2147483647, %v8229
    %vm10033 = vcmp.eq.f32.partialorder %v10032, 8.507059e+37
    %v10034 = vand.u32 %v8229, 2147483648
    %v10035 = vor.u32 1.1754944e-38, %v10034
    %v10036 = vsel %vm10033, %v10035, %v10031
    %v10037 = vmul.f32 1.0, %v10036
    %v10038 = vrcp.pop %v8230
    %v10039 = vmul.f32 %v8230, %v10038
    %v10040 = vsub.f32 1.0, %v10039
    %v10041 = vmul.f32 %v10038, %v10040
    %v10042 = vadd.f32 %v10038, %v10041
    %vm10043 = vweird.f32 %v8230
    %vm10044 = vweird.f32 %v10038
    %vm10045 = vmor %vm10043, %vm10044
    %v10046 = vsel %vm10045, %v10038, %v10042
    %v10047 = vand.u32 2147483647, %v8230
    %vm10048 = vcmp.eq.f32.partialorder %v10047, 8.507059e+37
    %v10049 = vand.u32 %v8230, 2147483648
    %v10050 = vor.u32 1.1754944e-38, %v10049
    %v10051 = vsel %vm10048, %v10050, %v10046
    %v10052 = vmul.f32 1.0, %v10051
    %v10053 = vrcp.pop %v8231
    %v10054 = vmul.f32 %v8231, %v10053
    %v10055 = vsub.f32 1.0, %v10054
    %v10056 = vmul.f32 %v10053, %v10055
    %v10057 = vadd.f32 %v10053, %v10056
    %vm10058 = vweird.f32 %v8231
    %vm10059 = vweird.f32 %v10053
    %vm10060 = vmor %vm10058, %vm10059
    %v10061 = vsel %vm10060, %v10053, %v10057
    %v10062 = vand.u32 2147483647, %v8231
    %vm10063 = vcmp.eq.f32.partialorder %v10062, 8.507059e+37
    %v10064 = vand.u32 %v8231, 2147483648
    %v10065 = vor.u32 1.1754944e-38, %v10064
    %v10066 = vsel %vm10063, %v10065, %v10061
    %v10067 = vmul.f32 1.0, %v10066
    %v10068 = vrcp.pop %v8232
    %v10069 = vmul.f32 %v8232, %v10068
    %v10070 = vsub.f32 1.0, %v10069
    %v10071 = vmul.f32 %v10068, %v10070
    %v10072 = vadd.f32 %v10068, %v10071
    %vm10073 = vweird.f32 %v8232
    %vm10074 = vweird.f32 %v10068
    %vm10075 = vmor %vm10073, %vm10074
    %v10076 = vsel %vm10075, %v10068, %v10072
    %v10077 = vand.u32 2147483647, %v8232
    %vm10078 = vcmp.eq.f32.partialorder %v10077, 8.507059e+37
    %v10079 = vand.u32 %v8232, 2147483648
    %v10080 = vor.u32 1.1754944e-38, %v10079
    %v10081 = vsel %vm10078, %v10080, %v10076
    %v10082 = vmul.f32 1.0, %v10081
    %v10083 = vrcp.pop %v8233
    %v10084 = vmul.f32 %v8233, %v10083
    %v10085 = vsub.f32 1.0, %v10084
    %v10086 = vmul.f32 %v10083, %v10085
    %v10087 = vadd.f32 %v10083, %v10086
    %vm10088 = vweird.f32 %v8233
    %vm10089 = vweird.f32 %v10083
    %vm10090 = vmor %vm10088, %vm10089
    %v10091 = vsel %vm10090, %v10083, %v10087
    %v10092 = vand.u32 2147483647, %v8233
    %vm10093 = vcmp.eq.f32.partialorder %v10092, 8.507059e+37
    %v10094 = vand.u32 %v8233, 2147483648
    %v10095 = vor.u32 1.1754944e-38, %v10094
    %v10096 = vsel %vm10093, %v10095, %v10091
    %v10097 = vmul.f32 1.0, %v10096
    %v10098 = vrcp.pop %v8234
    %v10099 = vmul.f32 %v8234, %v10098
    %v10100 = vsub.f32 1.0, %v10099
    %v10101 = vmul.f32 %v10098, %v10100
    %v10102 = vadd.f32 %v10098, %v10101
    %vm10103 = vweird.f32 %v8234
    %vm10104 = vweird.f32 %v10098
    %vm10105 = vmor %vm10103, %vm10104
    %v10106 = vsel %vm10105, %v10098, %v10102
    %v10107 = vand.u32 2147483647, %v8234
    %vm10108 = vcmp.eq.f32.partialorder %v10107, 8.507059e+37
    %v10109 = vand.u32 %v8234, 2147483648
    %v10110 = vor.u32 1.1754944e-38, %v10109
    %v10111 = vsel %vm10108, %v10110, %v10106
    %v10112 = vmul.f32 1.0, %v10111
    %v10113 = vrcp.pop %v8235
    %v10114 = vmul.f32 %v8235, %v10113
    %v10115 = vsub.f32 1.0, %v10114
    %v10116 = vmul.f32 %v10113, %v10115
    %v10117 = vadd.f32 %v10113, %v10116
    %vm10118 = vweird.f32 %v8235
    %vm10119 = vweird.f32 %v10113
    %vm10120 = vmor %vm10118, %vm10119
    %v10121 = vsel %vm10120, %v10113, %v10117
    %v10122 = vand.u32 2147483647, %v8235
    %vm10123 = vcmp.eq.f32.partialorder %v10122, 8.507059e+37
    %v10124 = vand.u32 %v8235, 2147483648
    %v10125 = vor.u32 1.1754944e-38, %v10124
    %v10126 = vsel %vm10123, %v10125, %v10121
    %v10127 = vmul.f32 1.0, %v10126
    %v10128 = vrcp.pop %v8236
    %v10129 = vmul.f32 %v8236, %v10128
    %v10130 = vsub.f32 1.0, %v10129
    %v10131 = vmul.f32 %v10128, %v10130
    %v10132 = vadd.f32 %v10128, %v10131
    %vm10133 = vweird.f32 %v8236
    %vm10134 = vweird.f32 %v10128
    %vm10135 = vmor %vm10133, %vm10134
    %v10136 = vsel %vm10135, %v10128, %v10132
    %v10137 = vand.u32 2147483647, %v8236
    %vm10138 = vcmp.eq.f32.partialorder %v10137, 8.507059e+37
    %v10139 = vand.u32 %v8236, 2147483648
    %v10140 = vor.u32 1.1754944e-38, %v10139
    %v10141 = vsel %vm10138, %v10140, %v10136
    %v10142 = vmul.f32 1.0, %v10141
    %v10143 = vrcp.pop %v8237
    %v10144 = vmul.f32 %v8237, %v10143
    %v10145 = vsub.f32 1.0, %v10144
    %v10146 = vmul.f32 %v10143, %v10145
    %v10147 = vadd.f32 %v10143, %v10146
    %vm10148 = vweird.f32 %v8237
    %vm10149 = vweird.f32 %v10143
    %vm10150 = vmor %vm10148, %vm10149
    %v10151 = vsel %vm10150, %v10143, %v10147
    %v10152 = vand.u32 2147483647, %v8237
    %vm10153 = vcmp.eq.f32.partialorder %v10152, 8.507059e+37
    %v10154 = vand.u32 %v8237, 2147483648
    %v10155 = vor.u32 1.1754944e-38, %v10154
    %v10156 = vsel %vm10153, %v10155, %v10151
    %v10157 = vmul.f32 1.0, %v10156
    %v10158 = vmul.f32 %v7343, %v8252
    %v10159 = vmul.f32 %v7346, %v8267
    %v10160 = vmul.f32 %v7349, %v8282
    %v10161 = vmul.f32 %v7352, %v8297
    %v10162 = vmul.f32 %v7355, %v8312
    %v10163 = vmul.f32 %v7358, %v8327
    %v10164 = vmul.f32 %v7361, %v8342
    %v10165 = vmul.f32 %v7364, %v8357
    %v10166 = vmul.f32 %v7367, %v8372
    %v10167 = vmul.f32 %v7370, %v8387
    %v10168 = vmul.f32 %v7373, %v8402
    %v10169 = vmul.f32 %v7376, %v8417
    %v10170 = vmul.f32 %v7379, %v8432
    %v10171 = vmul.f32 %v7382, %v8447
    %v10172 = vmul.f32 %v7385, %v8462
    %v10173 = vmul.f32 %v7388, %v8477
    %v10174 = vmul.f32 %v7391, %v8492
    %v10175 = vmul.f32 %v7394, %v8507
    %v10176 = vmul.f32 %v7397, %v8522
    %v10177 = vmul.f32 %v7400, %v8537
    %v10178 = vmul.f32 %v7403, %v8552
    %v10179 = vmul.f32 %v7406, %v8567
    %v10180 = vmul.f32 %v7409, %v8582
    %v10181 = vmul.f32 %v7412, %v8597
    %v10182 = vmul.f32 %v7415, %v8612
    %v10183 = vmul.f32 %v7418, %v8627
    %v10184 = vmul.f32 %v7421, %v8642
    %v10185 = vmul.f32 %v7424, %v8657
    %v10186 = vmul.f32 %v7427, %v8672
    %v10187 = vmul.f32 %v7430, %v8687
    %v10188 = vmul.f32 %v7433, %v8702
    %v10189 = vmul.f32 %v7436, %v8717
    %v10190 = vmul.f32 %v7439, %v8732
    %v10191 = vmul.f32 %v7442, %v8747
    %v10192 = vmul.f32 %v7445, %v8762
    %v10193 = vmul.f32 %v7448, %v8777
    %v10194 = vmul.f32 %v7451, %v8792
    %v10195 = vmul.f32 %v7454, %v8807
    %v10196 = vmul.f32 %v7457, %v8822
    %v10197 = vmul.f32 %v7460, %v8837
    %v10198 = vmul.f32 %v7463, %v8852
    %v10199 = vmul.f32 %v7466, %v8867
    %v10200 = vmul.f32 %v7469, %v8882
    %v10201 = vmul.f32 %v7472, %v8897
    %v10202 = vmul.f32 %v7475, %v8912
    %v10203 = vmul.f32 %v7478, %v8927
    %v10204 = vmul.f32 %v7481, %v8942
    %v10205 = vmul.f32 %v7484, %v8957
    %v10206 = vmul.f32 %v7487, %v8972
    %v10207 = vmul.f32 %v7490, %v8987
    %v10208 = vmul.f32 %v7493, %v9002
    %v10209 = vmul.f32 %v7496, %v9017
    %v10210 = vmul.f32 %v7499, %v9032
    %v10211 = vmul.f32 %v7502, %v9047
    %v10212 = vmul.f32 %v7505, %v9062
    %v10213 = vmul.f32 %v7508, %v9077
    %v10214 = vmul.f32 %v7511, %v9092
    %v10215 = vmul.f32 %v7514, %v9107
    %v10216 = vmul.f32 %v7517, %v9122
    %v10217 = vmul.f32 %v7520, %v9137
    %v10218 = vmul.f32 %v7523, %v9152
    %v10219 = vmul.f32 %v7526, %v9167
    %v10220 = vmul.f32 %v7529, %v9182
    %v10221 = vmul.f32 %v7532, %v9197
    %v10222 = vmul.f32 %v7535, %v9212
    %v10223 = vmul.f32 %v7538, %v9227
    %v10224 = vmul.f32 %v7541, %v9242
    %v10225 = vmul.f32 %v7544, %v9257
    %v10226 = vmul.f32 %v7547, %v9272
    %v10227 = vmul.f32 %v7550, %v9287
    %v10228 = vmul.f32 %v7553, %v9302
    %v10229 = vmul.f32 %v7556, %v9317
    %v10230 = vmul.f32 %v7559, %v9332
    %v10231 = vmul.f32 %v7562, %v9347
    %v10232 = vmul.f32 %v7565, %v9362
    %v10233 = vmul.f32 %v7568, %v9377
    %v10234 = vmul.f32 %v7571, %v9392
    %v10235 = vmul.f32 %v7574, %v9407
    %v10236 = vmul.f32 %v7577, %v9422
    %v10237 = vmul.f32 %v7580, %v9437
    %v10238 = vmul.f32 %v7583, %v9452
    %v10239 = vmul.f32 %v7586, %v9467
    %v10240 = vmul.f32 %v7589, %v9482
    %v10241 = vmul.f32 %v7592, %v9497
    %v10242 = vmul.f32 %v7595, %v9512
    %v10243 = vmul.f32 %v7598, %v9527
    %v10244 = vmul.f32 %v7601, %v9542
    %v10245 = vmul.f32 %v7604, %v9557
    %v10246 = vmul.f32 %v7607, %v9572
    %v10247 = vmul.f32 %v7610, %v9587
    %v10248 = vmul.f32 %v7613, %v9602
    %v10249 = vmul.f32 %v7616, %v9617
    %v10250 = vmul.f32 %v7619, %v9632
    %v10251 = vmul.f32 %v7622, %v9647
    %v10252 = vmul.f32 %v7625, %v9662
    %v10253 = vmul.f32 %v7628, %v9677
    %v10254 = vmul.f32 %v7631, %v9692
    %v10255 = vmul.f32 %v7634, %v9707
    %v10256 = vmul.f32 %v7637, %v9722
    %v10257 = vmul.f32 %v7640, %v9737
    %v10258 = vmul.f32 %v7643, %v9752
    %v10259 = vmul.f32 %v7646, %v9767
    %v10260 = vmul.f32 %v7649, %v9782
    %v10261 = vmul.f32 %v7652, %v9797
    %v10262 = vmul.f32 %v7655, %v9812
    %v10263 = vmul.f32 %v7658, %v9827
    %v10264 = vmul.f32 %v7661, %v9842
    %v10265 = vmul.f32 %v7664, %v9857
    %v10266 = vmul.f32 %v7667, %v9872
    %v10267 = vmul.f32 %v7670, %v9887
    %v10268 = vmul.f32 %v7673, %v9902
    %v10269 = vmul.f32 %v7676, %v9917
    %v10270 = vmul.f32 %v7679, %v9932
    %v10271 = vmul.f32 %v7682, %v9947
    %v10272 = vmul.f32 %v7685, %v9962
    %v10273 = vmul.f32 %v7688, %v9977
    %v10274 = vmul.f32 %v7691, %v9992
    %v10275 = vmul.f32 %v7694, %v10007
    %v10276 = vmul.f32 %v7697, %v10022
    %v10277 = vmul.f32 %v7700, %v10037
    %v10278 = vmul.f32 %v7703, %v10052
    %v10279 = vmul.f32 %v7706, %v10067
    %v10280 = vmul.f32 %v7709, %v10082
    %v10281 = vmul.f32 %v7712, %v10097
    %v10282 = vmul.f32 %v7715, %v10112
    %v10283 = vmul.f32 %v7718, %v10127
    %v10284 = vmul.f32 %v7721, %v10142
    %v10285 = vmul.f32 %v7724, %v10157
    %vm10286 = vcmask 15360
    %10287 = vst.msk [vmem:[#allocation2] sm:$0xff] %vm10286, 0.0
    %10288 = vst.msk [vmem:[#allocation2 + $0x8] sm:$0xff] %vm10286, 0.0
    %10289 = vst.msk [vmem:[#allocation2 + $0x10] sm:$0xff] %vm10286, 0.0
    %10290 = vst.msk [vmem:[#allocation2 + $0x18] sm:$0xff] %vm10286, 0.0
    %10291 = vst.msk [vmem:[#allocation2 + $0x20] sm:$0xff] %vm10286, 0.0
    %10292 = vst.msk [vmem:[#allocation2 + $0x28] sm:$0xff] %vm10286, 0.0
    %10293 = vst.msk [vmem:[#allocation2 + $0x30] sm:$0xff] %vm10286, 0.0
    %10294 = vst.msk [vmem:[#allocation2 + $0x38] sm:$0xff] %vm10286, 0.0
    %vm10295 = vcmask 294160
    %10296 = vst.msk [vmem:[#allocation2] sm:$0xff] %vm10295, 0.0
    %10297 = vst.msk [vmem:[#allocation2 + $0x8] sm:$0xff] %vm10295, 0.0
    %10298 = vst.msk [vmem:[#allocation2 + $0x10] sm:$0xff] %vm10295, 0.0
    %10299 = vst.msk [vmem:[#allocation2 + $0x18] sm:$0xff] %vm10295, 0.0
    %10300 = vst.msk [vmem:[#allocation2 + $0x20] sm:$0xff] %vm10295, 0.0
    %10301 = vst.msk [vmem:[#allocation2 + $0x28] sm:$0xff] %vm10295, 0.0
    %10302 = vst.msk [vmem:[#allocation2 + $0x30] sm:$0xff] %vm10295, 0.0
    %10303 = vst.msk [vmem:[#allocation2 + $0x38] sm:$0xff] %vm10295, 0.0
    %10304 = vst.msk [vmem:[#allocation3] sm:$0xff] %vm10286, 0.0
    %10305 = vst.msk [vmem:[#allocation3] sm:$0xff] %vm10295, 0.0
    %10314 = vrot.lane.b32.xlu0 %v10158, 2
    %v10315 = vpop.permute.xlu0 %10314
    %10316 = vrot.lane.b32.xlu0 %v10159, 2
    %v10317 = vpop.permute.xlu0 %10316
    %10318 = vrot.lane.b32.xlu0 %v10160, 2
    %v10319 = vpop.permute.xlu0 %10318
    %10320 = vrot.lane.b32.xlu0 %v10161, 2
    %v10321 = vpop.permute.xlu0 %10320
    %10322 = vrot.lane.b32.xlu0 %v10162, 2
    %v10323 = vpop.permute.xlu0 %10322
    %10324 = vrot.lane.b32.xlu0 %v10163, 2
    %v10325 = vpop.permute.xlu0 %10324
    %10326 = vrot.lane.b32.xlu0 %v10164, 2
    %v10327 = vpop.permute.xlu0 %10326
    %10328 = vrot.lane.b32.xlu0 %v10165, 2
    %v10329 = vpop.permute.xlu0 %10328
    %vm10338 = vcmask 31760
    %10339 = vst.msk [vmem:[#allocation2] sm:$0xff] %vm10338, %v10315
    %10340 = vst.msk [vmem:[#allocation2 + $0x8] sm:$0xff] %vm10338, %v10317
    %10341 = vst.msk [vmem:[#allocation2 + $0x10] sm:$0xff] %vm10338, %v10319
    %10342 = vst.msk [vmem:[#allocation2 + $0x18] sm:$0xff] %vm10338, %v10321
    %10343 = vst.msk [vmem:[#allocation2 + $0x20] sm:$0xff] %vm10338, %v10323
    %10344 = vst.msk [vmem:[#allocation2 + $0x28] sm:$0xff] %vm10338, %v10325
    %10345 = vst.msk [vmem:[#allocation2 + $0x30] sm:$0xff] %vm10338, %v10327
    %10346 = vst.msk [vmem:[#allocation2 + $0x38] sm:$0xff] %vm10338, %v10329
    %10355 = vrot.lane.b32.xlu0 %v10166, 4
    %v10356 = vpop.permute.xlu0 %10355
    %10357 = vrot.lane.b32.xlu0 %v10167, 4
    %v10358 = vpop.permute.xlu0 %10357
    %10359 = vrot.lane.b32.xlu0 %v10168, 4
    %v10360 = vpop.permute.xlu0 %10359
    %10361 = vrot.lane.b32.xlu0 %v10169, 4
    %v10362 = vpop.permute.xlu0 %10361
    %10363 = vrot.lane.b32.xlu0 %v10170, 4
    %v10364 = vpop.permute.xlu0 %10363
    %10365 = vrot.lane.b32.xlu0 %v10171, 4
    %v10366 = vpop.permute.xlu0 %10365
    %10367 = vrot.lane.b32.xlu0 %v10172, 4
    %v10368 = vpop.permute.xlu0 %10367
    %10369 = vrot.lane.b32.xlu0 %v10173, 4
    %v10370 = vpop.permute.xlu0 %10369
    %vm10379 = vcmask 48160
    %10380 = vst.msk [vmem:[#allocation2] sm:$0xff] %vm10379, %v10356
    %10381 = vst.msk [vmem:[#allocation2 + $0x8] sm:$0xff] %vm10379, %v10358
    %10382 = vst.msk [vmem:[#allocation2 + $0x10] sm:$0xff] %vm10379, %v10360
    %10383 = vst.msk [vmem:[#allocation2 + $0x18] sm:$0xff] %vm10379, %v10362
    %10384 = vst.msk [vmem:[#allocation2 + $0x20] sm:$0xff] %vm10379, %v10364
    %10385 = vst.msk [vmem:[#allocation2 + $0x28] sm:$0xff] %vm10379, %v10366
    %10386 = vst.msk [vmem:[#allocation2 + $0x30] sm:$0xff] %vm10379, %v10368
    %10387 = vst.msk [vmem:[#allocation2 + $0x38] sm:$0xff] %vm10379, %v10370
    %10396 = vrot.lane.b32.xlu0 %v10174, 6
    %v10397 = vpop.permute.xlu0 %10396
    %10398 = vrot.lane.b32.xlu0 %v10175, 6
    %v10399 = vpop.permute.xlu0 %10398
    %10400 = vrot.lane.b32.xlu0 %v10176, 6
    %v10401 = vpop.permute.xlu0 %10400
    %10402 = vrot.lane.b32.xlu0 %v10177, 6
    %v10403 = vpop.permute.xlu0 %10402
    %10404 = vrot.lane.b32.xlu0 %v10178, 6
    %v10405 = vpop.permute.xlu0 %10404
    %10406 = vrot.lane.b32.xlu0 %v10179, 6
    %v10407 = vpop.permute.xlu0 %10406
    %10408 = vrot.lane.b32.xlu0 %v10180, 6
    %v10409 = vpop.permute.xlu0 %10408
    %10410 = vrot.lane.b32.xlu0 %v10181, 6
    %v10411 = vpop.permute.xlu0 %10410
    %vm10420 = vcmask 64560
    %10421 = vst.msk [vmem:[#allocation2] sm:$0xff] %vm10420, %v10397
    %10422 = vst.msk [vmem:[#allocation2 + $0x8] sm:$0xff] %vm10420, %v10399
    %10423 = vst.msk [vmem:[#allocation2 + $0x10] sm:$0xff] %vm10420, %v10401
    %10424 = vst.msk [vmem:[#allocation2 + $0x18] sm:$0xff] %vm10420, %v10403
    %10425 = vst.msk [vmem:[#allocation2 + $0x20] sm:$0xff] %vm10420, %v10405
    %10426 = vst.msk [vmem:[#allocation2 + $0x28] sm:$0xff] %vm10420, %v10407
    %10427 = vst.msk [vmem:[#allocation2 + $0x30] sm:$0xff] %vm10420, %v10409
    %10428 = vst.msk [vmem:[#allocation2 + $0x38] sm:$0xff] %vm10420, %v10411
    %10437 = vrot.lane.b32.xlu0 %v10182, 8
    %v10438 = vpop.permute.xlu0 %10437
    %10439 = vrot.lane.b32.xlu0 %v10183, 8
    %v10440 = vpop.permute.xlu0 %10439
    %10441 = vrot.lane.b32.xlu0 %v10184, 8
    %v10442 = vpop.permute.xlu0 %10441
    %10443 = vrot.lane.b32.xlu0 %v10185, 8
    %v10444 = vpop.permute.xlu0 %10443
    %10445 = vrot.lane.b32.xlu0 %v10186, 8
    %v10446 = vpop.permute.xlu0 %10445
    %10447 = vrot.lane.b32.xlu0 %v10187, 8
    %v10448 = vpop.permute.xlu0 %10447
    %10449 = vrot.lane.b32.xlu0 %v10188, 8
    %v10450 = vpop.permute.xlu0 %10449
    %10451 = vrot.lane.b32.xlu0 %v10189, 8
    %v10452 = vpop.permute.xlu0 %10451
    %vm10461 = vcmask 80960
    %10462 = vst.msk [vmem:[#allocation2] sm:$0xff] %vm10461, %v10438
    %10463 = vst.msk [vmem:[#allocation2 + $0x8] sm:$0xff] %vm10461, %v10440
    %10464 = vst.msk [vmem:[#allocation2 + $0x10] sm:$0xff] %vm10461, %v10442
    %10465 = vst.msk [vmem:[#allocation2 + $0x18] sm:$0xff] %vm10461, %v10444
    %10466 = vst.msk [vmem:[#allocation2 + $0x20] sm:$0xff] %vm10461, %v10446
    %10467 = vst.msk [vmem:[#allocation2 + $0x28] sm:$0xff] %vm10461, %v10448
    %10468 = vst.msk [vmem:[#allocation2 + $0x30] sm:$0xff] %vm10461, %v10450
    %10469 = vst.msk [vmem:[#allocation2 + $0x38] sm:$0xff] %vm10461, %v10452
    %10478 = vrot.lane.b32.xlu0 %v10190, 10
    %v10479 = vpop.permute.xlu0 %10478
    %10480 = vrot.lane.b32.xlu0 %v10191, 10
    %v10481 = vpop.permute.xlu0 %10480
    %10482 = vrot.lane.b32.xlu0 %v10192, 10
    %v10483 = vpop.permute.xlu0 %10482
    %10484 = vrot.lane.b32.xlu0 %v10193, 10
    %v10485 = vpop.permute.xlu0 %10484
    %10486 = vrot.lane.b32.xlu0 %v10194, 10
    %v10487 = vpop.permute.xlu0 %10486
    %10488 = vrot.lane.b32.xlu0 %v10195, 10
    %v10489 = vpop.permute.xlu0 %10488
    %10490 = vrot.lane.b32.xlu0 %v10196, 10
    %v10491 = vpop.permute.xlu0 %10490
    %10492 = vrot.lane.b32.xlu0 %v10197, 10
    %v10493 = vpop.permute.xlu0 %10492
    %vm10502 = vcmask 97360
    %10503 = vst.msk [vmem:[#allocation2] sm:$0xff] %vm10502, %v10479
    %10504 = vst.msk [vmem:[#allocation2 + $0x8] sm:$0xff] %vm10502, %v10481
    %10505 = vst.msk [vmem:[#allocation2 + $0x10] sm:$0xff] %vm10502, %v10483
    %10506 = vst.msk [vmem:[#allocation2 + $0x18] sm:$0xff] %vm10502, %v10485
    %10507 = vst.msk [vmem:[#allocation2 + $0x20] sm:$0xff] %vm10502, %v10487
    %10508 = vst.msk [vmem:[#allocation2 + $0x28] sm:$0xff] %vm10502, %v10489
    %10509 = vst.msk [vmem:[#allocation2 + $0x30] sm:$0xff] %vm10502, %v10491
    %10510 = vst.msk [vmem:[#allocation2 + $0x38] sm:$0xff] %vm10502, %v10493
    %10519 = vrot.lane.b32.xlu0 %v10198, 12
    %v10520 = vpop.permute.xlu0 %10519
    %10521 = vrot.lane.b32.xlu0 %v10199, 12
    %v10522 = vpop.permute.xlu0 %10521
    %10523 = vrot.lane.b32.xlu0 %v10200, 12
    %v10524 = vpop.permute.xlu0 %10523
    %10525 = vrot.lane.b32.xlu0 %v10201, 12
    %v10526 = vpop.permute.xlu0 %10525
    %10527 = vrot.lane.b32.xlu0 %v10202, 12
    %v10528 = vpop.permute.xlu0 %10527
    %10529 = vrot.lane.b32.xlu0 %v10203, 12
    %v10530 = vpop.permute.xlu0 %10529
    %10531 = vrot.lane.b32.xlu0 %v10204, 12
    %v10532 = vpop.permute.xlu0 %10531
    %10533 = vrot.lane.b32.xlu0 %v10205, 12
    %v10534 = vpop.permute.xlu0 %10533
    %vm10543 = vcmask 113760
    %10544 = vst.msk [vmem:[#allocation2] sm:$0xff] %vm10543, %v10520
    %10545 = vst.msk [vmem:[#allocation2 + $0x8] sm:$0xff] %vm10543, %v10522
    %10546 = vst.msk [vmem:[#allocation2 + $0x10] sm:$0xff] %vm10543, %v10524
    %10547 = vst.msk [vmem:[#allocation2 + $0x18] sm:$0xff] %vm10543, %v10526
    %10548 = vst.msk [vmem:[#allocation2 + $0x20] sm:$0xff] %vm10543, %v10528
    %10549 = vst.msk [vmem:[#allocation2 + $0x28] sm:$0xff] %vm10543, %v10530
    %10550 = vst.msk [vmem:[#allocation2 + $0x30] sm:$0xff] %vm10543, %v10532
    %10551 = vst.msk [vmem:[#allocation2 + $0x38] sm:$0xff] %vm10543, %v10534
    %10560 = vrot.lane.b32.xlu0 %v10206, 14
    %v10561 = vpop.permute.xlu0 %10560
    %10562 = vrot.lane.b32.xlu0 %v10207, 14
    %v10563 = vpop.permute.xlu0 %10562
    %10564 = vrot.lane.b32.xlu0 %v10208, 14
    %v10565 = vpop.permute.xlu0 %10564
    %10566 = vrot.lane.b32.xlu0 %v10209, 14
    %v10567 = vpop.permute.xlu0 %10566
    %10568 = vrot.lane.b32.xlu0 %v10210, 14
    %v10569 = vpop.permute.xlu0 %10568
    %10570 = vrot.lane.b32.xlu0 %v10211, 14
    %v10571 = vpop.permute.xlu0 %10570
    %10572 = vrot.lane.b32.xlu0 %v10212, 14
    %v10573 = vpop.permute.xlu0 %10572
    %10574 = vrot.lane.b32.xlu0 %v10213, 14
    %v10575 = vpop.permute.xlu0 %10574
    %vm10584 = vcmask 130160
    %10585 = vst.msk [vmem:[#allocation2] sm:$0xff] %vm10584, %v10561
    %10586 = vst.msk [vmem:[#allocation2 + $0x8] sm:$0xff] %vm10584, %v10563
    %10587 = vst.msk [vmem:[#allocation2 + $0x10] sm:$0xff] %vm10584, %v10565
    %10588 = vst.msk [vmem:[#allocation2 + $0x18] sm:$0xff] %vm10584, %v10567
    %10589 = vst.msk [vmem:[#allocation2 + $0x20] sm:$0xff] %vm10584, %v10569
    %10590 = vst.msk [vmem:[#allocation2 + $0x28] sm:$0xff] %vm10584, %v10571
    %10591 = vst.msk [vmem:[#allocation2 + $0x30] sm:$0xff] %vm10584, %v10573
    %10592 = vst.msk [vmem:[#allocation2 + $0x38] sm:$0xff] %vm10584, %v10575
    %10601 = vrot.lane.b32.xlu0 %v10214, 16
    %v10602 = vpop.permute.xlu0 %10601
    %10603 = vrot.lane.b32.xlu0 %v10215, 16
    %v10604 = vpop.permute.xlu0 %10603
    %10605 = vrot.lane.b32.xlu0 %v10216, 16
    %v10606 = vpop.permute.xlu0 %10605
    %10607 = vrot.lane.b32.xlu0 %v10217, 16
    %v10608 = vpop.permute.xlu0 %10607
    %10609 = vrot.lane.b32.xlu0 %v10218, 16
    %v10610 = vpop.permute.xlu0 %10609
    %10611 = vrot.lane.b32.xlu0 %v10219, 16
    %v10612 = vpop.permute.xlu0 %10611
    %10613 = vrot.lane.b32.xlu0 %v10220, 16
    %v10614 = vpop.permute.xlu0 %10613
    %10615 = vrot.lane.b32.xlu0 %v10221, 16
    %v10616 = vpop.permute.xlu0 %10615
    %vm10625 = vcmask 146560
    %10626 = vst.msk [vmem:[#allocation2] sm:$0xff] %vm10625, %v10602
    %10627 = vst.msk [vmem:[#allocation2 + $0x8] sm:$0xff] %vm10625, %v10604
    %10628 = vst.msk [vmem:[#allocation2 + $0x10] sm:$0xff] %vm10625, %v10606
    %10629 = vst.msk [vmem:[#allocation2 + $0x18] sm:$0xff] %vm10625, %v10608
    %10630 = vst.msk [vmem:[#allocation2 + $0x20] sm:$0xff] %vm10625, %v10610
    %10631 = vst.msk [vmem:[#allocation2 + $0x28] sm:$0xff] %vm10625, %v10612
    %10632 = vst.msk [vmem:[#allocation2 + $0x30] sm:$0xff] %vm10625, %v10614
    %10633 = vst.msk [vmem:[#allocation2 + $0x38] sm:$0xff] %vm10625, %v10616
    %10642 = vrot.lane.b32.xlu0 %v10222, 18
    %v10643 = vpop.permute.xlu0 %10642
    %10644 = vrot.lane.b32.xlu0 %v10223, 18
    %v10645 = vpop.permute.xlu0 %10644
    %10646 = vrot.lane.b32.xlu0 %v10224, 18
    %v10647 = vpop.permute.xlu0 %10646
    %10648 = vrot.lane.b32.xlu0 %v10225, 18
    %v10649 = vpop.permute.xlu0 %10648
    %10650 = vrot.lane.b32.xlu0 %v10226, 18
    %v10651 = vpop.permute.xlu0 %10650
    %10652 = vrot.lane.b32.xlu0 %v10227, 18
    %v10653 = vpop.permute.xlu0 %10652
    %10654 = vrot.lane.b32.xlu0 %v10228, 18
    %v10655 = vpop.permute.xlu0 %10654
    %10656 = vrot.lane.b32.xlu0 %v10229, 18
    %v10657 = vpop.permute.xlu0 %10656
    %vm10666 = vcmask 162960
    %10667 = vst.msk [vmem:[#allocation2] sm:$0xff] %vm10666, %v10643
    %10668 = vst.msk [vmem:[#allocation2 + $0x8] sm:$0xff] %vm10666, %v10645
    %10669 = vst.msk [vmem:[#allocation2 + $0x10] sm:$0xff] %vm10666, %v10647
    %10670 = vst.msk [vmem:[#allocation2 + $0x18] sm:$0xff] %vm10666, %v10649
    %10671 = vst.msk [vmem:[#allocation2 + $0x20] sm:$0xff] %vm10666, %v10651
    %10672 = vst.msk [vmem:[#allocation2 + $0x28] sm:$0xff] %vm10666, %v10653
    %10673 = vst.msk [vmem:[#allocation2 + $0x30] sm:$0xff] %vm10666, %v10655
    %10674 = vst.msk [vmem:[#allocation2 + $0x38] sm:$0xff] %vm10666, %v10657
    %10683 = vrot.lane.b32.xlu0 %v10230, 20
    %v10684 = vpop.permute.xlu0 %10683
    %10685 = vrot.lane.b32.xlu0 %v10231, 20
    %v10686 = vpop.permute.xlu0 %10685
    %10687 = vrot.lane.b32.xlu0 %v10232, 20
    %v10688 = vpop.permute.xlu0 %10687
    %10689 = vrot.lane.b32.xlu0 %v10233, 20
    %v10690 = vpop.permute.xlu0 %10689
    %10691 = vrot.lane.b32.xlu0 %v10234, 20
    %v10692 = vpop.permute.xlu0 %10691
    %10693 = vrot.lane.b32.xlu0 %v10235, 20
    %v10694 = vpop.permute.xlu0 %10693
    %10695 = vrot.lane.b32.xlu0 %v10236, 20
    %v10696 = vpop.permute.xlu0 %10695
    %10697 = vrot.lane.b32.xlu0 %v10237, 20
    %v10698 = vpop.permute.xlu0 %10697
    %vm10707 = vcmask 179360
    %10708 = vst.msk [vmem:[#allocation2] sm:$0xff] %vm10707, %v10684
    %10709 = vst.msk [vmem:[#allocation2 + $0x8] sm:$0xff] %vm10707, %v10686
    %10710 = vst.msk [vmem:[#allocation2 + $0x10] sm:$0xff] %vm10707, %v10688
    %10711 = vst.msk [vmem:[#allocation2 + $0x18] sm:$0xff] %vm10707, %v10690
    %10712 = vst.msk [vmem:[#allocation2 + $0x20] sm:$0xff] %vm10707, %v10692
    %10713 = vst.msk [vmem:[#allocation2 + $0x28] sm:$0xff] %vm10707, %v10694
    %10714 = vst.msk [vmem:[#allocation2 + $0x30] sm:$0xff] %vm10707, %v10696
    %10715 = vst.msk [vmem:[#allocation2 + $0x38] sm:$0xff] %vm10707, %v10698
    %10724 = vrot.lane.b32.xlu0 %v10238, 22
    %v10725 = vpop.permute.xlu0 %10724
    %10726 = vrot.lane.b32.xlu0 %v10239, 22
    %v10727 = vpop.permute.xlu0 %10726
    %10728 = vrot.lane.b32.xlu0 %v10240, 22
    %v10729 = vpop.permute.xlu0 %10728
    %10730 = vrot.lane.b32.xlu0 %v10241, 22
    %v10731 = vpop.permute.xlu0 %10730
    %10732 = vrot.lane.b32.xlu0 %v10242, 22
    %v10733 = vpop.permute.xlu0 %10732
    %10734 = vrot.lane.b32.xlu0 %v10243, 22
    %v10735 = vpop.permute.xlu0 %10734
    %10736 = vrot.lane.b32.xlu0 %v10244, 22
    %v10737 = vpop.permute.xlu0 %10736
    %10738 = vrot.lane.b32.xlu0 %v10245, 22
    %v10739 = vpop.permute.xlu0 %10738
    %vm10748 = vcmask 195760
    %10749 = vst.msk [vmem:[#allocation2] sm:$0xff] %vm10748, %v10725
    %10750 = vst.msk [vmem:[#allocation2 + $0x8] sm:$0xff] %vm10748, %v10727
    %10751 = vst.msk [vmem:[#allocation2 + $0x10] sm:$0xff] %vm10748, %v10729
    %10752 = vst.msk [vmem:[#allocation2 + $0x18] sm:$0xff] %vm10748, %v10731
    %10753 = vst.msk [vmem:[#allocation2 + $0x20] sm:$0xff] %vm10748, %v10733
    %10754 = vst.msk [vmem:[#allocation2 + $0x28] sm:$0xff] %vm10748, %v10735
    %10755 = vst.msk [vmem:[#allocation2 + $0x30] sm:$0xff] %vm10748, %v10737
    %10756 = vst.msk [vmem:[#allocation2 + $0x38] sm:$0xff] %vm10748, %v10739
    %10765 = vrot.lane.b32.xlu0 %v10246, 24
    %v10766 = vpop.permute.xlu0 %10765
    %10767 = vrot.lane.b32.xlu0 %v10247, 24
    %v10768 = vpop.permute.xlu0 %10767
    %10769 = vrot.lane.b32.xlu0 %v10248, 24
    %v10770 = vpop.permute.xlu0 %10769
    %10771 = vrot.lane.b32.xlu0 %v10249, 24
    %v10772 = vpop.permute.xlu0 %10771
    %10773 = vrot.lane.b32.xlu0 %v10250, 24
    %v10774 = vpop.permute.xlu0 %10773
    %10775 = vrot.lane.b32.xlu0 %v10251, 24
    %v10776 = vpop.permute.xlu0 %10775
    %10777 = vrot.lane.b32.xlu0 %v10252, 24
    %v10778 = vpop.permute.xlu0 %10777
    %10779 = vrot.lane.b32.xlu0 %v10253, 24
    %v10780 = vpop.permute.xlu0 %10779
    %vm10789 = vcmask 212160
    %10790 = vst.msk [vmem:[#allocation2] sm:$0xff] %vm10789, %v10766
    %10791 = vst.msk [vmem:[#allocation2 + $0x8] sm:$0xff] %vm10789, %v10768
    %10792 = vst.msk [vmem:[#allocation2 + $0x10] sm:$0xff] %vm10789, %v10770
    %10793 = vst.msk [vmem:[#allocation2 + $0x18] sm:$0xff] %vm10789, %v10772
    %10794 = vst.msk [vmem:[#allocation2 + $0x20] sm:$0xff] %vm10789, %v10774
    %10795 = vst.msk [vmem:[#allocation2 + $0x28] sm:$0xff] %vm10789, %v10776
    %10796 = vst.msk [vmem:[#allocation2 + $0x30] sm:$0xff] %vm10789, %v10778
    %10797 = vst.msk [vmem:[#allocation2 + $0x38] sm:$0xff] %vm10789, %v10780
    %10806 = vrot.lane.b32.xlu0 %v10254, 26
    %v10807 = vpop.permute.xlu0 %10806
    %10808 = vrot.lane.b32.xlu0 %v10255, 26
    %v10809 = vpop.permute.xlu0 %10808
    %10810 = vrot.lane.b32.xlu0 %v10256, 26
    %v10811 = vpop.permute.xlu0 %10810
    %10812 = vrot.lane.b32.xlu0 %v10257, 26
    %v10813 = vpop.permute.xlu0 %10812
    %10814 = vrot.lane.b32.xlu0 %v10258, 26
    %v10815 = vpop.permute.xlu0 %10814
    %10816 = vrot.lane.b32.xlu0 %v10259, 26
    %v10817 = vpop.permute.xlu0 %10816
    %10818 = vrot.lane.b32.xlu0 %v10260, 26
    %v10819 = vpop.permute.xlu0 %10818
    %10820 = vrot.lane.b32.xlu0 %v10261, 26
    %v10821 = vpop.permute.xlu0 %10820
    %vm10830 = vcmask 228560
    %10831 = vst.msk [vmem:[#allocation2] sm:$0xff] %vm10830, %v10807
    %10832 = vst.msk [vmem:[#allocation2 + $0x8] sm:$0xff] %vm10830, %v10809
    %10833 = vst.msk [vmem:[#allocation2 + $0x10] sm:$0xff] %vm10830, %v10811
    %10834 = vst.msk [vmem:[#allocation2 + $0x18] sm:$0xff] %vm10830, %v10813
    %10835 = vst.msk [vmem:[#allocation2 + $0x20] sm:$0xff] %vm10830, %v10815
    %10836 = vst.msk [vmem:[#allocation2 + $0x28] sm:$0xff] %vm10830, %v10817
    %10837 = vst.msk [vmem:[#allocation2 + $0x30] sm:$0xff] %vm10830, %v10819
    %10838 = vst.msk [vmem:[#allocation2 + $0x38] sm:$0xff] %vm10830, %v10821
    %10847 = vrot.lane.b32.xlu0 %v10262, 28
    %v10848 = vpop.permute.xlu0 %10847
    %10849 = vrot.lane.b32.xlu0 %v10263, 28
    %v10850 = vpop.permute.xlu0 %10849
    %10851 = vrot.lane.b32.xlu0 %v10264, 28
    %v10852 = vpop.permute.xlu0 %10851
    %10853 = vrot.lane.b32.xlu0 %v10265, 28
    %v10854 = vpop.permute.xlu0 %10853
    %10855 = vrot.lane.b32.xlu0 %v10266, 28
    %v10856 = vpop.permute.xlu0 %10855
    %10857 = vrot.lane.b32.xlu0 %v10267, 28
    %v10858 = vpop.permute.xlu0 %10857
    %10859 = vrot.lane.b32.xlu0 %v10268, 28
    %v10860 = vpop.permute.xlu0 %10859
    %10861 = vrot.lane.b32.xlu0 %v10269, 28
    %v10862 = vpop.permute.xlu0 %10861
    %vm10871 = vcmask 244960
    %10872 = vst.msk [vmem:[#allocation2] sm:$0xff] %vm10871, %v10848
    %10873 = vst.msk [vmem:[#allocation2 + $0x8] sm:$0xff] %vm10871, %v10850
    %10874 = vst.msk [vmem:[#allocation2 + $0x10] sm:$0xff] %vm10871, %v10852
    %10875 = vst.msk [vmem:[#allocation2 + $0x18] sm:$0xff] %vm10871, %v10854
    %10876 = vst.msk [vmem:[#allocation2 + $0x20] sm:$0xff] %vm10871, %v10856
    %10877 = vst.msk [vmem:[#allocation2 + $0x28] sm:$0xff] %vm10871, %v10858
    %10878 = vst.msk [vmem:[#allocation2 + $0x30] sm:$0xff] %vm10871, %v10860
    %10879 = vst.msk [vmem:[#allocation2 + $0x38] sm:$0xff] %vm10871, %v10862
    %10888 = vrot.lane.b32.xlu0 %v10270, 30
    %v10889 = vpop.permute.xlu0 %10888
    %10890 = vrot.lane.b32.xlu0 %v10271, 30
    %v10891 = vpop.permute.xlu0 %10890
    %10892 = vrot.lane.b32.xlu0 %v10272, 30
    %v10893 = vpop.permute.xlu0 %10892
    %10894 = vrot.lane.b32.xlu0 %v10273, 30
    %v10895 = vpop.permute.xlu0 %10894
    %10896 = vrot.lane.b32.xlu0 %v10274, 30
    %v10897 = vpop.permute.xlu0 %10896
    %10898 = vrot.lane.b32.xlu0 %v10275, 30
    %v10899 = vpop.permute.xlu0 %10898
    %10900 = vrot.lane.b32.xlu0 %v10276, 30
    %v10901 = vpop.permute.xlu0 %10900
    %10902 = vrot.lane.b32.xlu0 %v10277, 30
    %v10903 = vpop.permute.xlu0 %10902
    %vm10912 = vcmask 261360
    %10913 = vst.msk [vmem:[#allocation2] sm:$0xff] %vm10912, %v10889
    %10914 = vst.msk [vmem:[#allocation2 + $0x8] sm:$0xff] %vm10912, %v10891
    %10915 = vst.msk [vmem:[#allocation2 + $0x10] sm:$0xff] %vm10912, %v10893
    %10916 = vst.msk [vmem:[#allocation2 + $0x18] sm:$0xff] %vm10912, %v10895
    %10917 = vst.msk [vmem:[#allocation2 + $0x20] sm:$0xff] %vm10912, %v10897
    %10918 = vst.msk [vmem:[#allocation2 + $0x28] sm:$0xff] %vm10912, %v10899
    %10919 = vst.msk [vmem:[#allocation2 + $0x30] sm:$0xff] %vm10912, %v10901
    %10920 = vst.msk [vmem:[#allocation2 + $0x38] sm:$0xff] %vm10912, %v10903
    %10929 = vrot.lane.b32.xlu0 %v10278, 32
    %v10930 = vpop.permute.xlu0 %10929
    %10931 = vrot.lane.b32.xlu0 %v10279, 32
    %v10932 = vpop.permute.xlu0 %10931
    %10933 = vrot.lane.b32.xlu0 %v10280, 32
    %v10934 = vpop.permute.xlu0 %10933
    %10935 = vrot.lane.b32.xlu0 %v10281, 32
    %v10936 = vpop.permute.xlu0 %10935
    %10937 = vrot.lane.b32.xlu0 %v10282, 32
    %v10938 = vpop.permute.xlu0 %10937
    %10939 = vrot.lane.b32.xlu0 %v10283, 32
    %v10940 = vpop.permute.xlu0 %10939
    %10941 = vrot.lane.b32.xlu0 %v10284, 32
    %v10942 = vpop.permute.xlu0 %10941
    %10943 = vrot.lane.b32.xlu0 %v10285, 32
    %v10944 = vpop.permute.xlu0 %10943
    %vm10953 = vcmask 277760
    %10954 = vst.msk [vmem:[#allocation2] sm:$0xff] %vm10953, %v10930
    %10955 = vst.msk [vmem:[#allocation2 + $0x8] sm:$0xff] %vm10953, %v10932
    %10956 = vst.msk [vmem:[#allocation2 + $0x10] sm:$0xff] %vm10953, %v10934
    %10957 = vst.msk [vmem:[#allocation2 + $0x18] sm:$0xff] %vm10953, %v10936
    %10958 = vst.msk [vmem:[#allocation2 + $0x20] sm:$0xff] %vm10953, %v10938
    %10959 = vst.msk [vmem:[#allocation2 + $0x28] sm:$0xff] %vm10953, %v10940
    %10960 = vst.msk [vmem:[#allocation2 + $0x30] sm:$0xff] %vm10953, %v10942
    %10961 = vst.msk [vmem:[#allocation2 + $0x38] sm:$0xff] %vm10953, %v10944
    %v10962 = vld [vmem:[#allocation2] sm:$0xff]
    %v10963 = vld [vmem:[#allocation2 + $0x8] sm:$0xff]
    %v10964 = vld [vmem:[#allocation2 + $0x10] sm:$0xff]
    %v10965 = vld [vmem:[#allocation2 + $0x18] sm:$0xff]
    %v10966 = vld [vmem:[#allocation2 + $0x20] sm:$0xff]
    %v10967 = vld [vmem:[#allocation2 + $0x28] sm:$0xff]
    %v10968 = vld [vmem:[#allocation2 + $0x30] sm:$0xff]
    %v10969 = vld [vmem:[#allocation2 + $0x38] sm:$0xff]
    %10978 = vrot.lane.b32.xlu0 %v10962, 126
    %v10979 = vpop.permute.xlu0 %10978
    %10980 = vrot.lane.b32.xlu0 %v10963, 126
    %v10981 = vpop.permute.xlu0 %10980
    %10982 = vrot.lane.b32.xlu0 %v10964, 126
    %v10983 = vpop.permute.xlu0 %10982
    %10984 = vrot.lane.b32.xlu0 %v10965, 126
    %v10985 = vpop.permute.xlu0 %10984
    %10986 = vrot.lane.b32.xlu0 %v10966, 126
    %v10987 = vpop.permute.xlu0 %10986
    %10988 = vrot.lane.b32.xlu0 %v10967, 126
    %v10989 = vpop.permute.xlu0 %10988
    %10990 = vrot.lane.b32.xlu0 %v10968, 126
    %v10991 = vpop.permute.xlu0 %10990
    %10992 = vrot.lane.b32.xlu0 %v10969, 126
    %v10993 = vpop.permute.xlu0 %10992
    %11002 = vrot.lane.b32.xlu0 %v10962, 124
    %v11003 = vpop.permute.xlu0 %11002
    %11004 = vrot.lane.b32.xlu0 %v10963, 124
    %v11005 = vpop.permute.xlu0 %11004
    %11006 = vrot.lane.b32.xlu0 %v10964, 124
    %v11007 = vpop.permute.xlu0 %11006
    %11008 = vrot.lane.b32.xlu0 %v10965, 124
    %v11009 = vpop.permute.xlu0 %11008
    %11010 = vrot.lane.b32.xlu0 %v10966, 124
    %v11011 = vpop.permute.xlu0 %11010
    %11012 = vrot.lane.b32.xlu0 %v10967, 124
    %v11013 = vpop.permute.xlu0 %11012
    %11014 = vrot.lane.b32.xlu0 %v10968, 124
    %v11015 = vpop.permute.xlu0 %11014
    %11016 = vrot.lane.b32.xlu0 %v10969, 124
    %v11017 = vpop.permute.xlu0 %11016
    %v11026 = vld [vmem:[#allocation10] sm:$0xff]
    %v11027 = vld [vmem:[#allocation10 + $0x8] sm:$0xff]
    %v11028 = vld [vmem:[%s8] sm:$0xff]
    %11030 = vset.pattern.permute.xlu0 0
    %11031 = vperm.xlu0 %11030, %v11028
    %v11032 = vpop.permute.xlu0 %11031
    %vm11034 = vcmask 523264
    %v11036 = vsel %vm11034, %v11027, 0
    %11038 = vmatpush.msra.mxu0 %v10993
    %11039 = vmatpush.msra.mxu0 %v10991
    %11040 = vmatpush.msra.mxu0 %v10989
    %11041 = vmatpush.msra.mxu0 %v10987
    %11042 = vmatpush.msra.mxu0 %v10985
    %11043 = vmatpush.msra.mxu0 %v10983
    %11044 = vmatpush.msra.mxu0 %v10981
    %11045 = vmatpush.msra.mxu0 %v10979
    %11046 = vmatpush.msra.mxu0 %v10969
    %11047 = vmatpush.msra.mxu0 %v10968
    %11048 = vmatpush.msra.mxu0 %v10967
    %11049 = vmatpush.msra.mxu0 %v10966
    %11050 = vmatpush.msra.mxu0 %v10965
    %11051 = vmatpush.msra.mxu0 %v10964
    %11052 = vmatpush.msra.mxu0 %v10963
    %11053 = vmatpush.msra.mxu0 %v10962
    %11054 = vmatmul.f32.gmra.mxu0 %v11026
    %v11055 = vpop.f32.mrf.mxu0
    %v11056 = vadd.f32 %v11032, %v11055
    %11057 = vdwg.mxu0
    %11058 = vmatpush.msra.mxu0 0.0
    %11059 = vmatpush.msra.mxu0 0.0
    %11060 = vmatpush.msra.mxu0 0.0
    %11061 = vmatpush.msra.mxu0 0.0
    %11062 = vmatpush.msra.mxu0 0.0
    %11063 = vmatpush.msra.mxu0 0.0
    %11064 = vmatpush.msra.mxu0 0.0
    %11065 = vmatpush.msra.mxu0 0.0
    %11066 = vmatpush.msra.mxu0 %v11017
    %11067 = vmatpush.msra.mxu0 %v11015
    %11068 = vmatpush.msra.mxu0 %v11013
    %11069 = vmatpush.msra.mxu0 %v11011
    %11070 = vmatpush.msra.mxu0 %v11009
    %11071 = vmatpush.msra.mxu0 %v11007
    %11072 = vmatpush.msra.mxu0 %v11005
    %11073 = vmatpush.msra.mxu0 %v11003
    %11074 = vmatmul.f32.gmra.mxu0 %v11036
    %v11075 = vpop.f32.mrf.mxu0
    %v11076 = vadd.f32 %v11056, %v11075
    %11077 = vdwg.mxu0
    %v11078 = vxor.u32 %v11076, 2147483648
    %v11079 = vmul.f32 %v11078, 1.442695
    %v11080 = vpow.pop %v11079
    %v11081 = vadd.f32 %v11080, 1.0
    %v11082 = vrcp.pop %v11081
    %v11083 = vmul.f32 %v11081, %v11082
    %v11084 = vsub.f32 1.0, %v11083
    %v11085 = vmul.f32 %v11082, %v11084
    %v11086 = vadd.f32 %v11082, %v11085
    %vm11087 = vweird.f32 %v11081
    %vm11088 = vweird.f32 %v11082
    %vm11089 = vmor %vm11087, %vm11088
    %v11090 = vsel %vm11089, %v11082, %v11086
    %v11091 = vand.u32 2147483647, %v11081
    %vm11092 = vcmp.eq.f32.partialorder %v11091, 8.507059e+37
    %v11093 = vand.u32 %v11081, 2147483648
    %v11094 = vor.u32 1.1754944e-38, %v11093
    %v11095 = vsel %vm11092, %v11094, %v11090
    %v11096 = vmul.f32 1.0, %v11095
    %v11097 = vmul.f32 %v11076, %v11096
    %11099 = vrot.lane.b32.xlu0 %v11097, 2
    %v11100 = vpop.permute.xlu0 %11099
    %vm11102 = vcmask 277520
    %11103 = vst.msk [vmem:[#allocation3] sm:$0xff] %vm11102, %v11100
    %v11104 = vld [vmem:[#allocation3] sm:$0xff]
    %11106 = vrot.lane.b32.xlu0 %v11104, 126
    %v11107 = vpop.permute.xlu0 %11106
    %11109 = vrot.lane.b32.xlu0 %v11104, 124
    %v11110 = vpop.permute.xlu0 %11109
    %v11112 = vld [vmem:[#allocation12] sm:$0xff]
    %v11113 = vld [vmem:[%s10] sm:$0xff]
    %11115 = vset.pattern.permute.xlu0 0
    %11116 = vperm.xlu0 %11115, %v11113
    %v11117 = vpop.permute.xlu0 %11116
    %vm11119 = vcmask 195584
    %v11121 = vsel %vm11119, %v11112, 0
    %11123 = vmatpush.msra.mxu0 0.0
    %11124 = vmatpush.msra.mxu0 0.0
    %11125 = vmatpush.msra.mxu0 0.0
    %11126 = vmatpush.msra.mxu0 0.0
    %11127 = vmatpush.msra.mxu0 0.0
    %11128 = vmatpush.msra.mxu0 0.0
    %11129 = vmatpush.msra.mxu0 0.0
    %11130 = vmatpush.msra.mxu0 0.0
    %11131 = vmatpush.msra.mxu0 0.0
    %11132 = vmatpush.msra.mxu0 0.0
    %11133 = vmatpush.msra.mxu0 0.0
    %11134 = vmatpush.msra.mxu0 0.0
    %11135 = vmatpush.msra.mxu0 0.0
    %11136 = vmatpush.msra.mxu0 %v11110
    %11137 = vmatpush.msra.mxu0 %v11107
    %11138 = vmatpush.msra.mxu0 %v11104
    %11139 = vmatmul.f32.gmra.mxu0 %v11121
    %v11140 = vpop.f32.mrf.mxu0
    %v11141 = vadd.f32 %v11117, %v11140
    %11142 = vdwg.mxu0
    %v11143 = vxor.u32 %v11141, 2147483648
    %v11144 = vmul.f32 %v11143, 1.442695
    %v11145 = vpow.pop %v11144
    %v11146 = vadd.f32 %v11145, 1.0
    %v11147 = vrcp.pop %v11146
    %v11148 = vmul.f32 %v11146, %v11147
    %v11149 = vsub.f32 1.0, %v11148
    %v11150 = vmul.f32 %v11147, %v11149
    %v11151 = vadd.f32 %v11147, %v11150
    %vm11152 = vweird.f32 %v11146
    %vm11153 = vweird.f32 %v11147
    %vm11154 = vmor %vm11152, %vm11153
    %v11155 = vsel %vm11154, %v11147, %v11151
    %v11156 = vand.u32 2147483647, %v11146
    %vm11157 = vcmp.eq.f32.partialorder %v11156, 8.507059e+37
    %v11158 = vand.u32 %v11146, 2147483648
    %v11159 = vor.u32 1.1754944e-38, %v11158
    %v11160 = vsel %vm11157, %v11159, %v11155
    %v11161 = vmul.f32 1.0, %v11160
    %v11162 = vmul.f32 %v11141, %v11161
    %11164 = vrot.lane.b32.xlu0 %v11162, 2
    %v11165 = vpop.permute.xlu0 %11164
    %11167 = vst.msk [vmem:[#allocation3] sm:$0xff] %vm11102, %v11165
    %v11168 = vld [vmem:[#allocation3] sm:$0xff]
    %11170 = vrot.lane.b32.xlu0 %v11168, 126
    %v11171 = vpop.permute.xlu0 %11170
    %11173 = vrot.lane.b32.xlu0 %v11168, 124
    %v11174 = vpop.permute.xlu0 %11173
    %v11176 = vld [vmem:[#allocation13] sm:$0xff]
    %v11177 = vld [vmem:[%s12] sm:$0xff]
    %11179 = vset.pattern.permute.xlu0 0
    %11180 = vperm.xlu0 %11179, %v11177
    %v11181 = vpop.permute.xlu0 %11180
    %v11184 = vsel %vm11119, %v11176, 0
    %11186 = vmatpush.msra.mxu0 0.0
    %11187 = vmatpush.msra.mxu0 0.0
    %11188 = vmatpush.msra.mxu0 0.0
    %11189 = vmatpush.msra.mxu0 0.0
    %11190 = vmatpush.msra.mxu0 0.0
    %11191 = vmatpush.msra.mxu0 0.0
    %11192 = vmatpush.msra.mxu0 0.0
    %11193 = vmatpush.msra.mxu0 0.0
    %11194 = vmatpush.msra.mxu0 0.0
    %11195 = vmatpush.msra.mxu0 0.0
    %11196 = vmatpush.msra.mxu0 0.0
    %11197 = vmatpush.msra.mxu0 0.0
    %11198 = vmatpush.msra.mxu0 0.0
    %11199 = vmatpush.msra.mxu0 %v11174
    %11200 = vmatpush.msra.mxu0 %v11171
    %11201 = vmatpush.msra.mxu0 %v11168
    %11202 = vmatmul.f32.gmra.mxu0 %v11184
    %v11203 = vpop.f32.mrf.mxu0
    %v11204 = vadd.f32 %v11181, %v11203
    %11205 = vdwg.mxu0
    %v11206 = vxor.u32 %v11204, 2147483648
    %v11207 = vmul.f32 %v11206, 1.442695
    %v11208 = vpow.pop %v11207
    %v11209 = vadd.f32 %v11208, 1.0
    %v11210 = vrcp.pop %v11209
    %v11211 = vmul.f32 %v11209, %v11210
    %v11212 = vsub.f32 1.0, %v11211
    %v11213 = vmul.f32 %v11210, %v11212
    %v11214 = vadd.f32 %v11210, %v11213
    %vm11215 = vweird.f32 %v11209
    %vm11216 = vweird.f32 %v11210
    %vm11217 = vmor %vm11215, %vm11216
    %v11218 = vsel %vm11217, %v11210, %v11214
    %v11219 = vand.u32 2147483647, %v11209
    %vm11220 = vcmp.eq.f32.partialorder %v11219, 8.507059e+37
    %v11221 = vand.u32 %v11209, 2147483648
    %v11222 = vor.u32 1.1754944e-38, %v11221
    %v11223 = vsel %vm11220, %v11222, %v11218
    %v11224 = vmul.f32 1.0, %v11223
    %v11225 = vmul.f32 %v11204, %v11224
    %vm11226 = vcmask 261120
    %11227 = vst.msk [vmem:[#allocation15] sm:$0xff] %vm11226, %v11225
    // Predicated region
    $region78: #{tpu_custom_call.1} parent=1 // pred_check
      _
    $region79: #{tpu_custom_call.1} parent=1 // pred_check_branch
      %11229 = sbr.rel (0) target = $region81
    $region80: #{tpu_custom_call.1} parent=1 // pred_region
      %11231 = vsyncadd [#allocation6], 0
      %s11233 = sshll.u32 [#allocation15], 4
      %s11234 = int_to_ptr.vmem [resolvable:$true] %s11233
      %s11235 = sshll.u32 %s13, 4
      %s11236 = int_to_ptr.hbm [resolvable:$true] %s11235
      %11238 = dma.vmem_to_hbm [thread:$0]  %s11234, 128, %s11236, [#allocation6]
    $region81: #{tpu_custom_call.1} parent=1 // pred_fallthru
      _
    // Predicated region
    $region82: #{tpu_custom_call.1} parent=1 // pred_check
      _
    $region83: #{tpu_custom_call.1} parent=1 // pred_check_branch
      %11240 = sbr.rel (0) target = $region85
    $region84: #{tpu_custom_call.1} parent=1 // pred_region
      %11242 = dma.done [#allocation6], 128
    $region85: #{tpu_custom_call.1} parent=1 // pred_fallthru
      _
    %11243 = vsyncpa [#allocation5], 1
    %11244 = vsyncpa [#allocation8], 1
    %11245 = vsyncpa [#allocation11], 1
    %11246 = vsyncpa [#allocation14], 1
    %11247 = vsyncpa [#allocation6], 1

</llo_original>
